<compile_context>
chip_gen: v5e
topology: v5e:2x2
jax: 0.10.0
libtpu: 0.0.40
codegen_flags: <defaults>
</compile_context>

<pallas_src>
import math
from functools import partial

import jax
import jax.numpy as jnp
from jax.experimental import pallas as pl
from jax.experimental.pallas import tpu as pltpu

NEG_SLOPE = 0.1


def _leaky_relu(x, slope=NEG_SLOPE):
    return jnp.where(x >= 0, x, slope * x)


# ---------------------------------------------------------------------------
# Channel-major im2col: flat row-padded line buffer -> lane-dense slab rows
# ---------------------------------------------------------------------------
def _im2col(prb_ref, slab_ref, col, H, W, C, d, row_off):
    """prb_ref: (C, (H+2d)*W + 2d) flat buffer whose interior
    [d + d*W : d + d*W + H*W] holds the image rows (flattened y*W + x) and whose
    halo is zero.  Writes the 9 dilated taps of a zero-padded 3x3 conv as
    lane-dense (C, H*W) blocks into slab_ref rows [row_off + t*C : row_off+(t+1)*C].
    Row (y) out-of-range positions read the zero halo; column (x) wrap-around is
    killed with a per-lane mask."""
    HW = H * W
    base = d + d * W
    for ky in range(3):
        for kx in range(3):
            t = ky * 3 + kx
            off = base + ((ky - 1) * W + (kx - 1)) * d   # contiguous lane slice
            tap = prb_ref[:, off:off + HW]               # (C, HW)
            if kx == 0:
                tap = jnp.where(col >= d, tap, 0.0)
            elif kx == 2:
                tap = jnp.where(col < W - d, tap, 0.0)
            slab_ref[row_off + t * C: row_off + (t + 1) * C, :] = tap.astype(slab_ref.dtype)


# ---------------------------------------------------------------------------
# Fused kernel: one grid step == one batch image, everything VMEM resident
# ---------------------------------------------------------------------------
def content_kernel(x_ref, w1t_ref, wl1t_ref, wd35t_ref, w3ft_ref,
                   wfl1t_ref, wfd35t_ref,
                   o_ref,
                   prb1, prb2, prb3, prb5,
                   slab1, slab2, slab35,
                   *, H, W, Cin, feat, mm):
    HW = H * W
    f = feat
    C2 = 2 * f      # 32
    C4 = 4 * f      # 64

    col = jax.lax.broadcasted_iota(jnp.int32, (1, HW), 1) % W   # x coordinate per lane

    # Zero only the (small) halos of the line buffers, every step.  The interiors
    # are fully rewritten below, so this is all that is needed, and it does not
    # depend on program_id (correct when the parallel axis is core-split).
    for prb, d in ((prb1, 1), (prb2, 2), (prb3, 3), (prb5, 5)):
        h = d + d * W
        Cp = prb.shape[0]
        prb[:, :h] = jnp.zeros((Cp, h), prb.dtype)
        prb[:, h + HW:] = jnp.zeros((Cp, prb.shape[1] - h - HW), prb.dtype)

    x2d = x_ref[0].astype(jnp.float32)                              # (Cin, HW)

    # ---- conv_1x1 : x_ = W1^T @ x  (Cin -> 4f), N = HW lanes -----------------
    x_full = jnp.dot(w1t_ref[...], x2d.astype(mm),
                     preferred_element_type=jnp.float32)            # (4f, HW)

    # ---- level1_1 + level1_2 (dil=2) as ONE block-diagonal matmul ------------
    d = 2
    prb2[:, d + d * W: d + d * W + HW] = x_full
    _im2col(prb2, slab2, col, H, W, C4, d, 0)
    y12 = _leaky_relu(jnp.dot(wl1t_ref[...], slab2[...],
                              preferred_element_type=jnp.float32))  # (4f,HW)=[x1|x2]
    # conv_fuse contribution of [x1 | x2]; accumulator stays in vregs.
    acc = jnp.dot(wfl1t_ref[...], y12.astype(mm),
                  preferred_element_type=jnp.float32)               # (2f, HW)

    # ---- level2_{1,3} (dil=3) + level2_{2,4} (dil=5) merged into ONE matmul --
    prb3[0:f, 3 + 3 * W: 3 + 3 * W + HW] = y12[0:f, :]              # x1[:, :f]
    prb3[f:C2, 3 + 3 * W: 3 + 3 * W + HW] = y12[C2:C2 + f, :]       # x2[:, :f]
    prb5[0:f, 5 + 5 * W: 5 + 5 * W + HW] = y12[f:C2, :]             # x1[:, f:]
    prb5[f:C2, 5 + 5 * W: 5 + 5 * W + HW] = y12[C2 + f:C4, :]       # x2[:, f:]
    _im2col(prb3, slab35, col, H, W, C2, 3, 0)
    _im2col(prb5, slab35, col, H, W, C2, 5, 9 * C2)
    y35 = _leaky_relu(jnp.dot(wd35t_ref[...], slab35[...],
                              preferred_element_type=jnp.float32))  # [x2_1|x2_3|x2_2|x2_4]
    acc = acc + jnp.dot(wfd35t_ref[...], y35.astype(mm),
                        preferred_element_type=jnp.float32)

    # ---- conv_3x3 (dil=1) on the raw input, conv_fuse folded in at init ------
    prb1[:, 1 + W: 1 + W + HW] = x2d
    _im2col(prb1, slab1, col, H, W, Cin, 1, 0)
    acc = acc + jnp.dot(w3ft_ref[...], slab1[...],
                        preferred_element_type=jnp.float32)

    o_ref[0] = acc.astype(o_ref.dtype)                              # lane-dense (2f, HW)


# ---------------------------------------------------------------------------
# Wrapper: one pallas_call for the whole module (NCHW in, NCHW out)
# ---------------------------------------------------------------------------
def content_module_forward(x_nchw, params, matmul_dtype=jnp.float32):
    fp = params["fused"]
    feat = params["feat"]
    N, Cin, H, W = x_nchw.shape
    HW = H * W
    Cout = 2 * feat
    mm = matmul_dtype

    x_flat = x_nchw.reshape(N, Cin, HW)
    weights = [fp["w1t"], fp["wl1t"], fp["wd35t"], fp["w3ft"],
               fp["wf_l1t"], fp["wf_d35t"]]
    weights = [w.astype(mm) for w in weights]

    out = pl.pallas_call(
        partial(content_kernel, H=H, W=W, Cin=Cin, feat=feat, mm=mm),
        out_shape=jax.ShapeDtypeStruct((N, Cout, HW), x_nchw.dtype),
        grid=(N,),
        in_specs=[pl.BlockSpec((1, Cin, HW), lambda n: (n, 0, 0))]
                 + [pl.BlockSpec(w.shape, lambda n: (0, 0)) for w in weights],
        out_specs=pl.BlockSpec((1, Cout, HW), lambda n: (n, 0, 0)),
        scratch_shapes=[
            # flat row-padded line buffers (halo kept zero, interior rewritten)
            pltpu.VMEM((Cin,      (H + 2) * W + 2),  jnp.float32),   # dil=1
            pltpu.VMEM((4 * feat, (H + 4) * W + 4),  jnp.float32),   # dil=2
            pltpu.VMEM((2 * feat, (H + 6) * W + 6),  jnp.float32),   # dil=3
            pltpu.VMEM((2 * feat, (H + 10) * W + 10), jnp.float32),  # dil=5
            # lane-dense im2col slabs (channel-major: (9C, HW))
            pltpu.VMEM((9 * Cin, HW), mm),                           # dil=1
            pltpu.VMEM((9 * 4 * feat, HW), mm),                      # dil=2
            pltpu.VMEM((2 * 9 * 2 * feat, HW), mm),                  # dil=3 + dil=5 merged
        ],
        compiler_params=pltpu.CompilerParams(
            dimension_semantics=("parallel",)),    # batch axis -> megacore / 2-TC split
    )(x_flat, *weights)
    return out.reshape(N, Cout, H, W)


# ---------------------------------------------------------------------------
# Parameters (deterministic PyTorch-default-style init) + fused weight forms
# ---------------------------------------------------------------------------
def _stack_block_diag(wa_hwio, wb_hwio):
    """Two (3,3,C,O) HWIO weights -> (9*(Ca+Cb), Oa+Ob) per-tap block-diagonal
    matmul weight matching the tap-major/channel-minor im2col slab layout."""
    wa = wa_hwio.reshape(9, wa_hwio.shape[2], wa_hwio.shape[3])
    wb = wb_hwio.reshape(9, wb_hwio.shape[2], wb_hwio.shape[3])
    T, Ca, Oa = wa.shape
    _, Cb, Ob = wb.shape
    w = jnp.zeros((T, Ca + Cb, Oa + Ob), wa.dtype)
    w = w.at[:, :Ca, :Oa].set(wa)
    w = w.at[:, Ca:, Oa:].set(wb)
    return w.reshape(T * (Ca + Cb), Oa + Ob)


def init_params(key, in_feat=32, n_feat=64):
    assert n_feat % 4 == 0
    feat = n_feat // 4

    def conv_w(k, cout, cin, ksz):
        bound = 1.0 / math.sqrt(cin * ksz * ksz)
        return jax.random.uniform(k, (cout, cin, ksz, ksz), jnp.float32,
                                  minval=-bound, maxval=bound)

    def to_hwio(w_oihw):
        return jnp.transpose(w_oihw, (2, 3, 1, 0))  # (kh, kw, Cin, Cout)

    ks = jax.random.split(key, 9)
    raw = {
        "conv_1x1": to_hwio(conv_w(ks[0], n_feat, in_feat, 1))[0, 0],        # (Cin, 4f)
        "conv_3x3": to_hwio(conv_w(ks[1], feat, in_feat, 3)),
        "level1_1": to_hwio(conv_w(ks[2], n_feat // 2, n_feat // 2, 3)),
        "level1_2": to_hwio(conv_w(ks[3], n_feat // 2, n_feat // 2, 3)),
        "level2_1": to_hwio(conv_w(ks[4], feat, feat, 3)),
        "level2_2": to_hwio(conv_w(ks[5], feat, feat, 3)),
        "level2_3": to_hwio(conv_w(ks[6], feat, feat, 3)),
        "level2_4": to_hwio(conv_w(ks[7], feat, feat, 3)),
        "conv_fuse": to_hwio(conv_w(ks[8], n_feat // 2, feat * 9, 1))[0, 0],  # (9f, 2f)
    }

    f = feat
    wf = raw["conv_fuse"]                                       # (9f, 2f) = (144, 32)
    # concat order: [x1(2f), x2(2f), x2_1(f), x2_2(f), x2_3(f), x2_4(f), x3(f)]
    wl1 = _stack_block_diag(raw["level1_1"], raw["level1_2"])   # (9*4f, 4f)
    wd3 = _stack_block_diag(raw["level2_1"], raw["level2_3"])   # (9*2f, 2f)
    wd5 = _stack_block_diag(raw["level2_2"], raw["level2_4"])   # (9*2f, 2f)
    # dil=3 and dil=5 merged into one block-diagonal K=2*9*2f matmul
    wd35 = jnp.zeros((2 * 9 * 2 * f, 4 * f), jnp.float32)
    wd35 = wd35.at[:9 * 2 * f, :2 * f].set(wd3).at[9 * 2 * f:, 2 * f:].set(wd5)
    # conv_fuse folded into conv_3x3 (x3 path is linear): (9*Cin, 2f)
    w3 = raw["conv_3x3"].reshape(9 * in_feat, f)
    w3f = w3 @ wf[8 * f:9 * f]
    wf_l1 = wf[0:4 * f]                                                        # [x1 | x2]
    wf_d35 = jnp.concatenate([wf[4 * f:5 * f], wf[6 * f:7 * f],                # x2_1, x2_3
                              wf[5 * f:6 * f], wf[7 * f:8 * f]], axis=0)       # x2_2, x2_4

    # channel-major (transposed) forms: out = W^T @ slab, output rows = channels
    fused = {
        "w1t":     raw["conv_1x1"].T,   # (4f, Cin)
        "wl1t":    wl1.T,               # (4f, 9*4f)
        "wd35t":   wd35.T,              # (4f, 2*9*2f)
        "w3ft":    w3f.T,               # (2f, 9*Cin)
        "wf_l1t":  wf_l1.T,             # (2f, 4f)
        "wf_d35t": wf_d35.T,            # (2f, 4f)
    }
    return {"feat": feat, "raw": raw, "fused": fused}


# ---------------------------------------------------------------------------
# Pure-JAX reference (correctness check), NHWC
# ---------------------------------------------------------------------------
def _ref_conv(x, w_hwio, dil, pad):
    return jax.lax.conv_general_dilated(
        x, w_hwio, window_strides=(1, 1), padding=((pad, pad), (pad, pad)),
        rhs_dilation=(dil, dil),
        dimension_numbers=("NHWC", "HWIO", "NHWC"))


def content_module_reference(x_nhwc, params):
    p = params["raw"]
    feat = params["feat"]
    lrelu = lambda v: jnp.where(v >= 0, v, NEG_SLOPE * v)
    x_ = _ref_conv(x_nhwc, p["conv_1x1"][None, None], dil=1, pad=0)
    x1 = lrelu(_ref_conv(x_[..., :2 * feat], p["level1_1"], 2, 2))
    x2 = lrelu(_ref_conv(x_[..., 2 * feat:], p["level1_2"], 2, 2))
    x2_1 = lrelu(_ref_conv(x1[..., :feat], p["level2_1"], 3, 3))
    x2_2 = lrelu(_ref_conv(x1[..., feat:], p["level2_2"], 5, 5))
    x2_3 = lrelu(_ref_conv(x2[..., :feat], p["level2_3"], 3, 3))
    x2_4 = lrelu(_ref_conv(x2[..., feat:], p["level2_4"], 5, 5))
    x3 = _ref_conv(x_nhwc, p["conv_3x3"], 1, 1)
    cat = jnp.concatenate([x1, x2, x2_1, x2_2, x2_3, x2_4, x3], axis=-1)
    return _ref_conv(cat, p["conv_fuse"][None, None], dil=1, pad=0)


# ---------------------------------------------------------------------------
if __name__ == "__main__":
    key = jax.random.PRNGKey(0)
    k_x, k_p = jax.random.split(key)

    N, C, H, W = 2, 32, 16, 16                         # PyTorch NCHW input shape
    x_nchw = jax.random.normal(k_x, (N, C, H, W), jnp.float32)
    params = init_params(k_p, in_feat=C, n_feat=64)

    # f32 MXU inputs: exact-parity path
    out = jax.block_until_ready(content_module_forward(x_nchw, params))

    x_nhwc = jnp.transpose(x_nchw, (0, 2, 3, 1))
    ref = jax.block_until_ready(content_module_reference(x_nhwc, params))
    ref = jnp.transpose(ref, (0, 3, 1, 2))             # NHWC -> NCHW

    assert out.shape == (N, 32, H, W), out.shape
    max_err = float(jnp.max(jnp.abs(out - ref)))
    assert jnp.allclose(out, ref, atol=1e-3, rtol=1e-3), max_err

    # bf16 MXU-input fast path (v6e/v7x recommendation) -- looser tolerance
    out_bf16 = jax.block_until_ready(
        content_module_forward(x_nchw, params, matmul_dtype=jnp.bfloat16))
    max_err_bf16 = float(jnp.max(jnp.abs(out_bf16 - ref)))
    assert bool(jnp.all(jnp.isfinite(out_bf16))) and max_err_bf16 < 0.25, max_err_bf16

    print("KERNEL_OK")
</pallas_src>

<mosaic_0001>
module attributes {stable_mosaic.version = 11 : i64} {
  func.func @content_kernel(%arg0: i32, %arg1: memref<1x32x256xf32, #tpu.memory_space<vmem>>, %arg2: memref<64x32xf32, #tpu.memory_space<vmem>>, %arg3: memref<64x576xf32, #tpu.memory_space<vmem>>, %arg4: memref<64x576xf32, #tpu.memory_space<vmem>>, %arg5: memref<32x288xf32, #tpu.memory_space<vmem>>, %arg6: memref<32x64xf32, #tpu.memory_space<vmem>>, %arg7: memref<32x64xf32, #tpu.memory_space<vmem>>, %arg8: memref<1x32x256xf32, #tpu.memory_space<vmem>>, %arg9: memref<32x290xf32, #tpu.memory_space<vmem>>, %arg10: memref<64x324xf32, #tpu.memory_space<vmem>>, %arg11: memref<32x358xf32, #tpu.memory_space<vmem>>, %arg12: memref<32x426xf32, #tpu.memory_space<vmem>>, %arg13: memref<288x256xf32, #tpu.memory_space<vmem>>, %arg14: memref<576x256xf32, #tpu.memory_space<vmem>>, %arg15: memref<576x256xf32, #tpu.memory_space<vmem>>) attributes {dimension_semantics = [#tpu.dimension_semantics<parallel>], iteration_bounds = array<i64: 2>, scalar_prefetch = 0 : i64, scratch_operands = 7 : i64, tpu.core_type = #tpu.core_type<tc>, window_params = [{transform_indices = @transform_0, window_bounds = array<i64: 1, 32, 256>}, {pipeline_mode = #tpu.pipeline_mode<synchronous>, transform_indices = @transform_1, window_bounds = array<i64: 64, 32>}, {pipeline_mode = #tpu.pipeline_mode<synchronous>, transform_indices = @transform_2, window_bounds = array<i64: 64, 576>}, {pipeline_mode = #tpu.pipeline_mode<synchronous>, transform_indices = @transform_3, window_bounds = array<i64: 64, 576>}, {pipeline_mode = #tpu.pipeline_mode<synchronous>, transform_indices = @transform_4, window_bounds = array<i64: 32, 288>}, {pipeline_mode = #tpu.pipeline_mode<synchronous>, transform_indices = @transform_5, window_bounds = array<i64: 32, 64>}, {pipeline_mode = #tpu.pipeline_mode<synchronous>, transform_indices = @transform_6, window_bounds = array<i64: 32, 64>}, {transform_indices = @transform_7, window_bounds = array<i64: 1, 32, 256>}]} {
    %0 = tpu.iota {dimensions = array<i32: 1>} : vector<1x256xi32>
    %c16_i32 = arith.constant 16 : i32
    %c0_i32 = arith.constant 0 : i32
    %1 = arith.cmpi eq, %c16_i32, %c0_i32 : i32
    %c1_i32 = arith.constant 1 : i32
    %2 = arith.select %1, %c1_i32, %c16_i32 : i32
    %3 = vector.broadcast %2 : i32 to vector<1x256xi32>
    %4 = arith.remsi %0, %3 : vector<1x256xi32>
    %c0_i32_0 = arith.constant 0 : i32
    %5 = vector.broadcast %c0_i32_0 : i32 to vector<1x256xi32>
    %6 = arith.cmpi ne, %4, %5 : vector<1x256xi32>
    %c0_i32_1 = arith.constant 0 : i32
    %7 = vector.broadcast %c0_i32_1 : i32 to vector<1x256xi32>
    %8 = arith.cmpi slt, %4, %7 : vector<1x256xi32>
    %c0_i32_2 = arith.constant 0 : i32
    %9 = arith.cmpi slt, %2, %c0_i32_2 : i32
    %10 = vector.broadcast %9 : i1 to vector<1x256xi1>
    %11 = vector.broadcast %10 : vector<1x256xi1> to vector<1x256xi1>
    %12 = arith.xori %8, %11 : vector<1x256xi1>
    %13 = arith.andi %12, %6 : vector<1x256xi1>
    %14 = vector.broadcast %2 : i32 to vector<1x256xi32>
    %15 = arith.addi %4, %14 : vector<1x256xi32>
    %16 = arith.select %13, %15, %4 : vector<1x256xi1>, vector<1x256xi32>
    %cst = arith.constant 0.000000e+00 : f32
    %17 = vector.broadcast %cst : f32 to vector<32x17xf32>
    %c0 = arith.constant 0 : index
    %c0_3 = arith.constant 0 : index
    %18 = vector.load %arg9[%c0, %c0_3] : memref<32x290xf32, #tpu.memory_space<vmem>>, vector<32x17xf32>
    tpu.vector_store %arg9[%c0, %c0_3], %17 {strides = array<i32>} : memref<32x290xf32, #tpu.memory_space<vmem>>, vector<32x17xf32>,
    %cst_4 = arith.constant 0.000000e+00 : f32
    %19 = vector.broadcast %cst_4 : f32 to vector<32x17xf32>
    %c0_5 = arith.constant 0 : index
    %c273 = arith.constant 273 : index
    %20 = vector.load %arg9[%c0_5, %c273] : memref<32x290xf32, #tpu.memory_space<vmem>>, vector<32x17xf32>
    tpu.vector_store %arg9[%c0_5, %c273], %19 {strides = array<i32>} : memref<32x290xf32, #tpu.memory_space<vmem>>, vector<32x17xf32>,
    %cst_6 = arith.constant 0.000000e+00 : f32
    %21 = vector.broadcast %cst_6 : f32 to vector<64x34xf32>
    %c0_7 = arith.constant 0 : index
    %c0_8 = arith.constant 0 : index
    %22 = vector.load %arg10[%c0_7, %c0_8] : memref<64x324xf32, #tpu.memory_space<vmem>>, vector<64x34xf32>
    tpu.vector_store %arg10[%c0_7, %c0_8], %21 {strides = array<i32>} : memref<64x324xf32, #tpu.memory_space<vmem>>, vector<64x34xf32>,
    %cst_9 = arith.constant 0.000000e+00 : f32
    %23 = vector.broadcast %cst_9 : f32 to vector<64x34xf32>
    %c0_10 = arith.constant 0 : index
    %c290 = arith.constant 290 : index
    %24 = vector.load %arg10[%c0_10, %c290] : memref<64x324xf32, #tpu.memory_space<vmem>>, vector<64x34xf32>
    tpu.vector_store %arg10[%c0_10, %c290], %23 {strides = array<i32>} : memref<64x324xf32, #tpu.memory_space<vmem>>, vector<64x34xf32>,
    %cst_11 = arith.constant 0.000000e+00 : f32
    %25 = vector.broadcast %cst_11 : f32 to vector<32x51xf32>
    %c0_12 = arith.constant 0 : index
    %c0_13 = arith.constant 0 : index
    %26 = vector.load %arg11[%c0_12, %c0_13] : memref<32x358xf32, #tpu.memory_space<vmem>>, vector<32x51xf32>
    tpu.vector_store %arg11[%c0_12, %c0_13], %25 {strides = array<i32>} : memref<32x358xf32, #tpu.memory_space<vmem>>, vector<32x51xf32>,
    %cst_14 = arith.constant 0.000000e+00 : f32
    %27 = vector.broadcast %cst_14 : f32 to vector<32x51xf32>
    %c0_15 = arith.constant 0 : index
    %c307 = arith.constant 307 : index
    %28 = vector.load %arg11[%c0_15, %c307] : memref<32x358xf32, #tpu.memory_space<vmem>>, vector<32x51xf32>
    tpu.vector_store %arg11[%c0_15, %c307], %27 {strides = array<i32>} : memref<32x358xf32, #tpu.memory_space<vmem>>, vector<32x51xf32>,
    %cst_16 = arith.constant 0.000000e+00 : f32
    %29 = vector.broadcast %cst_16 : f32 to vector<32x85xf32>
    %c0_17 = arith.constant 0 : index
    %c0_18 = arith.constant 0 : index
    %30 = vector.load %arg12[%c0_17, %c0_18] : memref<32x426xf32, #tpu.memory_space<vmem>>, vector<32x85xf32>
    tpu.vector_store %arg12[%c0_17, %c0_18], %29 {strides = array<i32>} : memref<32x426xf32, #tpu.memory_space<vmem>>, vector<32x85xf32>,
    %cst_19 = arith.constant 0.000000e+00 : f32
    %31 = vector.broadcast %cst_19 : f32 to vector<32x85xf32>
    %c0_20 = arith.constant 0 : index
    %c341 = arith.constant 341 : index
    %32 = vector.load %arg12[%c0_20, %c341] : memref<32x426xf32, #tpu.memory_space<vmem>>, vector<32x85xf32>
    tpu.vector_store %arg12[%c0_20, %c341], %31 {strides = array<i32>} : memref<32x426xf32, #tpu.memory_space<vmem>>, vector<32x85xf32>,
    %c0_21 = arith.constant 0 : index
    %c0_22 = arith.constant 0 : index
    %c0_23 = arith.constant 0 : index
    %33 = vector.load %arg1[%c0_21, %c0_22, %c0_23] : memref<1x32x256xf32, #tpu.memory_space<vmem>>, vector<1x32x256xf32>
    %34 = vector.shape_cast %33 : vector<1x32x256xf32> to vector<32x256xf32>
    %c0_24 = arith.constant 0 : index
    %c0_25 = arith.constant 0 : index
    %35 = vector.load %arg2[%c0_24, %c0_25] : memref<64x32xf32, #tpu.memory_space<vmem>>, vector<64x32xf32>
    %cst_26 = arith.constant dense<0.000000e+00> : vector<64x256xf32>
    %36 = tpu.matmul %35, %34, %cst_26 {dimension_numbers = #tpu.dot_dimension_numbers<[1], [0], [0], [1], [0, 0, 1, 1], [], []>} : vector<64x32xf32>, vector<32x256xf32>, vector<64x256xf32> -> vector<64x256xf32>
    %c0_27 = arith.constant 0 : index
    %c34 = arith.constant 34 : index
    %37 = vector.load %arg10[%c0_27, %c34] : memref<64x324xf32, #tpu.memory_space<vmem>>, vector<64x256xf32>
    tpu.vector_store %arg10[%c0_27, %c34], %36 {strides = array<i32>} : memref<64x324xf32, #tpu.memory_space<vmem>>, vector<64x256xf32>,
    %c0_28 = arith.constant 0 : index
    %c0_29 = arith.constant 0 : index
    %38 = vector.load %arg10[%c0_28, %c0_29] : memref<64x324xf32, #tpu.memory_space<vmem>>, vector<64x256xf32>
    %c2_i32 = arith.constant 2 : i32
    %39 = vector.broadcast %c2_i32 : i32 to vector<1x256xi32>
    %40 = arith.cmpi sge, %16, %39 : vector<1x256xi32>
    %cst_30 = arith.constant 0.000000e+00 : f32
    %41 = vector.shape_cast %40 : vector<1x256xi1> to vector<1x256xi1>
    %42 = vector.broadcast %41 : vector<1x256xi1> to vector<64x256xi1>
    %43 = vector.broadcast %cst_30 : f32 to vector<64x256xf32>
    %44 = arith.select %42, %38, %43 : vector<64x256xi1>, vector<64x256xf32>
    %c0_31 = arith.constant 0 : index
    %c0_32 = arith.constant 0 : index
    %45 = vector.load %arg14[%c0_31, %c0_32] : memref<576x256xf32, #tpu.memory_space<vmem>>, vector<64x256xf32>
    tpu.vector_store %arg14[%c0_31, %c0_32], %44 {strides = array<i32>} : memref<576x256xf32, #tpu.memory_space<vmem>>, vector<64x256xf32>,
    %c0_33 = arith.constant 0 : index
    %c2 = arith.constant 2 : index
    %46 = vector.load %arg10[%c0_33, %c2] : memref<64x324xf32, #tpu.memory_space<vmem>>, vector<64x256xf32>
    %c64 = arith.constant 64 : index
    %c0_34 = arith.constant 0 : index
    %47 = vector.load %arg14[%c64, %c0_34] : memref<576x256xf32, #tpu.memory_space<vmem>>, vector<64x256xf32>
    tpu.vector_store %arg14[%c64, %c0_34], %46 {strides = array<i32>} : memref<576x256xf32, #tpu.memory_space<vmem>>, vector<64x256xf32>,
    %c0_35 = arith.constant 0 : index
    %c4 = arith.constant 4 : index
    %48 = vector.load %arg10[%c0_35, %c4] : memref<64x324xf32, #tpu.memory_space<vmem>>, vector<64x256xf32>
    %c14_i32 = arith.constant 14 : i32
    %49 = vector.broadcast %c14_i32 : i32 to vector<1x256xi32>
    %50 = arith.cmpi slt, %16, %49 : vector<1x256xi32>
    %cst_36 = arith.constant 0.000000e+00 : f32
    %51 = vector.shape_cast %50 : vector<1x256xi1> to vector<1x256xi1>
    %52 = vector.broadcast %51 : vector<1x256xi1> to vector<64x256xi1>
    %53 = vector.broadcast %cst_36 : f32 to vector<64x256xf32>
    %54 = arith.select %52, %48, %53 : vector<64x256xi1>, vector<64x256xf32>
    %c128 = arith.constant 128 : index
    %c0_37 = arith.constant 0 : index
    %55 = vector.load %arg14[%c128, %c0_37] : memref<576x256xf32, #tpu.memory_space<vmem>>, vector<64x256xf32>
    tpu.vector_store %arg14[%c128, %c0_37], %54 {strides = array<i32>} : memref<576x256xf32, #tpu.memory_space<vmem>>, vector<64x256xf32>,
    %c0_38 = arith.constant 0 : index
    %c32 = arith.constant 32 : index
    %56 = vector.load %arg10[%c0_38, %c32] : memref<64x324xf32, #tpu.memory_space<vmem>>, vector<64x256xf32>
    %c2_i32_39 = arith.constant 2 : i32
    %57 = vector.broadcast %c2_i32_39 : i32 to vector<1x256xi32>
    %58 = arith.cmpi sge, %16, %57 : vector<1x256xi32>
    %cst_40 = arith.constant 0.000000e+00 : f32
    %59 = vector.shape_cast %58 : vector<1x256xi1> to vector<1x256xi1>
    %60 = vector.broadcast %59 : vector<1x256xi1> to vector<64x256xi1>
    %61 = vector.broadcast %cst_40 : f32 to vector<64x256xf32>
    %62 = arith.select %60, %56, %61 : vector<64x256xi1>, vector<64x256xf32>
    %c192 = arith.constant 192 : index
    %c0_41 = arith.constant 0 : index
    %63 = vector.load %arg14[%c192, %c0_41] : memref<576x256xf32, #tpu.memory_space<vmem>>, vector<64x256xf32>
    tpu.vector_store %arg14[%c192, %c0_41], %62 {strides = array<i32>} : memref<576x256xf32, #tpu.memory_space<vmem>>, vector<64x256xf32>,
    %c0_42 = arith.constant 0 : index
    %c34_43 = arith.constant 34 : index
    %64 = vector.load %arg10[%c0_42, %c34_43] : memref<64x324xf32, #tpu.memory_space<vmem>>, vector<64x256xf32>
    %c256 = arith.constant 256 : index
    %c0_44 = arith.constant 0 : index
    %65 = vector.load %arg14[%c256, %c0_44] : memref<576x256xf32, #tpu.memory_space<vmem>>, vector<64x256xf32>
    tpu.vector_store %arg14[%c256, %c0_44], %64 {strides = array<i32>} : memref<576x256xf32, #tpu.memory_space<vmem>>, vector<64x256xf32>,
    %c0_45 = arith.constant 0 : index
    %c36 = arith.constant 36 : index
    %66 = vector.load %arg10[%c0_45, %c36] : memref<64x324xf32, #tpu.memory_space<vmem>>, vector<64x256xf32>
    %c14_i32_46 = arith.constant 14 : i32
    %67 = vector.broadcast %c14_i32_46 : i32 to vector<1x256xi32>
    %68 = arith.cmpi slt, %16, %67 : vector<1x256xi32>
    %cst_47 = arith.constant 0.000000e+00 : f32
    %69 = vector.shape_cast %68 : vector<1x256xi1> to vector<1x256xi1>
    %70 = vector.broadcast %69 : vector<1x256xi1> to vector<64x256xi1>
    %71 = vector.broadcast %cst_47 : f32 to vector<64x256xf32>
    %72 = arith.select %70, %66, %71 : vector<64x256xi1>, vector<64x256xf32>
    %c320 = arith.constant 320 : index
    %c0_48 = arith.constant 0 : index
    %73 = vector.load %arg14[%c320, %c0_48] : memref<576x256xf32, #tpu.memory_space<vmem>>, vector<64x256xf32>
    tpu.vector_store %arg14[%c320, %c0_48], %72 {strides = array<i32>} : memref<576x256xf32, #tpu.memory_space<vmem>>, vector<64x256xf32>,
    %c0_49 = arith.constant 0 : index
    %c64_50 = arith.constant 64 : index
    %74 = vector.load %arg10[%c0_49, %c64_50] : memref<64x324xf32, #tpu.memory_space<vmem>>, vector<64x256xf32>
    %c2_i32_51 = arith.constant 2 : i32
    %75 = vector.broadcast %c2_i32_51 : i32 to vector<1x256xi32>
    %76 = arith.cmpi sge, %16, %75 : vector<1x256xi32>
    %cst_52 = arith.constant 0.000000e+00 : f32
    %77 = vector.shape_cast %76 : vector<1x256xi1> to vector<1x256xi1>
    %78 = vector.broadcast %77 : vector<1x256xi1> to vector<64x256xi1>
    %79 = vector.broadcast %cst_52 : f32 to vector<64x256xf32>
    %80 = arith.select %78, %74, %79 : vector<64x256xi1>, vector<64x256xf32>
    %c384 = arith.constant 384 : index
    %c0_53 = arith.constant 0 : index
    %81 = vector.load %arg14[%c384, %c0_53] : memref<576x256xf32, #tpu.memory_space<vmem>>, vector<64x256xf32>
    tpu.vector_store %arg14[%c384, %c0_53], %80 {strides = array<i32>} : memref<576x256xf32, #tpu.memory_space<vmem>>, vector<64x256xf32>,
    %c0_54 = arith.constant 0 : index
    %c66 = arith.constant 66 : index
    %82 = vector.load %arg10[%c0_54, %c66] : memref<64x324xf32, #tpu.memory_space<vmem>>, vector<64x256xf32>
    %c448 = arith.constant 448 : index
    %c0_55 = arith.constant 0 : index
    %83 = vector.load %arg14[%c448, %c0_55] : memref<576x256xf32, #tpu.memory_space<vmem>>, vector<64x256xf32>
    tpu.vector_store %arg14[%c448, %c0_55], %82 {strides = array<i32>} : memref<576x256xf32, #tpu.memory_space<vmem>>, vector<64x256xf32>,
    %c0_56 = arith.constant 0 : index
    %c68 = arith.constant 68 : index
    %84 = vector.load %arg10[%c0_56, %c68] : memref<64x324xf32, #tpu.memory_space<vmem>>, vector<64x256xf32>
    %c14_i32_57 = arith.constant 14 : i32
    %85 = vector.broadcast %c14_i32_57 : i32 to vector<1x256xi32>
    %86 = arith.cmpi slt, %16, %85 : vector<1x256xi32>
    %cst_58 = arith.constant 0.000000e+00 : f32
    %87 = vector.shape_cast %86 : vector<1x256xi1> to vector<1x256xi1>
    %88 = vector.broadcast %87 : vector<1x256xi1> to vector<64x256xi1>
    %89 = vector.broadcast %cst_58 : f32 to vector<64x256xf32>
    %90 = arith.select %88, %84, %89 : vector<64x256xi1>, vector<64x256xf32>
    %c512 = arith.constant 512 : index
    %c0_59 = arith.constant 0 : index
    %91 = vector.load %arg14[%c512, %c0_59] : memref<576x256xf32, #tpu.memory_space<vmem>>, vector<64x256xf32>
    tpu.vector_store %arg14[%c512, %c0_59], %90 {strides = array<i32>} : memref<576x256xf32, #tpu.memory_space<vmem>>, vector<64x256xf32>,
    %c0_60 = arith.constant 0 : index
    %c0_61 = arith.constant 0 : index
    %92 = vector.load %arg3[%c0_60, %c0_61] : memref<64x576xf32, #tpu.memory_space<vmem>>, vector<64x576xf32>
    %c0_62 = arith.constant 0 : index
    %c0_63 = arith.constant 0 : index
    %93 = vector.load %arg14[%c0_62, %c0_63] : memref<576x256xf32, #tpu.memory_space<vmem>>, vector<576x256xf32>
    %cst_64 = arith.constant dense<0.000000e+00> : vector<64x256xf32>
    %94 = tpu.matmul %92, %93, %cst_64 {dimension_numbers = #tpu.dot_dimension_numbers<[1], [0], [0], [1], [0, 0, 1, 1], [], []>} : vector<64x576xf32>, vector<576x256xf32>, vector<64x256xf32> -> vector<64x256xf32>
    %cst_65 = arith.constant 0.000000e+00 : f32
    %95 = vector.broadcast %cst_65 : f32 to vector<64x256xf32>
    %96 = arith.cmpf oge, %94, %95 : vector<64x256xf32>
    %cst_66 = arith.constant 1.000000e-01 : f32
    %97 = vector.broadcast %cst_66 : f32 to vector<64x256xf32>
    %98 = arith.mulf %97, %94 : vector<64x256xf32>
    %99 = arith.select %96, %94, %98 : vector<64x256xi1>, vector<64x256xf32>
    %c0_67 = arith.constant 0 : index
    %c0_68 = arith.constant 0 : index
    %100 = vector.load %arg6[%c0_67, %c0_68] : memref<32x64xf32, #tpu.memory_space<vmem>>, vector<32x64xf32>
    %cst_69 = arith.constant dense<0.000000e+00> : vector<32x256xf32>
    %101 = tpu.matmul %100, %99, %cst_69 {dimension_numbers = #tpu.dot_dimension_numbers<[1], [0], [0], [1], [0, 0, 1, 1], [], []>} : vector<32x64xf32>, vector<64x256xf32>, vector<32x256xf32> -> vector<32x256xf32>
    %102 = vector.extract_strided_slice %99 {offsets = [0, 0], sizes = [16, 256], strides = [1, 1]} : vector<64x256xf32> to vector<16x256xf32>
    %c0_70 = arith.constant 0 : index
    %c51 = arith.constant 51 : index
    %103 = vector.load %arg11[%c0_70, %c51] : memref<32x358xf32, #tpu.memory_space<vmem>>, vector<16x256xf32>
    tpu.vector_store %arg11[%c0_70, %c51], %102 {strides = array<i32>} : memref<32x358xf32, #tpu.memory_space<vmem>>, vector<16x256xf32>,
    %104 = vector.extract_strided_slice %99 {offsets = [32, 0], sizes = [16, 256], strides = [1, 1]} : vector<64x256xf32> to vector<16x256xf32>
    %c16 = arith.constant 16 : index
    %c51_71 = arith.constant 51 : index
    %105 = vector.load %arg11[%c16, %c51_71] : memref<32x358xf32, #tpu.memory_space<vmem>>, vector<16x256xf32>
    tpu.vector_store %arg11[%c16, %c51_71], %104 {strides = array<i32>} : memref<32x358xf32, #tpu.memory_space<vmem>>, vector<16x256xf32>,
    %106 = vector.extract_strided_slice %99 {offsets = [16, 0], sizes = [16, 256], strides = [1, 1]} : vector<64x256xf32> to vector<16x256xf32>
    %c0_72 = arith.constant 0 : index
    %c85 = arith.constant 85 : index
    %107 = vector.load %arg12[%c0_72, %c85] : memref<32x426xf32, #tpu.memory_space<vmem>>, vector<16x256xf32>
    tpu.vector_store %arg12[%c0_72, %c85], %106 {strides = array<i32>} : memref<32x426xf32, #tpu.memory_space<vmem>>, vector<16x256xf32>,
    %108 = vector.extract_strided_slice %99 {offsets = [48, 0], sizes = [16, 256], strides = [1, 1]} : vector<64x256xf32> to vector<16x256xf32>
    %c16_73 = arith.constant 16 : index
    %c85_74 = arith.constant 85 : index
    %109 = vector.load %arg12[%c16_73, %c85_74] : memref<32x426xf32, #tpu.memory_space<vmem>>, vector<16x256xf32>
    tpu.vector_store %arg12[%c16_73, %c85_74], %108 {strides = array<i32>} : memref<32x426xf32, #tpu.memory_space<vmem>>, vector<16x256xf32>,
    %c0_75 = arith.constant 0 : index
    %c0_76 = arith.constant 0 : index
    %110 = vector.load %arg11[%c0_75, %c0_76] : memref<32x358xf32, #tpu.memory_space<vmem>>, vector<32x256xf32>
    %c3_i32 = arith.constant 3 : i32
    %111 = vector.broadcast %c3_i32 : i32 to vector<1x256xi32>
    %112 = arith.cmpi sge, %16, %111 : vector<1x256xi32>
    %cst_77 = arith.constant 0.000000e+00 : f32
    %113 = vector.shape_cast %112 : vector<1x256xi1> to vector<1x256xi1>
    %114 = vector.broadcast %113 : vector<1x256xi1> to vector<32x256xi1>
    %115 = vector.broadcast %cst_77 : f32 to vector<32x256xf32>
    %116 = arith.select %114, %110, %115 : vector<32x256xi1>, vector<32x256xf32>
    %c0_78 = arith.constant 0 : index
    %c0_79 = arith.constant 0 : index
    %117 = vector.load %arg15[%c0_78, %c0_79] : memref<576x256xf32, #tpu.memory_space<vmem>>, vector<32x256xf32>
    tpu.vector_store %arg15[%c0_78, %c0_79], %116 {strides = array<i32>} : memref<576x256xf32, #tpu.memory_space<vmem>>, vector<32x256xf32>,
    %c0_80 = arith.constant 0 : index
    %c3 = arith.constant 3 : index
    %118 = vector.load %arg11[%c0_80, %c3] : memref<32x358xf32, #tpu.memory_space<vmem>>, vector<32x256xf32>
    %c32_81 = arith.constant 32 : index
    %c0_82 = arith.constant 0 : index
    %119 = vector.load %arg15[%c32_81, %c0_82] : memref<576x256xf32, #tpu.memory_space<vmem>>, vector<32x256xf32>
    tpu.vector_store %arg15[%c32_81, %c0_82], %118 {strides = array<i32>} : memref<576x256xf32, #tpu.memory_space<vmem>>, vector<32x256xf32>,
    %c0_83 = arith.constant 0 : index
    %c6 = arith.constant 6 : index
    %120 = vector.load %arg11[%c0_83, %c6] : memref<32x358xf32, #tpu.memory_space<vmem>>, vector<32x256xf32>
    %c13_i32 = arith.constant 13 : i32
    %121 = vector.broadcast %c13_i32 : i32 to vector<1x256xi32>
    %122 = arith.cmpi slt, %16, %121 : vector<1x256xi32>
    %cst_84 = arith.constant 0.000000e+00 : f32
    %123 = vector.shape_cast %122 : vector<1x256xi1> to vector<1x256xi1>
    %124 = vector.broadcast %123 : vector<1x256xi1> to vector<32x256xi1>
    %125 = vector.broadcast %cst_84 : f32 to vector<32x256xf32>
    %126 = arith.select %124, %120, %125 : vector<32x256xi1>, vector<32x256xf32>
    %c64_85 = arith.constant 64 : index
    %c0_86 = arith.constant 0 : index
    %127 = vector.load %arg15[%c64_85, %c0_86] : memref<576x256xf32, #tpu.memory_space<vmem>>, vector<32x256xf32>
    tpu.vector_store %arg15[%c64_85, %c0_86], %126 {strides = array<i32>} : memref<576x256xf32, #tpu.memory_space<vmem>>, vector<32x256xf32>,
    %c0_87 = arith.constant 0 : index
    %c48 = arith.constant 48 : index
    %128 = vector.load %arg11[%c0_87, %c48] : memref<32x358xf32, #tpu.memory_space<vmem>>, vector<32x256xf32>
    %c3_i32_88 = arith.constant 3 : i32
    %129 = vector.broadcast %c3_i32_88 : i32 to vector<1x256xi32>
    %130 = arith.cmpi sge, %16, %129 : vector<1x256xi32>
    %cst_89 = arith.constant 0.000000e+00 : f32
    %131 = vector.shape_cast %130 : vector<1x256xi1> to vector<1x256xi1>
    %132 = vector.broadcast %131 : vector<1x256xi1> to vector<32x256xi1>
    %133 = vector.broadcast %cst_89 : f32 to vector<32x256xf32>
    %134 = arith.select %132, %128, %133 : vector<32x256xi1>, vector<32x256xf32>
    %c96 = arith.constant 96 : index
    %c0_90 = arith.constant 0 : index
    %135 = vector.load %arg15[%c96, %c0_90] : memref<576x256xf32, #tpu.memory_space<vmem>>, vector<32x256xf32>
    tpu.vector_store %arg15[%c96, %c0_90], %134 {strides = array<i32>} : memref<576x256xf32, #tpu.memory_space<vmem>>, vector<32x256xf32>,
    %c0_91 = arith.constant 0 : index
    %c51_92 = arith.constant 51 : index
    %136 = vector.load %arg11[%c0_91, %c51_92] : memref<32x358xf32, #tpu.memory_space<vmem>>, vector<32x256xf32>
    %c128_93 = arith.constant 128 : index
    %c0_94 = arith.constant 0 : index
    %137 = vector.load %arg15[%c128_93, %c0_94] : memref<576x256xf32, #tpu.memory_space<vmem>>, vector<32x256xf32>
    tpu.vector_store %arg15[%c128_93, %c0_94], %136 {strides = array<i32>} : memref<576x256xf32, #tpu.memory_space<vmem>>, vector<32x256xf32>,
    %c0_95 = arith.constant 0 : index
    %c54 = arith.constant 54 : index
    %138 = vector.load %arg11[%c0_95, %c54] : memref<32x358xf32, #tpu.memory_space<vmem>>, vector<32x256xf32>
    %c13_i32_96 = arith.constant 13 : i32
    %139 = vector.broadcast %c13_i32_96 : i32 to vector<1x256xi32>
    %140 = arith.cmpi slt, %16, %139 : vector<1x256xi32>
    %cst_97 = arith.constant 0.000000e+00 : f32
    %141 = vector.shape_cast %140 : vector<1x256xi1> to vector<1x256xi1>
    %142 = vector.broadcast %141 : vector<1x256xi1> to vector<32x256xi1>
    %143 = vector.broadcast %cst_97 : f32 to vector<32x256xf32>
    %144 = arith.select %142, %138, %143 : vector<32x256xi1>, vector<32x256xf32>
    %c160 = arith.constant 160 : index
    %c0_98 = arith.constant 0 : index
    %145 = vector.load %arg15[%c160, %c0_98] : memref<576x256xf32, #tpu.memory_space<vmem>>, vector<32x256xf32>
    tpu.vector_store %arg15[%c160, %c0_98], %144 {strides = array<i32>} : memref<576x256xf32, #tpu.memory_space<vmem>>, vector<32x256xf32>,
    %c0_99 = arith.constant 0 : index
    %c96_100 = arith.constant 96 : index
    %146 = vector.load %arg11[%c0_99, %c96_100] : memref<32x358xf32, #tpu.memory_space<vmem>>, vector<32x256xf32>
    %c3_i32_101 = arith.constant 3 : i32
    %147 = vector.broadcast %c3_i32_101 : i32 to vector<1x256xi32>
    %148 = arith.cmpi sge, %16, %147 : vector<1x256xi32>
    %cst_102 = arith.constant 0.000000e+00 : f32
    %149 = vector.shape_cast %148 : vector<1x256xi1> to vector<1x256xi1>
    %150 = vector.broadcast %149 : vector<1x256xi1> to vector<32x256xi1>
    %151 = vector.broadcast %cst_102 : f32 to vector<32x256xf32>
    %152 = arith.select %150, %146, %151 : vector<32x256xi1>, vector<32x256xf32>
    %c192_103 = arith.constant 192 : index
    %c0_104 = arith.constant 0 : index
    %153 = vector.load %arg15[%c192_103, %c0_104] : memref<576x256xf32, #tpu.memory_space<vmem>>, vector<32x256xf32>
    tpu.vector_store %arg15[%c192_103, %c0_104], %152 {strides = array<i32>} : memref<576x256xf32, #tpu.memory_space<vmem>>, vector<32x256xf32>,
    %c0_105 = arith.constant 0 : index
    %c99 = arith.constant 99 : index
    %154 = vector.load %arg11[%c0_105, %c99] : memref<32x358xf32, #tpu.memory_space<vmem>>, vector<32x256xf32>
    %c224 = arith.constant 224 : index
    %c0_106 = arith.constant 0 : index
    %155 = vector.load %arg15[%c224, %c0_106] : memref<576x256xf32, #tpu.memory_space<vmem>>, vector<32x256xf32>
    tpu.vector_store %arg15[%c224, %c0_106], %154 {strides = array<i32>} : memref<576x256xf32, #tpu.memory_space<vmem>>, vector<32x256xf32>,
    %c0_107 = arith.constant 0 : index
    %c102 = arith.constant 102 : index
    %156 = vector.load %arg11[%c0_107, %c102] : memref<32x358xf32, #tpu.memory_space<vmem>>, vector<32x256xf32>
    %c13_i32_108 = arith.constant 13 : i32
    %157 = vector.broadcast %c13_i32_108 : i32 to vector<1x256xi32>
    %158 = arith.cmpi slt, %16, %157 : vector<1x256xi32>
    %cst_109 = arith.constant 0.000000e+00 : f32
    %159 = vector.shape_cast %158 : vector<1x256xi1> to vector<1x256xi1>
    %160 = vector.broadcast %159 : vector<1x256xi1> to vector<32x256xi1>
    %161 = vector.broadcast %cst_109 : f32 to vector<32x256xf32>
    %162 = arith.select %160, %156, %161 : vector<32x256xi1>, vector<32x256xf32>
    %c256_110 = arith.constant 256 : index
    %c0_111 = arith.constant 0 : index
    %163 = vector.load %arg15[%c256_110, %c0_111] : memref<576x256xf32, #tpu.memory_space<vmem>>, vector<32x256xf32>
    tpu.vector_store %arg15[%c256_110, %c0_111], %162 {strides = array<i32>} : memref<576x256xf32, #tpu.memory_space<vmem>>, vector<32x256xf32>,
    %c0_112 = arith.constant 0 : index
    %c0_113 = arith.constant 0 : index
    %164 = vector.load %arg12[%c0_112, %c0_113] : memref<32x426xf32, #tpu.memory_space<vmem>>, vector<32x256xf32>
    %c5_i32 = arith.constant 5 : i32
    %165 = vector.broadcast %c5_i32 : i32 to vector<1x256xi32>
    %166 = arith.cmpi sge, %16, %165 : vector<1x256xi32>
    %cst_114 = arith.constant 0.000000e+00 : f32
    %167 = vector.shape_cast %166 : vector<1x256xi1> to vector<1x256xi1>
    %168 = vector.broadcast %167 : vector<1x256xi1> to vector<32x256xi1>
    %169 = vector.broadcast %cst_114 : f32 to vector<32x256xf32>
    %170 = arith.select %168, %164, %169 : vector<32x256xi1>, vector<32x256xf32>
    %c288 = arith.constant 288 : index
    %c0_115 = arith.constant 0 : index
    %171 = vector.load %arg15[%c288, %c0_115] : memref<576x256xf32, #tpu.memory_space<vmem>>, vector<32x256xf32>
    tpu.vector_store %arg15[%c288, %c0_115], %170 {strides = array<i32>} : memref<576x256xf32, #tpu.memory_space<vmem>>, vector<32x256xf32>,
    %c0_116 = arith.constant 0 : index
    %c5 = arith.constant 5 : index
    %172 = vector.load %arg12[%c0_116, %c5] : memref<32x426xf32, #tpu.memory_space<vmem>>, vector<32x256xf32>
    %c320_117 = arith.constant 320 : index
    %c0_118 = arith.constant 0 : index
    %173 = vector.load %arg15[%c320_117, %c0_118] : memref<576x256xf32, #tpu.memory_space<vmem>>, vector<32x256xf32>
    tpu.vector_store %arg15[%c320_117, %c0_118], %172 {strides = array<i32>} : memref<576x256xf32, #tpu.memory_space<vmem>>, vector<32x256xf32>,
    %c0_119 = arith.constant 0 : index
    %c10 = arith.constant 10 : index
    %174 = vector.load %arg12[%c0_119, %c10] : memref<32x426xf32, #tpu.memory_space<vmem>>, vector<32x256xf32>
    %c11_i32 = arith.constant 11 : i32
    %175 = vector.broadcast %c11_i32 : i32 to vector<1x256xi32>
    %176 = arith.cmpi slt, %16, %175 : vector<1x256xi32>
    %cst_120 = arith.constant 0.000000e+00 : f32
    %177 = vector.shape_cast %176 : vector<1x256xi1> to vector<1x256xi1>
    %178 = vector.broadcast %177 : vector<1x256xi1> to vector<32x256xi1>
    %179 = vector.broadcast %cst_120 : f32 to vector<32x256xf32>
    %180 = arith.select %178, %174, %179 : vector<32x256xi1>, vector<32x256xf32>
    %c352 = arith.constant 352 : index
    %c0_121 = arith.constant 0 : index
    %181 = vector.load %arg15[%c352, %c0_121] : memref<576x256xf32, #tpu.memory_space<vmem>>, vector<32x256xf32>
    tpu.vector_store %arg15[%c352, %c0_121], %180 {strides = array<i32>} : memref<576x256xf32, #tpu.memory_space<vmem>>, vector<32x256xf32>,
    %c0_122 = arith.constant 0 : index
    %c80 = arith.constant 80 : index
    %182 = vector.load %arg12[%c0_122, %c80] : memref<32x426xf32, #tpu.memory_space<vmem>>, vector<32x256xf32>
    %c5_i32_123 = arith.constant 5 : i32
    %183 = vector.broadcast %c5_i32_123 : i32 to vector<1x256xi32>
    %184 = arith.cmpi sge, %16, %183 : vector<1x256xi32>
    %cst_124 = arith.constant 0.000000e+00 : f32
    %185 = vector.shape_cast %184 : vector<1x256xi1> to vector<1x256xi1>
    %186 = vector.broadcast %185 : vector<1x256xi1> to vector<32x256xi1>
    %187 = vector.broadcast %cst_124 : f32 to vector<32x256xf32>
    %188 = arith.select %186, %182, %187 : vector<32x256xi1>, vector<32x256xf32>
    %c384_125 = arith.constant 384 : index
    %c0_126 = arith.constant 0 : index
    %189 = vector.load %arg15[%c384_125, %c0_126] : memref<576x256xf32, #tpu.memory_space<vmem>>, vector<32x256xf32>
    tpu.vector_store %arg15[%c384_125, %c0_126], %188 {strides = array<i32>} : memref<576x256xf32, #tpu.memory_space<vmem>>, vector<32x256xf32>,
    %c0_127 = arith.constant 0 : index
    %c85_128 = arith.constant 85 : index
    %190 = vector.load %arg12[%c0_127, %c85_128] : memref<32x426xf32, #tpu.memory_space<vmem>>, vector<32x256xf32>
    %c416 = arith.constant 416 : index
    %c0_129 = arith.constant 0 : index
    %191 = vector.load %arg15[%c416, %c0_129] : memref<576x256xf32, #tpu.memory_space<vmem>>, vector<32x256xf32>
    tpu.vector_store %arg15[%c416, %c0_129], %190 {strides = array<i32>} : memref<576x256xf32, #tpu.memory_space<vmem>>, vector<32x256xf32>,
    %c0_130 = arith.constant 0 : index
    %c90 = arith.constant 90 : index
    %192 = vector.load %arg12[%c0_130, %c90] : memref<32x426xf32, #tpu.memory_space<vmem>>, vector<32x256xf32>
    %c11_i32_131 = arith.constant 11 : i32
    %193 = vector.broadcast %c11_i32_131 : i32 to vector<1x256xi32>
    %194 = arith.cmpi slt, %16, %193 : vector<1x256xi32>
    %cst_132 = arith.constant 0.000000e+00 : f32
    %195 = vector.shape_cast %194 : vector<1x256xi1> to vector<1x256xi1>
    %196 = vector.broadcast %195 : vector<1x256xi1> to vector<32x256xi1>
    %197 = vector.broadcast %cst_132 : f32 to vector<32x256xf32>
    %198 = arith.select %196, %192, %197 : vector<32x256xi1>, vector<32x256xf32>
    %c448_133 = arith.constant 448 : index
    %c0_134 = arith.constant 0 : index
    %199 = vector.load %arg15[%c448_133, %c0_134] : memref<576x256xf32, #tpu.memory_space<vmem>>, vector<32x256xf32>
    tpu.vector_store %arg15[%c448_133, %c0_134], %198 {strides = array<i32>} : memref<576x256xf32, #tpu.memory_space<vmem>>, vector<32x256xf32>,
    %c0_135 = arith.constant 0 : index
    %c160_136 = arith.constant 160 : index
    %200 = vector.load %arg12[%c0_135, %c160_136] : memref<32x426xf32, #tpu.memory_space<vmem>>, vector<32x256xf32>
    %c5_i32_137 = arith.constant 5 : i32
    %201 = vector.broadcast %c5_i32_137 : i32 to vector<1x256xi32>
    %202 = arith.cmpi sge, %16, %201 : vector<1x256xi32>
    %cst_138 = arith.constant 0.000000e+00 : f32
    %203 = vector.shape_cast %202 : vector<1x256xi1> to vector<1x256xi1>
    %204 = vector.broadcast %203 : vector<1x256xi1> to vector<32x256xi1>
    %205 = vector.broadcast %cst_138 : f32 to vector<32x256xf32>
    %206 = arith.select %204, %200, %205 : vector<32x256xi1>, vector<32x256xf32>
    %c480 = arith.constant 480 : index
    %c0_139 = arith.constant 0 : index
    %207 = vector.load %arg15[%c480, %c0_139] : memref<576x256xf32, #tpu.memory_space<vmem>>, vector<32x256xf32>
    tpu.vector_store %arg15[%c480, %c0_139], %206 {strides = array<i32>} : memref<576x256xf32, #tpu.memory_space<vmem>>, vector<32x256xf32>,
    %c0_140 = arith.constant 0 : index
    %c165 = arith.constant 165 : index
    %208 = vector.load %arg12[%c0_140, %c165] : memref<32x426xf32, #tpu.memory_space<vmem>>, vector<32x256xf32>
    %c512_141 = arith.constant 512 : index
    %c0_142 = arith.constant 0 : index
    %209 = vector.load %arg15[%c512_141, %c0_142] : memref<576x256xf32, #tpu.memory_space<vmem>>, vector<32x256xf32>
    tpu.vector_store %arg15[%c512_141, %c0_142], %208 {strides = array<i32>} : memref<576x256xf32, #tpu.memory_space<vmem>>, vector<32x256xf32>,
    %c0_143 = arith.constant 0 : index
    %c170 = arith.constant 170 : index
    %210 = vector.load %arg12[%c0_143, %c170] : memref<32x426xf32, #tpu.memory_space<vmem>>, vector<32x256xf32>
    %c11_i32_144 = arith.constant 11 : i32
    %211 = vector.broadcast %c11_i32_144 : i32 to vector<1x256xi32>
    %212 = arith.cmpi slt, %16, %211 : vector<1x256xi32>
    %cst_145 = arith.constant 0.000000e+00 : f32
    %213 = vector.shape_cast %212 : vector<1x256xi1> to vector<1x256xi1>
    %214 = vector.broadcast %213 : vector<1x256xi1> to vector<32x256xi1>
    %215 = vector.broadcast %cst_145 : f32 to vector<32x256xf32>
    %216 = arith.select %214, %210, %215 : vector<32x256xi1>, vector<32x256xf32>
    %c544 = arith.constant 544 : index
    %c0_146 = arith.constant 0 : index
    %217 = vector.load %arg15[%c544, %c0_146] : memref<576x256xf32, #tpu.memory_space<vmem>>, vector<32x256xf32>
    tpu.vector_store %arg15[%c544, %c0_146], %216 {strides = array<i32>} : memref<576x256xf32, #tpu.memory_space<vmem>>, vector<32x256xf32>,
    %c0_147 = arith.constant 0 : index
    %c0_148 = arith.constant 0 : index
    %218 = vector.load %arg4[%c0_147, %c0_148] : memref<64x576xf32, #tpu.memory_space<vmem>>, vector<64x576xf32>
    %c0_149 = arith.constant 0 : index
    %c0_150 = arith.constant 0 : index
    %219 = vector.load %arg15[%c0_149, %c0_150] : memref<576x256xf32, #tpu.memory_space<vmem>>, vector<576x256xf32>
    %cst_151 = arith.constant dense<0.000000e+00> : vector<64x256xf32>
    %220 = tpu.matmul %218, %219, %cst_151 {dimension_numbers = #tpu.dot_dimension_numbers<[1], [0], [0], [1], [0, 0, 1, 1], [], []>} : vector<64x576xf32>, vector<576x256xf32>, vector<64x256xf32> -> vector<64x256xf32>
    %cst_152 = arith.constant 0.000000e+00 : f32
    %221 = vector.broadcast %cst_152 : f32 to vector<64x256xf32>
    %222 = arith.cmpf oge, %220, %221 : vector<64x256xf32>
    %cst_153 = arith.constant 1.000000e-01 : f32
    %223 = vector.broadcast %cst_153 : f32 to vector<64x256xf32>
    %224 = arith.mulf %223, %220 : vector<64x256xf32>
    %225 = arith.select %222, %220, %224 : vector<64x256xi1>, vector<64x256xf32>
    %c0_154 = arith.constant 0 : index
    %c0_155 = arith.constant 0 : index
    %226 = vector.load %arg7[%c0_154, %c0_155] : memref<32x64xf32, #tpu.memory_space<vmem>>, vector<32x64xf32>
    %cst_156 = arith.constant dense<0.000000e+00> : vector<32x256xf32>
    %227 = tpu.matmul %226, %225, %cst_156 {dimension_numbers = #tpu.dot_dimension_numbers<[1], [0], [0], [1], [0, 0, 1, 1], [], []>} : vector<32x64xf32>, vector<64x256xf32>, vector<32x256xf32> -> vector<32x256xf32>
    %228 = arith.addf %101, %227 : vector<32x256xf32>
    %c0_157 = arith.constant 0 : index
    %c17 = arith.constant 17 : index
    %229 = vector.load %arg9[%c0_157, %c17] : memref<32x290xf32, #tpu.memory_space<vmem>>, vector<32x256xf32>
    tpu.vector_store %arg9[%c0_157, %c17], %34 {strides = array<i32>} : memref<32x290xf32, #tpu.memory_space<vmem>>, vector<32x256xf32>,
    %c0_158 = arith.constant 0 : index
    %c0_159 = arith.constant 0 : index
    %230 = vector.load %arg9[%c0_158, %c0_159] : memref<32x290xf32, #tpu.memory_space<vmem>>, vector<32x256xf32>
    %c1_i32_160 = arith.constant 1 : i32
    %231 = vector.broadcast %c1_i32_160 : i32 to vector<1x256xi32>
    %232 = arith.cmpi sge, %16, %231 : vector<1x256xi32>
    %cst_161 = arith.constant 0.000000e+00 : f32
    %233 = vector.shape_cast %232 : vector<1x256xi1> to vector<1x256xi1>
    %234 = vector.broadcast %233 : vector<1x256xi1> to vector<32x256xi1>
    %235 = vector.broadcast %cst_161 : f32 to vector<32x256xf32>
    %236 = arith.select %234, %230, %235 : vector<32x256xi1>, vector<32x256xf32>
    %c0_162 = arith.constant 0 : index
    %c0_163 = arith.constant 0 : index
    %237 = vector.load %arg13[%c0_162, %c0_163] : memref<288x256xf32, #tpu.memory_space<vmem>>, vector<32x256xf32>
    tpu.vector_store %arg13[%c0_162, %c0_163], %236 {strides = array<i32>} : memref<288x256xf32, #tpu.memory_space<vmem>>, vector<32x256xf32>,
    %c0_164 = arith.constant 0 : index
    %c1 = arith.constant 1 : index
    %238 = vector.load %arg9[%c0_164, %c1] : memref<32x290xf32, #tpu.memory_space<vmem>>, vector<32x256xf32>
    %c32_165 = arith.constant 32 : index
    %c0_166 = arith.constant 0 : index
    %239 = vector.load %arg13[%c32_165, %c0_166] : memref<288x256xf32, #tpu.memory_space<vmem>>, vector<32x256xf32>
    tpu.vector_store %arg13[%c32_165, %c0_166], %238 {strides = array<i32>} : memref<288x256xf32, #tpu.memory_space<vmem>>, vector<32x256xf32>,
    %c0_167 = arith.constant 0 : index
    %c2_168 = arith.constant 2 : index
    %240 = vector.load %arg9[%c0_167, %c2_168] : memref<32x290xf32, #tpu.memory_space<vmem>>, vector<32x256xf32>
    %c15_i32 = arith.constant 15 : i32
    %241 = vector.broadcast %c15_i32 : i32 to vector<1x256xi32>
    %242 = arith.cmpi slt, %16, %241 : vector<1x256xi32>
    %cst_169 = arith.constant 0.000000e+00 : f32
    %243 = vector.shape_cast %242 : vector<1x256xi1> to vector<1x256xi1>
    %244 = vector.broadcast %243 : vector<1x256xi1> to vector<32x256xi1>
    %245 = vector.broadcast %cst_169 : f32 to vector<32x256xf32>
    %246 = arith.select %244, %240, %245 : vector<32x256xi1>, vector<32x256xf32>
    %c64_170 = arith.constant 64 : index
    %c0_171 = arith.constant 0 : index
    %247 = vector.load %arg13[%c64_170, %c0_171] : memref<288x256xf32, #tpu.memory_space<vmem>>, vector<32x256xf32>
    tpu.vector_store %arg13[%c64_170, %c0_171], %246 {strides = array<i32>} : memref<288x256xf32, #tpu.memory_space<vmem>>, vector<32x256xf32>,
    %c0_172 = arith.constant 0 : index
    %c16_173 = arith.constant 16 : index
    %248 = vector.load %arg9[%c0_172, %c16_173] : memref<32x290xf32, #tpu.memory_space<vmem>>, vector<32x256xf32>
    %c1_i32_174 = arith.constant 1 : i32
    %249 = vector.broadcast %c1_i32_174 : i32 to vector<1x256xi32>
    %250 = arith.cmpi sge, %16, %249 : vector<1x256xi32>
    %cst_175 = arith.constant 0.000000e+00 : f32
    %251 = vector.shape_cast %250 : vector<1x256xi1> to vector<1x256xi1>
    %252 = vector.broadcast %251 : vector<1x256xi1> to vector<32x256xi1>
    %253 = vector.broadcast %cst_175 : f32 to vector<32x256xf32>
    %254 = arith.select %252, %248, %253 : vector<32x256xi1>, vector<32x256xf32>
    %c96_176 = arith.constant 96 : index
    %c0_177 = arith.constant 0 : index
    %255 = vector.load %arg13[%c96_176, %c0_177] : memref<288x256xf32, #tpu.memory_space<vmem>>, vector<32x256xf32>
    tpu.vector_store %arg13[%c96_176, %c0_177], %254 {strides = array<i32>} : memref<288x256xf32, #tpu.memory_space<vmem>>, vector<32x256xf32>,
    %c0_178 = arith.constant 0 : index
    %c17_179 = arith.constant 17 : index
    %256 = vector.load %arg9[%c0_178, %c17_179] : memref<32x290xf32, #tpu.memory_space<vmem>>, vector<32x256xf32>
    %c128_180 = arith.constant 128 : index
    %c0_181 = arith.constant 0 : index
    %257 = vector.load %arg13[%c128_180, %c0_181] : memref<288x256xf32, #tpu.memory_space<vmem>>, vector<32x256xf32>
    tpu.vector_store %arg13[%c128_180, %c0_181], %256 {strides = array<i32>} : memref<288x256xf32, #tpu.memory_space<vmem>>, vector<32x256xf32>,
    %c0_182 = arith.constant 0 : index
    %c18 = arith.constant 18 : index
    %258 = vector.load %arg9[%c0_182, %c18] : memref<32x290xf32, #tpu.memory_space<vmem>>, vector<32x256xf32>
    %c15_i32_183 = arith.constant 15 : i32
    %259 = vector.broadcast %c15_i32_183 : i32 to vector<1x256xi32>
    %260 = arith.cmpi slt, %16, %259 : vector<1x256xi32>
    %cst_184 = arith.constant 0.000000e+00 : f32
    %261 = vector.shape_cast %260 : vector<1x256xi1> to vector<1x256xi1>
    %262 = vector.broadcast %261 : vector<1x256xi1> to vector<32x256xi1>
    %263 = vector.broadcast %cst_184 : f32 to vector<32x256xf32>
    %264 = arith.select %262, %258, %263 : vector<32x256xi1>, vector<32x256xf32>
    %c160_185 = arith.constant 160 : index
    %c0_186 = arith.constant 0 : index
    %265 = vector.load %arg13[%c160_185, %c0_186] : memref<288x256xf32, #tpu.memory_space<vmem>>, vector<32x256xf32>
    tpu.vector_store %arg13[%c160_185, %c0_186], %264 {strides = array<i32>} : memref<288x256xf32, #tpu.memory_space<vmem>>, vector<32x256xf32>,
    %c0_187 = arith.constant 0 : index
    %c32_188 = arith.constant 32 : index
    %266 = vector.load %arg9[%c0_187, %c32_188] : memref<32x290xf32, #tpu.memory_space<vmem>>, vector<32x256xf32>
    %c1_i32_189 = arith.constant 1 : i32
    %267 = vector.broadcast %c1_i32_189 : i32 to vector<1x256xi32>
    %268 = arith.cmpi sge, %16, %267 : vector<1x256xi32>
    %cst_190 = arith.constant 0.000000e+00 : f32
    %269 = vector.shape_cast %268 : vector<1x256xi1> to vector<1x256xi1>
    %270 = vector.broadcast %269 : vector<1x256xi1> to vector<32x256xi1>
    %271 = vector.broadcast %cst_190 : f32 to vector<32x256xf32>
    %272 = arith.select %270, %266, %271 : vector<32x256xi1>, vector<32x256xf32>
    %c192_191 = arith.constant 192 : index
    %c0_192 = arith.constant 0 : index
    %273 = vector.load %arg13[%c192_191, %c0_192] : memref<288x256xf32, #tpu.memory_space<vmem>>, vector<32x256xf32>
    tpu.vector_store %arg13[%c192_191, %c0_192], %272 {strides = array<i32>} : memref<288x256xf32, #tpu.memory_space<vmem>>, vector<32x256xf32>,
    %c0_193 = arith.constant 0 : index
    %c33 = arith.constant 33 : index
    %274 = vector.load %arg9[%c0_193, %c33] : memref<32x290xf32, #tpu.memory_space<vmem>>, vector<32x256xf32>
    %c224_194 = arith.constant 224 : index
    %c0_195 = arith.constant 0 : index
    %275 = vector.load %arg13[%c224_194, %c0_195] : memref<288x256xf32, #tpu.memory_space<vmem>>, vector<32x256xf32>
    tpu.vector_store %arg13[%c224_194, %c0_195], %274 {strides = array<i32>} : memref<288x256xf32, #tpu.memory_space<vmem>>, vector<32x256xf32>,
    %c0_196 = arith.constant 0 : index
    %c34_197 = arith.constant 34 : index
    %276 = vector.load %arg9[%c0_196, %c34_197] : memref<32x290xf32, #tpu.memory_space<vmem>>, vector<32x256xf32>
    %c15_i32_198 = arith.constant 15 : i32
    %277 = vector.broadcast %c15_i32_198 : i32 to vector<1x256xi32>
    %278 = arith.cmpi slt, %16, %277 : vector<1x256xi32>
    %cst_199 = arith.constant 0.000000e+00 : f32
    %279 = vector.shape_cast %278 : vector<1x256xi1> to vector<1x256xi1>
    %280 = vector.broadcast %279 : vector<1x256xi1> to vector<32x256xi1>
    %281 = vector.broadcast %cst_199 : f32 to vector<32x256xf32>
    %282 = arith.select %280, %276, %281 : vector<32x256xi1>, vector<32x256xf32>
    %c256_200 = arith.constant 256 : index
    %c0_201 = arith.constant 0 : index
    %283 = vector.load %arg13[%c256_200, %c0_201] : memref<288x256xf32, #tpu.memory_space<vmem>>, vector<32x256xf32>
    tpu.vector_store %arg13[%c256_200, %c0_201], %282 {strides = array<i32>} : memref<288x256xf32, #tpu.memory_space<vmem>>, vector<32x256xf32>,
    %c0_202 = arith.constant 0 : index
    %c0_203 = arith.constant 0 : index
    %284 = vector.load %arg5[%c0_202, %c0_203] : memref<32x288xf32, #tpu.memory_space<vmem>>, vector<32x288xf32>
    %c0_204 = arith.constant 0 : index
    %c0_205 = arith.constant 0 : index
    %285 = vector.load %arg13[%c0_204, %c0_205] : memref<288x256xf32, #tpu.memory_space<vmem>>, vector<288x256xf32>
    %cst_206 = arith.constant dense<0.000000e+00> : vector<32x256xf32>
    %286 = tpu.matmul %284, %285, %cst_206 {dimension_numbers = #tpu.dot_dimension_numbers<[1], [0], [0], [1], [0, 0, 1, 1], [], []>} : vector<32x288xf32>, vector<288x256xf32>, vector<32x256xf32> -> vector<32x256xf32>
    %287 = arith.addf %228, %286 : vector<32x256xf32>
    %c0_207 = arith.constant 0 : index
    %c0_208 = arith.constant 0 : index
    %c0_209 = arith.constant 0 : index
    %288 = vector.load %arg8[%c0_207, %c0_208, %c0_209] : memref<1x32x256xf32, #tpu.memory_space<vmem>>, vector<1x32x256xf32>
    %289 = vector.shape_cast %288 : vector<1x32x256xf32> to vector<32x256xf32>
    %290 = vector.shape_cast %287 : vector<32x256xf32> to vector<1x32x256xf32>
    tpu.vector_store %arg8[%c0_207, %c0_208, %c0_209], %290 {strides = array<i32>} : memref<1x32x256xf32, #tpu.memory_space<vmem>>, vector<1x32x256xf32>,
    return
  }
  func.func @transform_0(%arg0: i32) -> (i32, i32, i32) {
    %c0_i32 = arith.constant 0 : i32
    %c0_i32_0 = arith.constant 0 : i32
    %c0_i32_1 = arith.constant 0 : i32
    return %arg0, %c0_i32, %c0_i32_0 : i32, i32, i32
  }
  func.func @transform_1(%arg0: i32) -> (i32, i32) {
    %c0_i32 = arith.constant 0 : i32
    %c0_i32_0 = arith.constant 0 : i32
    %c0_i32_1 = arith.constant 0 : i32
    return %c0_i32, %c0_i32_0 : i32, i32
  }
  func.func @transform_2(%arg0: i32) -> (i32, i32) {
    %c0_i32 = arith.constant 0 : i32
    %c0_i32_0 = arith.constant 0 : i32
    %c0_i32_1 = arith.constant 0 : i32
    return %c0_i32, %c0_i32_0 : i32, i32
  }
  func.func @transform_3(%arg0: i32) -> (i32, i32) {
    %c0_i32 = arith.constant 0 : i32
    %c0_i32_0 = arith.constant 0 : i32
    %c0_i32_1 = arith.constant 0 : i32
    return %c0_i32, %c0_i32_0 : i32, i32
  }
  func.func @transform_4(%arg0: i32) -> (i32, i32) {
    %c0_i32 = arith.constant 0 : i32
    %c0_i32_0 = arith.constant 0 : i32
    %c0_i32_1 = arith.constant 0 : i32
    return %c0_i32, %c0_i32_0 : i32, i32
  }
  func.func @transform_5(%arg0: i32) -> (i32, i32) {
    %c0_i32 = arith.constant 0 : i32
    %c0_i32_0 = arith.constant 0 : i32
    %c0_i32_1 = arith.constant 0 : i32
    return %c0_i32, %c0_i32_0 : i32, i32
  }
  func.func @transform_6(%arg0: i32) -> (i32, i32) {
    %c0_i32 = arith.constant 0 : i32
    %c0_i32_0 = arith.constant 0 : i32
    %c0_i32_1 = arith.constant 0 : i32
    return %c0_i32, %c0_i32_0 : i32, i32
  }
  func.func @transform_7(%arg0: i32) -> (i32, i32, i32) {
    %c0_i32 = arith.constant 0 : i32
    %c0_i32_0 = arith.constant 0 : i32
    %c0_i32_1 = arith.constant 0 : i32
    return %arg0, %c0_i32, %c0_i32_0 : i32, i32, i32
  }
}

</mosaic_0001>

<llo_original>
// kernel: tpu_custom_call.1
$region0: #{tpu_custom_call.1}
  #allocation0 [shape = 'u32[]', space=smem, size = 0x4, offset = 0x4, fixed_abs, tag = 'smem constant byte address 0x4 - core index']
  #allocation1 [shape = 'u32[72,128]{1,0:T(1,128)}', space=vmem, size = 0x9000, scoped, tag = 'internal scratch']
  #allocation2 [shape = 'f32[32,290]{1,0:T(8,128)}', space=vmem, size = 0xc000, scoped, tag = 'scratch operand']
  #allocation3 [shape = 'f32[64,324]{1,0:T(8,128)}', space=vmem, size = 0x18000, scoped, tag = 'scratch operand']
  #allocation4 [shape = 'f32[32,358]{1,0:T(8,128)}', space=vmem, size = 0xc000, scoped, tag = 'scratch operand']
  #allocation5 [shape = 'f32[32,426]{1,0:T(8,128)}', space=vmem, size = 0x10000, scoped, tag = 'scratch operand']
  #allocation6 [shape = 'f32[288,256]{1,0:T(8,128)}', space=vmem, size = 0x48000, scoped, tag = 'scratch operand']
  #allocation7 [shape = 'f32[576,256]{1,0:T(8,128)}', space=vmem, size = 0x90000, scoped, tag = 'scratch operand']
  #allocation8 [shape = 'f32[576,256]{1,0:T(8,128)}', space=vmem, size = 0x90000, scoped, tag = 'scratch operand']
  %s0 = inlined_call_operand.hbm [shape: f32[2,32,256], index: 0, kind: input, shape index: {}]
  %s1 = inlined_call_operand.vmem [shape: f32[64,32], index: 1, kind: input, shape index: {}]
  %s2 = inlined_call_operand.hbm [shape: f32[64,576], index: 2, kind: input, shape index: {}]
  %s3 = inlined_call_operand.hbm [shape: f32[64,576], index: 3, kind: input, shape index: {}]
  %s4 = inlined_call_operand.vmem [shape: f32[32,288], index: 4, kind: input, shape index: {}]
  %s5 = inlined_call_operand.hbm [shape: f32[32,64], index: 5, kind: input, shape index: {}]
  %s6 = inlined_call_operand.hbm [shape: f32[32,64], index: 6, kind: input, shape index: {}]
  %s7 = inlined_call_operand.hbm [shape: f32[2,32,256], index: 7, kind: output, shape index: {}]
  %s8 = sld [smem:[#allocation0]]
  $region81: #{tpu_custom_call.1} parent=0
    _
  %s10 = ssub.s32 1, %s8
  %s11 = scalar_select 0, %s10, %s8
  $region1: #{tpu_custom_call.1} parent=0
    #allocation9 [shape = 'u8[65536]{0}', space=vmem, size = 0x10000, scoped, tag = 'input window, operand 0']
    #allocation10 [shape = 's32[2]{0}', space=sflag, size = 0x8, scoped, tag = 'scoped memory for tpu_custom_call.1']
    #allocation11 [shape = 's32[2]{0}', space=sflag, size = 0x8, scoped, tag = 'scoped memory for tpu_custom_call.1']
    #allocation12 [shape = 'u8[163840]{0}', space=vmem, size = 0x28000, scoped, tag = 'input window, operand 2, single buffered']
    #allocation13 [shape = 's32[1]{0}', space=sflag, size = 0x4, scoped, tag = 'scoped memory for tpu_custom_call.1']
    #allocation14 [shape = 'u8[163840]{0}', space=vmem, size = 0x28000, scoped, tag = 'input window, operand 3, single buffered']
    #allocation15 [shape = 'u8[16384]{0}', space=vmem, size = 0x4000, scoped, tag = 'input window, operand 5, single buffered']
    #allocation16 [shape = 's32[1]{0}', space=sflag, size = 0x4, scoped, tag = 'scoped memory for tpu_custom_call.1']
    #allocation17 [shape = 'u8[16384]{0}', space=vmem, size = 0x4000, scoped, tag = 'input window, operand 6, single buffered']
    #allocation18 [shape = 'u8[65536]{0}', space=vmem, size = 0x10000, scoped, tag = 'output window, operand 0']
    %12 = vsyncpa [#allocation10], 0
    %s13 = scalar_lea.sflag [#allocation10], 1
    %14 = vsyncpa %s13, 0
    %15 = vsyncpa [#allocation13], 0
    %16 = vsyncpa [#allocation16], 0
    %17 = vsyncpa [#allocation11], 0
    %s18 = scalar_lea.sflag [#allocation11], 1
    %19 = vsyncpa %s18, 0
    loop: start=0, step=1, limit=4
    $region2: #{tpu_custom_call.1} parent=1 // loop_pre_header
      _
    $region3: #{tpu_custom_call.1} parent=1 // loop_header
      %s21 = sphi 0, %s25
      %p22 = scmp.ge.s32.totalorder %s21, 4
      %s31 = sphi 0, %s33
      %s34 = sphi 0, %s31
      %s35 = sphi 0, %s34
      %s51 = sphi 0, %s35
      %s55 = sphi 0, %s55
      %s57 = sphi 0, %s55
      %s58 = sphi 0, %s57
      %s72 = sphi 0, %s58
      %s76 = sphi 0, %s76
      %s78 = sphi 0, %s76
      %s79 = sphi 0, %s78
      %s93 = sphi 0, %s79
      %s97 = sphi 0, %s97
      %s99 = sphi 0, %s97
      %s100 = sphi 0, %s99
      %s114 = sphi 0, %s100
      %s118 = sphi 0, %s118
      %s120 = sphi 0, %s118
      %s121 = sphi 0, %s120
      %s135 = sphi 0, %s121
      %s139 = sphi 0, %s139
      %s141 = sphi 0, %s139
      %s142 = sphi 0, %s141
      %s156 = sphi 0, %s142
      %s160 = sphi 0, %s160
      %s162 = sphi 0, %s160
      %s163 = sphi 0, %s162
      %s177 = sphi 0, %s163
      %s183 = sphi 0, %s185
      %s186 = sphi 0, %s183
      %s187 = sphi 0, %s186
      %s203 = sphi 0, %s187
    $region4: #{tpu_custom_call.1} parent=1 // loop_header_branch
      %24 = sbr.rel (%p22) target = $region8
    $region5: #{tpu_custom_call.1} parent=1 // loop_body
      %s26 = ssub.s32 %s21, 1
      %s27 = ssub.s32 %s21, 2
      %s28 = sadd.s32 %s21, 1
      %s29 = ssub.s32 %s21, %s28
      %p30 = scmp.eq.s32.totalorder %s29, 0
      %s32 = sadd.s32 %s31, 1
      %s33 = scalar_select %p30, %s31, %s32
      %p36 = pneg %p30
      %p37 = scmp.eq.s32.totalorder %s21, 1
      %p38 = por %p36, %p37
      %p39 = scmp.ne.s32.totalorder %s31, %s34
      %p40 = scmp.eq.s32.totalorder %s21, 0
      %p41 = por %p39, %p40
      %p42 = scmp.ne.s32.totalorder %s31, %s34
      %p43 = scmp.eq.s32.totalorder %s26, 1
      %p44 = por %p42, %p43
      %p45 = scmp.ne.s32.totalorder %s34, %s35
      %p46 = scmp.eq.s32.totalorder %s26, 0
      %p47 = por %p45, %p46
      %p48 = scmp.ne.s32.totalorder %s34, %s35
      %p49 = scmp.eq.s32.totalorder %s27, 1
      %p50 = por %p48, %p49
      %p52 = scmp.ne.s32.totalorder %s35, %s51
      %p53 = scmp.eq.s32.totalorder %s27, 0
      %p54 = por %p52, %p53
      %s56 = sadd.s32 %s55, 1
      %p59 = scmp.eq.s32.totalorder %s21, 1
      %p60 = scmp.ne.s32.totalorder %s55, %s57
      %p61 = scmp.eq.s32.totalorder %s21, 0
      %p62 = por %p60, %p61
      %p63 = scmp.ne.s32.totalorder %s55, %s57
      %p64 = scmp.eq.s32.totalorder %s26, 1
      %p65 = por %p63, %p64
      %p66 = scmp.ne.s32.totalorder %s57, %s58
      %p67 = scmp.eq.s32.totalorder %s26, 0
      %p68 = por %p66, %p67
      %p69 = scmp.ne.s32.totalorder %s57, %s58
      %p70 = scmp.eq.s32.totalorder %s27, 1
      %p71 = por %p69, %p70
      %p73 = scmp.ne.s32.totalorder %s58, %s72
      %p74 = scmp.eq.s32.totalorder %s27, 0
      %p75 = por %p73, %p74
      %s77 = sadd.s32 %s76, 1
      %p80 = scmp.eq.s32.totalorder %s21, 1
      %p81 = scmp.ne.s32.totalorder %s76, %s78
      %p82 = scmp.eq.s32.totalorder %s21, 0
      %p83 = por %p81, %p82
      %p84 = scmp.ne.s32.totalorder %s76, %s78
      %p85 = scmp.eq.s32.totalorder %s26, 1
      %p86 = por %p84, %p85
      %p87 = scmp.ne.s32.totalorder %s78, %s79
      %p88 = scmp.eq.s32.totalorder %s26, 0
      %p89 = por %p87, %p88
      %p90 = scmp.ne.s32.totalorder %s78, %s79
      %p91 = scmp.eq.s32.totalorder %s27, 1
      %p92 = por %p90, %p91
      %p94 = scmp.ne.s32.totalorder %s79, %s93
      %p95 = scmp.eq.s32.totalorder %s27, 0
      %p96 = por %p94, %p95
      %s98 = sadd.s32 %s97, 1
      %p101 = scmp.eq.s32.totalorder %s21, 1
      %p102 = scmp.ne.s32.totalorder %s97, %s99
      %p103 = scmp.eq.s32.totalorder %s21, 0
      %p104 = por %p102, %p103
      %p105 = scmp.ne.s32.totalorder %s97, %s99
      %p106 = scmp.eq.s32.totalorder %s26, 1
      %p107 = por %p105, %p106
      %p108 = scmp.ne.s32.totalorder %s99, %s100
      %p109 = scmp.eq.s32.totalorder %s26, 0
      %p110 = por %p108, %p109
      %p111 = scmp.ne.s32.totalorder %s99, %s100
      %p112 = scmp.eq.s32.totalorder %s27, 1
      %p113 = por %p111, %p112
      %p115 = scmp.ne.s32.totalorder %s100, %s114
      %p116 = scmp.eq.s32.totalorder %s27, 0
      %p117 = por %p115, %p116
      %s119 = sadd.s32 %s118, 1
      %p122 = scmp.eq.s32.totalorder %s21, 1
      %p123 = scmp.ne.s32.totalorder %s118, %s120
      %p124 = scmp.eq.s32.totalorder %s21, 0
      %p125 = por %p123, %p124
      %p126 = scmp.ne.s32.totalorder %s118, %s120
      %p127 = scmp.eq.s32.totalorder %s26, 1
      %p128 = por %p126, %p127
      %p129 = scmp.ne.s32.totalorder %s120, %s121
      %p130 = scmp.eq.s32.totalorder %s26, 0
      %p131 = por %p129, %p130
      %p132 = scmp.ne.s32.totalorder %s120, %s121
      %p133 = scmp.eq.s32.totalorder %s27, 1
      %p134 = por %p132, %p133
      %p136 = scmp.ne.s32.totalorder %s121, %s135
      %p137 = scmp.eq.s32.totalorder %s27, 0
      %p138 = por %p136, %p137
      %s140 = sadd.s32 %s139, 1
      %p143 = scmp.eq.s32.totalorder %s21, 1
      %p144 = scmp.ne.s32.totalorder %s139, %s141
      %p145 = scmp.eq.s32.totalorder %s21, 0
      %p146 = por %p144, %p145
      %p147 = scmp.ne.s32.totalorder %s139, %s141
      %p148 = scmp.eq.s32.totalorder %s26, 1
      %p149 = por %p147, %p148
      %p150 = scmp.ne.s32.totalorder %s141, %s142
      %p151 = scmp.eq.s32.totalorder %s26, 0
      %p152 = por %p150, %p151
      %p153 = scmp.ne.s32.totalorder %s141, %s142
      %p154 = scmp.eq.s32.totalorder %s27, 1
      %p155 = por %p153, %p154
      %p157 = scmp.ne.s32.totalorder %s142, %s156
      %p158 = scmp.eq.s32.totalorder %s27, 0
      %p159 = por %p157, %p158
      %s161 = sadd.s32 %s160, 1
      %p164 = scmp.eq.s32.totalorder %s21, 1
      %p165 = scmp.ne.s32.totalorder %s160, %s162
      %p166 = scmp.eq.s32.totalorder %s21, 0
      %p167 = por %p165, %p166
      %p168 = scmp.ne.s32.totalorder %s160, %s162
      %p169 = scmp.eq.s32.totalorder %s26, 1
      %p170 = por %p168, %p169
      %p171 = scmp.ne.s32.totalorder %s162, %s163
      %p172 = scmp.eq.s32.totalorder %s26, 0
      %p173 = por %p171, %p172
      %p174 = scmp.ne.s32.totalorder %s162, %s163
      %p175 = scmp.eq.s32.totalorder %s27, 1
      %p176 = por %p174, %p175
      %p178 = scmp.ne.s32.totalorder %s163, %s177
      %p179 = scmp.eq.s32.totalorder %s27, 0
      %p180 = por %p178, %p179
      %s181 = ssub.s32 %s21, %s28
      %p182 = scmp.eq.s32.totalorder %s181, 0
      %s184 = sadd.s32 %s183, 1
      %s185 = scalar_select %p182, %s183, %s184
      %p188 = pneg %p182
      %p189 = scmp.eq.s32.totalorder %s21, 1
      %p190 = por %p188, %p189
      %p191 = scmp.ne.s32.totalorder %s183, %s186
      %p192 = scmp.eq.s32.totalorder %s21, 0
      %p193 = por %p191, %p192
      %p194 = scmp.ne.s32.totalorder %s183, %s186
      %p195 = scmp.eq.s32.totalorder %s26, 1
      %p196 = por %p194, %p195
      %p197 = scmp.ne.s32.totalorder %s186, %s187
      %p198 = scmp.eq.s32.totalorder %s26, 0
      %p199 = por %p197, %p198
      %p200 = scmp.ne.s32.totalorder %s186, %s187
      %p201 = scmp.eq.s32.totalorder %s27, 1
      %p202 = por %p200, %p201
      %p204 = scmp.ne.s32.totalorder %s187, %s203
      %p205 = scmp.eq.s32.totalorder %s27, 0
      %p206 = por %p204, %p205
      %p207 = scmp.le.s32.totalorder 1, %s21
      %p208 = scmp.lt.s32.totalorder %s21, 3
      %p209 = pnand %p207, %p208
      %p210 = pneg %p209
      // Predicated region
      $region9: #{tpu_custom_call.1} parent=5 // pred_check
        _
      $region10: #{tpu_custom_call.1} parent=5 // pred_check_branch
        %212 = sbr.rel (%p209) target = $region12
      $region11: #{tpu_custom_call.1} parent=5 // pred_region
        %s213 = ssub.s32 %s21, 1
        // Predicated region
        $region13: #{tpu_custom_call.1} parent=11 // pred_check
          %p214 = pneg %p68
        $region14: #{tpu_custom_call.1} parent=11 // pred_check_branch
          %216 = sbr.rel (%p214) target = $region16
        $region15: #{tpu_custom_call.1} parent=11 // pred_region
          _
        $region16: #{tpu_custom_call.1} parent=11 // pred_fallthru
          _
        // Predicated region
        $region17: #{tpu_custom_call.1} parent=11 // pred_check
          %p217 = pneg %p89
        $region18: #{tpu_custom_call.1} parent=11 // pred_check_branch
          %219 = sbr.rel (%p217) target = $region20
        $region19: #{tpu_custom_call.1} parent=11 // pred_region
          %221 = vsyncadd [#allocation13], 0
          %s222 = sshll.u32 %s2, 4
          %s223 = int_to_ptr.hbm [resolvable:$true] %s222
          %s224 = sshll.u32 [#allocation12], 4
          %s225 = int_to_ptr.vmem [resolvable:$true] %s224
          %230 = dma.hbm_to_vmem [thread:$0]  %s223, 5120, %s225, [#allocation13], 640, 640, 40
        $region20: #{tpu_custom_call.1} parent=11 // pred_fallthru
          _
        // Predicated region
        $region21: #{tpu_custom_call.1} parent=11 // pred_check
          %p231 = pneg %p110
        $region22: #{tpu_custom_call.1} parent=11 // pred_check_branch
          %233 = sbr.rel (%p231) target = $region24
        $region23: #{tpu_custom_call.1} parent=11 // pred_region
          %235 = vsyncadd [#allocation13], 0
          %s236 = sshll.u32 %s3, 4
          %s237 = int_to_ptr.hbm [resolvable:$true] %s236
          %s238 = sshll.u32 [#allocation14], 4
          %s239 = int_to_ptr.vmem [resolvable:$true] %s238
          %244 = dma.hbm_to_vmem [thread:$0]  %s237, 5120, %s239, [#allocation13], 640, 640, 40
        $region24: #{tpu_custom_call.1} parent=11 // pred_fallthru
          _
        // Predicated region
        $region25: #{tpu_custom_call.1} parent=11 // pred_check
          %p245 = pneg %p131
        $region26: #{tpu_custom_call.1} parent=11 // pred_check_branch
          %247 = sbr.rel (%p245) target = $region28
        $region27: #{tpu_custom_call.1} parent=11 // pred_region
          _
        $region28: #{tpu_custom_call.1} parent=11 // pred_fallthru
          _
        // Predicated region
        $region29: #{tpu_custom_call.1} parent=11 // pred_check
          %p248 = pneg %p152
        $region30: #{tpu_custom_call.1} parent=11 // pred_check_branch
          %250 = sbr.rel (%p248) target = $region32
        $region31: #{tpu_custom_call.1} parent=11 // pred_region
          %252 = vsyncadd [#allocation16], 0
          %s253 = sshll.u32 %s5, 4
          %s254 = int_to_ptr.hbm [resolvable:$true] %s253
          %s255 = sshll.u32 [#allocation15], 4
          %s256 = int_to_ptr.vmem [resolvable:$true] %s255
          %261 = dma.hbm_to_vmem [thread:$0]  %s254, 512, %s256, [#allocation16], 128, 128, 8
        $region32: #{tpu_custom_call.1} parent=11 // pred_fallthru
          _
        // Predicated region
        $region33: #{tpu_custom_call.1} parent=11 // pred_check
          %p262 = pneg %p173
        $region34: #{tpu_custom_call.1} parent=11 // pred_check_branch
          %264 = sbr.rel (%p262) target = $region36
        $region35: #{tpu_custom_call.1} parent=11 // pred_region
          %266 = vsyncadd [#allocation16], 0
          %s267 = sshll.u32 %s6, 4
          %s268 = int_to_ptr.hbm [resolvable:$true] %s267
          %s269 = sshll.u32 [#allocation17], 4
          %s270 = int_to_ptr.vmem [resolvable:$true] %s269
          %275 = dma.hbm_to_vmem [thread:$0]  %s268, 512, %s270, [#allocation16], 128, 128, 8
        $region36: #{tpu_custom_call.1} parent=11 // pred_fallthru
          _
      $region12: #{tpu_custom_call.1} parent=5 // pred_fallthru
        _
      %p276 = scmp.lt.s32.totalorder %s21, 2
      // Predicated region
      $region37: #{tpu_custom_call.1} parent=5 // pred_check
        %p277 = pneg %p276
      $region38: #{tpu_custom_call.1} parent=5 // pred_check_branch
        %279 = sbr.rel (%p277) target = $region40
      $region39: #{tpu_custom_call.1} parent=5 // pred_region
        // Predicated region
        $region41: #{tpu_custom_call.1} parent=39 // pred_check
          %p280 = pneg %p41
        $region42: #{tpu_custom_call.1} parent=39 // pred_check_branch
          %282 = sbr.rel (%p280) target = $region44
        $region43: #{tpu_custom_call.1} parent=39 // pred_region
          %s283 = sand.u32 %s31, 1
          %s284 = scalar_lea.sflag [#allocation10], %s283
          %s285 = sand.u32 %s31, 1
          %s286 = smul.addr %s285, 64
          %s287 = scalar_lea.vmem [#allocation9], %s286
          %289 = vsyncadd %s284, 0
          %s290 = smul.addr %s21, 8
          %s291 = smul.addr %s290, 8
          %s292 = scalar_lea.hbm %s0, %s291
          %s293 = sshll.u32 %s292, 4
          %s294 = int_to_ptr.hbm [resolvable:$true] %s293
          %s295 = sshll.u32 %s287, 4
          %s296 = int_to_ptr.vmem [resolvable:$true] %s295
          %301 = dma.hbm_to_vmem [thread:$0]  %s294, 1024, %s296, %s284, 256, 256, 16
        $region44: #{tpu_custom_call.1} parent=39 // pred_fallthru
          _
      $region40: #{tpu_custom_call.1} parent=5 // pred_fallthru
        _
      %p302 = scmp.le.s32.totalorder 1, %s21
      %p303 = scmp.lt.s32.totalorder %s21, 3
      %p304 = pnand %p302, %p303
      %p305 = pneg %p304
      // Predicated region
      $region45: #{tpu_custom_call.1} parent=5 // pred_check
        _
      $region46: #{tpu_custom_call.1} parent=5 // pred_check_branch
        %307 = sbr.rel (%p304) target = $region48
      $region47: #{tpu_custom_call.1} parent=5 // pred_region
        %s308 = ssub.s32 %s21, 1
        %s309 = sand.u32 %s34, 1
        %s310 = scalar_lea.sflag [#allocation10], %s309
        %s311 = sand.u32 %s34, 1
        %s312 = smul.addr %s311, 64
        %s313 = scalar_lea.vmem [#allocation9], %s312
        // Predicated region
        $region49: #{tpu_custom_call.1} parent=47 // pred_check
          %p314 = pneg %p47
        $region50: #{tpu_custom_call.1} parent=47 // pred_check_branch
          %316 = sbr.rel (%p314) target = $region52
        $region51: #{tpu_custom_call.1} parent=47 // pred_region
          %318 = dma.done %s310, 1024
        $region52: #{tpu_custom_call.1} parent=47 // pred_fallthru
          _
        // Predicated region
        $region53: #{tpu_custom_call.1} parent=47 // pred_check
          %p319 = pneg %p89
        $region54: #{tpu_custom_call.1} parent=47 // pred_check_branch
          %321 = sbr.rel (%p319) target = $region56
        $region55: #{tpu_custom_call.1} parent=47 // pred_region
          %323 = dma.done [#allocation13], 5120
        $region56: #{tpu_custom_call.1} parent=47 // pred_fallthru
          _
        // Predicated region
        $region57: #{tpu_custom_call.1} parent=47 // pred_check
          %p324 = pneg %p110
        $region58: #{tpu_custom_call.1} parent=47 // pred_check_branch
          %326 = sbr.rel (%p324) target = $region60
        $region59: #{tpu_custom_call.1} parent=47 // pred_region
          %328 = dma.done [#allocation13], 5120
        $region60: #{tpu_custom_call.1} parent=47 // pred_fallthru
          _
        // Predicated region
        $region61: #{tpu_custom_call.1} parent=47 // pred_check
          %p329 = pneg %p152
        $region62: #{tpu_custom_call.1} parent=47 // pred_check_branch
          %331 = sbr.rel (%p329) target = $region64
        $region63: #{tpu_custom_call.1} parent=47 // pred_region
          %333 = dma.done [#allocation16], 512
        $region64: #{tpu_custom_call.1} parent=47 // pred_fallthru
          _
        // Predicated region
        $region65: #{tpu_custom_call.1} parent=47 // pred_check
          %p334 = pneg %p173
        $region66: #{tpu_custom_call.1} parent=47 // pred_check_branch
          %336 = sbr.rel (%p334) target = $region68
        $region67: #{tpu_custom_call.1} parent=47 // pred_region
          %338 = dma.done [#allocation16], 512
        $region68: #{tpu_custom_call.1} parent=47 // pred_fallthru
          _
        %s339 = sand.u32 %s34, 1
        %s340 = scalar_lea.sflag [#allocation10], %s339
        %s341 = sand.u32 %s34, 1
        %s342 = smul.addr %s341, 64
        %s343 = scalar_lea.vmem [#allocation9], %s342
        %p344 = pneg %p47
        %p345 = pneg %p44
        %p346 = pneg %p68
        %p347 = pneg %p65
        %p348 = pneg %p89
        %p349 = pneg %p86
        %p350 = pneg %p110
        %p351 = pneg %p107
        %p352 = pneg %p131
        %p353 = pneg %p128
        %p354 = pneg %p152
        %p355 = pneg %p149
        %p356 = pneg %p173
        %p357 = pneg %p170
        %p358 = pneg %p199
        %p359 = pneg %p196
        %s360 = sand.u32 %s186, 1
        %s361 = scalar_lea.sflag [#allocation11], %s360
        %s362 = sand.u32 %s186, 1
        %s363 = smul.addr %s362, 64
        %s364 = scalar_lea.vmem [#allocation18], %s363
        %v365 = vlaneseq
        %v366 = vand.u32 %v365, 127
        %v367 = vadd.s32 %v366, 128
        %vm368 = vcmp.lt.s32.totalorder %v366, 0
        %v369 = vsub.s32 0, %v366
        %v370 = vsel %vm368, %v369, %v366
        %v371 = vshrl.u32 %v370, 4
        %v372 = vand.u32 %v370, 15
        %v373 = vsub.s32 0, %v372
        %v374 = vsel %vm368, %v373, %v372
        %vm375 = vcmp.lt.s32.totalorder %v367, 0
        %v376 = vsub.s32 0, %v367
        %v377 = vsel %vm375, %v376, %v367
        %v378 = vshrl.u32 %v377, 4
        %v379 = vand.u32 %v377, 15
        %v380 = vsub.s32 0, %v379
        %v381 = vsel %vm375, %v380, %v379
        %vm382 = vcmp.ne.s32.totalorder %v374, 0
        %vm383 = vcmp.ne.s32.totalorder %v381, 0
        %vm384 = vcmp.lt.s32.totalorder %v374, 0
        %vm385 = vcmp.lt.s32.totalorder %v381, 0
        %vm386 = vmand %vm384, %vm382
        %vm387 = vmand %vm385, %vm383
        %v388 = vadd.s32 %v374, 16
        %v389 = vadd.s32 %v381, 16
        %v390 = vsel %vm386, %v388, %v374
        %v391 = vsel %vm387, %v389, %v381
        %vm392 = vcmask 138240
        %393 = vst.msk [vmem:[#allocation2] sm:$0xff] %vm392, 0.0
        %394 = vst.msk [vmem:[#allocation2 + $0x18] sm:$0xff] %vm392, 0.0
        %395 = vst.msk [vmem:[#allocation2 + $0x30] sm:$0xff] %vm392, 0.0
        %396 = vst.msk [vmem:[#allocation2 + $0x48] sm:$0xff] %vm392, 0.0
        %vm397 = vcmask 277640
        %398 = vst.msk [vmem:[#allocation2 + $0x10] sm:$0xff] %vm397, 0.0
        %399 = vst.msk [vmem:[#allocation2 + $0x28] sm:$0xff] %vm397, 0.0
        %400 = vst.msk [vmem:[#allocation2 + $0x40] sm:$0xff] %vm397, 0.0
        %401 = vst.msk [vmem:[#allocation2 + $0x58] sm:$0xff] %vm397, 0.0
        %vm402 = vcmask 277504
        %403 = vst.msk [vmem:[#allocation3] sm:$0xff] %vm402, 0.0
        %404 = vst.msk [vmem:[#allocation3 + $0x18] sm:$0xff] %vm402, 0.0
        %405 = vst.msk [vmem:[#allocation3 + $0x30] sm:$0xff] %vm402, 0.0
        %406 = vst.msk [vmem:[#allocation3 + $0x48] sm:$0xff] %vm402, 0.0
        %407 = vst.msk [vmem:[#allocation3 + $0x60] sm:$0xff] %vm402, 0.0
        %408 = vst.msk [vmem:[#allocation3 + $0x78] sm:$0xff] %vm402, 0.0
        %409 = vst.msk [vmem:[#allocation3 + $0x90] sm:$0xff] %vm402, 0.0
        %410 = vst.msk [vmem:[#allocation3 + $0xa8] sm:$0xff] %vm402, 0.0
        %vm411 = vcmask 556304
        %412 = vst.msk [vmem:[#allocation3 + $0x10] sm:$0xff] %vm411, 0.0
        %413 = vst.msk [vmem:[#allocation3 + $0x28] sm:$0xff] %vm411, 0.0
        %414 = vst.msk [vmem:[#allocation3 + $0x40] sm:$0xff] %vm411, 0.0
        %415 = vst.msk [vmem:[#allocation3 + $0x58] sm:$0xff] %vm411, 0.0
        %416 = vst.msk [vmem:[#allocation3 + $0x70] sm:$0xff] %vm411, 0.0
        %417 = vst.msk [vmem:[#allocation3 + $0x88] sm:$0xff] %vm411, 0.0
        %418 = vst.msk [vmem:[#allocation3 + $0xa0] sm:$0xff] %vm411, 0.0
        %419 = vst.msk [vmem:[#allocation3 + $0xb8] sm:$0xff] %vm411, 0.0
        %vm420 = vcmask 416768
        %421 = vst.msk [vmem:[#allocation4] sm:$0xff] %vm420, 0.0
        %422 = vst.msk [vmem:[#allocation4 + $0x18] sm:$0xff] %vm420, 0.0
        %423 = vst.msk [vmem:[#allocation4 + $0x30] sm:$0xff] %vm420, 0.0
        %424 = vst.msk [vmem:[#allocation4 + $0x48] sm:$0xff] %vm420, 0.0
        %vm425 = vcmask 834968
        %426 = vst.msk [vmem:[#allocation4 + $0x10] sm:$0xff] %vm425, 0.0
        %427 = vst.msk [vmem:[#allocation4 + $0x28] sm:$0xff] %vm425, 0.0
        %428 = vst.msk [vmem:[#allocation4 + $0x40] sm:$0xff] %vm425, 0.0
        %429 = vst.msk [vmem:[#allocation4 + $0x58] sm:$0xff] %vm425, 0.0
        %vm430 = vcmask 695296
        %431 = vst.msk [vmem:[#allocation5] sm:$0xff] %vm430, 0.0
        %432 = vst.msk [vmem:[#allocation5 + $0x20] sm:$0xff] %vm430, 0.0
        %433 = vst.msk [vmem:[#allocation5 + $0x40] sm:$0xff] %vm430, 0.0
        %434 = vst.msk [vmem:[#allocation5 + $0x60] sm:$0xff] %vm430, 0.0
        %vm435 = vcmask 1048232
        %436 = vst.msk [vmem:[#allocation5 + $0x10] sm:$0xff] %vm435, 0.0
        %vm437 = vcmask 343040
        %438 = vst.msk [vmem:[#allocation5 + $0x18] sm:$0xff] %vm437, 0.0
        %439 = vst.msk [vmem:[#allocation5 + $0x30] sm:$0xff] %vm435, 0.0
        %440 = vst.msk [vmem:[#allocation5 + $0x38] sm:$0xff] %vm437, 0.0
        %441 = vst.msk [vmem:[#allocation5 + $0x50] sm:$0xff] %vm435, 0.0
        %442 = vst.msk [vmem:[#allocation5 + $0x58] sm:$0xff] %vm437, 0.0
        %443 = vst.msk [vmem:[#allocation5 + $0x70] sm:$0xff] %vm435, 0.0
        %444 = vst.msk [vmem:[#allocation5 + $0x78] sm:$0xff] %vm437, 0.0
        %v445 = vld [vmem:[%s313] sm:$0xff]
        %v446 = vld [vmem:[%s313 + $0x8] sm:$0xff]
        %v447 = vld [vmem:[%s313 + $0x10] sm:$0xff]
        %v448 = vld [vmem:[%s313 + $0x18] sm:$0xff]
        %v449 = vld [vmem:[%s313 + $0x20] sm:$0xff]
        %v450 = vld [vmem:[%s313 + $0x28] sm:$0xff]
        %v451 = vld [vmem:[%s313 + $0x30] sm:$0xff]
        %v452 = vld [vmem:[%s313 + $0x38] sm:$0xff]
        %v453 = vld [vmem:[%s1] sm:$0xff]
        %v454 = vld [vmem:[%s1 + $0x8] sm:$0xff]
        %v455 = vld [vmem:[%s1 + $0x10] sm:$0xff]
        %v456 = vld [vmem:[%s1 + $0x18] sm:$0xff]
        %v457 = vld [vmem:[%s1 + $0x20] sm:$0xff]
        %v458 = vld [vmem:[%s1 + $0x28] sm:$0xff]
        %v459 = vld [vmem:[%s1 + $0x30] sm:$0xff]
        %v460 = vld [vmem:[%s1 + $0x38] sm:$0xff]
        %vm461 = vcmask 261120
        %v463 = vsel %vm461, %v453, 0
        %v466 = vsel %vm461, %v454, 0
        %v469 = vsel %vm461, %v455, 0
        %v472 = vsel %vm461, %v456, 0
        %v475 = vsel %vm461, %v457, 0
        %v478 = vsel %vm461, %v458, 0
        %v481 = vsel %vm461, %v459, 0
        %v484 = vsel %vm461, %v460, 0
        %486 = vmatpush.msra.mxu0 0.0
        %487 = vmatpush.msra.mxu0 0.0
        %488 = vmatpush.msra.mxu0 0.0
        %489 = vmatpush.msra.mxu0 0.0
        %490 = vmatpush.msra.mxu0 0.0
        %491 = vmatpush.msra.mxu0 0.0
        %492 = vmatpush.msra.mxu0 0.0
        %493 = vmatpush.msra.mxu0 0.0
        %494 = vmatpush.msra.mxu0 0.0
        %495 = vmatpush.msra.mxu0 0.0
        %496 = vmatpush.msra.mxu0 0.0
        %497 = vmatpush.msra.mxu0 0.0
        %498 = vmatpush.msra.mxu0 %v451
        %499 = vmatpush.msra.mxu0 %v449
        %500 = vmatpush.msra.mxu0 %v447
        %501 = vmatpush.msra.mxu0 %v445
        %502 = vmatmul.f32.gmra.mxu0 %v463
        %v503 = vpop.f32.mrf.mxu0
        %v504 = vadd.f32 0.0, %v503
        %505 = vmatmul.f32.gmra.mxu0 %v466
        %v506 = vpop.f32.mrf.mxu0
        %v507 = vadd.f32 0.0, %v506
        %508 = vmatmul.f32.gmra.mxu0 %v469
        %v509 = vpop.f32.mrf.mxu0
        %v510 = vadd.f32 0.0, %v509
        %511 = vmatmul.f32.gmra.mxu0 %v472
        %v512 = vpop.f32.mrf.mxu0
        %v513 = vadd.f32 0.0, %v512
        %514 = vmatmul.f32.gmra.mxu0 %v475
        %v515 = vpop.f32.mrf.mxu0
        %v516 = vadd.f32 0.0, %v515
        %517 = vmatmul.f32.gmra.mxu0 %v478
        %v518 = vpop.f32.mrf.mxu0
        %v519 = vadd.f32 0.0, %v518
        %520 = vmatmul.f32.gmra.mxu0 %v481
        %v521 = vpop.f32.mrf.mxu0
        %v522 = vadd.f32 0.0, %v521
        %523 = vmatmul.f32.gmra.mxu0 %v484
        %v524 = vpop.f32.mrf.mxu0
        %v525 = vadd.f32 0.0, %v524
        %526 = vdwg.mxu0
        %527 = vmatpush.msra.mxu0 0.0
        %528 = vmatpush.msra.mxu0 0.0
        %529 = vmatpush.msra.mxu0 0.0
        %530 = vmatpush.msra.mxu0 0.0
        %531 = vmatpush.msra.mxu0 0.0
        %532 = vmatpush.msra.mxu0 0.0
        %533 = vmatpush.msra.mxu0 0.0
        %534 = vmatpush.msra.mxu0 0.0
        %535 = vmatpush.msra.mxu0 0.0
        %536 = vmatpush.msra.mxu0 0.0
        %537 = vmatpush.msra.mxu0 0.0
        %538 = vmatpush.msra.mxu0 0.0
        %539 = vmatpush.msra.mxu0 %v452
        %540 = vmatpush.msra.mxu0 %v450
        %541 = vmatpush.msra.mxu0 %v448
        %542 = vmatpush.msra.mxu0 %v446
        %543 = vmatmul.f32.gmra.mxu0 %v463
        %v544 = vpop.f32.mrf.mxu0
        %v545 = vadd.f32 0.0, %v544
        %546 = vmatmul.f32.gmra.mxu0 %v466
        %v547 = vpop.f32.mrf.mxu0
        %v548 = vadd.f32 0.0, %v547
        %549 = vmatmul.f32.gmra.mxu0 %v469
        %v550 = vpop.f32.mrf.mxu0
        %v551 = vadd.f32 0.0, %v550
        %552 = vmatmul.f32.gmra.mxu0 %v472
        %v553 = vpop.f32.mrf.mxu0
        %v554 = vadd.f32 0.0, %v553
        %555 = vmatmul.f32.gmra.mxu0 %v475
        %v556 = vpop.f32.mrf.mxu0
        %v557 = vadd.f32 0.0, %v556
        %558 = vmatmul.f32.gmra.mxu0 %v478
        %v559 = vpop.f32.mrf.mxu0
        %v560 = vadd.f32 0.0, %v559
        %561 = vmatmul.f32.gmra.mxu0 %v481
        %v562 = vpop.f32.mrf.mxu0
        %v563 = vadd.f32 0.0, %v562
        %564 = vmatmul.f32.gmra.mxu0 %v484
        %v565 = vpop.f32.mrf.mxu0
        %v566 = vadd.f32 0.0, %v565
        %567 = vdwg.mxu0
        %584 = vrot.lane.b32.xlu0 %v504, 34
        %v585 = vpop.permute.xlu0 %584
        %586 = vrot.lane.b32.xlu0 %v545, 34
        %v587 = vpop.permute.xlu0 %586
        %588 = vrot.lane.b32.xlu0 %v507, 34
        %v589 = vpop.permute.xlu0 %588
        %590 = vrot.lane.b32.xlu0 %v548, 34
        %v591 = vpop.permute.xlu0 %590
        %592 = vrot.lane.b32.xlu0 %v510, 34
        %v593 = vpop.permute.xlu0 %592
        %594 = vrot.lane.b32.xlu0 %v551, 34
        %v595 = vpop.permute.xlu0 %594
        %596 = vrot.lane.b32.xlu0 %v513, 34
        %v597 = vpop.permute.xlu0 %596
        %598 = vrot.lane.b32.xlu0 %v554, 34
        %v599 = vpop.permute.xlu0 %598
        %600 = vrot.lane.b32.xlu0 %v516, 34
        %v601 = vpop.permute.xlu0 %600
        %602 = vrot.lane.b32.xlu0 %v557, 34
        %v603 = vpop.permute.xlu0 %602
        %604 = vrot.lane.b32.xlu0 %v519, 34
        %v605 = vpop.permute.xlu0 %604
        %606 = vrot.lane.b32.xlu0 %v560, 34
        %v607 = vpop.permute.xlu0 %606
        %608 = vrot.lane.b32.xlu0 %v522, 34
        %v609 = vpop.permute.xlu0 %608
        %610 = vrot.lane.b32.xlu0 %v563, 34
        %v611 = vpop.permute.xlu0 %610
        %612 = vrot.lane.b32.xlu0 %v525, 34
        %v613 = vpop.permute.xlu0 %612
        %614 = vrot.lane.b32.xlu0 %v566, 34
        %v615 = vpop.permute.xlu0 %614
        %v616 = vsel %vm402, %v585, %v587
        %v617 = vsel %vm402, %v589, %v591
        %v618 = vsel %vm402, %v593, %v595
        %v619 = vsel %vm402, %v597, %v599
        %v620 = vsel %vm402, %v601, %v603
        %v621 = vsel %vm402, %v605, %v607
        %v622 = vsel %vm402, %v609, %v611
        %v623 = vsel %vm402, %v613, %v615
        %vm648 = vcmask 1047824
        %649 = vst.msk [vmem:[#allocation3] sm:$0xff] %vm648, %v585
        %650 = vst [vmem:[#allocation3 + $0x8] sm:$0xff] %v616
        %651 = vst.msk [vmem:[#allocation3 + $0x10] sm:$0xff] %vm402, %v587
        %652 = vst.msk [vmem:[#allocation3 + $0x18] sm:$0xff] %vm648, %v589
        %653 = vst [vmem:[#allocation3 + $0x20] sm:$0xff] %v617
        %654 = vst.msk [vmem:[#allocation3 + $0x28] sm:$0xff] %vm402, %v591
        %655 = vst.msk [vmem:[#allocation3 + $0x30] sm:$0xff] %vm648, %v593
        %656 = vst [vmem:[#allocation3 + $0x38] sm:$0xff] %v618
        %657 = vst.msk [vmem:[#allocation3 + $0x40] sm:$0xff] %vm402, %v595
        %658 = vst.msk [vmem:[#allocation3 + $0x48] sm:$0xff] %vm648, %v597
        %659 = vst [vmem:[#allocation3 + $0x50] sm:$0xff] %v619
        %660 = vst.msk [vmem:[#allocation3 + $0x58] sm:$0xff] %vm402, %v599
        %661 = vst.msk [vmem:[#allocation3 + $0x60] sm:$0xff] %vm648, %v601
        %662 = vst [vmem:[#allocation3 + $0x68] sm:$0xff] %v620
        %663 = vst.msk [vmem:[#allocation3 + $0x70] sm:$0xff] %vm402, %v603
        %664 = vst.msk [vmem:[#allocation3 + $0x78] sm:$0xff] %vm648, %v605
        %665 = vst [vmem:[#allocation3 + $0x80] sm:$0xff] %v621
        %666 = vst.msk [vmem:[#allocation3 + $0x88] sm:$0xff] %vm402, %v607
        %667 = vst.msk [vmem:[#allocation3 + $0x90] sm:$0xff] %vm648, %v609
        %668 = vst [vmem:[#allocation3 + $0x98] sm:$0xff] %v622
        %669 = vst.msk [vmem:[#allocation3 + $0xa0] sm:$0xff] %vm402, %v611
        %670 = vst.msk [vmem:[#allocation3 + $0xa8] sm:$0xff] %vm648, %v613
        %671 = vst [vmem:[#allocation3 + $0xb0] sm:$0xff] %v623
        %672 = vst.msk [vmem:[#allocation3 + $0xb8] sm:$0xff] %vm402, %v615
        %v673 = vld [vmem:[#allocation3] sm:$0xff]
        %v674 = vld [vmem:[#allocation3 + $0x8] sm:$0xff]
        %v675 = vld [vmem:[#allocation3 + $0x18] sm:$0xff]
        %v676 = vld [vmem:[#allocation3 + $0x20] sm:$0xff]
        %v677 = vld [vmem:[#allocation3 + $0x30] sm:$0xff]
        %v678 = vld [vmem:[#allocation3 + $0x38] sm:$0xff]
        %v679 = vld [vmem:[#allocation3 + $0x48] sm:$0xff]
        %v680 = vld [vmem:[#allocation3 + $0x50] sm:$0xff]
        %v681 = vld [vmem:[#allocation3 + $0x60] sm:$0xff]
        %v682 = vld [vmem:[#allocation3 + $0x68] sm:$0xff]
        %v683 = vld [vmem:[#allocation3 + $0x78] sm:$0xff]
        %v684 = vld [vmem:[#allocation3 + $0x80] sm:$0xff]
        %v685 = vld [vmem:[#allocation3 + $0x90] sm:$0xff]
        %v686 = vld [vmem:[#allocation3 + $0x98] sm:$0xff]
        %v687 = vld [vmem:[#allocation3 + $0xa8] sm:$0xff]
        %v688 = vld [vmem:[#allocation3 + $0xb0] sm:$0xff]
        %vm689 = vcmp.ge.s32.totalorder %v390, 2
        %vm690 = vcmp.ge.s32.totalorder %v391, 2
        %v691 = vsel %vm689, 1, 0
        %v692 = vsel %vm690, 1, 0
        %vm693 = vcmp.eq.s32.totalorder %v691, 1
        %vm694 = vcmp.eq.s32.totalorder %v692, 1
        %v695 = vsel %vm693, %v673, 0.0
        %v696 = vsel %vm694, %v674, 0.0
        %v697 = vsel %vm693, %v675, 0.0
        %v698 = vsel %vm694, %v676, 0.0
        %v699 = vsel %vm693, %v677, 0.0
        %v700 = vsel %vm694, %v678, 0.0
        %v701 = vsel %vm693, %v679, 0.0
        %v702 = vsel %vm694, %v680, 0.0
        %v703 = vsel %vm693, %v681, 0.0
        %v704 = vsel %vm694, %v682, 0.0
        %v705 = vsel %vm693, %v683, 0.0
        %v706 = vsel %vm694, %v684, 0.0
        %v707 = vsel %vm693, %v685, 0.0
        %v708 = vsel %vm694, %v686, 0.0
        %v709 = vsel %vm693, %v687, 0.0
        %v710 = vsel %vm694, %v688, 0.0
        %711 = vst [vmem:[#allocation7] sm:$0xff] %v695
        %712 = vst [vmem:[#allocation7 + $0x8] sm:$0xff] %v696
        %713 = vst [vmem:[#allocation7 + $0x10] sm:$0xff] %v697
        %714 = vst [vmem:[#allocation7 + $0x18] sm:$0xff] %v698
        %715 = vst [vmem:[#allocation7 + $0x20] sm:$0xff] %v699
        %716 = vst [vmem:[#allocation7 + $0x28] sm:$0xff] %v700
        %717 = vst [vmem:[#allocation7 + $0x30] sm:$0xff] %v701
        %718 = vst [vmem:[#allocation7 + $0x38] sm:$0xff] %v702
        %719 = vst [vmem:[#allocation7 + $0x40] sm:$0xff] %v703
        %720 = vst [vmem:[#allocation7 + $0x48] sm:$0xff] %v704
        %721 = vst [vmem:[#allocation7 + $0x50] sm:$0xff] %v705
        %722 = vst [vmem:[#allocation7 + $0x58] sm:$0xff] %v706
        %723 = vst [vmem:[#allocation7 + $0x60] sm:$0xff] %v707
        %724 = vst [vmem:[#allocation7 + $0x68] sm:$0xff] %v708
        %725 = vst [vmem:[#allocation7 + $0x70] sm:$0xff] %v709
        %726 = vst [vmem:[#allocation7 + $0x78] sm:$0xff] %v710
        %v727 = vld [vmem:[#allocation3] sm:$0xff]
        %v728 = vld [vmem:[#allocation3 + $0x8] sm:$0xff]
        %v729 = vld [vmem:[#allocation3 + $0x10] sm:$0xff]
        %v730 = vld [vmem:[#allocation3 + $0x18] sm:$0xff]
        %v731 = vld [vmem:[#allocation3 + $0x20] sm:$0xff]
        %v732 = vld [vmem:[#allocation3 + $0x28] sm:$0xff]
        %v733 = vld [vmem:[#allocation3 + $0x30] sm:$0xff]
        %v734 = vld [vmem:[#allocation3 + $0x38] sm:$0xff]
        %v735 = vld [vmem:[#allocation3 + $0x40] sm:$0xff]
        %v736 = vld [vmem:[#allocation3 + $0x48] sm:$0xff]
        %v737 = vld [vmem:[#allocation3 + $0x50] sm:$0xff]
        %v738 = vld [vmem:[#allocation3 + $0x58] sm:$0xff]
        %v739 = vld [vmem:[#allocation3 + $0x60] sm:$0xff]
        %v740 = vld [vmem:[#allocation3 + $0x68] sm:$0xff]
        %v741 = vld [vmem:[#allocation3 + $0x70] sm:$0xff]
        %v742 = vld [vmem:[#allocation3 + $0x78] sm:$0xff]
        %v743 = vld [vmem:[#allocation3 + $0x80] sm:$0xff]
        %v744 = vld [vmem:[#allocation3 + $0x88] sm:$0xff]
        %v745 = vld [vmem:[#allocation3 + $0x90] sm:$0xff]
        %v746 = vld [vmem:[#allocation3 + $0x98] sm:$0xff]
        %v747 = vld [vmem:[#allocation3 + $0xa0] sm:$0xff]
        %v748 = vld [vmem:[#allocation3 + $0xa8] sm:$0xff]
        %v749 = vld [vmem:[#allocation3 + $0xb0] sm:$0xff]
        %v750 = vld [vmem:[#allocation3 + $0xb8] sm:$0xff]
        %775 = vrot.lane.b32.xlu0 %v727, 126
        %v776 = vpop.permute.xlu0 %775
        %777 = vrot.lane.b32.xlu0 %v728, 126
        %v778 = vpop.permute.xlu0 %777
        %779 = vrot.lane.b32.xlu0 %v729, 126
        %v780 = vpop.permute.xlu0 %779
        %781 = vrot.lane.b32.xlu0 %v730, 126
        %v782 = vpop.permute.xlu0 %781
        %783 = vrot.lane.b32.xlu0 %v731, 126
        %v784 = vpop.permute.xlu0 %783
        %785 = vrot.lane.b32.xlu0 %v732, 126
        %v786 = vpop.permute.xlu0 %785
        %787 = vrot.lane.b32.xlu0 %v733, 126
        %v788 = vpop.permute.xlu0 %787
        %789 = vrot.lane.b32.xlu0 %v734, 126
        %v790 = vpop.permute.xlu0 %789
        %791 = vrot.lane.b32.xlu0 %v735, 126
        %v792 = vpop.permute.xlu0 %791
        %793 = vrot.lane.b32.xlu0 %v736, 126
        %v794 = vpop.permute.xlu0 %793
        %795 = vrot.lane.b32.xlu0 %v737, 126
        %v796 = vpop.permute.xlu0 %795
        %797 = vrot.lane.b32.xlu0 %v738, 126
        %v798 = vpop.permute.xlu0 %797
        %799 = vrot.lane.b32.xlu0 %v739, 126
        %v800 = vpop.permute.xlu0 %799
        %801 = vrot.lane.b32.xlu0 %v740, 126
        %v802 = vpop.permute.xlu0 %801
        %803 = vrot.lane.b32.xlu0 %v741, 126
        %v804 = vpop.permute.xlu0 %803
        %805 = vrot.lane.b32.xlu0 %v742, 126
        %v806 = vpop.permute.xlu0 %805
        %807 = vrot.lane.b32.xlu0 %v743, 126
        %v808 = vpop.permute.xlu0 %807
        %809 = vrot.lane.b32.xlu0 %v744, 126
        %v810 = vpop.permute.xlu0 %809
        %811 = vrot.lane.b32.xlu0 %v745, 126
        %v812 = vpop.permute.xlu0 %811
        %813 = vrot.lane.b32.xlu0 %v746, 126
        %v814 = vpop.permute.xlu0 %813
        %815 = vrot.lane.b32.xlu0 %v747, 126
        %v816 = vpop.permute.xlu0 %815
        %817 = vrot.lane.b32.xlu0 %v748, 126
        %v818 = vpop.permute.xlu0 %817
        %819 = vrot.lane.b32.xlu0 %v749, 126
        %v820 = vpop.permute.xlu0 %819
        %821 = vrot.lane.b32.xlu0 %v750, 126
        %v822 = vpop.permute.xlu0 %821
        %vm823 = vcmask 1031168
        %v824 = vsel %vm823, %v776, %v778
        %v825 = vsel %vm823, %v778, %v780
        %v826 = vsel %vm823, %v782, %v784
        %v827 = vsel %vm823, %v784, %v786
        %v828 = vsel %vm823, %v788, %v790
        %v829 = vsel %vm823, %v790, %v792
        %v830 = vsel %vm823, %v794, %v796
        %v831 = vsel %vm823, %v796, %v798
        %v832 = vsel %vm823, %v800, %v802
        %v833 = vsel %vm823, %v802, %v804
        %v834 = vsel %vm823, %v806, %v808
        %v835 = vsel %vm823, %v808, %v810
        %v836 = vsel %vm823, %v812, %v814
        %v837 = vsel %vm823, %v814, %v816
        %v838 = vsel %vm823, %v818, %v820
        %v839 = vsel %vm823, %v820, %v822
        %856 = vst [vmem:[#allocation7 + $0x80] sm:$0xff] %v824
        %857 = vst [vmem:[#allocation7 + $0x88] sm:$0xff] %v825
        %858 = vst [vmem:[#allocation7 + $0x90] sm:$0xff] %v826
        %859 = vst [vmem:[#allocation7 + $0x98] sm:$0xff] %v827
        %860 = vst [vmem:[#allocation7 + $0xa0] sm:$0xff] %v828
        %861 = vst [vmem:[#allocation7 + $0xa8] sm:$0xff] %v829
        %862 = vst [vmem:[#allocation7 + $0xb0] sm:$0xff] %v830
        %863 = vst [vmem:[#allocation7 + $0xb8] sm:$0xff] %v831
        %864 = vst [vmem:[#allocation7 + $0xc0] sm:$0xff] %v832
        %865 = vst [vmem:[#allocation7 + $0xc8] sm:$0xff] %v833
        %866 = vst [vmem:[#allocation7 + $0xd0] sm:$0xff] %v834
        %867 = vst [vmem:[#allocation7 + $0xd8] sm:$0xff] %v835
        %868 = vst [vmem:[#allocation7 + $0xe0] sm:$0xff] %v836
        %869 = vst [vmem:[#allocation7 + $0xe8] sm:$0xff] %v837
        %870 = vst [vmem:[#allocation7 + $0xf0] sm:$0xff] %v838
        %871 = vst [vmem:[#allocation7 + $0xf8] sm:$0xff] %v839
        %v872 = vld [vmem:[#allocation3] sm:$0xff]
        %v873 = vld [vmem:[#allocation3 + $0x8] sm:$0xff]
        %v874 = vld [vmem:[#allocation3 + $0x10] sm:$0xff]
        %v875 = vld [vmem:[#allocation3 + $0x18] sm:$0xff]
        %v876 = vld [vmem:[#allocation3 + $0x20] sm:$0xff]
        %v877 = vld [vmem:[#allocation3 + $0x28] sm:$0xff]
        %v878 = vld [vmem:[#allocation3 + $0x30] sm:$0xff]
        %v879 = vld [vmem:[#allocation3 + $0x38] sm:$0xff]
        %v880 = vld [vmem:[#allocation3 + $0x40] sm:$0xff]
        %v881 = vld [vmem:[#allocation3 + $0x48] sm:$0xff]
        %v882 = vld [vmem:[#allocation3 + $0x50] sm:$0xff]
        %v883 = vld [vmem:[#allocation3 + $0x58] sm:$0xff]
        %v884 = vld [vmem:[#allocation3 + $0x60] sm:$0xff]
        %v885 = vld [vmem:[#allocation3 + $0x68] sm:$0xff]
        %v886 = vld [vmem:[#allocation3 + $0x70] sm:$0xff]
        %v887 = vld [vmem:[#allocation3 + $0x78] sm:$0xff]
        %v888 = vld [vmem:[#allocation3 + $0x80] sm:$0xff]
        %v889 = vld [vmem:[#allocation3 + $0x88] sm:$0xff]
        %v890 = vld [vmem:[#allocation3 + $0x90] sm:$0xff]
        %v891 = vld [vmem:[#allocation3 + $0x98] sm:$0xff]
        %v892 = vld [vmem:[#allocation3 + $0xa0] sm:$0xff]
        %v893 = vld [vmem:[#allocation3 + $0xa8] sm:$0xff]
        %v894 = vld [vmem:[#allocation3 + $0xb0] sm:$0xff]
        %v895 = vld [vmem:[#allocation3 + $0xb8] sm:$0xff]
        %vm896 = vcmp.lt.s32.totalorder %v390, 14
        %vm897 = vcmp.lt.s32.totalorder %v391, 14
        %v898 = vsel %vm896, 1, 0
        %v899 = vsel %vm897, 1, 0
        %vm900 = vcmp.eq.s32.totalorder %v898, 1
        %vm901 = vcmp.eq.s32.totalorder %v899, 1
        %926 = vrot.lane.b32.xlu0 %v872, 124
        %v927 = vpop.permute.xlu0 %926
        %928 = vrot.lane.b32.xlu0 %v873, 124
        %v929 = vpop.permute.xlu0 %928
        %930 = vrot.lane.b32.xlu0 %v874, 124
        %v931 = vpop.permute.xlu0 %930
        %932 = vrot.lane.b32.xlu0 %v875, 124
        %v933 = vpop.permute.xlu0 %932
        %934 = vrot.lane.b32.xlu0 %v876, 124
        %v935 = vpop.permute.xlu0 %934
        %936 = vrot.lane.b32.xlu0 %v877, 124
        %v937 = vpop.permute.xlu0 %936
        %938 = vrot.lane.b32.xlu0 %v878, 124
        %v939 = vpop.permute.xlu0 %938
        %940 = vrot.lane.b32.xlu0 %v879, 124
        %v941 = vpop.permute.xlu0 %940
        %942 = vrot.lane.b32.xlu0 %v880, 124
        %v943 = vpop.permute.xlu0 %942
        %944 = vrot.lane.b32.xlu0 %v881, 124
        %v945 = vpop.permute.xlu0 %944
        %946 = vrot.lane.b32.xlu0 %v882, 124
        %v947 = vpop.permute.xlu0 %946
        %948 = vrot.lane.b32.xlu0 %v883, 124
        %v949 = vpop.permute.xlu0 %948
        %950 = vrot.lane.b32.xlu0 %v884, 124
        %v951 = vpop.permute.xlu0 %950
        %952 = vrot.lane.b32.xlu0 %v885, 124
        %v953 = vpop.permute.xlu0 %952
        %954 = vrot.lane.b32.xlu0 %v886, 124
        %v955 = vpop.permute.xlu0 %954
        %956 = vrot.lane.b32.xlu0 %v887, 124
        %v957 = vpop.permute.xlu0 %956
        %958 = vrot.lane.b32.xlu0 %v888, 124
        %v959 = vpop.permute.xlu0 %958
        %960 = vrot.lane.b32.xlu0 %v889, 124
        %v961 = vpop.permute.xlu0 %960
        %962 = vrot.lane.b32.xlu0 %v890, 124
        %v963 = vpop.permute.xlu0 %962
        %964 = vrot.lane.b32.xlu0 %v891, 124
        %v965 = vpop.permute.xlu0 %964
        %966 = vrot.lane.b32.xlu0 %v892, 124
        %v967 = vpop.permute.xlu0 %966
        %968 = vrot.lane.b32.xlu0 %v893, 124
        %v969 = vpop.permute.xlu0 %968
        %970 = vrot.lane.b32.xlu0 %v894, 124
        %v971 = vpop.permute.xlu0 %970
        %972 = vrot.lane.b32.xlu0 %v895, 124
        %v973 = vpop.permute.xlu0 %972
        %vm974 = vcmask 1014784
        %v975 = vsel %vm974, %v927, %v929
        %v976 = vsel %vm974, %v929, %v931
        %v977 = vsel %vm974, %v933, %v935
        %v978 = vsel %vm974, %v935, %v937
        %v979 = vsel %vm974, %v939, %v941
        %v980 = vsel %vm974, %v941, %v943
        %v981 = vsel %vm974, %v945, %v947
        %v982 = vsel %vm974, %v947, %v949
        %v983 = vsel %vm974, %v951, %v953
        %v984 = vsel %vm974, %v953, %v955
        %v985 = vsel %vm974, %v957, %v959
        %v986 = vsel %vm974, %v959, %v961
        %v987 = vsel %vm974, %v963, %v965
        %v988 = vsel %vm974, %v965, %v967
        %v989 = vsel %vm974, %v969, %v971
        %v990 = vsel %vm974, %v971, %v973
        %v1007 = vsel %vm900, %v975, 0.0
        %v1008 = vsel %vm901, %v976, 0.0
        %v1009 = vsel %vm900, %v977, 0.0
        %v1010 = vsel %vm901, %v978, 0.0
        %v1011 = vsel %vm900, %v979, 0.0
        %v1012 = vsel %vm901, %v980, 0.0
        %v1013 = vsel %vm900, %v981, 0.0
        %v1014 = vsel %vm901, %v982, 0.0
        %v1015 = vsel %vm900, %v983, 0.0
        %v1016 = vsel %vm901, %v984, 0.0
        %v1017 = vsel %vm900, %v985, 0.0
        %v1018 = vsel %vm901, %v986, 0.0
        %v1019 = vsel %vm900, %v987, 0.0
        %v1020 = vsel %vm901, %v988, 0.0
        %v1021 = vsel %vm900, %v989, 0.0
        %v1022 = vsel %vm901, %v990, 0.0
        %1023 = vst [vmem:[#allocation7 + $0x100] sm:$0xff] %v1007
        %1024 = vst [vmem:[#allocation7 + $0x108] sm:$0xff] %v1008
        %1025 = vst [vmem:[#allocation7 + $0x110] sm:$0xff] %v1009
        %1026 = vst [vmem:[#allocation7 + $0x118] sm:$0xff] %v1010
        %1027 = vst [vmem:[#allocation7 + $0x120] sm:$0xff] %v1011
        %1028 = vst [vmem:[#allocation7 + $0x128] sm:$0xff] %v1012
        %1029 = vst [vmem:[#allocation7 + $0x130] sm:$0xff] %v1013
        %1030 = vst [vmem:[#allocation7 + $0x138] sm:$0xff] %v1014
        %1031 = vst [vmem:[#allocation7 + $0x140] sm:$0xff] %v1015
        %1032 = vst [vmem:[#allocation7 + $0x148] sm:$0xff] %v1016
        %1033 = vst [vmem:[#allocation7 + $0x150] sm:$0xff] %v1017
        %1034 = vst [vmem:[#allocation7 + $0x158] sm:$0xff] %v1018
        %1035 = vst [vmem:[#allocation7 + $0x160] sm:$0xff] %v1019
        %1036 = vst [vmem:[#allocation7 + $0x168] sm:$0xff] %v1020
        %1037 = vst [vmem:[#allocation7 + $0x170] sm:$0xff] %v1021
        %1038 = vst [vmem:[#allocation7 + $0x178] sm:$0xff] %v1022
        %v1039 = vld [vmem:[#allocation3] sm:$0xff]
        %v1040 = vld [vmem:[#allocation3 + $0x8] sm:$0xff]
        %v1041 = vld [vmem:[#allocation3 + $0x10] sm:$0xff]
        %v1042 = vld [vmem:[#allocation3 + $0x18] sm:$0xff]
        %v1043 = vld [vmem:[#allocation3 + $0x20] sm:$0xff]
        %v1044 = vld [vmem:[#allocation3 + $0x28] sm:$0xff]
        %v1045 = vld [vmem:[#allocation3 + $0x30] sm:$0xff]
        %v1046 = vld [vmem:[#allocation3 + $0x38] sm:$0xff]
        %v1047 = vld [vmem:[#allocation3 + $0x40] sm:$0xff]
        %v1048 = vld [vmem:[#allocation3 + $0x48] sm:$0xff]
        %v1049 = vld [vmem:[#allocation3 + $0x50] sm:$0xff]
        %v1050 = vld [vmem:[#allocation3 + $0x58] sm:$0xff]
        %v1051 = vld [vmem:[#allocation3 + $0x60] sm:$0xff]
        %v1052 = vld [vmem:[#allocation3 + $0x68] sm:$0xff]
        %v1053 = vld [vmem:[#allocation3 + $0x70] sm:$0xff]
        %v1054 = vld [vmem:[#allocation3 + $0x78] sm:$0xff]
        %v1055 = vld [vmem:[#allocation3 + $0x80] sm:$0xff]
        %v1056 = vld [vmem:[#allocation3 + $0x88] sm:$0xff]
        %v1057 = vld [vmem:[#allocation3 + $0x90] sm:$0xff]
        %v1058 = vld [vmem:[#allocation3 + $0x98] sm:$0xff]
        %v1059 = vld [vmem:[#allocation3 + $0xa0] sm:$0xff]
        %v1060 = vld [vmem:[#allocation3 + $0xa8] sm:$0xff]
        %v1061 = vld [vmem:[#allocation3 + $0xb0] sm:$0xff]
        %v1062 = vld [vmem:[#allocation3 + $0xb8] sm:$0xff]
        %1087 = vrot.lane.b32.xlu0 %v1039, 96
        %v1088 = vpop.permute.xlu0 %1087
        %1089 = vrot.lane.b32.xlu0 %v1040, 96
        %v1090 = vpop.permute.xlu0 %1089
        %1091 = vrot.lane.b32.xlu0 %v1041, 96
        %v1092 = vpop.permute.xlu0 %1091
        %1093 = vrot.lane.b32.xlu0 %v1042, 96
        %v1094 = vpop.permute.xlu0 %1093
        %1095 = vrot.lane.b32.xlu0 %v1043, 96
        %v1096 = vpop.permute.xlu0 %1095
        %1097 = vrot.lane.b32.xlu0 %v1044, 96
        %v1098 = vpop.permute.xlu0 %1097
        %1099 = vrot.lane.b32.xlu0 %v1045, 96
        %v1100 = vpop.permute.xlu0 %1099
        %1101 = vrot.lane.b32.xlu0 %v1046, 96
        %v1102 = vpop.permute.xlu0 %1101
        %1103 = vrot.lane.b32.xlu0 %v1047, 96
        %v1104 = vpop.permute.xlu0 %1103
        %1105 = vrot.lane.b32.xlu0 %v1048, 96
        %v1106 = vpop.permute.xlu0 %1105
        %1107 = vrot.lane.b32.xlu0 %v1049, 96
        %v1108 = vpop.permute.xlu0 %1107
        %1109 = vrot.lane.b32.xlu0 %v1050, 96
        %v1110 = vpop.permute.xlu0 %1109
        %1111 = vrot.lane.b32.xlu0 %v1051, 96
        %v1112 = vpop.permute.xlu0 %1111
        %1113 = vrot.lane.b32.xlu0 %v1052, 96
        %v1114 = vpop.permute.xlu0 %1113
        %1115 = vrot.lane.b32.xlu0 %v1053, 96
        %v1116 = vpop.permute.xlu0 %1115
        %1117 = vrot.lane.b32.xlu0 %v1054, 96
        %v1118 = vpop.permute.xlu0 %1117
        %1119 = vrot.lane.b32.xlu0 %v1055, 96
        %v1120 = vpop.permute.xlu0 %1119
        %1121 = vrot.lane.b32.xlu0 %v1056, 96
        %v1122 = vpop.permute.xlu0 %1121
        %1123 = vrot.lane.b32.xlu0 %v1057, 96
        %v1124 = vpop.permute.xlu0 %1123
        %1125 = vrot.lane.b32.xlu0 %v1058, 96
        %v1126 = vpop.permute.xlu0 %1125
        %1127 = vrot.lane.b32.xlu0 %v1059, 96
        %v1128 = vpop.permute.xlu0 %1127
        %1129 = vrot.lane.b32.xlu0 %v1060, 96
        %v1130 = vpop.permute.xlu0 %1129
        %1131 = vrot.lane.b32.xlu0 %v1061, 96
        %v1132 = vpop.permute.xlu0 %1131
        %1133 = vrot.lane.b32.xlu0 %v1062, 96
        %v1134 = vpop.permute.xlu0 %1133
        %vm1135 = vcmask 785408
        %v1136 = vsel %vm1135, %v1088, %v1090
        %v1137 = vsel %vm1135, %v1090, %v1092
        %v1138 = vsel %vm1135, %v1094, %v1096
        %v1139 = vsel %vm1135, %v1096, %v1098
        %v1140 = vsel %vm1135, %v1100, %v1102
        %v1141 = vsel %vm1135, %v1102, %v1104
        %v1142 = vsel %vm1135, %v1106, %v1108
        %v1143 = vsel %vm1135, %v1108, %v1110
        %v1144 = vsel %vm1135, %v1112, %v1114
        %v1145 = vsel %vm1135, %v1114, %v1116
        %v1146 = vsel %vm1135, %v1118, %v1120
        %v1147 = vsel %vm1135, %v1120, %v1122
        %v1148 = vsel %vm1135, %v1124, %v1126
        %v1149 = vsel %vm1135, %v1126, %v1128
        %v1150 = vsel %vm1135, %v1130, %v1132
        %v1151 = vsel %vm1135, %v1132, %v1134
        %v1168 = vsel %vm693, %v1136, 0.0
        %v1169 = vsel %vm694, %v1137, 0.0
        %v1170 = vsel %vm693, %v1138, 0.0
        %v1171 = vsel %vm694, %v1139, 0.0
        %v1172 = vsel %vm693, %v1140, 0.0
        %v1173 = vsel %vm694, %v1141, 0.0
        %v1174 = vsel %vm693, %v1142, 0.0
        %v1175 = vsel %vm694, %v1143, 0.0
        %v1176 = vsel %vm693, %v1144, 0.0
        %v1177 = vsel %vm694, %v1145, 0.0
        %v1178 = vsel %vm693, %v1146, 0.0
        %v1179 = vsel %vm694, %v1147, 0.0
        %v1180 = vsel %vm693, %v1148, 0.0
        %v1181 = vsel %vm694, %v1149, 0.0
        %v1182 = vsel %vm693, %v1150, 0.0
        %v1183 = vsel %vm694, %v1151, 0.0
        %1184 = vst [vmem:[#allocation7 + $0x180] sm:$0xff] %v1168
        %1185 = vst [vmem:[#allocation7 + $0x188] sm:$0xff] %v1169
        %1186 = vst [vmem:[#allocation7 + $0x190] sm:$0xff] %v1170
        %1187 = vst [vmem:[#allocation7 + $0x198] sm:$0xff] %v1171
        %1188 = vst [vmem:[#allocation7 + $0x1a0] sm:$0xff] %v1172
        %1189 = vst [vmem:[#allocation7 + $0x1a8] sm:$0xff] %v1173
        %1190 = vst [vmem:[#allocation7 + $0x1b0] sm:$0xff] %v1174
        %1191 = vst [vmem:[#allocation7 + $0x1b8] sm:$0xff] %v1175
        %1192 = vst [vmem:[#allocation7 + $0x1c0] sm:$0xff] %v1176
        %1193 = vst [vmem:[#allocation7 + $0x1c8] sm:$0xff] %v1177
        %1194 = vst [vmem:[#allocation7 + $0x1d0] sm:$0xff] %v1178
        %1195 = vst [vmem:[#allocation7 + $0x1d8] sm:$0xff] %v1179
        %1196 = vst [vmem:[#allocation7 + $0x1e0] sm:$0xff] %v1180
        %1197 = vst [vmem:[#allocation7 + $0x1e8] sm:$0xff] %v1181
        %1198 = vst [vmem:[#allocation7 + $0x1f0] sm:$0xff] %v1182
        %1199 = vst [vmem:[#allocation7 + $0x1f8] sm:$0xff] %v1183
        %v1200 = vld [vmem:[#allocation3] sm:$0xff]
        %v1201 = vld [vmem:[#allocation3 + $0x8] sm:$0xff]
        %v1202 = vld [vmem:[#allocation3 + $0x10] sm:$0xff]
        %v1203 = vld [vmem:[#allocation3 + $0x18] sm:$0xff]
        %v1204 = vld [vmem:[#allocation3 + $0x20] sm:$0xff]
        %v1205 = vld [vmem:[#allocation3 + $0x28] sm:$0xff]
        %v1206 = vld [vmem:[#allocation3 + $0x30] sm:$0xff]
        %v1207 = vld [vmem:[#allocation3 + $0x38] sm:$0xff]
        %v1208 = vld [vmem:[#allocation3 + $0x40] sm:$0xff]
        %v1209 = vld [vmem:[#allocation3 + $0x48] sm:$0xff]
        %v1210 = vld [vmem:[#allocation3 + $0x50] sm:$0xff]
        %v1211 = vld [vmem:[#allocation3 + $0x58] sm:$0xff]
        %v1212 = vld [vmem:[#allocation3 + $0x60] sm:$0xff]
        %v1213 = vld [vmem:[#allocation3 + $0x68] sm:$0xff]
        %v1214 = vld [vmem:[#allocation3 + $0x70] sm:$0xff]
        %v1215 = vld [vmem:[#allocation3 + $0x78] sm:$0xff]
        %v1216 = vld [vmem:[#allocation3 + $0x80] sm:$0xff]
        %v1217 = vld [vmem:[#allocation3 + $0x88] sm:$0xff]
        %v1218 = vld [vmem:[#allocation3 + $0x90] sm:$0xff]
        %v1219 = vld [vmem:[#allocation3 + $0x98] sm:$0xff]
        %v1220 = vld [vmem:[#allocation3 + $0xa0] sm:$0xff]
        %v1221 = vld [vmem:[#allocation3 + $0xa8] sm:$0xff]
        %v1222 = vld [vmem:[#allocation3 + $0xb0] sm:$0xff]
        %v1223 = vld [vmem:[#allocation3 + $0xb8] sm:$0xff]
        %1248 = vrot.lane.b32.xlu0 %v1200, 94
        %v1249 = vpop.permute.xlu0 %1248
        %1250 = vrot.lane.b32.xlu0 %v1201, 94
        %v1251 = vpop.permute.xlu0 %1250
        %1252 = vrot.lane.b32.xlu0 %v1202, 94
        %v1253 = vpop.permute.xlu0 %1252
        %1254 = vrot.lane.b32.xlu0 %v1203, 94
        %v1255 = vpop.permute.xlu0 %1254
        %1256 = vrot.lane.b32.xlu0 %v1204, 94
        %v1257 = vpop.permute.xlu0 %1256
        %1258 = vrot.lane.b32.xlu0 %v1205, 94
        %v1259 = vpop.permute.xlu0 %1258
        %1260 = vrot.lane.b32.xlu0 %v1206, 94
        %v1261 = vpop.permute.xlu0 %1260
        %1262 = vrot.lane.b32.xlu0 %v1207, 94
        %v1263 = vpop.permute.xlu0 %1262
        %1264 = vrot.lane.b32.xlu0 %v1208, 94
        %v1265 = vpop.permute.xlu0 %1264
        %1266 = vrot.lane.b32.xlu0 %v1209, 94
        %v1267 = vpop.permute.xlu0 %1266
        %1268 = vrot.lane.b32.xlu0 %v1210, 94
        %v1269 = vpop.permute.xlu0 %1268
        %1270 = vrot.lane.b32.xlu0 %v1211, 94
        %v1271 = vpop.permute.xlu0 %1270
        %1272 = vrot.lane.b32.xlu0 %v1212, 94
        %v1273 = vpop.permute.xlu0 %1272
        %1274 = vrot.lane.b32.xlu0 %v1213, 94
        %v1275 = vpop.permute.xlu0 %1274
        %1276 = vrot.lane.b32.xlu0 %v1214, 94
        %v1277 = vpop.permute.xlu0 %1276
        %1278 = vrot.lane.b32.xlu0 %v1215, 94
        %v1279 = vpop.permute.xlu0 %1278
        %1280 = vrot.lane.b32.xlu0 %v1216, 94
        %v1281 = vpop.permute.xlu0 %1280
        %1282 = vrot.lane.b32.xlu0 %v1217, 94
        %v1283 = vpop.permute.xlu0 %1282
        %1284 = vrot.lane.b32.xlu0 %v1218, 94
        %v1285 = vpop.permute.xlu0 %1284
        %1286 = vrot.lane.b32.xlu0 %v1219, 94
        %v1287 = vpop.permute.xlu0 %1286
        %1288 = vrot.lane.b32.xlu0 %v1220, 94
        %v1289 = vpop.permute.xlu0 %1288
        %1290 = vrot.lane.b32.xlu0 %v1221, 94
        %v1291 = vpop.permute.xlu0 %1290
        %1292 = vrot.lane.b32.xlu0 %v1222, 94
        %v1293 = vpop.permute.xlu0 %1292
        %1294 = vrot.lane.b32.xlu0 %v1223, 94
        %v1295 = vpop.permute.xlu0 %1294
        %vm1296 = vcmask 769024
        %v1297 = vsel %vm1296, %v1249, %v1251
        %v1298 = vsel %vm1296, %v1251, %v1253
        %v1299 = vsel %vm1296, %v1255, %v1257
        %v1300 = vsel %vm1296, %v1257, %v1259
        %v1301 = vsel %vm1296, %v1261, %v1263
        %v1302 = vsel %vm1296, %v1263, %v1265
        %v1303 = vsel %vm1296, %v1267, %v1269
        %v1304 = vsel %vm1296, %v1269, %v1271
        %v1305 = vsel %vm1296, %v1273, %v1275
        %v1306 = vsel %vm1296, %v1275, %v1277
        %v1307 = vsel %vm1296, %v1279, %v1281
        %v1308 = vsel %vm1296, %v1281, %v1283
        %v1309 = vsel %vm1296, %v1285, %v1287
        %v1310 = vsel %vm1296, %v1287, %v1289
        %v1311 = vsel %vm1296, %v1291, %v1293
        %v1312 = vsel %vm1296, %v1293, %v1295
        %1329 = vst [vmem:[#allocation7 + $0x200] sm:$0xff] %v1297
        %1330 = vst [vmem:[#allocation7 + $0x208] sm:$0xff] %v1298
        %1331 = vst [vmem:[#allocation7 + $0x210] sm:$0xff] %v1299
        %1332 = vst [vmem:[#allocation7 + $0x218] sm:$0xff] %v1300
        %1333 = vst [vmem:[#allocation7 + $0x220] sm:$0xff] %v1301
        %1334 = vst [vmem:[#allocation7 + $0x228] sm:$0xff] %v1302
        %1335 = vst [vmem:[#allocation7 + $0x230] sm:$0xff] %v1303
        %1336 = vst [vmem:[#allocation7 + $0x238] sm:$0xff] %v1304
        %1337 = vst [vmem:[#allocation7 + $0x240] sm:$0xff] %v1305
        %1338 = vst [vmem:[#allocation7 + $0x248] sm:$0xff] %v1306
        %1339 = vst [vmem:[#allocation7 + $0x250] sm:$0xff] %v1307
        %1340 = vst [vmem:[#allocation7 + $0x258] sm:$0xff] %v1308
        %1341 = vst [vmem:[#allocation7 + $0x260] sm:$0xff] %v1309
        %1342 = vst [vmem:[#allocation7 + $0x268] sm:$0xff] %v1310
        %1343 = vst [vmem:[#allocation7 + $0x270] sm:$0xff] %v1311
        %1344 = vst [vmem:[#allocation7 + $0x278] sm:$0xff] %v1312
        %v1345 = vld [vmem:[#allocation3] sm:$0xff]
        %v1346 = vld [vmem:[#allocation3 + $0x8] sm:$0xff]
        %v1347 = vld [vmem:[#allocation3 + $0x10] sm:$0xff]
        %v1348 = vld [vmem:[#allocation3 + $0x18] sm:$0xff]
        %v1349 = vld [vmem:[#allocation3 + $0x20] sm:$0xff]
        %v1350 = vld [vmem:[#allocation3 + $0x28] sm:$0xff]
        %v1351 = vld [vmem:[#allocation3 + $0x30] sm:$0xff]
        %v1352 = vld [vmem:[#allocation3 + $0x38] sm:$0xff]
        %v1353 = vld [vmem:[#allocation3 + $0x40] sm:$0xff]
        %v1354 = vld [vmem:[#allocation3 + $0x48] sm:$0xff]
        %v1355 = vld [vmem:[#allocation3 + $0x50] sm:$0xff]
        %v1356 = vld [vmem:[#allocation3 + $0x58] sm:$0xff]
        %v1357 = vld [vmem:[#allocation3 + $0x60] sm:$0xff]
        %v1358 = vld [vmem:[#allocation3 + $0x68] sm:$0xff]
        %v1359 = vld [vmem:[#allocation3 + $0x70] sm:$0xff]
        %v1360 = vld [vmem:[#allocation3 + $0x78] sm:$0xff]
        %v1361 = vld [vmem:[#allocation3 + $0x80] sm:$0xff]
        %v1362 = vld [vmem:[#allocation3 + $0x88] sm:$0xff]
        %v1363 = vld [vmem:[#allocation3 + $0x90] sm:$0xff]
        %v1364 = vld [vmem:[#allocation3 + $0x98] sm:$0xff]
        %v1365 = vld [vmem:[#allocation3 + $0xa0] sm:$0xff]
        %v1366 = vld [vmem:[#allocation3 + $0xa8] sm:$0xff]
        %v1367 = vld [vmem:[#allocation3 + $0xb0] sm:$0xff]
        %v1368 = vld [vmem:[#allocation3 + $0xb8] sm:$0xff]
        %1393 = vrot.lane.b32.xlu0 %v1345, 92
        %v1394 = vpop.permute.xlu0 %1393
        %1395 = vrot.lane.b32.xlu0 %v1346, 92
        %v1396 = vpop.permute.xlu0 %1395
        %1397 = vrot.lane.b32.xlu0 %v1347, 92
        %v1398 = vpop.permute.xlu0 %1397
        %1399 = vrot.lane.b32.xlu0 %v1348, 92
        %v1400 = vpop.permute.xlu0 %1399
        %1401 = vrot.lane.b32.xlu0 %v1349, 92
        %v1402 = vpop.permute.xlu0 %1401
        %1403 = vrot.lane.b32.xlu0 %v1350, 92
        %v1404 = vpop.permute.xlu0 %1403
        %1405 = vrot.lane.b32.xlu0 %v1351, 92
        %v1406 = vpop.permute.xlu0 %1405
        %1407 = vrot.lane.b32.xlu0 %v1352, 92
        %v1408 = vpop.permute.xlu0 %1407
        %1409 = vrot.lane.b32.xlu0 %v1353, 92
        %v1410 = vpop.permute.xlu0 %1409
        %1411 = vrot.lane.b32.xlu0 %v1354, 92
        %v1412 = vpop.permute.xlu0 %1411
        %1413 = vrot.lane.b32.xlu0 %v1355, 92
        %v1414 = vpop.permute.xlu0 %1413
        %1415 = vrot.lane.b32.xlu0 %v1356, 92
        %v1416 = vpop.permute.xlu0 %1415
        %1417 = vrot.lane.b32.xlu0 %v1357, 92
        %v1418 = vpop.permute.xlu0 %1417
        %1419 = vrot.lane.b32.xlu0 %v1358, 92
        %v1420 = vpop.permute.xlu0 %1419
        %1421 = vrot.lane.b32.xlu0 %v1359, 92
        %v1422 = vpop.permute.xlu0 %1421
        %1423 = vrot.lane.b32.xlu0 %v1360, 92
        %v1424 = vpop.permute.xlu0 %1423
        %1425 = vrot.lane.b32.xlu0 %v1361, 92
        %v1426 = vpop.permute.xlu0 %1425
        %1427 = vrot.lane.b32.xlu0 %v1362, 92
        %v1428 = vpop.permute.xlu0 %1427
        %1429 = vrot.lane.b32.xlu0 %v1363, 92
        %v1430 = vpop.permute.xlu0 %1429
        %1431 = vrot.lane.b32.xlu0 %v1364, 92
        %v1432 = vpop.permute.xlu0 %1431
        %1433 = vrot.lane.b32.xlu0 %v1365, 92
        %v1434 = vpop.permute.xlu0 %1433
        %1435 = vrot.lane.b32.xlu0 %v1366, 92
        %v1436 = vpop.permute.xlu0 %1435
        %1437 = vrot.lane.b32.xlu0 %v1367, 92
        %v1438 = vpop.permute.xlu0 %1437
        %1439 = vrot.lane.b32.xlu0 %v1368, 92
        %v1440 = vpop.permute.xlu0 %1439
        %vm1441 = vcmask 752640
        %v1442 = vsel %vm1441, %v1394, %v1396
        %v1443 = vsel %vm1441, %v1396, %v1398
        %v1444 = vsel %vm1441, %v1400, %v1402
        %v1445 = vsel %vm1441, %v1402, %v1404
        %v1446 = vsel %vm1441, %v1406, %v1408
        %v1447 = vsel %vm1441, %v1408, %v1410
        %v1448 = vsel %vm1441, %v1412, %v1414
        %v1449 = vsel %vm1441, %v1414, %v1416
        %v1450 = vsel %vm1441, %v1418, %v1420
        %v1451 = vsel %vm1441, %v1420, %v1422
        %v1452 = vsel %vm1441, %v1424, %v1426
        %v1453 = vsel %vm1441, %v1426, %v1428
        %v1454 = vsel %vm1441, %v1430, %v1432
        %v1455 = vsel %vm1441, %v1432, %v1434
        %v1456 = vsel %vm1441, %v1436, %v1438
        %v1457 = vsel %vm1441, %v1438, %v1440
        %v1474 = vsel %vm900, %v1442, 0.0
        %v1475 = vsel %vm901, %v1443, 0.0
        %v1476 = vsel %vm900, %v1444, 0.0
        %v1477 = vsel %vm901, %v1445, 0.0
        %v1478 = vsel %vm900, %v1446, 0.0
        %v1479 = vsel %vm901, %v1447, 0.0
        %v1480 = vsel %vm900, %v1448, 0.0
        %v1481 = vsel %vm901, %v1449, 0.0
        %v1482 = vsel %vm900, %v1450, 0.0
        %v1483 = vsel %vm901, %v1451, 0.0
        %v1484 = vsel %vm900, %v1452, 0.0
        %v1485 = vsel %vm901, %v1453, 0.0
        %v1486 = vsel %vm900, %v1454, 0.0
        %v1487 = vsel %vm901, %v1455, 0.0
        %v1488 = vsel %vm900, %v1456, 0.0
        %v1489 = vsel %vm901, %v1457, 0.0
        %1490 = vst [vmem:[#allocation7 + $0x280] sm:$0xff] %v1474
        %1491 = vst [vmem:[#allocation7 + $0x288] sm:$0xff] %v1475
        %1492 = vst [vmem:[#allocation7 + $0x290] sm:$0xff] %v1476
        %1493 = vst [vmem:[#allocation7 + $0x298] sm:$0xff] %v1477
        %1494 = vst [vmem:[#allocation7 + $0x2a0] sm:$0xff] %v1478
        %1495 = vst [vmem:[#allocation7 + $0x2a8] sm:$0xff] %v1479
        %1496 = vst [vmem:[#allocation7 + $0x2b0] sm:$0xff] %v1480
        %1497 = vst [vmem:[#allocation7 + $0x2b8] sm:$0xff] %v1481
        %1498 = vst [vmem:[#allocation7 + $0x2c0] sm:$0xff] %v1482
        %1499 = vst [vmem:[#allocation7 + $0x2c8] sm:$0xff] %v1483
        %1500 = vst [vmem:[#allocation7 + $0x2d0] sm:$0xff] %v1484
        %1501 = vst [vmem:[#allocation7 + $0x2d8] sm:$0xff] %v1485
        %1502 = vst [vmem:[#allocation7 + $0x2e0] sm:$0xff] %v1486
        %1503 = vst [vmem:[#allocation7 + $0x2e8] sm:$0xff] %v1487
        %1504 = vst [vmem:[#allocation7 + $0x2f0] sm:$0xff] %v1488
        %1505 = vst [vmem:[#allocation7 + $0x2f8] sm:$0xff] %v1489
        %v1506 = vld [vmem:[#allocation3] sm:$0xff]
        %v1507 = vld [vmem:[#allocation3 + $0x8] sm:$0xff]
        %v1508 = vld [vmem:[#allocation3 + $0x10] sm:$0xff]
        %v1509 = vld [vmem:[#allocation3 + $0x18] sm:$0xff]
        %v1510 = vld [vmem:[#allocation3 + $0x20] sm:$0xff]
        %v1511 = vld [vmem:[#allocation3 + $0x28] sm:$0xff]
        %v1512 = vld [vmem:[#allocation3 + $0x30] sm:$0xff]
        %v1513 = vld [vmem:[#allocation3 + $0x38] sm:$0xff]
        %v1514 = vld [vmem:[#allocation3 + $0x40] sm:$0xff]
        %v1515 = vld [vmem:[#allocation3 + $0x48] sm:$0xff]
        %v1516 = vld [vmem:[#allocation3 + $0x50] sm:$0xff]
        %v1517 = vld [vmem:[#allocation3 + $0x58] sm:$0xff]
        %v1518 = vld [vmem:[#allocation3 + $0x60] sm:$0xff]
        %v1519 = vld [vmem:[#allocation3 + $0x68] sm:$0xff]
        %v1520 = vld [vmem:[#allocation3 + $0x70] sm:$0xff]
        %v1521 = vld [vmem:[#allocation3 + $0x78] sm:$0xff]
        %v1522 = vld [vmem:[#allocation3 + $0x80] sm:$0xff]
        %v1523 = vld [vmem:[#allocation3 + $0x88] sm:$0xff]
        %v1524 = vld [vmem:[#allocation3 + $0x90] sm:$0xff]
        %v1525 = vld [vmem:[#allocation3 + $0x98] sm:$0xff]
        %v1526 = vld [vmem:[#allocation3 + $0xa0] sm:$0xff]
        %v1527 = vld [vmem:[#allocation3 + $0xa8] sm:$0xff]
        %v1528 = vld [vmem:[#allocation3 + $0xb0] sm:$0xff]
        %v1529 = vld [vmem:[#allocation3 + $0xb8] sm:$0xff]
        %1554 = vrot.lane.b32.xlu0 %v1506, 64
        %v1555 = vpop.permute.xlu0 %1554
        %1556 = vrot.lane.b32.xlu0 %v1507, 64
        %v1557 = vpop.permute.xlu0 %1556
        %1558 = vrot.lane.b32.xlu0 %v1508, 64
        %v1559 = vpop.permute.xlu0 %1558
        %1560 = vrot.lane.b32.xlu0 %v1509, 64
        %v1561 = vpop.permute.xlu0 %1560
        %1562 = vrot.lane.b32.xlu0 %v1510, 64
        %v1563 = vpop.permute.xlu0 %1562
        %1564 = vrot.lane.b32.xlu0 %v1511, 64
        %v1565 = vpop.permute.xlu0 %1564
        %1566 = vrot.lane.b32.xlu0 %v1512, 64
        %v1567 = vpop.permute.xlu0 %1566
        %1568 = vrot.lane.b32.xlu0 %v1513, 64
        %v1569 = vpop.permute.xlu0 %1568
        %1570 = vrot.lane.b32.xlu0 %v1514, 64
        %v1571 = vpop.permute.xlu0 %1570
        %1572 = vrot.lane.b32.xlu0 %v1515, 64
        %v1573 = vpop.permute.xlu0 %1572
        %1574 = vrot.lane.b32.xlu0 %v1516, 64
        %v1575 = vpop.permute.xlu0 %1574
        %1576 = vrot.lane.b32.xlu0 %v1517, 64
        %v1577 = vpop.permute.xlu0 %1576
        %1578 = vrot.lane.b32.xlu0 %v1518, 64
        %v1579 = vpop.permute.xlu0 %1578
        %1580 = vrot.lane.b32.xlu0 %v1519, 64
        %v1581 = vpop.permute.xlu0 %1580
        %1582 = vrot.lane.b32.xlu0 %v1520, 64
        %v1583 = vpop.permute.xlu0 %1582
        %1584 = vrot.lane.b32.xlu0 %v1521, 64
        %v1585 = vpop.permute.xlu0 %1584
        %1586 = vrot.lane.b32.xlu0 %v1522, 64
        %v1587 = vpop.permute.xlu0 %1586
        %1588 = vrot.lane.b32.xlu0 %v1523, 64
        %v1589 = vpop.permute.xlu0 %1588
        %1590 = vrot.lane.b32.xlu0 %v1524, 64
        %v1591 = vpop.permute.xlu0 %1590
        %1592 = vrot.lane.b32.xlu0 %v1525, 64
        %v1593 = vpop.permute.xlu0 %1592
        %1594 = vrot.lane.b32.xlu0 %v1526, 64
        %v1595 = vpop.permute.xlu0 %1594
        %1596 = vrot.lane.b32.xlu0 %v1527, 64
        %v1597 = vpop.permute.xlu0 %1596
        %1598 = vrot.lane.b32.xlu0 %v1528, 64
        %v1599 = vpop.permute.xlu0 %1598
        %1600 = vrot.lane.b32.xlu0 %v1529, 64
        %v1601 = vpop.permute.xlu0 %1600
        %vm1602 = vcmask 523264
        %v1603 = vsel %vm1602, %v1555, %v1557
        %v1604 = vsel %vm1602, %v1557, %v1559
        %v1605 = vsel %vm1602, %v1561, %v1563
        %v1606 = vsel %vm1602, %v1563, %v1565
        %v1607 = vsel %vm1602, %v1567, %v1569
        %v1608 = vsel %vm1602, %v1569, %v1571
        %v1609 = vsel %vm1602, %v1573, %v1575
        %v1610 = vsel %vm1602, %v1575, %v1577
        %v1611 = vsel %vm1602, %v1579, %v1581
        %v1612 = vsel %vm1602, %v1581, %v1583
        %v1613 = vsel %vm1602, %v1585, %v1587
        %v1614 = vsel %vm1602, %v1587, %v1589
        %v1615 = vsel %vm1602, %v1591, %v1593
        %v1616 = vsel %vm1602, %v1593, %v1595
        %v1617 = vsel %vm1602, %v1597, %v1599
        %v1618 = vsel %vm1602, %v1599, %v1601
        %v1635 = vsel %vm693, %v1603, 0.0
        %v1636 = vsel %vm694, %v1604, 0.0
        %v1637 = vsel %vm693, %v1605, 0.0
        %v1638 = vsel %vm694, %v1606, 0.0
        %v1639 = vsel %vm693, %v1607, 0.0
        %v1640 = vsel %vm694, %v1608, 0.0
        %v1641 = vsel %vm693, %v1609, 0.0
        %v1642 = vsel %vm694, %v1610, 0.0
        %v1643 = vsel %vm693, %v1611, 0.0
        %v1644 = vsel %vm694, %v1612, 0.0
        %v1645 = vsel %vm693, %v1613, 0.0
        %v1646 = vsel %vm694, %v1614, 0.0
        %v1647 = vsel %vm693, %v1615, 0.0
        %v1648 = vsel %vm694, %v1616, 0.0
        %v1649 = vsel %vm693, %v1617, 0.0
        %v1650 = vsel %vm694, %v1618, 0.0
        %1651 = vst [vmem:[#allocation7 + $0x300] sm:$0xff] %v1635
        %1652 = vst [vmem:[#allocation7 + $0x308] sm:$0xff] %v1636
        %1653 = vst [vmem:[#allocation7 + $0x310] sm:$0xff] %v1637
        %1654 = vst [vmem:[#allocation7 + $0x318] sm:$0xff] %v1638
        %1655 = vst [vmem:[#allocation7 + $0x320] sm:$0xff] %v1639
        %1656 = vst [vmem:[#allocation7 + $0x328] sm:$0xff] %v1640
        %1657 = vst [vmem:[#allocation7 + $0x330] sm:$0xff] %v1641
        %1658 = vst [vmem:[#allocation7 + $0x338] sm:$0xff] %v1642
        %1659 = vst [vmem:[#allocation7 + $0x340] sm:$0xff] %v1643
        %1660 = vst [vmem:[#allocation7 + $0x348] sm:$0xff] %v1644
        %1661 = vst [vmem:[#allocation7 + $0x350] sm:$0xff] %v1645
        %1662 = vst [vmem:[#allocation7 + $0x358] sm:$0xff] %v1646
        %1663 = vst [vmem:[#allocation7 + $0x360] sm:$0xff] %v1647
        %1664 = vst [vmem:[#allocation7 + $0x368] sm:$0xff] %v1648
        %1665 = vst [vmem:[#allocation7 + $0x370] sm:$0xff] %v1649
        %1666 = vst [vmem:[#allocation7 + $0x378] sm:$0xff] %v1650
        %v1667 = vld [vmem:[#allocation3] sm:$0xff]
        %v1668 = vld [vmem:[#allocation3 + $0x8] sm:$0xff]
        %v1669 = vld [vmem:[#allocation3 + $0x10] sm:$0xff]
        %v1670 = vld [vmem:[#allocation3 + $0x18] sm:$0xff]
        %v1671 = vld [vmem:[#allocation3 + $0x20] sm:$0xff]
        %v1672 = vld [vmem:[#allocation3 + $0x28] sm:$0xff]
        %v1673 = vld [vmem:[#allocation3 + $0x30] sm:$0xff]
        %v1674 = vld [vmem:[#allocation3 + $0x38] sm:$0xff]
        %v1675 = vld [vmem:[#allocation3 + $0x40] sm:$0xff]
        %v1676 = vld [vmem:[#allocation3 + $0x48] sm:$0xff]
        %v1677 = vld [vmem:[#allocation3 + $0x50] sm:$0xff]
        %v1678 = vld [vmem:[#allocation3 + $0x58] sm:$0xff]
        %v1679 = vld [vmem:[#allocation3 + $0x60] sm:$0xff]
        %v1680 = vld [vmem:[#allocation3 + $0x68] sm:$0xff]
        %v1681 = vld [vmem:[#allocation3 + $0x70] sm:$0xff]
        %v1682 = vld [vmem:[#allocation3 + $0x78] sm:$0xff]
        %v1683 = vld [vmem:[#allocation3 + $0x80] sm:$0xff]
        %v1684 = vld [vmem:[#allocation3 + $0x88] sm:$0xff]
        %v1685 = vld [vmem:[#allocation3 + $0x90] sm:$0xff]
        %v1686 = vld [vmem:[#allocation3 + $0x98] sm:$0xff]
        %v1687 = vld [vmem:[#allocation3 + $0xa0] sm:$0xff]
        %v1688 = vld [vmem:[#allocation3 + $0xa8] sm:$0xff]
        %v1689 = vld [vmem:[#allocation3 + $0xb0] sm:$0xff]
        %v1690 = vld [vmem:[#allocation3 + $0xb8] sm:$0xff]
        %1715 = vrot.lane.b32.xlu0 %v1667, 62
        %v1716 = vpop.permute.xlu0 %1715
        %1717 = vrot.lane.b32.xlu0 %v1668, 62
        %v1718 = vpop.permute.xlu0 %1717
        %1719 = vrot.lane.b32.xlu0 %v1669, 62
        %v1720 = vpop.permute.xlu0 %1719
        %1721 = vrot.lane.b32.xlu0 %v1670, 62
        %v1722 = vpop.permute.xlu0 %1721
        %1723 = vrot.lane.b32.xlu0 %v1671, 62
        %v1724 = vpop.permute.xlu0 %1723
        %1725 = vrot.lane.b32.xlu0 %v1672, 62
        %v1726 = vpop.permute.xlu0 %1725
        %1727 = vrot.lane.b32.xlu0 %v1673, 62
        %v1728 = vpop.permute.xlu0 %1727
        %1729 = vrot.lane.b32.xlu0 %v1674, 62
        %v1730 = vpop.permute.xlu0 %1729
        %1731 = vrot.lane.b32.xlu0 %v1675, 62
        %v1732 = vpop.permute.xlu0 %1731
        %1733 = vrot.lane.b32.xlu0 %v1676, 62
        %v1734 = vpop.permute.xlu0 %1733
        %1735 = vrot.lane.b32.xlu0 %v1677, 62
        %v1736 = vpop.permute.xlu0 %1735
        %1737 = vrot.lane.b32.xlu0 %v1678, 62
        %v1738 = vpop.permute.xlu0 %1737
        %1739 = vrot.lane.b32.xlu0 %v1679, 62
        %v1740 = vpop.permute.xlu0 %1739
        %1741 = vrot.lane.b32.xlu0 %v1680, 62
        %v1742 = vpop.permute.xlu0 %1741
        %1743 = vrot.lane.b32.xlu0 %v1681, 62
        %v1744 = vpop.permute.xlu0 %1743
        %1745 = vrot.lane.b32.xlu0 %v1682, 62
        %v1746 = vpop.permute.xlu0 %1745
        %1747 = vrot.lane.b32.xlu0 %v1683, 62
        %v1748 = vpop.permute.xlu0 %1747
        %1749 = vrot.lane.b32.xlu0 %v1684, 62
        %v1750 = vpop.permute.xlu0 %1749
        %1751 = vrot.lane.b32.xlu0 %v1685, 62
        %v1752 = vpop.permute.xlu0 %1751
        %1753 = vrot.lane.b32.xlu0 %v1686, 62
        %v1754 = vpop.permute.xlu0 %1753
        %1755 = vrot.lane.b32.xlu0 %v1687, 62
        %v1756 = vpop.permute.xlu0 %1755
        %1757 = vrot.lane.b32.xlu0 %v1688, 62
        %v1758 = vpop.permute.xlu0 %1757
        %1759 = vrot.lane.b32.xlu0 %v1689, 62
        %v1760 = vpop.permute.xlu0 %1759
        %1761 = vrot.lane.b32.xlu0 %v1690, 62
        %v1762 = vpop.permute.xlu0 %1761
        %vm1763 = vcmask 506880
        %v1764 = vsel %vm1763, %v1716, %v1718
        %v1765 = vsel %vm1763, %v1718, %v1720
        %v1766 = vsel %vm1763, %v1722, %v1724
        %v1767 = vsel %vm1763, %v1724, %v1726
        %v1768 = vsel %vm1763, %v1728, %v1730
        %v1769 = vsel %vm1763, %v1730, %v1732
        %v1770 = vsel %vm1763, %v1734, %v1736
        %v1771 = vsel %vm1763, %v1736, %v1738
        %v1772 = vsel %vm1763, %v1740, %v1742
        %v1773 = vsel %vm1763, %v1742, %v1744
        %v1774 = vsel %vm1763, %v1746, %v1748
        %v1775 = vsel %vm1763, %v1748, %v1750
        %v1776 = vsel %vm1763, %v1752, %v1754
        %v1777 = vsel %vm1763, %v1754, %v1756
        %v1778 = vsel %vm1763, %v1758, %v1760
        %v1779 = vsel %vm1763, %v1760, %v1762
        %1796 = vst [vmem:[#allocation7 + $0x380] sm:$0xff] %v1764
        %1797 = vst [vmem:[#allocation7 + $0x388] sm:$0xff] %v1765
        %1798 = vst [vmem:[#allocation7 + $0x390] sm:$0xff] %v1766
        %1799 = vst [vmem:[#allocation7 + $0x398] sm:$0xff] %v1767
        %1800 = vst [vmem:[#allocation7 + $0x3a0] sm:$0xff] %v1768
        %1801 = vst [vmem:[#allocation7 + $0x3a8] sm:$0xff] %v1769
        %1802 = vst [vmem:[#allocation7 + $0x3b0] sm:$0xff] %v1770
        %1803 = vst [vmem:[#allocation7 + $0x3b8] sm:$0xff] %v1771
        %1804 = vst [vmem:[#allocation7 + $0x3c0] sm:$0xff] %v1772
        %1805 = vst [vmem:[#allocation7 + $0x3c8] sm:$0xff] %v1773
        %1806 = vst [vmem:[#allocation7 + $0x3d0] sm:$0xff] %v1774
        %1807 = vst [vmem:[#allocation7 + $0x3d8] sm:$0xff] %v1775
        %1808 = vst [vmem:[#allocation7 + $0x3e0] sm:$0xff] %v1776
        %1809 = vst [vmem:[#allocation7 + $0x3e8] sm:$0xff] %v1777
        %1810 = vst [vmem:[#allocation7 + $0x3f0] sm:$0xff] %v1778
        %1811 = vst [vmem:[#allocation7 + $0x3f8] sm:$0xff] %v1779
        %v1812 = vld [vmem:[#allocation3] sm:$0xff]
        %v1813 = vld [vmem:[#allocation3 + $0x8] sm:$0xff]
        %v1814 = vld [vmem:[#allocation3 + $0x10] sm:$0xff]
        %v1815 = vld [vmem:[#allocation3 + $0x18] sm:$0xff]
        %v1816 = vld [vmem:[#allocation3 + $0x20] sm:$0xff]
        %v1817 = vld [vmem:[#allocation3 + $0x28] sm:$0xff]
        %v1818 = vld [vmem:[#allocation3 + $0x30] sm:$0xff]
        %v1819 = vld [vmem:[#allocation3 + $0x38] sm:$0xff]
        %v1820 = vld [vmem:[#allocation3 + $0x40] sm:$0xff]
        %v1821 = vld [vmem:[#allocation3 + $0x48] sm:$0xff]
        %v1822 = vld [vmem:[#allocation3 + $0x50] sm:$0xff]
        %v1823 = vld [vmem:[#allocation3 + $0x58] sm:$0xff]
        %v1824 = vld [vmem:[#allocation3 + $0x60] sm:$0xff]
        %v1825 = vld [vmem:[#allocation3 + $0x68] sm:$0xff]
        %v1826 = vld [vmem:[#allocation3 + $0x70] sm:$0xff]
        %v1827 = vld [vmem:[#allocation3 + $0x78] sm:$0xff]
        %v1828 = vld [vmem:[#allocation3 + $0x80] sm:$0xff]
        %v1829 = vld [vmem:[#allocation3 + $0x88] sm:$0xff]
        %v1830 = vld [vmem:[#allocation3 + $0x90] sm:$0xff]
        %v1831 = vld [vmem:[#allocation3 + $0x98] sm:$0xff]
        %v1832 = vld [vmem:[#allocation3 + $0xa0] sm:$0xff]
        %v1833 = vld [vmem:[#allocation3 + $0xa8] sm:$0xff]
        %v1834 = vld [vmem:[#allocation3 + $0xb0] sm:$0xff]
        %v1835 = vld [vmem:[#allocation3 + $0xb8] sm:$0xff]
        %1860 = vrot.lane.b32.xlu0 %v1812, 60
        %v1861 = vpop.permute.xlu0 %1860
        %1862 = vrot.lane.b32.xlu0 %v1813, 60
        %v1863 = vpop.permute.xlu0 %1862
        %1864 = vrot.lane.b32.xlu0 %v1814, 60
        %v1865 = vpop.permute.xlu0 %1864
        %1866 = vrot.lane.b32.xlu0 %v1815, 60
        %v1867 = vpop.permute.xlu0 %1866
        %1868 = vrot.lane.b32.xlu0 %v1816, 60
        %v1869 = vpop.permute.xlu0 %1868
        %1870 = vrot.lane.b32.xlu0 %v1817, 60
        %v1871 = vpop.permute.xlu0 %1870
        %1872 = vrot.lane.b32.xlu0 %v1818, 60
        %v1873 = vpop.permute.xlu0 %1872
        %1874 = vrot.lane.b32.xlu0 %v1819, 60
        %v1875 = vpop.permute.xlu0 %1874
        %1876 = vrot.lane.b32.xlu0 %v1820, 60
        %v1877 = vpop.permute.xlu0 %1876
        %1878 = vrot.lane.b32.xlu0 %v1821, 60
        %v1879 = vpop.permute.xlu0 %1878
        %1880 = vrot.lane.b32.xlu0 %v1822, 60
        %v1881 = vpop.permute.xlu0 %1880
        %1882 = vrot.lane.b32.xlu0 %v1823, 60
        %v1883 = vpop.permute.xlu0 %1882
        %1884 = vrot.lane.b32.xlu0 %v1824, 60
        %v1885 = vpop.permute.xlu0 %1884
        %1886 = vrot.lane.b32.xlu0 %v1825, 60
        %v1887 = vpop.permute.xlu0 %1886
        %1888 = vrot.lane.b32.xlu0 %v1826, 60
        %v1889 = vpop.permute.xlu0 %1888
        %1890 = vrot.lane.b32.xlu0 %v1827, 60
        %v1891 = vpop.permute.xlu0 %1890
        %1892 = vrot.lane.b32.xlu0 %v1828, 60
        %v1893 = vpop.permute.xlu0 %1892
        %1894 = vrot.lane.b32.xlu0 %v1829, 60
        %v1895 = vpop.permute.xlu0 %1894
        %1896 = vrot.lane.b32.xlu0 %v1830, 60
        %v1897 = vpop.permute.xlu0 %1896
        %1898 = vrot.lane.b32.xlu0 %v1831, 60
        %v1899 = vpop.permute.xlu0 %1898
        %1900 = vrot.lane.b32.xlu0 %v1832, 60
        %v1901 = vpop.permute.xlu0 %1900
        %1902 = vrot.lane.b32.xlu0 %v1833, 60
        %v1903 = vpop.permute.xlu0 %1902
        %1904 = vrot.lane.b32.xlu0 %v1834, 60
        %v1905 = vpop.permute.xlu0 %1904
        %1906 = vrot.lane.b32.xlu0 %v1835, 60
        %v1907 = vpop.permute.xlu0 %1906
        %vm1908 = vcmask 490496
        %v1909 = vsel %vm1908, %v1861, %v1863
        %v1910 = vsel %vm1908, %v1863, %v1865
        %v1911 = vsel %vm1908, %v1867, %v1869
        %v1912 = vsel %vm1908, %v1869, %v1871
        %v1913 = vsel %vm1908, %v1873, %v1875
        %v1914 = vsel %vm1908, %v1875, %v1877
        %v1915 = vsel %vm1908, %v1879, %v1881
        %v1916 = vsel %vm1908, %v1881, %v1883
        %v1917 = vsel %vm1908, %v1885, %v1887
        %v1918 = vsel %vm1908, %v1887, %v1889
        %v1919 = vsel %vm1908, %v1891, %v1893
        %v1920 = vsel %vm1908, %v1893, %v1895
        %v1921 = vsel %vm1908, %v1897, %v1899
        %v1922 = vsel %vm1908, %v1899, %v1901
        %v1923 = vsel %vm1908, %v1903, %v1905
        %v1924 = vsel %vm1908, %v1905, %v1907
        %v1941 = vsel %vm900, %v1909, 0.0
        %v1942 = vsel %vm901, %v1910, 0.0
        %v1943 = vsel %vm900, %v1911, 0.0
        %v1944 = vsel %vm901, %v1912, 0.0
        %v1945 = vsel %vm900, %v1913, 0.0
        %v1946 = vsel %vm901, %v1914, 0.0
        %v1947 = vsel %vm900, %v1915, 0.0
        %v1948 = vsel %vm901, %v1916, 0.0
        %v1949 = vsel %vm900, %v1917, 0.0
        %v1950 = vsel %vm901, %v1918, 0.0
        %v1951 = vsel %vm900, %v1919, 0.0
        %v1952 = vsel %vm901, %v1920, 0.0
        %v1953 = vsel %vm900, %v1921, 0.0
        %v1954 = vsel %vm901, %v1922, 0.0
        %v1955 = vsel %vm900, %v1923, 0.0
        %v1956 = vsel %vm901, %v1924, 0.0
        %1957 = vst [vmem:[#allocation7 + $0x400] sm:$0xff] %v1941
        %1958 = vst [vmem:[#allocation7 + $0x408] sm:$0xff] %v1942
        %1959 = vst [vmem:[#allocation7 + $0x410] sm:$0xff] %v1943
        %1960 = vst [vmem:[#allocation7 + $0x418] sm:$0xff] %v1944
        %1961 = vst [vmem:[#allocation7 + $0x420] sm:$0xff] %v1945
        %1962 = vst [vmem:[#allocation7 + $0x428] sm:$0xff] %v1946
        %1963 = vst [vmem:[#allocation7 + $0x430] sm:$0xff] %v1947
        %1964 = vst [vmem:[#allocation7 + $0x438] sm:$0xff] %v1948
        %1965 = vst [vmem:[#allocation7 + $0x440] sm:$0xff] %v1949
        %1966 = vst [vmem:[#allocation7 + $0x448] sm:$0xff] %v1950
        %1967 = vst [vmem:[#allocation7 + $0x450] sm:$0xff] %v1951
        %1968 = vst [vmem:[#allocation7 + $0x458] sm:$0xff] %v1952
        %1969 = vst [vmem:[#allocation7 + $0x460] sm:$0xff] %v1953
        %1970 = vst [vmem:[#allocation7 + $0x468] sm:$0xff] %v1954
        %1971 = vst [vmem:[#allocation7 + $0x470] sm:$0xff] %v1955
        %1972 = vst [vmem:[#allocation7 + $0x478] sm:$0xff] %v1956
        %v1973 = vld [vmem:[#allocation12] sm:$0xff]
        %v1974 = vld [vmem:[#allocation12 + $0x8] sm:$0xff]
        %v1975 = vld [vmem:[#allocation12 + $0x10] sm:$0xff]
        %v1976 = vld [vmem:[#allocation12 + $0x18] sm:$0xff]
        %v1977 = vld [vmem:[#allocation12 + $0x20] sm:$0xff]
        %v1978 = vld [vmem:[#allocation12 + $0x28] sm:$0xff]
        %v1979 = vld [vmem:[#allocation12 + $0x30] sm:$0xff]
        %v1980 = vld [vmem:[#allocation12 + $0x38] sm:$0xff]
        %v1981 = vld [vmem:[#allocation12 + $0x40] sm:$0xff]
        %v1982 = vld [vmem:[#allocation12 + $0x48] sm:$0xff]
        %v1983 = vld [vmem:[#allocation12 + $0x50] sm:$0xff]
        %v1984 = vld [vmem:[#allocation12 + $0x58] sm:$0xff]
        %v1985 = vld [vmem:[#allocation12 + $0x60] sm:$0xff]
        %v1986 = vld [vmem:[#allocation12 + $0x68] sm:$0xff]
        %v1987 = vld [vmem:[#allocation12 + $0x70] sm:$0xff]
        %v1988 = vld [vmem:[#allocation12 + $0x78] sm:$0xff]
        %v1989 = vld [vmem:[#allocation12 + $0x80] sm:$0xff]
        %v1990 = vld [vmem:[#allocation12 + $0x88] sm:$0xff]
        %v1991 = vld [vmem:[#allocation12 + $0x90] sm:$0xff]
        %v1992 = vld [vmem:[#allocation12 + $0x98] sm:$0xff]
        %v1993 = vld [vmem:[#allocation12 + $0xa0] sm:$0xff]
        %v1994 = vld [vmem:[#allocation12 + $0xa8] sm:$0xff]
        %v1995 = vld [vmem:[#allocation12 + $0xb0] sm:$0xff]
        %v1996 = vld [vmem:[#allocation12 + $0xb8] sm:$0xff]
        %v1997 = vld [vmem:[#allocation12 + $0xc0] sm:$0xff]
        %v1998 = vld [vmem:[#allocation12 + $0xc8] sm:$0xff]
        %v1999 = vld [vmem:[#allocation12 + $0xd0] sm:$0xff]
        %v2000 = vld [vmem:[#allocation12 + $0xd8] sm:$0xff]
        %v2001 = vld [vmem:[#allocation12 + $0xe0] sm:$0xff]
        %v2002 = vld [vmem:[#allocation12 + $0xe8] sm:$0xff]
        %v2003 = vld [vmem:[#allocation12 + $0xf0] sm:$0xff]
        %v2004 = vld [vmem:[#allocation12 + $0xf8] sm:$0xff]
        %v2005 = vld [vmem:[#allocation12 + $0x100] sm:$0xff]
        %v2006 = vld [vmem:[#allocation12 + $0x108] sm:$0xff]
        %v2007 = vld [vmem:[#allocation12 + $0x110] sm:$0xff]
        %v2008 = vld [vmem:[#allocation12 + $0x118] sm:$0xff]
        %v2009 = vld [vmem:[#allocation12 + $0x120] sm:$0xff]
        %v2010 = vld [vmem:[#allocation12 + $0x128] sm:$0xff]
        %v2011 = vld [vmem:[#allocation12 + $0x130] sm:$0xff]
        %v2012 = vld [vmem:[#allocation12 + $0x138] sm:$0xff]
        %v2013 = vld [vmem:[#allocation7] sm:$0xff]
        %v2014 = vld [vmem:[#allocation7 + $0x8] sm:$0xff]
        %v2015 = vld [vmem:[#allocation7 + $0x10] sm:$0xff]
        %v2016 = vld [vmem:[#allocation7 + $0x18] sm:$0xff]
        %v2017 = vld [vmem:[#allocation7 + $0x20] sm:$0xff]
        %v2018 = vld [vmem:[#allocation7 + $0x28] sm:$0xff]
        %v2019 = vld [vmem:[#allocation7 + $0x30] sm:$0xff]
        %v2020 = vld [vmem:[#allocation7 + $0x38] sm:$0xff]
        %v2021 = vld [vmem:[#allocation7 + $0x40] sm:$0xff]
        %v2022 = vld [vmem:[#allocation7 + $0x48] sm:$0xff]
        %v2023 = vld [vmem:[#allocation7 + $0x50] sm:$0xff]
        %v2024 = vld [vmem:[#allocation7 + $0x58] sm:$0xff]
        %v2025 = vld [vmem:[#allocation7 + $0x60] sm:$0xff]
        %v2026 = vld [vmem:[#allocation7 + $0x68] sm:$0xff]
        %v2027 = vld [vmem:[#allocation7 + $0x70] sm:$0xff]
        %v2028 = vld [vmem:[#allocation7 + $0x78] sm:$0xff]
        %v2029 = vld [vmem:[#allocation7 + $0x80] sm:$0xff]
        %v2030 = vld [vmem:[#allocation7 + $0x88] sm:$0xff]
        %v2031 = vld [vmem:[#allocation7 + $0x90] sm:$0xff]
        %v2032 = vld [vmem:[#allocation7 + $0x98] sm:$0xff]
        %v2033 = vld [vmem:[#allocation7 + $0xa0] sm:$0xff]
        %v2034 = vld [vmem:[#allocation7 + $0xa8] sm:$0xff]
        %v2035 = vld [vmem:[#allocation7 + $0xb0] sm:$0xff]
        %v2036 = vld [vmem:[#allocation7 + $0xb8] sm:$0xff]
        %v2037 = vld [vmem:[#allocation7 + $0xc0] sm:$0xff]
        %v2038 = vld [vmem:[#allocation7 + $0xc8] sm:$0xff]
        %v2039 = vld [vmem:[#allocation7 + $0xd0] sm:$0xff]
        %v2040 = vld [vmem:[#allocation7 + $0xd8] sm:$0xff]
        %v2041 = vld [vmem:[#allocation7 + $0xe0] sm:$0xff]
        %v2042 = vld [vmem:[#allocation7 + $0xe8] sm:$0xff]
        %v2043 = vld [vmem:[#allocation7 + $0xf0] sm:$0xff]
        %v2044 = vld [vmem:[#allocation7 + $0xf8] sm:$0xff]
        %v2045 = vld [vmem:[#allocation7 + $0x100] sm:$0xff]
        %v2046 = vld [vmem:[#allocation7 + $0x108] sm:$0xff]
        %v2047 = vld [vmem:[#allocation7 + $0x110] sm:$0xff]
        %v2048 = vld [vmem:[#allocation7 + $0x118] sm:$0xff]
        %v2049 = vld [vmem:[#allocation7 + $0x120] sm:$0xff]
        %v2050 = vld [vmem:[#allocation7 + $0x128] sm:$0xff]
        %v2051 = vld [vmem:[#allocation7 + $0x130] sm:$0xff]
        %v2052 = vld [vmem:[#allocation7 + $0x138] sm:$0xff]
        %v2053 = vld [vmem:[#allocation7 + $0x140] sm:$0xff]
        %v2054 = vld [vmem:[#allocation7 + $0x148] sm:$0xff]
        %v2055 = vld [vmem:[#allocation7 + $0x150] sm:$0xff]
        %v2056 = vld [vmem:[#allocation7 + $0x158] sm:$0xff]
        %v2057 = vld [vmem:[#allocation7 + $0x160] sm:$0xff]
        %v2058 = vld [vmem:[#allocation7 + $0x168] sm:$0xff]
        %v2059 = vld [vmem:[#allocation7 + $0x170] sm:$0xff]
        %v2060 = vld [vmem:[#allocation7 + $0x178] sm:$0xff]
        %v2061 = vld [vmem:[#allocation7 + $0x180] sm:$0xff]
        %v2062 = vld [vmem:[#allocation7 + $0x188] sm:$0xff]
        %v2063 = vld [vmem:[#allocation7 + $0x190] sm:$0xff]
        %v2064 = vld [vmem:[#allocation7 + $0x198] sm:$0xff]
        %v2065 = vld [vmem:[#allocation7 + $0x1a0] sm:$0xff]
        %v2066 = vld [vmem:[#allocation7 + $0x1a8] sm:$0xff]
        %v2067 = vld [vmem:[#allocation7 + $0x1b0] sm:$0xff]
        %v2068 = vld [vmem:[#allocation7 + $0x1b8] sm:$0xff]
        %v2069 = vld [vmem:[#allocation7 + $0x1c0] sm:$0xff]
        %v2070 = vld [vmem:[#allocation7 + $0x1c8] sm:$0xff]
        %v2071 = vld [vmem:[#allocation7 + $0x1d0] sm:$0xff]
        %v2072 = vld [vmem:[#allocation7 + $0x1d8] sm:$0xff]
        %v2073 = vld [vmem:[#allocation7 + $0x1e0] sm:$0xff]
        %v2074 = vld [vmem:[#allocation7 + $0x1e8] sm:$0xff]
        %v2075 = vld [vmem:[#allocation7 + $0x1f0] sm:$0xff]
        %v2076 = vld [vmem:[#allocation7 + $0x1f8] sm:$0xff]
        %v2077 = vld [vmem:[#allocation7 + $0x200] sm:$0xff]
        %v2078 = vld [vmem:[#allocation7 + $0x208] sm:$0xff]
        %v2079 = vld [vmem:[#allocation7 + $0x210] sm:$0xff]
        %v2080 = vld [vmem:[#allocation7 + $0x218] sm:$0xff]
        %v2081 = vld [vmem:[#allocation7 + $0x220] sm:$0xff]
        %v2082 = vld [vmem:[#allocation7 + $0x228] sm:$0xff]
        %v2083 = vld [vmem:[#allocation7 + $0x230] sm:$0xff]
        %v2084 = vld [vmem:[#allocation7 + $0x238] sm:$0xff]
        %v2085 = vld [vmem:[#allocation7 + $0x240] sm:$0xff]
        %v2086 = vld [vmem:[#allocation7 + $0x248] sm:$0xff]
        %v2087 = vld [vmem:[#allocation7 + $0x250] sm:$0xff]
        %v2088 = vld [vmem:[#allocation7 + $0x258] sm:$0xff]
        %v2089 = vld [vmem:[#allocation7 + $0x260] sm:$0xff]
        %v2090 = vld [vmem:[#allocation7 + $0x268] sm:$0xff]
        %v2091 = vld [vmem:[#allocation7 + $0x270] sm:$0xff]
        %v2092 = vld [vmem:[#allocation7 + $0x278] sm:$0xff]
        %v2093 = vld [vmem:[#allocation7 + $0x280] sm:$0xff]
        %v2094 = vld [vmem:[#allocation7 + $0x288] sm:$0xff]
        %v2095 = vld [vmem:[#allocation7 + $0x290] sm:$0xff]
        %v2096 = vld [vmem:[#allocation7 + $0x298] sm:$0xff]
        %v2097 = vld [vmem:[#allocation7 + $0x2a0] sm:$0xff]
        %v2098 = vld [vmem:[#allocation7 + $0x2a8] sm:$0xff]
        %v2099 = vld [vmem:[#allocation7 + $0x2b0] sm:$0xff]
        %v2100 = vld [vmem:[#allocation7 + $0x2b8] sm:$0xff]
        %v2101 = vld [vmem:[#allocation7 + $0x2c0] sm:$0xff]
        %v2102 = vld [vmem:[#allocation7 + $0x2c8] sm:$0xff]
        %v2103 = vld [vmem:[#allocation7 + $0x2d0] sm:$0xff]
        %v2104 = vld [vmem:[#allocation7 + $0x2d8] sm:$0xff]
        %v2105 = vld [vmem:[#allocation7 + $0x2e0] sm:$0xff]
        %v2106 = vld [vmem:[#allocation7 + $0x2e8] sm:$0xff]
        %v2107 = vld [vmem:[#allocation7 + $0x2f0] sm:$0xff]
        %v2108 = vld [vmem:[#allocation7 + $0x2f8] sm:$0xff]
        %v2109 = vld [vmem:[#allocation7 + $0x300] sm:$0xff]
        %v2110 = vld [vmem:[#allocation7 + $0x308] sm:$0xff]
        %v2111 = vld [vmem:[#allocation7 + $0x310] sm:$0xff]
        %v2112 = vld [vmem:[#allocation7 + $0x318] sm:$0xff]
        %v2113 = vld [vmem:[#allocation7 + $0x320] sm:$0xff]
        %v2114 = vld [vmem:[#allocation7 + $0x328] sm:$0xff]
        %v2115 = vld [vmem:[#allocation7 + $0x330] sm:$0xff]
        %v2116 = vld [vmem:[#allocation7 + $0x338] sm:$0xff]
        %v2117 = vld [vmem:[#allocation7 + $0x340] sm:$0xff]
        %v2118 = vld [vmem:[#allocation7 + $0x348] sm:$0xff]
        %v2119 = vld [vmem:[#allocation7 + $0x350] sm:$0xff]
        %v2120 = vld [vmem:[#allocation7 + $0x358] sm:$0xff]
        %v2121 = vld [vmem:[#allocation7 + $0x360] sm:$0xff]
        %v2122 = vld [vmem:[#allocation7 + $0x368] sm:$0xff]
        %v2123 = vld [vmem:[#allocation7 + $0x370] sm:$0xff]
        %v2124 = vld [vmem:[#allocation7 + $0x378] sm:$0xff]
        %v2125 = vld [vmem:[#allocation7 + $0x380] sm:$0xff]
        %v2126 = vld [vmem:[#allocation7 + $0x388] sm:$0xff]
        %v2127 = vld [vmem:[#allocation7 + $0x390] sm:$0xff]
        %v2128 = vld [vmem:[#allocation7 + $0x398] sm:$0xff]
        %v2129 = vld [vmem:[#allocation7 + $0x3a0] sm:$0xff]
        %v2130 = vld [vmem:[#allocation7 + $0x3a8] sm:$0xff]
        %v2131 = vld [vmem:[#allocation7 + $0x3b0] sm:$0xff]
        %v2132 = vld [vmem:[#allocation7 + $0x3b8] sm:$0xff]
        %v2133 = vld [vmem:[#allocation7 + $0x3c0] sm:$0xff]
        %v2134 = vld [vmem:[#allocation7 + $0x3c8] sm:$0xff]
        %v2135 = vld [vmem:[#allocation7 + $0x3d0] sm:$0xff]
        %v2136 = vld [vmem:[#allocation7 + $0x3d8] sm:$0xff]
        %v2137 = vld [vmem:[#allocation7 + $0x3e0] sm:$0xff]
        %v2138 = vld [vmem:[#allocation7 + $0x3e8] sm:$0xff]
        %v2139 = vld [vmem:[#allocation7 + $0x3f0] sm:$0xff]
        %v2140 = vld [vmem:[#allocation7 + $0x3f8] sm:$0xff]
        %v2141 = vld [vmem:[#allocation7 + $0x400] sm:$0xff]
        %v2142 = vld [vmem:[#allocation7 + $0x408] sm:$0xff]
        %v2143 = vld [vmem:[#allocation7 + $0x410] sm:$0xff]
        %v2144 = vld [vmem:[#allocation7 + $0x418] sm:$0xff]
        %v2145 = vld [vmem:[#allocation7 + $0x420] sm:$0xff]
        %v2146 = vld [vmem:[#allocation7 + $0x428] sm:$0xff]
        %v2147 = vld [vmem:[#allocation7 + $0x430] sm:$0xff]
        %v2148 = vld [vmem:[#allocation7 + $0x438] sm:$0xff]
        %v2149 = vld [vmem:[#allocation7 + $0x440] sm:$0xff]
        %v2150 = vld [vmem:[#allocation7 + $0x448] sm:$0xff]
        %v2151 = vld [vmem:[#allocation7 + $0x450] sm:$0xff]
        %v2152 = vld [vmem:[#allocation7 + $0x458] sm:$0xff]
        %v2153 = vld [vmem:[#allocation7 + $0x460] sm:$0xff]
        %v2154 = vld [vmem:[#allocation7 + $0x468] sm:$0xff]
        %v2155 = vld [vmem:[#allocation7 + $0x470] sm:$0xff]
        %v2156 = vld [vmem:[#allocation7 + $0x478] sm:$0xff]
        %v2158 = vsel %vm1602, %v1977, 0
        %v2161 = vsel %vm1602, %v1982, 0
        %v2164 = vsel %vm1602, %v1987, 0
        %v2167 = vsel %vm1602, %v1992, 0
        %v2170 = vsel %vm1602, %v1997, 0
        %v2173 = vsel %vm1602, %v2002, 0
        %v2176 = vsel %vm1602, %v2007, 0
        %v2179 = vsel %vm1602, %v2012, 0
        %2181 = vmatpush.msra.mxu0 %v2043
        %2182 = vmatpush.msra.mxu0 %v2041
        %2183 = vmatpush.msra.mxu0 %v2039
        %2184 = vmatpush.msra.mxu0 %v2037
        %2185 = vmatpush.msra.mxu0 %v2035
        %2186 = vmatpush.msra.mxu0 %v2033
        %2187 = vmatpush.msra.mxu0 %v2031
        %2188 = vmatpush.msra.mxu0 %v2029
        %2189 = vmatpush.msra.mxu0 %v2027
        %2190 = vmatpush.msra.mxu0 %v2025
        %2191 = vmatpush.msra.mxu0 %v2023
        %2192 = vmatpush.msra.mxu0 %v2021
        %2193 = vmatpush.msra.mxu0 %v2019
        %2194 = vmatpush.msra.mxu0 %v2017
        %2195 = vmatpush.msra.mxu0 %v2015
        %2196 = vmatpush.msra.mxu0 %v2013
        %2197 = vmatmul.f32.gmra.mxu0 %v1973
        %v2198 = vpop.f32.mrf.mxu0
        %v2199 = vadd.f32 0.0, %v2198
        %2200 = vmatmul.f32.gmra.mxu0 %v1978
        %v2201 = vpop.f32.mrf.mxu0
        %v2202 = vadd.f32 0.0, %v2201
        %2203 = vmatmul.f32.gmra.mxu0 %v1983
        %v2204 = vpop.f32.mrf.mxu0
        %v2205 = vadd.f32 0.0, %v2204
        %2206 = vmatmul.f32.gmra.mxu0 %v1988
        %v2207 = vpop.f32.mrf.mxu0
        %v2208 = vadd.f32 0.0, %v2207
        %2209 = vmatmul.f32.gmra.mxu0 %v1993
        %v2210 = vpop.f32.mrf.mxu0
        %v2211 = vadd.f32 0.0, %v2210
        %2212 = vmatmul.f32.gmra.mxu0 %v1998
        %v2213 = vpop.f32.mrf.mxu0
        %v2214 = vadd.f32 0.0, %v2213
        %2215 = vmatmul.f32.gmra.mxu0 %v2003
        %v2216 = vpop.f32.mrf.mxu0
        %v2217 = vadd.f32 0.0, %v2216
        %2218 = vmatmul.f32.gmra.mxu0 %v2008
        %v2219 = vpop.f32.mrf.mxu0
        %v2220 = vadd.f32 0.0, %v2219
        %2221 = vdwg.mxu0
        %2222 = vmatpush.msra.mxu0 %v2075
        %2223 = vmatpush.msra.mxu0 %v2073
        %2224 = vmatpush.msra.mxu0 %v2071
        %2225 = vmatpush.msra.mxu0 %v2069
        %2226 = vmatpush.msra.mxu0 %v2067
        %2227 = vmatpush.msra.mxu0 %v2065
        %2228 = vmatpush.msra.mxu0 %v2063
        %2229 = vmatpush.msra.mxu0 %v2061
        %2230 = vmatpush.msra.mxu0 %v2059
        %2231 = vmatpush.msra.mxu0 %v2057
        %2232 = vmatpush.msra.mxu0 %v2055
        %2233 = vmatpush.msra.mxu0 %v2053
        %2234 = vmatpush.msra.mxu0 %v2051
        %2235 = vmatpush.msra.mxu0 %v2049
        %2236 = vmatpush.msra.mxu0 %v2047
        %2237 = vmatpush.msra.mxu0 %v2045
        %2238 = vmatmul.f32.gmra.mxu0 %v1974
        %v2239 = vpop.f32.mrf.mxu0
        %v2240 = vadd.f32 %v2199, %v2239
        %2241 = vmatmul.f32.gmra.mxu0 %v1979
        %v2242 = vpop.f32.mrf.mxu0
        %v2243 = vadd.f32 %v2202, %v2242
        %2244 = vmatmul.f32.gmra.mxu0 %v1984
        %v2245 = vpop.f32.mrf.mxu0
        %v2246 = vadd.f32 %v2205, %v2245
        %2247 = vmatmul.f32.gmra.mxu0 %v1989
        %v2248 = vpop.f32.mrf.mxu0
        %v2249 = vadd.f32 %v2208, %v2248
        %2250 = vmatmul.f32.gmra.mxu0 %v1994
        %v2251 = vpop.f32.mrf.mxu0
        %v2252 = vadd.f32 %v2211, %v2251
        %2253 = vmatmul.f32.gmra.mxu0 %v1999
        %v2254 = vpop.f32.mrf.mxu0
        %v2255 = vadd.f32 %v2214, %v2254
        %2256 = vmatmul.f32.gmra.mxu0 %v2004
        %v2257 = vpop.f32.mrf.mxu0
        %v2258 = vadd.f32 %v2217, %v2257
        %2259 = vmatmul.f32.gmra.mxu0 %v2009
        %v2260 = vpop.f32.mrf.mxu0
        %v2261 = vadd.f32 %v2220, %v2260
        %2262 = vdwg.mxu0
        %2263 = vmatpush.msra.mxu0 %v2107
        %2264 = vmatpush.msra.mxu0 %v2105
        %2265 = vmatpush.msra.mxu0 %v2103
        %2266 = vmatpush.msra.mxu0 %v2101
        %2267 = vmatpush.msra.mxu0 %v2099
        %2268 = vmatpush.msra.mxu0 %v2097
        %2269 = vmatpush.msra.mxu0 %v2095
        %2270 = vmatpush.msra.mxu0 %v2093
        %2271 = vmatpush.msra.mxu0 %v2091
        %2272 = vmatpush.msra.mxu0 %v2089
        %2273 = vmatpush.msra.mxu0 %v2087
        %2274 = vmatpush.msra.mxu0 %v2085
        %2275 = vmatpush.msra.mxu0 %v2083
        %2276 = vmatpush.msra.mxu0 %v2081
        %2277 = vmatpush.msra.mxu0 %v2079
        %2278 = vmatpush.msra.mxu0 %v2077
        %2279 = vmatmul.f32.gmra.mxu0 %v1975
        %v2280 = vpop.f32.mrf.mxu0
        %v2281 = vadd.f32 %v2240, %v2280
        %2282 = vmatmul.f32.gmra.mxu0 %v1980
        %v2283 = vpop.f32.mrf.mxu0
        %v2284 = vadd.f32 %v2243, %v2283
        %2285 = vmatmul.f32.gmra.mxu0 %v1985
        %v2286 = vpop.f32.mrf.mxu0
        %v2287 = vadd.f32 %v2246, %v2286
        %2288 = vmatmul.f32.gmra.mxu0 %v1990
        %v2289 = vpop.f32.mrf.mxu0
        %v2290 = vadd.f32 %v2249, %v2289
        %2291 = vmatmul.f32.gmra.mxu0 %v1995
        %v2292 = vpop.f32.mrf.mxu0
        %v2293 = vadd.f32 %v2252, %v2292
        %2294 = vmatmul.f32.gmra.mxu0 %v2000
        %v2295 = vpop.f32.mrf.mxu0
        %v2296 = vadd.f32 %v2255, %v2295
        %2297 = vmatmul.f32.gmra.mxu0 %v2005
        %v2298 = vpop.f32.mrf.mxu0
        %v2299 = vadd.f32 %v2258, %v2298
        %2300 = vmatmul.f32.gmra.mxu0 %v2010
        %v2301 = vpop.f32.mrf.mxu0
        %v2302 = vadd.f32 %v2261, %v2301
        %2303 = vdwg.mxu0
        %2304 = vmatpush.msra.mxu0 %v2139
        %2305 = vmatpush.msra.mxu0 %v2137
        %2306 = vmatpush.msra.mxu0 %v2135
        %2307 = vmatpush.msra.mxu0 %v2133
        %2308 = vmatpush.msra.mxu0 %v2131
        %2309 = vmatpush.msra.mxu0 %v2129
        %2310 = vmatpush.msra.mxu0 %v2127
        %2311 = vmatpush.msra.mxu0 %v2125
        %2312 = vmatpush.msra.mxu0 %v2123
        %2313 = vmatpush.msra.mxu0 %v2121
        %2314 = vmatpush.msra.mxu0 %v2119
        %2315 = vmatpush.msra.mxu0 %v2117
        %2316 = vmatpush.msra.mxu0 %v2115
        %2317 = vmatpush.msra.mxu0 %v2113
        %2318 = vmatpush.msra.mxu0 %v2111
        %2319 = vmatpush.msra.mxu0 %v2109
        %2320 = vmatmul.f32.gmra.mxu0 %v1976
        %v2321 = vpop.f32.mrf.mxu0
        %v2322 = vadd.f32 %v2281, %v2321
        %2323 = vmatmul.f32.gmra.mxu0 %v1981
        %v2324 = vpop.f32.mrf.mxu0
        %v2325 = vadd.f32 %v2284, %v2324
        %2326 = vmatmul.f32.gmra.mxu0 %v1986
        %v2327 = vpop.f32.mrf.mxu0
        %v2328 = vadd.f32 %v2287, %v2327
        %2329 = vmatmul.f32.gmra.mxu0 %v1991
        %v2330 = vpop.f32.mrf.mxu0
        %v2331 = vadd.f32 %v2290, %v2330
        %2332 = vmatmul.f32.gmra.mxu0 %v1996
        %v2333 = vpop.f32.mrf.mxu0
        %v2334 = vadd.f32 %v2293, %v2333
        %2335 = vmatmul.f32.gmra.mxu0 %v2001
        %v2336 = vpop.f32.mrf.mxu0
        %v2337 = vadd.f32 %v2296, %v2336
        %2338 = vmatmul.f32.gmra.mxu0 %v2006
        %v2339 = vpop.f32.mrf.mxu0
        %v2340 = vadd.f32 %v2299, %v2339
        %2341 = vmatmul.f32.gmra.mxu0 %v2011
        %v2342 = vpop.f32.mrf.mxu0
        %v2343 = vadd.f32 %v2302, %v2342
        %2344 = vdwg.mxu0
        %2345 = vmatpush.msra.mxu0 0.0
        %2346 = vmatpush.msra.mxu0 0.0
        %2347 = vmatpush.msra.mxu0 0.0
        %2348 = vmatpush.msra.mxu0 0.0
        %2349 = vmatpush.msra.mxu0 0.0
        %2350 = vmatpush.msra.mxu0 0.0
        %2351 = vmatpush.msra.mxu0 0.0
        %2352 = vmatpush.msra.mxu0 0.0
        %2353 = vmatpush.msra.mxu0 %v2155
        %2354 = vmatpush.msra.mxu0 %v2153
        %2355 = vmatpush.msra.mxu0 %v2151
        %2356 = vmatpush.msra.mxu0 %v2149
        %2357 = vmatpush.msra.mxu0 %v2147
        %2358 = vmatpush.msra.mxu0 %v2145
        %2359 = vmatpush.msra.mxu0 %v2143
        %2360 = vmatpush.msra.mxu0 %v2141
        %2361 = vmatmul.f32.gmra.mxu0 %v2158
        %v2362 = vpop.f32.mrf.mxu0
        %v2363 = vadd.f32 %v2322, %v2362
        %2364 = vmatmul.f32.gmra.mxu0 %v2161
        %v2365 = vpop.f32.mrf.mxu0
        %v2366 = vadd.f32 %v2325, %v2365
        %2367 = vmatmul.f32.gmra.mxu0 %v2164
        %v2368 = vpop.f32.mrf.mxu0
        %v2369 = vadd.f32 %v2328, %v2368
        %2370 = vmatmul.f32.gmra.mxu0 %v2167
        %v2371 = vpop.f32.mrf.mxu0
        %v2372 = vadd.f32 %v2331, %v2371
        %2373 = vmatmul.f32.gmra.mxu0 %v2170
        %v2374 = vpop.f32.mrf.mxu0
        %v2375 = vadd.f32 %v2334, %v2374
        %2376 = vmatmul.f32.gmra.mxu0 %v2173
        %v2377 = vpop.f32.mrf.mxu0
        %v2378 = vadd.f32 %v2337, %v2377
        %2379 = vmatmul.f32.gmra.mxu0 %v2176
        %v2380 = vpop.f32.mrf.mxu0
        %v2381 = vadd.f32 %v2340, %v2380
        %2382 = vmatmul.f32.gmra.mxu0 %v2179
        %v2383 = vpop.f32.mrf.mxu0
        %v2384 = vadd.f32 %v2343, %v2383
        %2385 = vdwg.mxu0
        %2386 = vmatpush.msra.mxu0 %v2044
        %2387 = vmatpush.msra.mxu0 %v2042
        %2388 = vmatpush.msra.mxu0 %v2040
        %2389 = vmatpush.msra.mxu0 %v2038
        %2390 = vmatpush.msra.mxu0 %v2036
        %2391 = vmatpush.msra.mxu0 %v2034
        %2392 = vmatpush.msra.mxu0 %v2032
        %2393 = vmatpush.msra.mxu0 %v2030
        %2394 = vmatpush.msra.mxu0 %v2028
        %2395 = vmatpush.msra.mxu0 %v2026
        %2396 = vmatpush.msra.mxu0 %v2024
        %2397 = vmatpush.msra.mxu0 %v2022
        %2398 = vmatpush.msra.mxu0 %v2020
        %2399 = vmatpush.msra.mxu0 %v2018
        %2400 = vmatpush.msra.mxu0 %v2016
        %2401 = vmatpush.msra.mxu0 %v2014
        %2402 = vmatmul.f32.gmra.mxu0 %v1973
        %v2403 = vpop.f32.mrf.mxu0
        %v2404 = vadd.f32 0.0, %v2403
        %2405 = vmatmul.f32.gmra.mxu0 %v1978
        %v2406 = vpop.f32.mrf.mxu0
        %v2407 = vadd.f32 0.0, %v2406
        %2408 = vmatmul.f32.gmra.mxu0 %v1983
        %v2409 = vpop.f32.mrf.mxu0
        %v2410 = vadd.f32 0.0, %v2409
        %2411 = vmatmul.f32.gmra.mxu0 %v1988
        %v2412 = vpop.f32.mrf.mxu0
        %v2413 = vadd.f32 0.0, %v2412
        %2414 = vmatmul.f32.gmra.mxu0 %v1993
        %v2415 = vpop.f32.mrf.mxu0
        %v2416 = vadd.f32 0.0, %v2415
        %2417 = vmatmul.f32.gmra.mxu0 %v1998
        %v2418 = vpop.f32.mrf.mxu0
        %v2419 = vadd.f32 0.0, %v2418
        %2420 = vmatmul.f32.gmra.mxu0 %v2003
        %v2421 = vpop.f32.mrf.mxu0
        %v2422 = vadd.f32 0.0, %v2421
        %2423 = vmatmul.f32.gmra.mxu0 %v2008
        %v2424 = vpop.f32.mrf.mxu0
        %v2425 = vadd.f32 0.0, %v2424
        %2426 = vdwg.mxu0
        %2427 = vmatpush.msra.mxu0 %v2076
        %2428 = vmatpush.msra.mxu0 %v2074
        %2429 = vmatpush.msra.mxu0 %v2072
        %2430 = vmatpush.msra.mxu0 %v2070
        %2431 = vmatpush.msra.mxu0 %v2068
        %2432 = vmatpush.msra.mxu0 %v2066
        %2433 = vmatpush.msra.mxu0 %v2064
        %2434 = vmatpush.msra.mxu0 %v2062
        %2435 = vmatpush.msra.mxu0 %v2060
        %2436 = vmatpush.msra.mxu0 %v2058
        %2437 = vmatpush.msra.mxu0 %v2056
        %2438 = vmatpush.msra.mxu0 %v2054
        %2439 = vmatpush.msra.mxu0 %v2052
        %2440 = vmatpush.msra.mxu0 %v2050
        %2441 = vmatpush.msra.mxu0 %v2048
        %2442 = vmatpush.msra.mxu0 %v2046
        %2443 = vmatmul.f32.gmra.mxu0 %v1974
        %v2444 = vpop.f32.mrf.mxu0
        %v2445 = vadd.f32 %v2404, %v2444
        %2446 = vmatmul.f32.gmra.mxu0 %v1979
        %v2447 = vpop.f32.mrf.mxu0
        %v2448 = vadd.f32 %v2407, %v2447
        %2449 = vmatmul.f32.gmra.mxu0 %v1984
        %v2450 = vpop.f32.mrf.mxu0
        %v2451 = vadd.f32 %v2410, %v2450
        %2452 = vmatmul.f32.gmra.mxu0 %v1989
        %v2453 = vpop.f32.mrf.mxu0
        %v2454 = vadd.f32 %v2413, %v2453
        %2455 = vmatmul.f32.gmra.mxu0 %v1994
        %v2456 = vpop.f32.mrf.mxu0
        %v2457 = vadd.f32 %v2416, %v2456
        %2458 = vmatmul.f32.gmra.mxu0 %v1999
        %v2459 = vpop.f32.mrf.mxu0
        %v2460 = vadd.f32 %v2419, %v2459
        %2461 = vmatmul.f32.gmra.mxu0 %v2004
        %v2462 = vpop.f32.mrf.mxu0
        %v2463 = vadd.f32 %v2422, %v2462
        %2464 = vmatmul.f32.gmra.mxu0 %v2009
        %v2465 = vpop.f32.mrf.mxu0
        %v2466 = vadd.f32 %v2425, %v2465
        %2467 = vdwg.mxu0
        %2468 = vmatpush.msra.mxu0 %v2108
        %2469 = vmatpush.msra.mxu0 %v2106
        %2470 = vmatpush.msra.mxu0 %v2104
        %2471 = vmatpush.msra.mxu0 %v2102
        %2472 = vmatpush.msra.mxu0 %v2100
        %2473 = vmatpush.msra.mxu0 %v2098
        %2474 = vmatpush.msra.mxu0 %v2096
        %2475 = vmatpush.msra.mxu0 %v2094
        %2476 = vmatpush.msra.mxu0 %v2092
        %2477 = vmatpush.msra.mxu0 %v2090
        %2478 = vmatpush.msra.mxu0 %v2088
        %2479 = vmatpush.msra.mxu0 %v2086
        %2480 = vmatpush.msra.mxu0 %v2084
        %2481 = vmatpush.msra.mxu0 %v2082
        %2482 = vmatpush.msra.mxu0 %v2080
        %2483 = vmatpush.msra.mxu0 %v2078
        %2484 = vmatmul.f32.gmra.mxu0 %v1975
        %v2485 = vpop.f32.mrf.mxu0
        %v2486 = vadd.f32 %v2445, %v2485
        %2487 = vmatmul.f32.gmra.mxu0 %v1980
        %v2488 = vpop.f32.mrf.mxu0
        %v2489 = vadd.f32 %v2448, %v2488
        %2490 = vmatmul.f32.gmra.mxu0 %v1985
        %v2491 = vpop.f32.mrf.mxu0
        %v2492 = vadd.f32 %v2451, %v2491
        %2493 = vmatmul.f32.gmra.mxu0 %v1990
        %v2494 = vpop.f32.mrf.mxu0
        %v2495 = vadd.f32 %v2454, %v2494
        %2496 = vmatmul.f32.gmra.mxu0 %v1995
        %v2497 = vpop.f32.mrf.mxu0
        %v2498 = vadd.f32 %v2457, %v2497
        %2499 = vmatmul.f32.gmra.mxu0 %v2000
        %v2500 = vpop.f32.mrf.mxu0
        %v2501 = vadd.f32 %v2460, %v2500
        %2502 = vmatmul.f32.gmra.mxu0 %v2005
        %v2503 = vpop.f32.mrf.mxu0
        %v2504 = vadd.f32 %v2463, %v2503
        %2505 = vmatmul.f32.gmra.mxu0 %v2010
        %v2506 = vpop.f32.mrf.mxu0
        %v2507 = vadd.f32 %v2466, %v2506
        %2508 = vdwg.mxu0
        %2509 = vmatpush.msra.mxu0 %v2140
        %2510 = vmatpush.msra.mxu0 %v2138
        %2511 = vmatpush.msra.mxu0 %v2136
        %2512 = vmatpush.msra.mxu0 %v2134
        %2513 = vmatpush.msra.mxu0 %v2132
        %2514 = vmatpush.msra.mxu0 %v2130
        %2515 = vmatpush.msra.mxu0 %v2128
        %2516 = vmatpush.msra.mxu0 %v2126
        %2517 = vmatpush.msra.mxu0 %v2124
        %2518 = vmatpush.msra.mxu0 %v2122
        %2519 = vmatpush.msra.mxu0 %v2120
        %2520 = vmatpush.msra.mxu0 %v2118
        %2521 = vmatpush.msra.mxu0 %v2116
        %2522 = vmatpush.msra.mxu0 %v2114
        %2523 = vmatpush.msra.mxu0 %v2112
        %2524 = vmatpush.msra.mxu0 %v2110
        %2525 = vmatmul.f32.gmra.mxu0 %v1976
        %v2526 = vpop.f32.mrf.mxu0
        %v2527 = vadd.f32 %v2486, %v2526
        %2528 = vmatmul.f32.gmra.mxu0 %v1981
        %v2529 = vpop.f32.mrf.mxu0
        %v2530 = vadd.f32 %v2489, %v2529
        %2531 = vmatmul.f32.gmra.mxu0 %v1986
        %v2532 = vpop.f32.mrf.mxu0
        %v2533 = vadd.f32 %v2492, %v2532
        %2534 = vmatmul.f32.gmra.mxu0 %v1991
        %v2535 = vpop.f32.mrf.mxu0
        %v2536 = vadd.f32 %v2495, %v2535
        %2537 = vmatmul.f32.gmra.mxu0 %v1996
        %v2538 = vpop.f32.mrf.mxu0
        %v2539 = vadd.f32 %v2498, %v2538
        %2540 = vmatmul.f32.gmra.mxu0 %v2001
        %v2541 = vpop.f32.mrf.mxu0
        %v2542 = vadd.f32 %v2501, %v2541
        %2543 = vmatmul.f32.gmra.mxu0 %v2006
        %v2544 = vpop.f32.mrf.mxu0
        %v2545 = vadd.f32 %v2504, %v2544
        %2546 = vmatmul.f32.gmra.mxu0 %v2011
        %v2547 = vpop.f32.mrf.mxu0
        %v2548 = vadd.f32 %v2507, %v2547
        %2549 = vdwg.mxu0
        %2550 = vmatpush.msra.mxu0 0.0
        %2551 = vmatpush.msra.mxu0 0.0
        %2552 = vmatpush.msra.mxu0 0.0
        %2553 = vmatpush.msra.mxu0 0.0
        %2554 = vmatpush.msra.mxu0 0.0
        %2555 = vmatpush.msra.mxu0 0.0
        %2556 = vmatpush.msra.mxu0 0.0
        %2557 = vmatpush.msra.mxu0 0.0
        %2558 = vmatpush.msra.mxu0 %v2156
        %2559 = vmatpush.msra.mxu0 %v2154
        %2560 = vmatpush.msra.mxu0 %v2152
        %2561 = vmatpush.msra.mxu0 %v2150
        %2562 = vmatpush.msra.mxu0 %v2148
        %2563 = vmatpush.msra.mxu0 %v2146
        %2564 = vmatpush.msra.mxu0 %v2144
        %2565 = vmatpush.msra.mxu0 %v2142
        %2566 = vmatmul.f32.gmra.mxu0 %v2158
        %v2567 = vpop.f32.mrf.mxu0
        %v2568 = vadd.f32 %v2527, %v2567
        %2569 = vmatmul.f32.gmra.mxu0 %v2161
        %v2570 = vpop.f32.mrf.mxu0
        %v2571 = vadd.f32 %v2530, %v2570
        %2572 = vmatmul.f32.gmra.mxu0 %v2164
        %v2573 = vpop.f32.mrf.mxu0
        %v2574 = vadd.f32 %v2533, %v2573
        %2575 = vmatmul.f32.gmra.mxu0 %v2167
        %v2576 = vpop.f32.mrf.mxu0
        %v2577 = vadd.f32 %v2536, %v2576
        %2578 = vmatmul.f32.gmra.mxu0 %v2170
        %v2579 = vpop.f32.mrf.mxu0
        %v2580 = vadd.f32 %v2539, %v2579
        %2581 = vmatmul.f32.gmra.mxu0 %v2173
        %v2582 = vpop.f32.mrf.mxu0
        %v2583 = vadd.f32 %v2542, %v2582
        %2584 = vmatmul.f32.gmra.mxu0 %v2176
        %v2585 = vpop.f32.mrf.mxu0
        %v2586 = vadd.f32 %v2545, %v2585
        %2587 = vmatmul.f32.gmra.mxu0 %v2179
        %v2588 = vpop.f32.mrf.mxu0
        %v2589 = vadd.f32 %v2548, %v2588
        %2590 = vdwg.mxu0
        %vm2591 = vcmp.ge.f32.partialorder %v2363, 0.0
        %vm2592 = vcmp.ge.f32.partialorder %v2568, 0.0
        %vm2593 = vcmp.ge.f32.partialorder %v2366, 0.0
        %vm2594 = vcmp.ge.f32.partialorder %v2571, 0.0
        %vm2595 = vcmp.ge.f32.partialorder %v2369, 0.0
        %vm2596 = vcmp.ge.f32.partialorder %v2574, 0.0
        %vm2597 = vcmp.ge.f32.partialorder %v2372, 0.0
        %vm2598 = vcmp.ge.f32.partialorder %v2577, 0.0
        %vm2599 = vcmp.ge.f32.partialorder %v2375, 0.0
        %vm2600 = vcmp.ge.f32.partialorder %v2580, 0.0
        %vm2601 = vcmp.ge.f32.partialorder %v2378, 0.0
        %vm2602 = vcmp.ge.f32.partialorder %v2583, 0.0
        %vm2603 = vcmp.ge.f32.partialorder %v2381, 0.0
        %vm2604 = vcmp.ge.f32.partialorder %v2586, 0.0
        %vm2605 = vcmp.ge.f32.partialorder %v2384, 0.0
        %vm2606 = vcmp.ge.f32.partialorder %v2589, 0.0
        %v2607 = vmul.f32 %v2363, 0.1
        %v2608 = vmul.f32 %v2568, 0.1
        %v2609 = vmul.f32 %v2366, 0.1
        %v2610 = vmul.f32 %v2571, 0.1
        %v2611 = vmul.f32 %v2369, 0.1
        %v2612 = vmul.f32 %v2574, 0.1
        %v2613 = vmul.f32 %v2372, 0.1
        %v2614 = vmul.f32 %v2577, 0.1
        %v2615 = vmul.f32 %v2375, 0.1
        %v2616 = vmul.f32 %v2580, 0.1
        %v2617 = vmul.f32 %v2378, 0.1
        %v2618 = vmul.f32 %v2583, 0.1
        %v2619 = vmul.f32 %v2381, 0.1
        %v2620 = vmul.f32 %v2586, 0.1
        %v2621 = vmul.f32 %v2384, 0.1
        %v2622 = vmul.f32 %v2589, 0.1
        %v2623 = vsel %vm2591, %v2363, %v2607
        %v2624 = vsel %vm2592, %v2568, %v2608
        %v2625 = vsel %vm2593, %v2366, %v2609
        %v2626 = vsel %vm2594, %v2571, %v2610
        %v2627 = vsel %vm2595, %v2369, %v2611
        %v2628 = vsel %vm2596, %v2574, %v2612
        %v2629 = vsel %vm2597, %v2372, %v2613
        %v2630 = vsel %vm2598, %v2577, %v2614
        %v2631 = vsel %vm2599, %v2375, %v2615
        %v2632 = vsel %vm2600, %v2580, %v2616
        %v2633 = vsel %vm2601, %v2378, %v2617
        %v2634 = vsel %vm2602, %v2583, %v2618
        %v2635 = vsel %vm2603, %v2381, %v2619
        %v2636 = vsel %vm2604, %v2586, %v2620
        %v2637 = vsel %vm2605, %v2384, %v2621
        %v2638 = vsel %vm2606, %v2589, %v2622
        %v2639 = vld [vmem:[#allocation15] sm:$0xff]
        %v2640 = vld [vmem:[#allocation15 + $0x8] sm:$0xff]
        %v2641 = vld [vmem:[#allocation15 + $0x10] sm:$0xff]
        %v2642 = vld [vmem:[#allocation15 + $0x18] sm:$0xff]
        %2647 = vrot.lane.b32.xlu0 %v2623, 51
        %v2648 = vpop.permute.xlu0 %2647
        %2649 = vrot.lane.b32.xlu0 %v2624, 51
        %v2650 = vpop.permute.xlu0 %2649
        %2651 = vrot.lane.b32.xlu0 %v2625, 51
        %v2652 = vpop.permute.xlu0 %2651
        %2653 = vrot.lane.b32.xlu0 %v2626, 51
        %v2654 = vpop.permute.xlu0 %2653
        %v2655 = vsel %vm420, %v2648, %v2650
        %v2656 = vsel %vm420, %v2652, %v2654
        %vm2663 = vcmask 1047960
        %2664 = vst.msk [vmem:[#allocation4] sm:$0xff] %vm2663, %v2648
        %2665 = vst [vmem:[#allocation4 + $0x8] sm:$0xff] %v2655
        %2666 = vst.msk [vmem:[#allocation4 + $0x10] sm:$0xff] %vm420, %v2650
        %2667 = vst.msk [vmem:[#allocation4 + $0x18] sm:$0xff] %vm2663, %v2652
        %2668 = vst [vmem:[#allocation4 + $0x20] sm:$0xff] %v2656
        %2669 = vst.msk [vmem:[#allocation4 + $0x28] sm:$0xff] %vm420, %v2654
        %2674 = vrot.lane.b32.xlu0 %v2631, 51
        %v2675 = vpop.permute.xlu0 %2674
        %2676 = vrot.lane.b32.xlu0 %v2632, 51
        %v2677 = vpop.permute.xlu0 %2676
        %2678 = vrot.lane.b32.xlu0 %v2633, 51
        %v2679 = vpop.permute.xlu0 %2678
        %2680 = vrot.lane.b32.xlu0 %v2634, 51
        %v2681 = vpop.permute.xlu0 %2680
        %v2682 = vsel %vm420, %v2675, %v2677
        %v2683 = vsel %vm420, %v2679, %v2681
        %2690 = vst.msk [vmem:[#allocation4 + $0x30] sm:$0xff] %vm2663, %v2675
        %2691 = vst [vmem:[#allocation4 + $0x38] sm:$0xff] %v2682
        %2692 = vst.msk [vmem:[#allocation4 + $0x40] sm:$0xff] %vm420, %v2677
        %2693 = vst.msk [vmem:[#allocation4 + $0x48] sm:$0xff] %vm2663, %v2679
        %2694 = vst [vmem:[#allocation4 + $0x50] sm:$0xff] %v2683
        %2695 = vst.msk [vmem:[#allocation4 + $0x58] sm:$0xff] %vm420, %v2681
        %2700 = vrot.lane.b32.xlu0 %v2627, 85
        %v2701 = vpop.permute.xlu0 %2700
        %2702 = vrot.lane.b32.xlu0 %v2628, 85
        %v2703 = vpop.permute.xlu0 %2702
        %2704 = vrot.lane.b32.xlu0 %v2629, 85
        %v2705 = vpop.permute.xlu0 %2704
        %2706 = vrot.lane.b32.xlu0 %v2630, 85
        %v2707 = vpop.permute.xlu0 %2706
        %v2708 = vsel %vm430, %v2701, %v2703
        %v2709 = vsel %vm430, %v2705, %v2707
        %2716 = vst.msk [vmem:[#allocation5] sm:$0xff] %vm435, %v2701
        %2717 = vst [vmem:[#allocation5 + $0x8] sm:$0xff] %v2708
        %2718 = vst.msk [vmem:[#allocation5 + $0x10] sm:$0xff] %vm430, %v2703
        %2719 = vst.msk [vmem:[#allocation5 + $0x20] sm:$0xff] %vm435, %v2705
        %2720 = vst [vmem:[#allocation5 + $0x28] sm:$0xff] %v2709
        %2721 = vst.msk [vmem:[#allocation5 + $0x30] sm:$0xff] %vm430, %v2707
        %2726 = vrot.lane.b32.xlu0 %v2635, 85
        %v2727 = vpop.permute.xlu0 %2726
        %2728 = vrot.lane.b32.xlu0 %v2636, 85
        %v2729 = vpop.permute.xlu0 %2728
        %2730 = vrot.lane.b32.xlu0 %v2637, 85
        %v2731 = vpop.permute.xlu0 %2730
        %2732 = vrot.lane.b32.xlu0 %v2638, 85
        %v2733 = vpop.permute.xlu0 %2732
        %v2734 = vsel %vm430, %v2727, %v2729
        %v2735 = vsel %vm430, %v2731, %v2733
        %2742 = vst.msk [vmem:[#allocation5 + $0x40] sm:$0xff] %vm435, %v2727
        %2743 = vst [vmem:[#allocation5 + $0x48] sm:$0xff] %v2734
        %2744 = vst.msk [vmem:[#allocation5 + $0x50] sm:$0xff] %vm430, %v2729
        %2745 = vst.msk [vmem:[#allocation5 + $0x60] sm:$0xff] %vm435, %v2731
        %2746 = vst [vmem:[#allocation5 + $0x68] sm:$0xff] %v2735
        %2747 = vst.msk [vmem:[#allocation5 + $0x70] sm:$0xff] %vm430, %v2733
        %v2748 = vld [vmem:[#allocation4] sm:$0xff]
        %v2749 = vld [vmem:[#allocation4 + $0x8] sm:$0xff]
        %v2750 = vld [vmem:[#allocation4 + $0x18] sm:$0xff]
        %v2751 = vld [vmem:[#allocation4 + $0x20] sm:$0xff]
        %v2752 = vld [vmem:[#allocation4 + $0x30] sm:$0xff]
        %v2753 = vld [vmem:[#allocation4 + $0x38] sm:$0xff]
        %v2754 = vld [vmem:[#allocation4 + $0x48] sm:$0xff]
        %v2755 = vld [vmem:[#allocation4 + $0x50] sm:$0xff]
        %vm2756 = vcmp.ge.s32.totalorder %v390, 3
        %vm2757 = vcmp.ge.s32.totalorder %v391, 3
        %v2758 = vsel %vm2756, 1, 0
        %v2759 = vsel %vm2757, 1, 0
        %vm2760 = vcmp.eq.s32.totalorder %v2758, 1
        %vm2761 = vcmp.eq.s32.totalorder %v2759, 1
        %v2762 = vsel %vm2760, %v2748, 0.0
        %v2763 = vsel %vm2761, %v2749, 0.0
        %v2764 = vsel %vm2760, %v2750, 0.0
        %v2765 = vsel %vm2761, %v2751, 0.0
        %v2766 = vsel %vm2760, %v2752, 0.0
        %v2767 = vsel %vm2761, %v2753, 0.0
        %v2768 = vsel %vm2760, %v2754, 0.0
        %v2769 = vsel %vm2761, %v2755, 0.0
        %2770 = vst [vmem:[#allocation8] sm:$0xff] %v2762
        %2771 = vst [vmem:[#allocation8 + $0x8] sm:$0xff] %v2763
        %2772 = vst [vmem:[#allocation8 + $0x10] sm:$0xff] %v2764
        %2773 = vst [vmem:[#allocation8 + $0x18] sm:$0xff] %v2765
        %2774 = vst [vmem:[#allocation8 + $0x20] sm:$0xff] %v2766
        %2775 = vst [vmem:[#allocation8 + $0x28] sm:$0xff] %v2767
        %2776 = vst [vmem:[#allocation8 + $0x30] sm:$0xff] %v2768
        %2777 = vst [vmem:[#allocation8 + $0x38] sm:$0xff] %v2769
        %v2778 = vld [vmem:[#allocation4] sm:$0xff]
        %v2779 = vld [vmem:[#allocation4 + $0x8] sm:$0xff]
        %v2780 = vld [vmem:[#allocation4 + $0x10] sm:$0xff]
        %v2781 = vld [vmem:[#allocation4 + $0x18] sm:$0xff]
        %v2782 = vld [vmem:[#allocation4 + $0x20] sm:$0xff]
        %v2783 = vld [vmem:[#allocation4 + $0x28] sm:$0xff]
        %v2784 = vld [vmem:[#allocation4 + $0x30] sm:$0xff]
        %v2785 = vld [vmem:[#allocation4 + $0x38] sm:$0xff]
        %v2786 = vld [vmem:[#allocation4 + $0x40] sm:$0xff]
        %v2787 = vld [vmem:[#allocation4 + $0x48] sm:$0xff]
        %v2788 = vld [vmem:[#allocation4 + $0x50] sm:$0xff]
        %v2789 = vld [vmem:[#allocation4 + $0x58] sm:$0xff]
        %2802 = vrot.lane.b32.xlu0 %v2778, 125
        %v2803 = vpop.permute.xlu0 %2802
        %2804 = vrot.lane.b32.xlu0 %v2779, 125
        %v2805 = vpop.permute.xlu0 %2804
        %2806 = vrot.lane.b32.xlu0 %v2780, 125
        %v2807 = vpop.permute.xlu0 %2806
        %2808 = vrot.lane.b32.xlu0 %v2781, 125
        %v2809 = vpop.permute.xlu0 %2808
        %2810 = vrot.lane.b32.xlu0 %v2782, 125
        %v2811 = vpop.permute.xlu0 %2810
        %2812 = vrot.lane.b32.xlu0 %v2783, 125
        %v2813 = vpop.permute.xlu0 %2812
        %2814 = vrot.lane.b32.xlu0 %v2784, 125
        %v2815 = vpop.permute.xlu0 %2814
        %2816 = vrot.lane.b32.xlu0 %v2785, 125
        %v2817 = vpop.permute.xlu0 %2816
        %2818 = vrot.lane.b32.xlu0 %v2786, 125
        %v2819 = vpop.permute.xlu0 %2818
        %2820 = vrot.lane.b32.xlu0 %v2787, 125
        %v2821 = vpop.permute.xlu0 %2820
        %2822 = vrot.lane.b32.xlu0 %v2788, 125
        %v2823 = vpop.permute.xlu0 %2822
        %2824 = vrot.lane.b32.xlu0 %v2789, 125
        %v2825 = vpop.permute.xlu0 %2824
        %vm2826 = vcmask 1022976
        %v2827 = vsel %vm2826, %v2803, %v2805
        %v2828 = vsel %vm2826, %v2805, %v2807
        %v2829 = vsel %vm2826, %v2809, %v2811
        %v2830 = vsel %vm2826, %v2811, %v2813
        %v2831 = vsel %vm2826, %v2815, %v2817
        %v2832 = vsel %vm2826, %v2817, %v2819
        %v2833 = vsel %vm2826, %v2821, %v2823
        %v2834 = vsel %vm2826, %v2823, %v2825
        %2843 = vst [vmem:[#allocation8 + $0x40] sm:$0xff] %v2827
        %2844 = vst [vmem:[#allocation8 + $0x48] sm:$0xff] %v2828
        %2845 = vst [vmem:[#allocation8 + $0x50] sm:$0xff] %v2829
        %2846 = vst [vmem:[#allocation8 + $0x58] sm:$0xff] %v2830
        %2847 = vst [vmem:[#allocation8 + $0x60] sm:$0xff] %v2831
        %2848 = vst [vmem:[#allocation8 + $0x68] sm:$0xff] %v2832
        %2849 = vst [vmem:[#allocation8 + $0x70] sm:$0xff] %v2833
        %2850 = vst [vmem:[#allocation8 + $0x78] sm:$0xff] %v2834
        %v2851 = vld [vmem:[#allocation4] sm:$0xff]
        %v2852 = vld [vmem:[#allocation4 + $0x8] sm:$0xff]
        %v2853 = vld [vmem:[#allocation4 + $0x10] sm:$0xff]
        %v2854 = vld [vmem:[#allocation4 + $0x18] sm:$0xff]
        %v2855 = vld [vmem:[#allocation4 + $0x20] sm:$0xff]
        %v2856 = vld [vmem:[#allocation4 + $0x28] sm:$0xff]
        %v2857 = vld [vmem:[#allocation4 + $0x30] sm:$0xff]
        %v2858 = vld [vmem:[#allocation4 + $0x38] sm:$0xff]
        %v2859 = vld [vmem:[#allocation4 + $0x40] sm:$0xff]
        %v2860 = vld [vmem:[#allocation4 + $0x48] sm:$0xff]
        %v2861 = vld [vmem:[#allocation4 + $0x50] sm:$0xff]
        %v2862 = vld [vmem:[#allocation4 + $0x58] sm:$0xff]
        %vm2863 = vcmp.lt.s32.totalorder %v390, 13
        %vm2864 = vcmp.lt.s32.totalorder %v391, 13
        %v2865 = vsel %vm2863, 1, 0
        %v2866 = vsel %vm2864, 1, 0
        %vm2867 = vcmp.eq.s32.totalorder %v2865, 1
        %vm2868 = vcmp.eq.s32.totalorder %v2866, 1
        %2881 = vrot.lane.b32.xlu0 %v2851, 122
        %v2882 = vpop.permute.xlu0 %2881
        %2883 = vrot.lane.b32.xlu0 %v2852, 122
        %v2884 = vpop.permute.xlu0 %2883
        %2885 = vrot.lane.b32.xlu0 %v2853, 122
        %v2886 = vpop.permute.xlu0 %2885
        %2887 = vrot.lane.b32.xlu0 %v2854, 122
        %v2888 = vpop.permute.xlu0 %2887
        %2889 = vrot.lane.b32.xlu0 %v2855, 122
        %v2890 = vpop.permute.xlu0 %2889
        %2891 = vrot.lane.b32.xlu0 %v2856, 122
        %v2892 = vpop.permute.xlu0 %2891
        %2893 = vrot.lane.b32.xlu0 %v2857, 122
        %v2894 = vpop.permute.xlu0 %2893
        %2895 = vrot.lane.b32.xlu0 %v2858, 122
        %v2896 = vpop.permute.xlu0 %2895
        %2897 = vrot.lane.b32.xlu0 %v2859, 122
        %v2898 = vpop.permute.xlu0 %2897
        %2899 = vrot.lane.b32.xlu0 %v2860, 122
        %v2900 = vpop.permute.xlu0 %2899
        %2901 = vrot.lane.b32.xlu0 %v2861, 122
        %v2902 = vpop.permute.xlu0 %2901
        %2903 = vrot.lane.b32.xlu0 %v2862, 122
        %v2904 = vpop.permute.xlu0 %2903
        %vm2905 = vcmask 998400
        %v2906 = vsel %vm2905, %v2882, %v2884
        %v2907 = vsel %vm2905, %v2884, %v2886
        %v2908 = vsel %vm2905, %v2888, %v2890
        %v2909 = vsel %vm2905, %v2890, %v2892
        %v2910 = vsel %vm2905, %v2894, %v2896
        %v2911 = vsel %vm2905, %v2896, %v2898
        %v2912 = vsel %vm2905, %v2900, %v2902
        %v2913 = vsel %vm2905, %v2902, %v2904
        %v2922 = vsel %vm2867, %v2906, 0.0
        %v2923 = vsel %vm2868, %v2907, 0.0
        %v2924 = vsel %vm2867, %v2908, 0.0
        %v2925 = vsel %vm2868, %v2909, 0.0
        %v2926 = vsel %vm2867, %v2910, 0.0
        %v2927 = vsel %vm2868, %v2911, 0.0
        %v2928 = vsel %vm2867, %v2912, 0.0
        %v2929 = vsel %vm2868, %v2913, 0.0
        %2930 = vst [vmem:[#allocation8 + $0x80] sm:$0xff] %v2922
        %2931 = vst [vmem:[#allocation8 + $0x88] sm:$0xff] %v2923
        %2932 = vst [vmem:[#allocation8 + $0x90] sm:$0xff] %v2924
        %2933 = vst [vmem:[#allocation8 + $0x98] sm:$0xff] %v2925
        %2934 = vst [vmem:[#allocation8 + $0xa0] sm:$0xff] %v2926
        %2935 = vst [vmem:[#allocation8 + $0xa8] sm:$0xff] %v2927
        %2936 = vst [vmem:[#allocation8 + $0xb0] sm:$0xff] %v2928
        %2937 = vst [vmem:[#allocation8 + $0xb8] sm:$0xff] %v2929
        %v2938 = vld [vmem:[#allocation4] sm:$0xff]
        %v2939 = vld [vmem:[#allocation4 + $0x8] sm:$0xff]
        %v2940 = vld [vmem:[#allocation4 + $0x10] sm:$0xff]
        %v2941 = vld [vmem:[#allocation4 + $0x18] sm:$0xff]
        %v2942 = vld [vmem:[#allocation4 + $0x20] sm:$0xff]
        %v2943 = vld [vmem:[#allocation4 + $0x28] sm:$0xff]
        %v2944 = vld [vmem:[#allocation4 + $0x30] sm:$0xff]
        %v2945 = vld [vmem:[#allocation4 + $0x38] sm:$0xff]
        %v2946 = vld [vmem:[#allocation4 + $0x40] sm:$0xff]
        %v2947 = vld [vmem:[#allocation4 + $0x48] sm:$0xff]
        %v2948 = vld [vmem:[#allocation4 + $0x50] sm:$0xff]
        %v2949 = vld [vmem:[#allocation4 + $0x58] sm:$0xff]
        %2962 = vrot.lane.b32.xlu0 %v2938, 80
        %v2963 = vpop.permute.xlu0 %2962
        %2964 = vrot.lane.b32.xlu0 %v2939, 80
        %v2965 = vpop.permute.xlu0 %2964
        %2966 = vrot.lane.b32.xlu0 %v2940, 80
        %v2967 = vpop.permute.xlu0 %2966
        %2968 = vrot.lane.b32.xlu0 %v2941, 80
        %v2969 = vpop.permute.xlu0 %2968
        %2970 = vrot.lane.b32.xlu0 %v2942, 80
        %v2971 = vpop.permute.xlu0 %2970
        %2972 = vrot.lane.b32.xlu0 %v2943, 80
        %v2973 = vpop.permute.xlu0 %2972
        %2974 = vrot.lane.b32.xlu0 %v2944, 80
        %v2975 = vpop.permute.xlu0 %2974
        %2976 = vrot.lane.b32.xlu0 %v2945, 80
        %v2977 = vpop.permute.xlu0 %2976
        %2978 = vrot.lane.b32.xlu0 %v2946, 80
        %v2979 = vpop.permute.xlu0 %2978
        %2980 = vrot.lane.b32.xlu0 %v2947, 80
        %v2981 = vpop.permute.xlu0 %2980
        %2982 = vrot.lane.b32.xlu0 %v2948, 80
        %v2983 = vpop.permute.xlu0 %2982
        %2984 = vrot.lane.b32.xlu0 %v2949, 80
        %v2985 = vpop.permute.xlu0 %2984
        %vm2986 = vcmask 654336
        %v2987 = vsel %vm2986, %v2963, %v2965
        %v2988 = vsel %vm2986, %v2965, %v2967
        %v2989 = vsel %vm2986, %v2969, %v2971
        %v2990 = vsel %vm2986, %v2971, %v2973
        %v2991 = vsel %vm2986, %v2975, %v2977
        %v2992 = vsel %vm2986, %v2977, %v2979
        %v2993 = vsel %vm2986, %v2981, %v2983
        %v2994 = vsel %vm2986, %v2983, %v2985
        %v3003 = vsel %vm2760, %v2987, 0.0
        %v3004 = vsel %vm2761, %v2988, 0.0
        %v3005 = vsel %vm2760, %v2989, 0.0
        %v3006 = vsel %vm2761, %v2990, 0.0
        %v3007 = vsel %vm2760, %v2991, 0.0
        %v3008 = vsel %vm2761, %v2992, 0.0
        %v3009 = vsel %vm2760, %v2993, 0.0
        %v3010 = vsel %vm2761, %v2994, 0.0
        %3011 = vst [vmem:[#allocation8 + $0xc0] sm:$0xff] %v3003
        %3012 = vst [vmem:[#allocation8 + $0xc8] sm:$0xff] %v3004
        %3013 = vst [vmem:[#allocation8 + $0xd0] sm:$0xff] %v3005
        %3014 = vst [vmem:[#allocation8 + $0xd8] sm:$0xff] %v3006
        %3015 = vst [vmem:[#allocation8 + $0xe0] sm:$0xff] %v3007
        %3016 = vst [vmem:[#allocation8 + $0xe8] sm:$0xff] %v3008
        %3017 = vst [vmem:[#allocation8 + $0xf0] sm:$0xff] %v3009
        %3018 = vst [vmem:[#allocation8 + $0xf8] sm:$0xff] %v3010
        %v3019 = vld [vmem:[#allocation4] sm:$0xff]
        %v3020 = vld [vmem:[#allocation4 + $0x8] sm:$0xff]
        %v3021 = vld [vmem:[#allocation4 + $0x10] sm:$0xff]
        %v3022 = vld [vmem:[#allocation4 + $0x18] sm:$0xff]
        %v3023 = vld [vmem:[#allocation4 + $0x20] sm:$0xff]
        %v3024 = vld [vmem:[#allocation4 + $0x28] sm:$0xff]
        %v3025 = vld [vmem:[#allocation4 + $0x30] sm:$0xff]
        %v3026 = vld [vmem:[#allocation4 + $0x38] sm:$0xff]
        %v3027 = vld [vmem:[#allocation4 + $0x40] sm:$0xff]
        %v3028 = vld [vmem:[#allocation4 + $0x48] sm:$0xff]
        %v3029 = vld [vmem:[#allocation4 + $0x50] sm:$0xff]
        %v3030 = vld [vmem:[#allocation4 + $0x58] sm:$0xff]
        %3043 = vrot.lane.b32.xlu0 %v3019, 77
        %v3044 = vpop.permute.xlu0 %3043
        %3045 = vrot.lane.b32.xlu0 %v3020, 77
        %v3046 = vpop.permute.xlu0 %3045
        %3047 = vrot.lane.b32.xlu0 %v3021, 77
        %v3048 = vpop.permute.xlu0 %3047
        %3049 = vrot.lane.b32.xlu0 %v3022, 77
        %v3050 = vpop.permute.xlu0 %3049
        %3051 = vrot.lane.b32.xlu0 %v3023, 77
        %v3052 = vpop.permute.xlu0 %3051
        %3053 = vrot.lane.b32.xlu0 %v3024, 77
        %v3054 = vpop.permute.xlu0 %3053
        %3055 = vrot.lane.b32.xlu0 %v3025, 77
        %v3056 = vpop.permute.xlu0 %3055
        %3057 = vrot.lane.b32.xlu0 %v3026, 77
        %v3058 = vpop.permute.xlu0 %3057
        %3059 = vrot.lane.b32.xlu0 %v3027, 77
        %v3060 = vpop.permute.xlu0 %3059
        %3061 = vrot.lane.b32.xlu0 %v3028, 77
        %v3062 = vpop.permute.xlu0 %3061
        %3063 = vrot.lane.b32.xlu0 %v3029, 77
        %v3064 = vpop.permute.xlu0 %3063
        %3065 = vrot.lane.b32.xlu0 %v3030, 77
        %v3066 = vpop.permute.xlu0 %3065
        %vm3067 = vcmask 629760
        %v3068 = vsel %vm3067, %v3044, %v3046
        %v3069 = vsel %vm3067, %v3046, %v3048
        %v3070 = vsel %vm3067, %v3050, %v3052
        %v3071 = vsel %vm3067, %v3052, %v3054
        %v3072 = vsel %vm3067, %v3056, %v3058
        %v3073 = vsel %vm3067, %v3058, %v3060
        %v3074 = vsel %vm3067, %v3062, %v3064
        %v3075 = vsel %vm3067, %v3064, %v3066
        %3084 = vst [vmem:[#allocation8 + $0x100] sm:$0xff] %v3068
        %3085 = vst [vmem:[#allocation8 + $0x108] sm:$0xff] %v3069
        %3086 = vst [vmem:[#allocation8 + $0x110] sm:$0xff] %v3070
        %3087 = vst [vmem:[#allocation8 + $0x118] sm:$0xff] %v3071
        %3088 = vst [vmem:[#allocation8 + $0x120] sm:$0xff] %v3072
        %3089 = vst [vmem:[#allocation8 + $0x128] sm:$0xff] %v3073
        %3090 = vst [vmem:[#allocation8 + $0x130] sm:$0xff] %v3074
        %3091 = vst [vmem:[#allocation8 + $0x138] sm:$0xff] %v3075
        %v3092 = vld [vmem:[#allocation4] sm:$0xff]
        %v3093 = vld [vmem:[#allocation4 + $0x8] sm:$0xff]
        %v3094 = vld [vmem:[#allocation4 + $0x10] sm:$0xff]
        %v3095 = vld [vmem:[#allocation4 + $0x18] sm:$0xff]
        %v3096 = vld [vmem:[#allocation4 + $0x20] sm:$0xff]
        %v3097 = vld [vmem:[#allocation4 + $0x28] sm:$0xff]
        %v3098 = vld [vmem:[#allocation4 + $0x30] sm:$0xff]
        %v3099 = vld [vmem:[#allocation4 + $0x38] sm:$0xff]
        %v3100 = vld [vmem:[#allocation4 + $0x40] sm:$0xff]
        %v3101 = vld [vmem:[#allocation4 + $0x48] sm:$0xff]
        %v3102 = vld [vmem:[#allocation4 + $0x50] sm:$0xff]
        %v3103 = vld [vmem:[#allocation4 + $0x58] sm:$0xff]
        %3116 = vrot.lane.b32.xlu0 %v3092, 74
        %v3117 = vpop.permute.xlu0 %3116
        %3118 = vrot.lane.b32.xlu0 %v3093, 74
        %v3119 = vpop.permute.xlu0 %3118
        %3120 = vrot.lane.b32.xlu0 %v3094, 74
        %v3121 = vpop.permute.xlu0 %3120
        %3122 = vrot.lane.b32.xlu0 %v3095, 74
        %v3123 = vpop.permute.xlu0 %3122
        %3124 = vrot.lane.b32.xlu0 %v3096, 74
        %v3125 = vpop.permute.xlu0 %3124
        %3126 = vrot.lane.b32.xlu0 %v3097, 74
        %v3127 = vpop.permute.xlu0 %3126
        %3128 = vrot.lane.b32.xlu0 %v3098, 74
        %v3129 = vpop.permute.xlu0 %3128
        %3130 = vrot.lane.b32.xlu0 %v3099, 74
        %v3131 = vpop.permute.xlu0 %3130
        %3132 = vrot.lane.b32.xlu0 %v3100, 74
        %v3133 = vpop.permute.xlu0 %3132
        %3134 = vrot.lane.b32.xlu0 %v3101, 74
        %v3135 = vpop.permute.xlu0 %3134
        %3136 = vrot.lane.b32.xlu0 %v3102, 74
        %v3137 = vpop.permute.xlu0 %3136
        %3138 = vrot.lane.b32.xlu0 %v3103, 74
        %v3139 = vpop.permute.xlu0 %3138
        %vm3140 = vcmask 605184
        %v3141 = vsel %vm3140, %v3117, %v3119
        %v3142 = vsel %vm3140, %v3119, %v3121
        %v3143 = vsel %vm3140, %v3123, %v3125
        %v3144 = vsel %vm3140, %v3125, %v3127
        %v3145 = vsel %vm3140, %v3129, %v3131
        %v3146 = vsel %vm3140, %v3131, %v3133
        %v3147 = vsel %vm3140, %v3135, %v3137
        %v3148 = vsel %vm3140, %v3137, %v3139
        %v3157 = vsel %vm2867, %v3141, 0.0
        %v3158 = vsel %vm2868, %v3142, 0.0
        %v3159 = vsel %vm2867, %v3143, 0.0
        %v3160 = vsel %vm2868, %v3144, 0.0
        %v3161 = vsel %vm2867, %v3145, 0.0
        %v3162 = vsel %vm2868, %v3146, 0.0
        %v3163 = vsel %vm2867, %v3147, 0.0
        %v3164 = vsel %vm2868, %v3148, 0.0
        %3165 = vst [vmem:[#allocation8 + $0x140] sm:$0xff] %v3157
        %3166 = vst [vmem:[#allocation8 + $0x148] sm:$0xff] %v3158
        %3167 = vst [vmem:[#allocation8 + $0x150] sm:$0xff] %v3159
        %3168 = vst [vmem:[#allocation8 + $0x158] sm:$0xff] %v3160
        %3169 = vst [vmem:[#allocation8 + $0x160] sm:$0xff] %v3161
        %3170 = vst [vmem:[#allocation8 + $0x168] sm:$0xff] %v3162
        %3171 = vst [vmem:[#allocation8 + $0x170] sm:$0xff] %v3163
        %3172 = vst [vmem:[#allocation8 + $0x178] sm:$0xff] %v3164
        %v3173 = vld [vmem:[#allocation4] sm:$0xff]
        %v3174 = vld [vmem:[#allocation4 + $0x8] sm:$0xff]
        %v3175 = vld [vmem:[#allocation4 + $0x10] sm:$0xff]
        %v3176 = vld [vmem:[#allocation4 + $0x18] sm:$0xff]
        %v3177 = vld [vmem:[#allocation4 + $0x20] sm:$0xff]
        %v3178 = vld [vmem:[#allocation4 + $0x28] sm:$0xff]
        %v3179 = vld [vmem:[#allocation4 + $0x30] sm:$0xff]
        %v3180 = vld [vmem:[#allocation4 + $0x38] sm:$0xff]
        %v3181 = vld [vmem:[#allocation4 + $0x40] sm:$0xff]
        %v3182 = vld [vmem:[#allocation4 + $0x48] sm:$0xff]
        %v3183 = vld [vmem:[#allocation4 + $0x50] sm:$0xff]
        %v3184 = vld [vmem:[#allocation4 + $0x58] sm:$0xff]
        %3197 = vrot.lane.b32.xlu0 %v3173, 32
        %v3198 = vpop.permute.xlu0 %3197
        %3199 = vrot.lane.b32.xlu0 %v3174, 32
        %v3200 = vpop.permute.xlu0 %3199
        %3201 = vrot.lane.b32.xlu0 %v3175, 32
        %v3202 = vpop.permute.xlu0 %3201
        %3203 = vrot.lane.b32.xlu0 %v3176, 32
        %v3204 = vpop.permute.xlu0 %3203
        %3205 = vrot.lane.b32.xlu0 %v3177, 32
        %v3206 = vpop.permute.xlu0 %3205
        %3207 = vrot.lane.b32.xlu0 %v3178, 32
        %v3208 = vpop.permute.xlu0 %3207
        %3209 = vrot.lane.b32.xlu0 %v3179, 32
        %v3210 = vpop.permute.xlu0 %3209
        %3211 = vrot.lane.b32.xlu0 %v3180, 32
        %v3212 = vpop.permute.xlu0 %3211
        %3213 = vrot.lane.b32.xlu0 %v3181, 32
        %v3214 = vpop.permute.xlu0 %3213
        %3215 = vrot.lane.b32.xlu0 %v3182, 32
        %v3216 = vpop.permute.xlu0 %3215
        %3217 = vrot.lane.b32.xlu0 %v3183, 32
        %v3218 = vpop.permute.xlu0 %3217
        %3219 = vrot.lane.b32.xlu0 %v3184, 32
        %v3220 = vpop.permute.xlu0 %3219
        %v3221 = vsel %vm461, %v3198, %v3200
        %v3222 = vsel %vm461, %v3200, %v3202
        %v3223 = vsel %vm461, %v3204, %v3206
        %v3224 = vsel %vm461, %v3206, %v3208
        %v3225 = vsel %vm461, %v3210, %v3212
        %v3226 = vsel %vm461, %v3212, %v3214
        %v3227 = vsel %vm461, %v3216, %v3218
        %v3228 = vsel %vm461, %v3218, %v3220
        %v3237 = vsel %vm2760, %v3221, 0.0
        %v3238 = vsel %vm2761, %v3222, 0.0
        %v3239 = vsel %vm2760, %v3223, 0.0
        %v3240 = vsel %vm2761, %v3224, 0.0
        %v3241 = vsel %vm2760, %v3225, 0.0
        %v3242 = vsel %vm2761, %v3226, 0.0
        %v3243 = vsel %vm2760, %v3227, 0.0
        %v3244 = vsel %vm2761, %v3228, 0.0
        %3245 = vst [vmem:[#allocation8 + $0x180] sm:$0xff] %v3237
        %3246 = vst [vmem:[#allocation8 + $0x188] sm:$0xff] %v3238
        %3247 = vst [vmem:[#allocation8 + $0x190] sm:$0xff] %v3239
        %3248 = vst [vmem:[#allocation8 + $0x198] sm:$0xff] %v3240
        %3249 = vst [vmem:[#allocation8 + $0x1a0] sm:$0xff] %v3241
        %3250 = vst [vmem:[#allocation8 + $0x1a8] sm:$0xff] %v3242
        %3251 = vst [vmem:[#allocation8 + $0x1b0] sm:$0xff] %v3243
        %3252 = vst [vmem:[#allocation8 + $0x1b8] sm:$0xff] %v3244
        %v3253 = vld [vmem:[#allocation4] sm:$0xff]
        %v3254 = vld [vmem:[#allocation4 + $0x8] sm:$0xff]
        %v3255 = vld [vmem:[#allocation4 + $0x10] sm:$0xff]
        %v3256 = vld [vmem:[#allocation4 + $0x18] sm:$0xff]
        %v3257 = vld [vmem:[#allocation4 + $0x20] sm:$0xff]
        %v3258 = vld [vmem:[#allocation4 + $0x28] sm:$0xff]
        %v3259 = vld [vmem:[#allocation4 + $0x30] sm:$0xff]
        %v3260 = vld [vmem:[#allocation4 + $0x38] sm:$0xff]
        %v3261 = vld [vmem:[#allocation4 + $0x40] sm:$0xff]
        %v3262 = vld [vmem:[#allocation4 + $0x48] sm:$0xff]
        %v3263 = vld [vmem:[#allocation4 + $0x50] sm:$0xff]
        %v3264 = vld [vmem:[#allocation4 + $0x58] sm:$0xff]
        %3277 = vrot.lane.b32.xlu0 %v3253, 29
        %v3278 = vpop.permute.xlu0 %3277
        %3279 = vrot.lane.b32.xlu0 %v3254, 29
        %v3280 = vpop.permute.xlu0 %3279
        %3281 = vrot.lane.b32.xlu0 %v3255, 29
        %v3282 = vpop.permute.xlu0 %3281
        %3283 = vrot.lane.b32.xlu0 %v3256, 29
        %v3284 = vpop.permute.xlu0 %3283
        %3285 = vrot.lane.b32.xlu0 %v3257, 29
        %v3286 = vpop.permute.xlu0 %3285
        %3287 = vrot.lane.b32.xlu0 %v3258, 29
        %v3288 = vpop.permute.xlu0 %3287
        %3289 = vrot.lane.b32.xlu0 %v3259, 29
        %v3290 = vpop.permute.xlu0 %3289
        %3291 = vrot.lane.b32.xlu0 %v3260, 29
        %v3292 = vpop.permute.xlu0 %3291
        %3293 = vrot.lane.b32.xlu0 %v3261, 29
        %v3294 = vpop.permute.xlu0 %3293
        %3295 = vrot.lane.b32.xlu0 %v3262, 29
        %v3296 = vpop.permute.xlu0 %3295
        %3297 = vrot.lane.b32.xlu0 %v3263, 29
        %v3298 = vpop.permute.xlu0 %3297
        %3299 = vrot.lane.b32.xlu0 %v3264, 29
        %v3300 = vpop.permute.xlu0 %3299
        %vm3301 = vcmask 236544
        %v3302 = vsel %vm3301, %v3278, %v3280
        %v3303 = vsel %vm3301, %v3280, %v3282
        %v3304 = vsel %vm3301, %v3284, %v3286
        %v3305 = vsel %vm3301, %v3286, %v3288
        %v3306 = vsel %vm3301, %v3290, %v3292
        %v3307 = vsel %vm3301, %v3292, %v3294
        %v3308 = vsel %vm3301, %v3296, %v3298
        %v3309 = vsel %vm3301, %v3298, %v3300
        %3318 = vst [vmem:[#allocation8 + $0x1c0] sm:$0xff] %v3302
        %3319 = vst [vmem:[#allocation8 + $0x1c8] sm:$0xff] %v3303
        %3320 = vst [vmem:[#allocation8 + $0x1d0] sm:$0xff] %v3304
        %3321 = vst [vmem:[#allocation8 + $0x1d8] sm:$0xff] %v3305
        %3322 = vst [vmem:[#allocation8 + $0x1e0] sm:$0xff] %v3306
        %3323 = vst [vmem:[#allocation8 + $0x1e8] sm:$0xff] %v3307
        %3324 = vst [vmem:[#allocation8 + $0x1f0] sm:$0xff] %v3308
        %3325 = vst [vmem:[#allocation8 + $0x1f8] sm:$0xff] %v3309
        %v3326 = vld [vmem:[#allocation4] sm:$0xff]
        %v3327 = vld [vmem:[#allocation4 + $0x8] sm:$0xff]
        %v3328 = vld [vmem:[#allocation4 + $0x10] sm:$0xff]
        %v3329 = vld [vmem:[#allocation4 + $0x18] sm:$0xff]
        %v3330 = vld [vmem:[#allocation4 + $0x20] sm:$0xff]
        %v3331 = vld [vmem:[#allocation4 + $0x28] sm:$0xff]
        %v3332 = vld [vmem:[#allocation4 + $0x30] sm:$0xff]
        %v3333 = vld [vmem:[#allocation4 + $0x38] sm:$0xff]
        %v3334 = vld [vmem:[#allocation4 + $0x40] sm:$0xff]
        %v3335 = vld [vmem:[#allocation4 + $0x48] sm:$0xff]
        %v3336 = vld [vmem:[#allocation4 + $0x50] sm:$0xff]
        %v3337 = vld [vmem:[#allocation4 + $0x58] sm:$0xff]
        %3350 = vrot.lane.b32.xlu0 %v3326, 26
        %v3351 = vpop.permute.xlu0 %3350
        %3352 = vrot.lane.b32.xlu0 %v3327, 26
        %v3353 = vpop.permute.xlu0 %3352
        %3354 = vrot.lane.b32.xlu0 %v3328, 26
        %v3355 = vpop.permute.xlu0 %3354
        %3356 = vrot.lane.b32.xlu0 %v3329, 26
        %v3357 = vpop.permute.xlu0 %3356
        %3358 = vrot.lane.b32.xlu0 %v3330, 26
        %v3359 = vpop.permute.xlu0 %3358
        %3360 = vrot.lane.b32.xlu0 %v3331, 26
        %v3361 = vpop.permute.xlu0 %3360
        %3362 = vrot.lane.b32.xlu0 %v3332, 26
        %v3363 = vpop.permute.xlu0 %3362
        %3364 = vrot.lane.b32.xlu0 %v3333, 26
        %v3365 = vpop.permute.xlu0 %3364
        %3366 = vrot.lane.b32.xlu0 %v3334, 26
        %v3367 = vpop.permute.xlu0 %3366
        %3368 = vrot.lane.b32.xlu0 %v3335, 26
        %v3369 = vpop.permute.xlu0 %3368
        %3370 = vrot.lane.b32.xlu0 %v3336, 26
        %v3371 = vpop.permute.xlu0 %3370
        %3372 = vrot.lane.b32.xlu0 %v3337, 26
        %v3373 = vpop.permute.xlu0 %3372
        %vm3374 = vcmask 211968
        %v3375 = vsel %vm3374, %v3351, %v3353
        %v3376 = vsel %vm3374, %v3353, %v3355
        %v3377 = vsel %vm3374, %v3357, %v3359
        %v3378 = vsel %vm3374, %v3359, %v3361
        %v3379 = vsel %vm3374, %v3363, %v3365
        %v3380 = vsel %vm3374, %v3365, %v3367
        %v3381 = vsel %vm3374, %v3369, %v3371
        %v3382 = vsel %vm3374, %v3371, %v3373
        %v3391 = vsel %vm2867, %v3375, 0.0
        %v3392 = vsel %vm2868, %v3376, 0.0
        %v3393 = vsel %vm2867, %v3377, 0.0
        %v3394 = vsel %vm2868, %v3378, 0.0
        %v3395 = vsel %vm2867, %v3379, 0.0
        %v3396 = vsel %vm2868, %v3380, 0.0
        %v3397 = vsel %vm2867, %v3381, 0.0
        %v3398 = vsel %vm2868, %v3382, 0.0
        %3399 = vst [vmem:[#allocation8 + $0x200] sm:$0xff] %v3391
        %3400 = vst [vmem:[#allocation8 + $0x208] sm:$0xff] %v3392
        %3401 = vst [vmem:[#allocation8 + $0x210] sm:$0xff] %v3393
        %3402 = vst [vmem:[#allocation8 + $0x218] sm:$0xff] %v3394
        %3403 = vst [vmem:[#allocation8 + $0x220] sm:$0xff] %v3395
        %3404 = vst [vmem:[#allocation8 + $0x228] sm:$0xff] %v3396
        %3405 = vst [vmem:[#allocation8 + $0x230] sm:$0xff] %v3397
        %3406 = vst [vmem:[#allocation8 + $0x238] sm:$0xff] %v3398
        %v3407 = vld [vmem:[#allocation5] sm:$0xff]
        %v3408 = vld [vmem:[#allocation5 + $0x8] sm:$0xff]
        %v3409 = vld [vmem:[#allocation5 + $0x20] sm:$0xff]
        %v3410 = vld [vmem:[#allocation5 + $0x28] sm:$0xff]
        %v3411 = vld [vmem:[#allocation5 + $0x40] sm:$0xff]
        %v3412 = vld [vmem:[#allocation5 + $0x48] sm:$0xff]
        %v3413 = vld [vmem:[#allocation5 + $0x60] sm:$0xff]
        %v3414 = vld [vmem:[#allocation5 + $0x68] sm:$0xff]
        %vm3415 = vcmp.ge.s32.totalorder %v390, 5
        %vm3416 = vcmp.ge.s32.totalorder %v391, 5
        %v3417 = vsel %vm3415, 1, 0
        %v3418 = vsel %vm3416, 1, 0
        %vm3419 = vcmp.eq.s32.totalorder %v3417, 1
        %vm3420 = vcmp.eq.s32.totalorder %v3418, 1
        %v3421 = vsel %vm3419, %v3407, 0.0
        %v3422 = vsel %vm3420, %v3408, 0.0
        %v3423 = vsel %vm3419, %v3409, 0.0
        %v3424 = vsel %vm3420, %v3410, 0.0
        %v3425 = vsel %vm3419, %v3411, 0.0
        %v3426 = vsel %vm3420, %v3412, 0.0
        %v3427 = vsel %vm3419, %v3413, 0.0
        %v3428 = vsel %vm3420, %v3414, 0.0
        %3429 = vst [vmem:[#allocation8 + $0x240] sm:$0xff] %v3421
        %3430 = vst [vmem:[#allocation8 + $0x248] sm:$0xff] %v3422
        %3431 = vst [vmem:[#allocation8 + $0x250] sm:$0xff] %v3423
        %3432 = vst [vmem:[#allocation8 + $0x258] sm:$0xff] %v3424
        %3433 = vst [vmem:[#allocation8 + $0x260] sm:$0xff] %v3425
        %3434 = vst [vmem:[#allocation8 + $0x268] sm:$0xff] %v3426
        %3435 = vst [vmem:[#allocation8 + $0x270] sm:$0xff] %v3427
        %3436 = vst [vmem:[#allocation8 + $0x278] sm:$0xff] %v3428
        %v3437 = vld [vmem:[#allocation5] sm:$0xff]
        %v3438 = vld [vmem:[#allocation5 + $0x8] sm:$0xff]
        %v3439 = vld [vmem:[#allocation5 + $0x10] sm:$0xff]
        %v3440 = vld [vmem:[#allocation5 + $0x20] sm:$0xff]
        %v3441 = vld [vmem:[#allocation5 + $0x28] sm:$0xff]
        %v3442 = vld [vmem:[#allocation5 + $0x30] sm:$0xff]
        %v3443 = vld [vmem:[#allocation5 + $0x40] sm:$0xff]
        %v3444 = vld [vmem:[#allocation5 + $0x48] sm:$0xff]
        %v3445 = vld [vmem:[#allocation5 + $0x50] sm:$0xff]
        %v3446 = vld [vmem:[#allocation5 + $0x60] sm:$0xff]
        %v3447 = vld [vmem:[#allocation5 + $0x68] sm:$0xff]
        %v3448 = vld [vmem:[#allocation5 + $0x70] sm:$0xff]
        %3461 = vrot.lane.b32.xlu0 %v3437, 123
        %v3462 = vpop.permute.xlu0 %3461
        %3463 = vrot.lane.b32.xlu0 %v3438, 123
        %v3464 = vpop.permute.xlu0 %3463
        %3465 = vrot.lane.b32.xlu0 %v3439, 123
        %v3466 = vpop.permute.xlu0 %3465
        %3467 = vrot.lane.b32.xlu0 %v3440, 123
        %v3468 = vpop.permute.xlu0 %3467
        %3469 = vrot.lane.b32.xlu0 %v3441, 123
        %v3470 = vpop.permute.xlu0 %3469
        %3471 = vrot.lane.b32.xlu0 %v3442, 123
        %v3472 = vpop.permute.xlu0 %3471
        %3473 = vrot.lane.b32.xlu0 %v3443, 123
        %v3474 = vpop.permute.xlu0 %3473
        %3475 = vrot.lane.b32.xlu0 %v3444, 123
        %v3476 = vpop.permute.xlu0 %3475
        %3477 = vrot.lane.b32.xlu0 %v3445, 123
        %v3478 = vpop.permute.xlu0 %3477
        %3479 = vrot.lane.b32.xlu0 %v3446, 123
        %v3480 = vpop.permute.xlu0 %3479
        %3481 = vrot.lane.b32.xlu0 %v3447, 123
        %v3482 = vpop.permute.xlu0 %3481
        %3483 = vrot.lane.b32.xlu0 %v3448, 123
        %v3484 = vpop.permute.xlu0 %3483
        %vm3485 = vcmask 1006592
        %v3486 = vsel %vm3485, %v3462, %v3464
        %v3487 = vsel %vm3485, %v3464, %v3466
        %v3488 = vsel %vm3485, %v3468, %v3470
        %v3489 = vsel %vm3485, %v3470, %v3472
        %v3490 = vsel %vm3485, %v3474, %v3476
        %v3491 = vsel %vm3485, %v3476, %v3478
        %v3492 = vsel %vm3485, %v3480, %v3482
        %v3493 = vsel %vm3485, %v3482, %v3484
        %3502 = vst [vmem:[#allocation8 + $0x280] sm:$0xff] %v3486
        %3503 = vst [vmem:[#allocation8 + $0x288] sm:$0xff] %v3487
        %3504 = vst [vmem:[#allocation8 + $0x290] sm:$0xff] %v3488
        %3505 = vst [vmem:[#allocation8 + $0x298] sm:$0xff] %v3489
        %3506 = vst [vmem:[#allocation8 + $0x2a0] sm:$0xff] %v3490
        %3507 = vst [vmem:[#allocation8 + $0x2a8] sm:$0xff] %v3491
        %3508 = vst [vmem:[#allocation8 + $0x2b0] sm:$0xff] %v3492
        %3509 = vst [vmem:[#allocation8 + $0x2b8] sm:$0xff] %v3493
        %v3510 = vld [vmem:[#allocation5] sm:$0xff]
        %v3511 = vld [vmem:[#allocation5 + $0x8] sm:$0xff]
        %v3512 = vld [vmem:[#allocation5 + $0x10] sm:$0xff]
        %v3513 = vld [vmem:[#allocation5 + $0x20] sm:$0xff]
        %v3514 = vld [vmem:[#allocation5 + $0x28] sm:$0xff]
        %v3515 = vld [vmem:[#allocation5 + $0x30] sm:$0xff]
        %v3516 = vld [vmem:[#allocation5 + $0x40] sm:$0xff]
        %v3517 = vld [vmem:[#allocation5 + $0x48] sm:$0xff]
        %v3518 = vld [vmem:[#allocation5 + $0x50] sm:$0xff]
        %v3519 = vld [vmem:[#allocation5 + $0x60] sm:$0xff]
        %v3520 = vld [vmem:[#allocation5 + $0x68] sm:$0xff]
        %v3521 = vld [vmem:[#allocation5 + $0x70] sm:$0xff]
        %vm3522 = vcmp.lt.s32.totalorder %v390, 11
        %vm3523 = vcmp.lt.s32.totalorder %v391, 11
        %v3524 = vsel %vm3522, 1, 0
        %v3525 = vsel %vm3523, 1, 0
        %vm3526 = vcmp.eq.s32.totalorder %v3524, 1
        %vm3527 = vcmp.eq.s32.totalorder %v3525, 1
        %3540 = vrot.lane.b32.xlu0 %v3510, 118
        %v3541 = vpop.permute.xlu0 %3540
        %3542 = vrot.lane.b32.xlu0 %v3511, 118
        %v3543 = vpop.permute.xlu0 %3542
        %3544 = vrot.lane.b32.xlu0 %v3512, 118
        %v3545 = vpop.permute.xlu0 %3544
        %3546 = vrot.lane.b32.xlu0 %v3513, 118
        %v3547 = vpop.permute.xlu0 %3546
        %3548 = vrot.lane.b32.xlu0 %v3514, 118
        %v3549 = vpop.permute.xlu0 %3548
        %3550 = vrot.lane.b32.xlu0 %v3515, 118
        %v3551 = vpop.permute.xlu0 %3550
        %3552 = vrot.lane.b32.xlu0 %v3516, 118
        %v3553 = vpop.permute.xlu0 %3552
        %3554 = vrot.lane.b32.xlu0 %v3517, 118
        %v3555 = vpop.permute.xlu0 %3554
        %3556 = vrot.lane.b32.xlu0 %v3518, 118
        %v3557 = vpop.permute.xlu0 %3556
        %3558 = vrot.lane.b32.xlu0 %v3519, 118
        %v3559 = vpop.permute.xlu0 %3558
        %3560 = vrot.lane.b32.xlu0 %v3520, 118
        %v3561 = vpop.permute.xlu0 %3560
        %3562 = vrot.lane.b32.xlu0 %v3521, 118
        %v3563 = vpop.permute.xlu0 %3562
        %vm3564 = vcmask 965632
        %v3565 = vsel %vm3564, %v3541, %v3543
        %v3566 = vsel %vm3564, %v3543, %v3545
        %v3567 = vsel %vm3564, %v3547, %v3549
        %v3568 = vsel %vm3564, %v3549, %v3551
        %v3569 = vsel %vm3564, %v3553, %v3555
        %v3570 = vsel %vm3564, %v3555, %v3557
        %v3571 = vsel %vm3564, %v3559, %v3561
        %v3572 = vsel %vm3564, %v3561, %v3563
        %v3581 = vsel %vm3526, %v3565, 0.0
        %v3582 = vsel %vm3527, %v3566, 0.0
        %v3583 = vsel %vm3526, %v3567, 0.0
        %v3584 = vsel %vm3527, %v3568, 0.0
        %v3585 = vsel %vm3526, %v3569, 0.0
        %v3586 = vsel %vm3527, %v3570, 0.0
        %v3587 = vsel %vm3526, %v3571, 0.0
        %v3588 = vsel %vm3527, %v3572, 0.0
        %3589 = vst [vmem:[#allocation8 + $0x2c0] sm:$0xff] %v3581
        %3590 = vst [vmem:[#allocation8 + $0x2c8] sm:$0xff] %v3582
        %3591 = vst [vmem:[#allocation8 + $0x2d0] sm:$0xff] %v3583
        %3592 = vst [vmem:[#allocation8 + $0x2d8] sm:$0xff] %v3584
        %3593 = vst [vmem:[#allocation8 + $0x2e0] sm:$0xff] %v3585
        %3594 = vst [vmem:[#allocation8 + $0x2e8] sm:$0xff] %v3586
        %3595 = vst [vmem:[#allocation8 + $0x2f0] sm:$0xff] %v3587
        %3596 = vst [vmem:[#allocation8 + $0x2f8] sm:$0xff] %v3588
        %v3597 = vld [vmem:[#allocation5] sm:$0xff]
        %v3598 = vld [vmem:[#allocation5 + $0x8] sm:$0xff]
        %v3599 = vld [vmem:[#allocation5 + $0x10] sm:$0xff]
        %v3600 = vld [vmem:[#allocation5 + $0x20] sm:$0xff]
        %v3601 = vld [vmem:[#allocation5 + $0x28] sm:$0xff]
        %v3602 = vld [vmem:[#allocation5 + $0x30] sm:$0xff]
        %v3603 = vld [vmem:[#allocation5 + $0x40] sm:$0xff]
        %v3604 = vld [vmem:[#allocation5 + $0x48] sm:$0xff]
        %v3605 = vld [vmem:[#allocation5 + $0x50] sm:$0xff]
        %v3606 = vld [vmem:[#allocation5 + $0x60] sm:$0xff]
        %v3607 = vld [vmem:[#allocation5 + $0x68] sm:$0xff]
        %v3608 = vld [vmem:[#allocation5 + $0x70] sm:$0xff]
        %3621 = vrot.lane.b32.xlu0 %v3597, 48
        %v3622 = vpop.permute.xlu0 %3621
        %3623 = vrot.lane.b32.xlu0 %v3598, 48
        %v3624 = vpop.permute.xlu0 %3623
        %3625 = vrot.lane.b32.xlu0 %v3599, 48
        %v3626 = vpop.permute.xlu0 %3625
        %3627 = vrot.lane.b32.xlu0 %v3600, 48
        %v3628 = vpop.permute.xlu0 %3627
        %3629 = vrot.lane.b32.xlu0 %v3601, 48
        %v3630 = vpop.permute.xlu0 %3629
        %3631 = vrot.lane.b32.xlu0 %v3602, 48
        %v3632 = vpop.permute.xlu0 %3631
        %3633 = vrot.lane.b32.xlu0 %v3603, 48
        %v3634 = vpop.permute.xlu0 %3633
        %3635 = vrot.lane.b32.xlu0 %v3604, 48
        %v3636 = vpop.permute.xlu0 %3635
        %3637 = vrot.lane.b32.xlu0 %v3605, 48
        %v3638 = vpop.permute.xlu0 %3637
        %3639 = vrot.lane.b32.xlu0 %v3606, 48
        %v3640 = vpop.permute.xlu0 %3639
        %3641 = vrot.lane.b32.xlu0 %v3607, 48
        %v3642 = vpop.permute.xlu0 %3641
        %3643 = vrot.lane.b32.xlu0 %v3608, 48
        %v3644 = vpop.permute.xlu0 %3643
        %vm3645 = vcmask 392192
        %v3646 = vsel %vm3645, %v3622, %v3624
        %v3647 = vsel %vm3645, %v3624, %v3626
        %v3648 = vsel %vm3645, %v3628, %v3630
        %v3649 = vsel %vm3645, %v3630, %v3632
        %v3650 = vsel %vm3645, %v3634, %v3636
        %v3651 = vsel %vm3645, %v3636, %v3638
        %v3652 = vsel %vm3645, %v3640, %v3642
        %v3653 = vsel %vm3645, %v3642, %v3644
        %v3662 = vsel %vm3419, %v3646, 0.0
        %v3663 = vsel %vm3420, %v3647, 0.0
        %v3664 = vsel %vm3419, %v3648, 0.0
        %v3665 = vsel %vm3420, %v3649, 0.0
        %v3666 = vsel %vm3419, %v3650, 0.0
        %v3667 = vsel %vm3420, %v3651, 0.0
        %v3668 = vsel %vm3419, %v3652, 0.0
        %v3669 = vsel %vm3420, %v3653, 0.0
        %3670 = vst [vmem:[#allocation8 + $0x300] sm:$0xff] %v3662
        %3671 = vst [vmem:[#allocation8 + $0x308] sm:$0xff] %v3663
        %3672 = vst [vmem:[#allocation8 + $0x310] sm:$0xff] %v3664
        %3673 = vst [vmem:[#allocation8 + $0x318] sm:$0xff] %v3665
        %3674 = vst [vmem:[#allocation8 + $0x320] sm:$0xff] %v3666
        %3675 = vst [vmem:[#allocation8 + $0x328] sm:$0xff] %v3667
        %3676 = vst [vmem:[#allocation8 + $0x330] sm:$0xff] %v3668
        %3677 = vst [vmem:[#allocation8 + $0x338] sm:$0xff] %v3669
        %v3678 = vld [vmem:[#allocation5] sm:$0xff]
        %v3679 = vld [vmem:[#allocation5 + $0x8] sm:$0xff]
        %v3680 = vld [vmem:[#allocation5 + $0x10] sm:$0xff]
        %v3681 = vld [vmem:[#allocation5 + $0x20] sm:$0xff]
        %v3682 = vld [vmem:[#allocation5 + $0x28] sm:$0xff]
        %v3683 = vld [vmem:[#allocation5 + $0x30] sm:$0xff]
        %v3684 = vld [vmem:[#allocation5 + $0x40] sm:$0xff]
        %v3685 = vld [vmem:[#allocation5 + $0x48] sm:$0xff]
        %v3686 = vld [vmem:[#allocation5 + $0x50] sm:$0xff]
        %v3687 = vld [vmem:[#allocation5 + $0x60] sm:$0xff]
        %v3688 = vld [vmem:[#allocation5 + $0x68] sm:$0xff]
        %v3689 = vld [vmem:[#allocation5 + $0x70] sm:$0xff]
        %3702 = vrot.lane.b32.xlu0 %v3678, 43
        %v3703 = vpop.permute.xlu0 %3702
        %3704 = vrot.lane.b32.xlu0 %v3679, 43
        %v3705 = vpop.permute.xlu0 %3704
        %3706 = vrot.lane.b32.xlu0 %v3680, 43
        %v3707 = vpop.permute.xlu0 %3706
        %3708 = vrot.lane.b32.xlu0 %v3681, 43
        %v3709 = vpop.permute.xlu0 %3708
        %3710 = vrot.lane.b32.xlu0 %v3682, 43
        %v3711 = vpop.permute.xlu0 %3710
        %3712 = vrot.lane.b32.xlu0 %v3683, 43
        %v3713 = vpop.permute.xlu0 %3712
        %3714 = vrot.lane.b32.xlu0 %v3684, 43
        %v3715 = vpop.permute.xlu0 %3714
        %3716 = vrot.lane.b32.xlu0 %v3685, 43
        %v3717 = vpop.permute.xlu0 %3716
        %3718 = vrot.lane.b32.xlu0 %v3686, 43
        %v3719 = vpop.permute.xlu0 %3718
        %3720 = vrot.lane.b32.xlu0 %v3687, 43
        %v3721 = vpop.permute.xlu0 %3720
        %3722 = vrot.lane.b32.xlu0 %v3688, 43
        %v3723 = vpop.permute.xlu0 %3722
        %3724 = vrot.lane.b32.xlu0 %v3689, 43
        %v3725 = vpop.permute.xlu0 %3724
        %vm3726 = vcmask 351232
        %v3727 = vsel %vm3726, %v3703, %v3705
        %v3728 = vsel %vm3726, %v3705, %v3707
        %v3729 = vsel %vm3726, %v3709, %v3711
        %v3730 = vsel %vm3726, %v3711, %v3713
        %v3731 = vsel %vm3726, %v3715, %v3717
        %v3732 = vsel %vm3726, %v3717, %v3719
        %v3733 = vsel %vm3726, %v3721, %v3723
        %v3734 = vsel %vm3726, %v3723, %v3725
        %3743 = vst [vmem:[#allocation8 + $0x340] sm:$0xff] %v3727
        %3744 = vst [vmem:[#allocation8 + $0x348] sm:$0xff] %v3728
        %3745 = vst [vmem:[#allocation8 + $0x350] sm:$0xff] %v3729
        %3746 = vst [vmem:[#allocation8 + $0x358] sm:$0xff] %v3730
        %3747 = vst [vmem:[#allocation8 + $0x360] sm:$0xff] %v3731
        %3748 = vst [vmem:[#allocation8 + $0x368] sm:$0xff] %v3732
        %3749 = vst [vmem:[#allocation8 + $0x370] sm:$0xff] %v3733
        %3750 = vst [vmem:[#allocation8 + $0x378] sm:$0xff] %v3734
        %v3751 = vld [vmem:[#allocation5] sm:$0xff]
        %v3752 = vld [vmem:[#allocation5 + $0x8] sm:$0xff]
        %v3753 = vld [vmem:[#allocation5 + $0x10] sm:$0xff]
        %v3754 = vld [vmem:[#allocation5 + $0x20] sm:$0xff]
        %v3755 = vld [vmem:[#allocation5 + $0x28] sm:$0xff]
        %v3756 = vld [vmem:[#allocation5 + $0x30] sm:$0xff]
        %v3757 = vld [vmem:[#allocation5 + $0x40] sm:$0xff]
        %v3758 = vld [vmem:[#allocation5 + $0x48] sm:$0xff]
        %v3759 = vld [vmem:[#allocation5 + $0x50] sm:$0xff]
        %v3760 = vld [vmem:[#allocation5 + $0x60] sm:$0xff]
        %v3761 = vld [vmem:[#allocation5 + $0x68] sm:$0xff]
        %v3762 = vld [vmem:[#allocation5 + $0x70] sm:$0xff]
        %3775 = vrot.lane.b32.xlu0 %v3751, 38
        %v3776 = vpop.permute.xlu0 %3775
        %3777 = vrot.lane.b32.xlu0 %v3752, 38
        %v3778 = vpop.permute.xlu0 %3777
        %3779 = vrot.lane.b32.xlu0 %v3753, 38
        %v3780 = vpop.permute.xlu0 %3779
        %3781 = vrot.lane.b32.xlu0 %v3754, 38
        %v3782 = vpop.permute.xlu0 %3781
        %3783 = vrot.lane.b32.xlu0 %v3755, 38
        %v3784 = vpop.permute.xlu0 %3783
        %3785 = vrot.lane.b32.xlu0 %v3756, 38
        %v3786 = vpop.permute.xlu0 %3785
        %3787 = vrot.lane.b32.xlu0 %v3757, 38
        %v3788 = vpop.permute.xlu0 %3787
        %3789 = vrot.lane.b32.xlu0 %v3758, 38
        %v3790 = vpop.permute.xlu0 %3789
        %3791 = vrot.lane.b32.xlu0 %v3759, 38
        %v3792 = vpop.permute.xlu0 %3791
        %3793 = vrot.lane.b32.xlu0 %v3760, 38
        %v3794 = vpop.permute.xlu0 %3793
        %3795 = vrot.lane.b32.xlu0 %v3761, 38
        %v3796 = vpop.permute.xlu0 %3795
        %3797 = vrot.lane.b32.xlu0 %v3762, 38
        %v3798 = vpop.permute.xlu0 %3797
        %vm3799 = vcmask 310272
        %v3800 = vsel %vm3799, %v3776, %v3778
        %v3801 = vsel %vm3799, %v3778, %v3780
        %v3802 = vsel %vm3799, %v3782, %v3784
        %v3803 = vsel %vm3799, %v3784, %v3786
        %v3804 = vsel %vm3799, %v3788, %v3790
        %v3805 = vsel %vm3799, %v3790, %v3792
        %v3806 = vsel %vm3799, %v3794, %v3796
        %v3807 = vsel %vm3799, %v3796, %v3798
        %v3816 = vsel %vm3526, %v3800, 0.0
        %v3817 = vsel %vm3527, %v3801, 0.0
        %v3818 = vsel %vm3526, %v3802, 0.0
        %v3819 = vsel %vm3527, %v3803, 0.0
        %v3820 = vsel %vm3526, %v3804, 0.0
        %v3821 = vsel %vm3527, %v3805, 0.0
        %v3822 = vsel %vm3526, %v3806, 0.0
        %v3823 = vsel %vm3527, %v3807, 0.0
        %3824 = vst [vmem:[#allocation8 + $0x380] sm:$0xff] %v3816
        %3825 = vst [vmem:[#allocation8 + $0x388] sm:$0xff] %v3817
        %3826 = vst [vmem:[#allocation8 + $0x390] sm:$0xff] %v3818
        %3827 = vst [vmem:[#allocation8 + $0x398] sm:$0xff] %v3819
        %3828 = vst [vmem:[#allocation8 + $0x3a0] sm:$0xff] %v3820
        %3829 = vst [vmem:[#allocation8 + $0x3a8] sm:$0xff] %v3821
        %3830 = vst [vmem:[#allocation8 + $0x3b0] sm:$0xff] %v3822
        %3831 = vst [vmem:[#allocation8 + $0x3b8] sm:$0xff] %v3823
        %v3832 = vld [vmem:[#allocation5 + $0x8] sm:$0xff]
        %v3833 = vld [vmem:[#allocation5 + $0x10] sm:$0xff]
        %v3834 = vld [vmem:[#allocation5 + $0x18] sm:$0xff]
        %v3835 = vld [vmem:[#allocation5 + $0x28] sm:$0xff]
        %v3836 = vld [vmem:[#allocation5 + $0x30] sm:$0xff]
        %v3837 = vld [vmem:[#allocation5 + $0x38] sm:$0xff]
        %v3838 = vld [vmem:[#allocation5 + $0x48] sm:$0xff]
        %v3839 = vld [vmem:[#allocation5 + $0x50] sm:$0xff]
        %v3840 = vld [vmem:[#allocation5 + $0x58] sm:$0xff]
        %v3841 = vld [vmem:[#allocation5 + $0x68] sm:$0xff]
        %v3842 = vld [vmem:[#allocation5 + $0x70] sm:$0xff]
        %v3843 = vld [vmem:[#allocation5 + $0x78] sm:$0xff]
        %3856 = vrot.lane.b32.xlu0 %v3832, 96
        %v3857 = vpop.permute.xlu0 %3856
        %3858 = vrot.lane.b32.xlu0 %v3833, 96
        %v3859 = vpop.permute.xlu0 %3858
        %3860 = vrot.lane.b32.xlu0 %v3834, 96
        %v3861 = vpop.permute.xlu0 %3860
        %3862 = vrot.lane.b32.xlu0 %v3835, 96
        %v3863 = vpop.permute.xlu0 %3862
        %3864 = vrot.lane.b32.xlu0 %v3836, 96
        %v3865 = vpop.permute.xlu0 %3864
        %3866 = vrot.lane.b32.xlu0 %v3837, 96
        %v3867 = vpop.permute.xlu0 %3866
        %3868 = vrot.lane.b32.xlu0 %v3838, 96
        %v3869 = vpop.permute.xlu0 %3868
        %3870 = vrot.lane.b32.xlu0 %v3839, 96
        %v3871 = vpop.permute.xlu0 %3870
        %3872 = vrot.lane.b32.xlu0 %v3840, 96
        %v3873 = vpop.permute.xlu0 %3872
        %3874 = vrot.lane.b32.xlu0 %v3841, 96
        %v3875 = vpop.permute.xlu0 %3874
        %3876 = vrot.lane.b32.xlu0 %v3842, 96
        %v3877 = vpop.permute.xlu0 %3876
        %3878 = vrot.lane.b32.xlu0 %v3843, 96
        %v3879 = vpop.permute.xlu0 %3878
        %v3880 = vsel %vm1135, %v3857, %v3859
        %v3881 = vsel %vm1135, %v3859, %v3861
        %v3882 = vsel %vm1135, %v3863, %v3865
        %v3883 = vsel %vm1135, %v3865, %v3867
        %v3884 = vsel %vm1135, %v3869, %v3871
        %v3885 = vsel %vm1135, %v3871, %v3873
        %v3886 = vsel %vm1135, %v3875, %v3877
        %v3887 = vsel %vm1135, %v3877, %v3879
        %v3896 = vsel %vm3419, %v3880, 0.0
        %v3897 = vsel %vm3420, %v3881, 0.0
        %v3898 = vsel %vm3419, %v3882, 0.0
        %v3899 = vsel %vm3420, %v3883, 0.0
        %v3900 = vsel %vm3419, %v3884, 0.0
        %v3901 = vsel %vm3420, %v3885, 0.0
        %v3902 = vsel %vm3419, %v3886, 0.0
        %v3903 = vsel %vm3420, %v3887, 0.0
        %3904 = vst [vmem:[#allocation8 + $0x3c0] sm:$0xff] %v3896
        %3905 = vst [vmem:[#allocation8 + $0x3c8] sm:$0xff] %v3897
        %3906 = vst [vmem:[#allocation8 + $0x3d0] sm:$0xff] %v3898
        %3907 = vst [vmem:[#allocation8 + $0x3d8] sm:$0xff] %v3899
        %3908 = vst [vmem:[#allocation8 + $0x3e0] sm:$0xff] %v3900
        %3909 = vst [vmem:[#allocation8 + $0x3e8] sm:$0xff] %v3901
        %3910 = vst [vmem:[#allocation8 + $0x3f0] sm:$0xff] %v3902
        %3911 = vst [vmem:[#allocation8 + $0x3f8] sm:$0xff] %v3903
        %v3912 = vld [vmem:[#allocation5 + $0x8] sm:$0xff]
        %v3913 = vld [vmem:[#allocation5 + $0x10] sm:$0xff]
        %v3914 = vld [vmem:[#allocation5 + $0x18] sm:$0xff]
        %v3915 = vld [vmem:[#allocation5 + $0x28] sm:$0xff]
        %v3916 = vld [vmem:[#allocation5 + $0x30] sm:$0xff]
        %v3917 = vld [vmem:[#allocation5 + $0x38] sm:$0xff]
        %v3918 = vld [vmem:[#allocation5 + $0x48] sm:$0xff]
        %v3919 = vld [vmem:[#allocation5 + $0x50] sm:$0xff]
        %v3920 = vld [vmem:[#allocation5 + $0x58] sm:$0xff]
        %v3921 = vld [vmem:[#allocation5 + $0x68] sm:$0xff]
        %v3922 = vld [vmem:[#allocation5 + $0x70] sm:$0xff]
        %v3923 = vld [vmem:[#allocation5 + $0x78] sm:$0xff]
        %3936 = vrot.lane.b32.xlu0 %v3912, 91
        %v3937 = vpop.permute.xlu0 %3936
        %3938 = vrot.lane.b32.xlu0 %v3913, 91
        %v3939 = vpop.permute.xlu0 %3938
        %3940 = vrot.lane.b32.xlu0 %v3914, 91
        %v3941 = vpop.permute.xlu0 %3940
        %3942 = vrot.lane.b32.xlu0 %v3915, 91
        %v3943 = vpop.permute.xlu0 %3942
        %3944 = vrot.lane.b32.xlu0 %v3916, 91
        %v3945 = vpop.permute.xlu0 %3944
        %3946 = vrot.lane.b32.xlu0 %v3917, 91
        %v3947 = vpop.permute.xlu0 %3946
        %3948 = vrot.lane.b32.xlu0 %v3918, 91
        %v3949 = vpop.permute.xlu0 %3948
        %3950 = vrot.lane.b32.xlu0 %v3919, 91
        %v3951 = vpop.permute.xlu0 %3950
        %3952 = vrot.lane.b32.xlu0 %v3920, 91
        %v3953 = vpop.permute.xlu0 %3952
        %3954 = vrot.lane.b32.xlu0 %v3921, 91
        %v3955 = vpop.permute.xlu0 %3954
        %3956 = vrot.lane.b32.xlu0 %v3922, 91
        %v3957 = vpop.permute.xlu0 %3956
        %3958 = vrot.lane.b32.xlu0 %v3923, 91
        %v3959 = vpop.permute.xlu0 %3958
        %vm3960 = vcmask 744448
        %v3961 = vsel %vm3960, %v3937, %v3939
        %v3962 = vsel %vm3960, %v3939, %v3941
        %v3963 = vsel %vm3960, %v3943, %v3945
        %v3964 = vsel %vm3960, %v3945, %v3947
        %v3965 = vsel %vm3960, %v3949, %v3951
        %v3966 = vsel %vm3960, %v3951, %v3953
        %v3967 = vsel %vm3960, %v3955, %v3957
        %v3968 = vsel %vm3960, %v3957, %v3959
        %3977 = vst [vmem:[#allocation8 + $0x400] sm:$0xff] %v3961
        %3978 = vst [vmem:[#allocation8 + $0x408] sm:$0xff] %v3962
        %3979 = vst [vmem:[#allocation8 + $0x410] sm:$0xff] %v3963
        %3980 = vst [vmem:[#allocation8 + $0x418] sm:$0xff] %v3964
        %3981 = vst [vmem:[#allocation8 + $0x420] sm:$0xff] %v3965
        %3982 = vst [vmem:[#allocation8 + $0x428] sm:$0xff] %v3966
        %3983 = vst [vmem:[#allocation8 + $0x430] sm:$0xff] %v3967
        %3984 = vst [vmem:[#allocation8 + $0x438] sm:$0xff] %v3968
        %v3985 = vld [vmem:[#allocation5 + $0x8] sm:$0xff]
        %v3986 = vld [vmem:[#allocation5 + $0x10] sm:$0xff]
        %v3987 = vld [vmem:[#allocation5 + $0x18] sm:$0xff]
        %v3988 = vld [vmem:[#allocation5 + $0x28] sm:$0xff]
        %v3989 = vld [vmem:[#allocation5 + $0x30] sm:$0xff]
        %v3990 = vld [vmem:[#allocation5 + $0x38] sm:$0xff]
        %v3991 = vld [vmem:[#allocation5 + $0x48] sm:$0xff]
        %v3992 = vld [vmem:[#allocation5 + $0x50] sm:$0xff]
        %v3993 = vld [vmem:[#allocation5 + $0x58] sm:$0xff]
        %v3994 = vld [vmem:[#allocation5 + $0x68] sm:$0xff]
        %v3995 = vld [vmem:[#allocation5 + $0x70] sm:$0xff]
        %v3996 = vld [vmem:[#allocation5 + $0x78] sm:$0xff]
        %4009 = vrot.lane.b32.xlu0 %v3985, 86
        %v4010 = vpop.permute.xlu0 %4009
        %4011 = vrot.lane.b32.xlu0 %v3986, 86
        %v4012 = vpop.permute.xlu0 %4011
        %4013 = vrot.lane.b32.xlu0 %v3987, 86
        %v4014 = vpop.permute.xlu0 %4013
        %4015 = vrot.lane.b32.xlu0 %v3988, 86
        %v4016 = vpop.permute.xlu0 %4015
        %4017 = vrot.lane.b32.xlu0 %v3989, 86
        %v4018 = vpop.permute.xlu0 %4017
        %4019 = vrot.lane.b32.xlu0 %v3990, 86
        %v4020 = vpop.permute.xlu0 %4019
        %4021 = vrot.lane.b32.xlu0 %v3991, 86
        %v4022 = vpop.permute.xlu0 %4021
        %4023 = vrot.lane.b32.xlu0 %v3992, 86
        %v4024 = vpop.permute.xlu0 %4023
        %4025 = vrot.lane.b32.xlu0 %v3993, 86
        %v4026 = vpop.permute.xlu0 %4025
        %4027 = vrot.lane.b32.xlu0 %v3994, 86
        %v4028 = vpop.permute.xlu0 %4027
        %4029 = vrot.lane.b32.xlu0 %v3995, 86
        %v4030 = vpop.permute.xlu0 %4029
        %4031 = vrot.lane.b32.xlu0 %v3996, 86
        %v4032 = vpop.permute.xlu0 %4031
        %vm4033 = vcmask 703488
        %v4034 = vsel %vm4033, %v4010, %v4012
        %v4035 = vsel %vm4033, %v4012, %v4014
        %v4036 = vsel %vm4033, %v4016, %v4018
        %v4037 = vsel %vm4033, %v4018, %v4020
        %v4038 = vsel %vm4033, %v4022, %v4024
        %v4039 = vsel %vm4033, %v4024, %v4026
        %v4040 = vsel %vm4033, %v4028, %v4030
        %v4041 = vsel %vm4033, %v4030, %v4032
        %v4050 = vsel %vm3526, %v4034, 0.0
        %v4051 = vsel %vm3527, %v4035, 0.0
        %v4052 = vsel %vm3526, %v4036, 0.0
        %v4053 = vsel %vm3527, %v4037, 0.0
        %v4054 = vsel %vm3526, %v4038, 0.0
        %v4055 = vsel %vm3527, %v4039, 0.0
        %v4056 = vsel %vm3526, %v4040, 0.0
        %v4057 = vsel %vm3527, %v4041, 0.0
        %4058 = vst [vmem:[#allocation8 + $0x440] sm:$0xff] %v4050
        %4059 = vst [vmem:[#allocation8 + $0x448] sm:$0xff] %v4051
        %4060 = vst [vmem:[#allocation8 + $0x450] sm:$0xff] %v4052
        %4061 = vst [vmem:[#allocation8 + $0x458] sm:$0xff] %v4053
        %4062 = vst [vmem:[#allocation8 + $0x460] sm:$0xff] %v4054
        %4063 = vst [vmem:[#allocation8 + $0x468] sm:$0xff] %v4055
        %4064 = vst [vmem:[#allocation8 + $0x470] sm:$0xff] %v4056
        %4065 = vst [vmem:[#allocation8 + $0x478] sm:$0xff] %v4057
        %v4066 = vld [vmem:[#allocation14] sm:$0xff]
        %v4067 = vld [vmem:[#allocation14 + $0x8] sm:$0xff]
        %v4068 = vld [vmem:[#allocation14 + $0x10] sm:$0xff]
        %v4069 = vld [vmem:[#allocation14 + $0x18] sm:$0xff]
        %v4070 = vld [vmem:[#allocation14 + $0x20] sm:$0xff]
        %v4071 = vld [vmem:[#allocation14 + $0x28] sm:$0xff]
        %v4072 = vld [vmem:[#allocation14 + $0x30] sm:$0xff]
        %v4073 = vld [vmem:[#allocation14 + $0x38] sm:$0xff]
        %v4074 = vld [vmem:[#allocation14 + $0x40] sm:$0xff]
        %v4075 = vld [vmem:[#allocation14 + $0x48] sm:$0xff]
        %v4076 = vld [vmem:[#allocation14 + $0x50] sm:$0xff]
        %v4077 = vld [vmem:[#allocation14 + $0x58] sm:$0xff]
        %v4078 = vld [vmem:[#allocation14 + $0x60] sm:$0xff]
        %v4079 = vld [vmem:[#allocation14 + $0x68] sm:$0xff]
        %v4080 = vld [vmem:[#allocation14 + $0x70] sm:$0xff]
        %v4081 = vld [vmem:[#allocation14 + $0x78] sm:$0xff]
        %v4082 = vld [vmem:[#allocation14 + $0x80] sm:$0xff]
        %v4083 = vld [vmem:[#allocation14 + $0x88] sm:$0xff]
        %v4084 = vld [vmem:[#allocation14 + $0x90] sm:$0xff]
        %v4085 = vld [vmem:[#allocation14 + $0x98] sm:$0xff]
        %v4086 = vld [vmem:[#allocation14 + $0xa0] sm:$0xff]
        %v4087 = vld [vmem:[#allocation14 + $0xa8] sm:$0xff]
        %v4088 = vld [vmem:[#allocation14 + $0xb0] sm:$0xff]
        %v4089 = vld [vmem:[#allocation14 + $0xb8] sm:$0xff]
        %v4090 = vld [vmem:[#allocation14 + $0xc0] sm:$0xff]
        %v4091 = vld [vmem:[#allocation14 + $0xc8] sm:$0xff]
        %v4092 = vld [vmem:[#allocation14 + $0xd0] sm:$0xff]
        %v4093 = vld [vmem:[#allocation14 + $0xd8] sm:$0xff]
        %v4094 = vld [vmem:[#allocation14 + $0xe0] sm:$0xff]
        %v4095 = vld [vmem:[#allocation14 + $0xe8] sm:$0xff]
        %v4096 = vld [vmem:[#allocation14 + $0xf0] sm:$0xff]
        %v4097 = vld [vmem:[#allocation14 + $0xf8] sm:$0xff]
        %v4098 = vld [vmem:[#allocation14 + $0x100] sm:$0xff]
        %v4099 = vld [vmem:[#allocation14 + $0x108] sm:$0xff]
        %v4100 = vld [vmem:[#allocation14 + $0x110] sm:$0xff]
        %v4101 = vld [vmem:[#allocation14 + $0x118] sm:$0xff]
        %v4102 = vld [vmem:[#allocation14 + $0x120] sm:$0xff]
        %v4103 = vld [vmem:[#allocation14 + $0x128] sm:$0xff]
        %v4104 = vld [vmem:[#allocation14 + $0x130] sm:$0xff]
        %v4105 = vld [vmem:[#allocation14 + $0x138] sm:$0xff]
        %v4106 = vld [vmem:[#allocation8] sm:$0xff]
        %v4107 = vld [vmem:[#allocation8 + $0x8] sm:$0xff]
        %v4108 = vld [vmem:[#allocation8 + $0x10] sm:$0xff]
        %v4109 = vld [vmem:[#allocation8 + $0x18] sm:$0xff]
        %v4110 = vld [vmem:[#allocation8 + $0x20] sm:$0xff]
        %v4111 = vld [vmem:[#allocation8 + $0x28] sm:$0xff]
        %v4112 = vld [vmem:[#allocation8 + $0x30] sm:$0xff]
        %v4113 = vld [vmem:[#allocation8 + $0x38] sm:$0xff]
        %v4114 = vld [vmem:[#allocation8 + $0x40] sm:$0xff]
        %v4115 = vld [vmem:[#allocation8 + $0x48] sm:$0xff]
        %v4116 = vld [vmem:[#allocation8 + $0x50] sm:$0xff]
        %v4117 = vld [vmem:[#allocation8 + $0x58] sm:$0xff]
        %v4118 = vld [vmem:[#allocation8 + $0x60] sm:$0xff]
        %v4119 = vld [vmem:[#allocation8 + $0x68] sm:$0xff]
        %v4120 = vld [vmem:[#allocation8 + $0x70] sm:$0xff]
        %v4121 = vld [vmem:[#allocation8 + $0x78] sm:$0xff]
        %v4122 = vld [vmem:[#allocation8 + $0x80] sm:$0xff]
        %v4123 = vld [vmem:[#allocation8 + $0x88] sm:$0xff]
        %v4124 = vld [vmem:[#allocation8 + $0x90] sm:$0xff]
        %v4125 = vld [vmem:[#allocation8 + $0x98] sm:$0xff]
        %v4126 = vld [vmem:[#allocation8 + $0xa0] sm:$0xff]
        %v4127 = vld [vmem:[#allocation8 + $0xa8] sm:$0xff]
        %v4128 = vld [vmem:[#allocation8 + $0xb0] sm:$0xff]
        %v4129 = vld [vmem:[#allocation8 + $0xb8] sm:$0xff]
        %v4130 = vld [vmem:[#allocation8 + $0xc0] sm:$0xff]
        %v4131 = vld [vmem:[#allocation8 + $0xc8] sm:$0xff]
        %v4132 = vld [vmem:[#allocation8 + $0xd0] sm:$0xff]
        %v4133 = vld [vmem:[#allocation8 + $0xd8] sm:$0xff]
        %v4134 = vld [vmem:[#allocation8 + $0xe0] sm:$0xff]
        %v4135 = vld [vmem:[#allocation8 + $0xe8] sm:$0xff]
        %v4136 = vld [vmem:[#allocation8 + $0xf0] sm:$0xff]
        %v4137 = vld [vmem:[#allocation8 + $0xf8] sm:$0xff]
        %v4138 = vld [vmem:[#allocation8 + $0x100] sm:$0xff]
        %v4139 = vld [vmem:[#allocation8 + $0x108] sm:$0xff]
        %v4140 = vld [vmem:[#allocation8 + $0x110] sm:$0xff]
        %v4141 = vld [vmem:[#allocation8 + $0x118] sm:$0xff]
        %v4142 = vld [vmem:[#allocation8 + $0x120] sm:$0xff]
        %v4143 = vld [vmem:[#allocation8 + $0x128] sm:$0xff]
        %v4144 = vld [vmem:[#allocation8 + $0x130] sm:$0xff]
        %v4145 = vld [vmem:[#allocation8 + $0x138] sm:$0xff]
        %v4146 = vld [vmem:[#allocation8 + $0x140] sm:$0xff]
        %v4147 = vld [vmem:[#allocation8 + $0x148] sm:$0xff]
        %v4148 = vld [vmem:[#allocation8 + $0x150] sm:$0xff]
        %v4149 = vld [vmem:[#allocation8 + $0x158] sm:$0xff]
        %v4150 = vld [vmem:[#allocation8 + $0x160] sm:$0xff]
        %v4151 = vld [vmem:[#allocation8 + $0x168] sm:$0xff]
        %v4152 = vld [vmem:[#allocation8 + $0x170] sm:$0xff]
        %v4153 = vld [vmem:[#allocation8 + $0x178] sm:$0xff]
        %v4154 = vld [vmem:[#allocation8 + $0x180] sm:$0xff]
        %v4155 = vld [vmem:[#allocation8 + $0x188] sm:$0xff]
        %v4156 = vld [vmem:[#allocation8 + $0x190] sm:$0xff]
        %v4157 = vld [vmem:[#allocation8 + $0x198] sm:$0xff]
        %v4158 = vld [vmem:[#allocation8 + $0x1a0] sm:$0xff]
        %v4159 = vld [vmem:[#allocation8 + $0x1a8] sm:$0xff]
        %v4160 = vld [vmem:[#allocation8 + $0x1b0] sm:$0xff]
        %v4161 = vld [vmem:[#allocation8 + $0x1b8] sm:$0xff]
        %v4162 = vld [vmem:[#allocation8 + $0x1c0] sm:$0xff]
        %v4163 = vld [vmem:[#allocation8 + $0x1c8] sm:$0xff]
        %v4164 = vld [vmem:[#allocation8 + $0x1d0] sm:$0xff]
        %v4165 = vld [vmem:[#allocation8 + $0x1d8] sm:$0xff]
        %v4166 = vld [vmem:[#allocation8 + $0x1e0] sm:$0xff]
        %v4167 = vld [vmem:[#allocation8 + $0x1e8] sm:$0xff]
        %v4168 = vld [vmem:[#allocation8 + $0x1f0] sm:$0xff]
        %v4169 = vld [vmem:[#allocation8 + $0x1f8] sm:$0xff]
        %v4170 = vld [vmem:[#allocation8 + $0x200] sm:$0xff]
        %v4171 = vld [vmem:[#allocation8 + $0x208] sm:$0xff]
        %v4172 = vld [vmem:[#allocation8 + $0x210] sm:$0xff]
        %v4173 = vld [vmem:[#allocation8 + $0x218] sm:$0xff]
        %v4174 = vld [vmem:[#allocation8 + $0x220] sm:$0xff]
        %v4175 = vld [vmem:[#allocation8 + $0x228] sm:$0xff]
        %v4176 = vld [vmem:[#allocation8 + $0x230] sm:$0xff]
        %v4177 = vld [vmem:[#allocation8 + $0x238] sm:$0xff]
        %v4178 = vld [vmem:[#allocation8 + $0x240] sm:$0xff]
        %v4179 = vld [vmem:[#allocation8 + $0x248] sm:$0xff]
        %v4180 = vld [vmem:[#allocation8 + $0x250] sm:$0xff]
        %v4181 = vld [vmem:[#allocation8 + $0x258] sm:$0xff]
        %v4182 = vld [vmem:[#allocation8 + $0x260] sm:$0xff]
        %v4183 = vld [vmem:[#allocation8 + $0x268] sm:$0xff]
        %v4184 = vld [vmem:[#allocation8 + $0x270] sm:$0xff]
        %v4185 = vld [vmem:[#allocation8 + $0x278] sm:$0xff]
        %v4186 = vld [vmem:[#allocation8 + $0x280] sm:$0xff]
        %v4187 = vld [vmem:[#allocation8 + $0x288] sm:$0xff]
        %v4188 = vld [vmem:[#allocation8 + $0x290] sm:$0xff]
        %v4189 = vld [vmem:[#allocation8 + $0x298] sm:$0xff]
        %v4190 = vld [vmem:[#allocation8 + $0x2a0] sm:$0xff]
        %v4191 = vld [vmem:[#allocation8 + $0x2a8] sm:$0xff]
        %v4192 = vld [vmem:[#allocation8 + $0x2b0] sm:$0xff]
        %v4193 = vld [vmem:[#allocation8 + $0x2b8] sm:$0xff]
        %v4194 = vld [vmem:[#allocation8 + $0x2c0] sm:$0xff]
        %v4195 = vld [vmem:[#allocation8 + $0x2c8] sm:$0xff]
        %v4196 = vld [vmem:[#allocation8 + $0x2d0] sm:$0xff]
        %v4197 = vld [vmem:[#allocation8 + $0x2d8] sm:$0xff]
        %v4198 = vld [vmem:[#allocation8 + $0x2e0] sm:$0xff]
        %v4199 = vld [vmem:[#allocation8 + $0x2e8] sm:$0xff]
        %v4200 = vld [vmem:[#allocation8 + $0x2f0] sm:$0xff]
        %v4201 = vld [vmem:[#allocation8 + $0x2f8] sm:$0xff]
        %v4202 = vld [vmem:[#allocation8 + $0x300] sm:$0xff]
        %v4203 = vld [vmem:[#allocation8 + $0x308] sm:$0xff]
        %v4204 = vld [vmem:[#allocation8 + $0x310] sm:$0xff]
        %v4205 = vld [vmem:[#allocation8 + $0x318] sm:$0xff]
        %v4206 = vld [vmem:[#allocation8 + $0x320] sm:$0xff]
        %v4207 = vld [vmem:[#allocation8 + $0x328] sm:$0xff]
        %v4208 = vld [vmem:[#allocation8 + $0x330] sm:$0xff]
        %v4209 = vld [vmem:[#allocation8 + $0x338] sm:$0xff]
        %v4210 = vld [vmem:[#allocation8 + $0x340] sm:$0xff]
        %v4211 = vld [vmem:[#allocation8 + $0x348] sm:$0xff]
        %v4212 = vld [vmem:[#allocation8 + $0x350] sm:$0xff]
        %v4213 = vld [vmem:[#allocation8 + $0x358] sm:$0xff]
        %v4214 = vld [vmem:[#allocation8 + $0x360] sm:$0xff]
        %v4215 = vld [vmem:[#allocation8 + $0x368] sm:$0xff]
        %v4216 = vld [vmem:[#allocation8 + $0x370] sm:$0xff]
        %v4217 = vld [vmem:[#allocation8 + $0x378] sm:$0xff]
        %v4218 = vld [vmem:[#allocation8 + $0x380] sm:$0xff]
        %v4219 = vld [vmem:[#allocation8 + $0x388] sm:$0xff]
        %v4220 = vld [vmem:[#allocation8 + $0x390] sm:$0xff]
        %v4221 = vld [vmem:[#allocation8 + $0x398] sm:$0xff]
        %v4222 = vld [vmem:[#allocation8 + $0x3a0] sm:$0xff]
        %v4223 = vld [vmem:[#allocation8 + $0x3a8] sm:$0xff]
        %v4224 = vld [vmem:[#allocation8 + $0x3b0] sm:$0xff]
        %v4225 = vld [vmem:[#allocation8 + $0x3b8] sm:$0xff]
        %v4226 = vld [vmem:[#allocation8 + $0x3c0] sm:$0xff]
        %v4227 = vld [vmem:[#allocation8 + $0x3c8] sm:$0xff]
        %v4228 = vld [vmem:[#allocation8 + $0x3d0] sm:$0xff]
        %v4229 = vld [vmem:[#allocation8 + $0x3d8] sm:$0xff]
        %v4230 = vld [vmem:[#allocation8 + $0x3e0] sm:$0xff]
        %v4231 = vld [vmem:[#allocation8 + $0x3e8] sm:$0xff]
        %v4232 = vld [vmem:[#allocation8 + $0x3f0] sm:$0xff]
        %v4233 = vld [vmem:[#allocation8 + $0x3f8] sm:$0xff]
        %v4234 = vld [vmem:[#allocation8 + $0x400] sm:$0xff]
        %v4235 = vld [vmem:[#allocation8 + $0x408] sm:$0xff]
        %v4236 = vld [vmem:[#allocation8 + $0x410] sm:$0xff]
        %v4237 = vld [vmem:[#allocation8 + $0x418] sm:$0xff]
        %v4238 = vld [vmem:[#allocation8 + $0x420] sm:$0xff]
        %v4239 = vld [vmem:[#allocation8 + $0x428] sm:$0xff]
        %v4240 = vld [vmem:[#allocation8 + $0x430] sm:$0xff]
        %v4241 = vld [vmem:[#allocation8 + $0x438] sm:$0xff]
        %v4242 = vld [vmem:[#allocation8 + $0x440] sm:$0xff]
        %v4243 = vld [vmem:[#allocation8 + $0x448] sm:$0xff]
        %v4244 = vld [vmem:[#allocation8 + $0x450] sm:$0xff]
        %v4245 = vld [vmem:[#allocation8 + $0x458] sm:$0xff]
        %v4246 = vld [vmem:[#allocation8 + $0x460] sm:$0xff]
        %v4247 = vld [vmem:[#allocation8 + $0x468] sm:$0xff]
        %v4248 = vld [vmem:[#allocation8 + $0x470] sm:$0xff]
        %v4249 = vld [vmem:[#allocation8 + $0x478] sm:$0xff]
        %v4251 = vsel %vm1602, %v4070, 0
        %v4254 = vsel %vm1602, %v4075, 0
        %v4257 = vsel %vm1602, %v4080, 0
        %v4260 = vsel %vm1602, %v4085, 0
        %v4263 = vsel %vm1602, %v4090, 0
        %v4266 = vsel %vm1602, %v4095, 0
        %v4269 = vsel %vm1602, %v4100, 0
        %v4272 = vsel %vm1602, %v4105, 0
        %4274 = vmatpush.msra.mxu0 %v4136
        %4275 = vmatpush.msra.mxu0 %v4134
        %4276 = vmatpush.msra.mxu0 %v4132
        %4277 = vmatpush.msra.mxu0 %v4130
        %4278 = vmatpush.msra.mxu0 %v4128
        %4279 = vmatpush.msra.mxu0 %v4126
        %4280 = vmatpush.msra.mxu0 %v4124
        %4281 = vmatpush.msra.mxu0 %v4122
        %4282 = vmatpush.msra.mxu0 %v4120
        %4283 = vmatpush.msra.mxu0 %v4118
        %4284 = vmatpush.msra.mxu0 %v4116
        %4285 = vmatpush.msra.mxu0 %v4114
        %4286 = vmatpush.msra.mxu0 %v4112
        %4287 = vmatpush.msra.mxu0 %v4110
        %4288 = vmatpush.msra.mxu0 %v4108
        %4289 = vmatpush.msra.mxu0 %v4106
        %4290 = vmatmul.f32.gmra.mxu0 %v4066
        %v4291 = vpop.f32.mrf.mxu0
        %v4292 = vadd.f32 0.0, %v4291
        %4293 = vmatmul.f32.gmra.mxu0 %v4071
        %v4294 = vpop.f32.mrf.mxu0
        %v4295 = vadd.f32 0.0, %v4294
        %4296 = vmatmul.f32.gmra.mxu0 %v4076
        %v4297 = vpop.f32.mrf.mxu0
        %v4298 = vadd.f32 0.0, %v4297
        %4299 = vmatmul.f32.gmra.mxu0 %v4081
        %v4300 = vpop.f32.mrf.mxu0
        %v4301 = vadd.f32 0.0, %v4300
        %4302 = vmatmul.f32.gmra.mxu0 %v4086
        %v4303 = vpop.f32.mrf.mxu0
        %v4304 = vadd.f32 0.0, %v4303
        %4305 = vmatmul.f32.gmra.mxu0 %v4091
        %v4306 = vpop.f32.mrf.mxu0
        %v4307 = vadd.f32 0.0, %v4306
        %4308 = vmatmul.f32.gmra.mxu0 %v4096
        %v4309 = vpop.f32.mrf.mxu0
        %v4310 = vadd.f32 0.0, %v4309
        %4311 = vmatmul.f32.gmra.mxu0 %v4101
        %v4312 = vpop.f32.mrf.mxu0
        %v4313 = vadd.f32 0.0, %v4312
        %4314 = vdwg.mxu0
        %4315 = vmatpush.msra.mxu0 %v4168
        %4316 = vmatpush.msra.mxu0 %v4166
        %4317 = vmatpush.msra.mxu0 %v4164
        %4318 = vmatpush.msra.mxu0 %v4162
        %4319 = vmatpush.msra.mxu0 %v4160
        %4320 = vmatpush.msra.mxu0 %v4158
        %4321 = vmatpush.msra.mxu0 %v4156
        %4322 = vmatpush.msra.mxu0 %v4154
        %4323 = vmatpush.msra.mxu0 %v4152
        %4324 = vmatpush.msra.mxu0 %v4150
        %4325 = vmatpush.msra.mxu0 %v4148
        %4326 = vmatpush.msra.mxu0 %v4146
        %4327 = vmatpush.msra.mxu0 %v4144
        %4328 = vmatpush.msra.mxu0 %v4142
        %4329 = vmatpush.msra.mxu0 %v4140
        %4330 = vmatpush.msra.mxu0 %v4138
        %4331 = vmatmul.f32.gmra.mxu0 %v4067
        %v4332 = vpop.f32.mrf.mxu0
        %v4333 = vadd.f32 %v4292, %v4332
        %4334 = vmatmul.f32.gmra.mxu0 %v4072
        %v4335 = vpop.f32.mrf.mxu0
        %v4336 = vadd.f32 %v4295, %v4335
        %4337 = vmatmul.f32.gmra.mxu0 %v4077
        %v4338 = vpop.f32.mrf.mxu0
        %v4339 = vadd.f32 %v4298, %v4338
        %4340 = vmatmul.f32.gmra.mxu0 %v4082
        %v4341 = vpop.f32.mrf.mxu0
        %v4342 = vadd.f32 %v4301, %v4341
        %4343 = vmatmul.f32.gmra.mxu0 %v4087
        %v4344 = vpop.f32.mrf.mxu0
        %v4345 = vadd.f32 %v4304, %v4344
        %4346 = vmatmul.f32.gmra.mxu0 %v4092
        %v4347 = vpop.f32.mrf.mxu0
        %v4348 = vadd.f32 %v4307, %v4347
        %4349 = vmatmul.f32.gmra.mxu0 %v4097
        %v4350 = vpop.f32.mrf.mxu0
        %v4351 = vadd.f32 %v4310, %v4350
        %4352 = vmatmul.f32.gmra.mxu0 %v4102
        %v4353 = vpop.f32.mrf.mxu0
        %v4354 = vadd.f32 %v4313, %v4353
        %4355 = vdwg.mxu0
        %4356 = vmatpush.msra.mxu0 %v4200
        %4357 = vmatpush.msra.mxu0 %v4198
        %4358 = vmatpush.msra.mxu0 %v4196
        %4359 = vmatpush.msra.mxu0 %v4194
        %4360 = vmatpush.msra.mxu0 %v4192
        %4361 = vmatpush.msra.mxu0 %v4190
        %4362 = vmatpush.msra.mxu0 %v4188
        %4363 = vmatpush.msra.mxu0 %v4186
        %4364 = vmatpush.msra.mxu0 %v4184
        %4365 = vmatpush.msra.mxu0 %v4182
        %4366 = vmatpush.msra.mxu0 %v4180
        %4367 = vmatpush.msra.mxu0 %v4178
        %4368 = vmatpush.msra.mxu0 %v4176
        %4369 = vmatpush.msra.mxu0 %v4174
        %4370 = vmatpush.msra.mxu0 %v4172
        %4371 = vmatpush.msra.mxu0 %v4170
        %4372 = vmatmul.f32.gmra.mxu0 %v4068
        %v4373 = vpop.f32.mrf.mxu0
        %v4374 = vadd.f32 %v4333, %v4373
        %4375 = vmatmul.f32.gmra.mxu0 %v4073
        %v4376 = vpop.f32.mrf.mxu0
        %v4377 = vadd.f32 %v4336, %v4376
        %4378 = vmatmul.f32.gmra.mxu0 %v4078
        %v4379 = vpop.f32.mrf.mxu0
        %v4380 = vadd.f32 %v4339, %v4379
        %4381 = vmatmul.f32.gmra.mxu0 %v4083
        %v4382 = vpop.f32.mrf.mxu0
        %v4383 = vadd.f32 %v4342, %v4382
        %4384 = vmatmul.f32.gmra.mxu0 %v4088
        %v4385 = vpop.f32.mrf.mxu0
        %v4386 = vadd.f32 %v4345, %v4385
        %4387 = vmatmul.f32.gmra.mxu0 %v4093
        %v4388 = vpop.f32.mrf.mxu0
        %v4389 = vadd.f32 %v4348, %v4388
        %4390 = vmatmul.f32.gmra.mxu0 %v4098
        %v4391 = vpop.f32.mrf.mxu0
        %v4392 = vadd.f32 %v4351, %v4391
        %4393 = vmatmul.f32.gmra.mxu0 %v4103
        %v4394 = vpop.f32.mrf.mxu0
        %v4395 = vadd.f32 %v4354, %v4394
        %4396 = vdwg.mxu0
        %4397 = vmatpush.msra.mxu0 %v4232
        %4398 = vmatpush.msra.mxu0 %v4230
        %4399 = vmatpush.msra.mxu0 %v4228
        %4400 = vmatpush.msra.mxu0 %v4226
        %4401 = vmatpush.msra.mxu0 %v4224
        %4402 = vmatpush.msra.mxu0 %v4222
        %4403 = vmatpush.msra.mxu0 %v4220
        %4404 = vmatpush.msra.mxu0 %v4218
        %4405 = vmatpush.msra.mxu0 %v4216
        %4406 = vmatpush.msra.mxu0 %v4214
        %4407 = vmatpush.msra.mxu0 %v4212
        %4408 = vmatpush.msra.mxu0 %v4210
        %4409 = vmatpush.msra.mxu0 %v4208
        %4410 = vmatpush.msra.mxu0 %v4206
        %4411 = vmatpush.msra.mxu0 %v4204
        %4412 = vmatpush.msra.mxu0 %v4202
        %4413 = vmatmul.f32.gmra.mxu0 %v4069
        %v4414 = vpop.f32.mrf.mxu0
        %v4415 = vadd.f32 %v4374, %v4414
        %4416 = vmatmul.f32.gmra.mxu0 %v4074
        %v4417 = vpop.f32.mrf.mxu0
        %v4418 = vadd.f32 %v4377, %v4417
        %4419 = vmatmul.f32.gmra.mxu0 %v4079
        %v4420 = vpop.f32.mrf.mxu0
        %v4421 = vadd.f32 %v4380, %v4420
        %4422 = vmatmul.f32.gmra.mxu0 %v4084
        %v4423 = vpop.f32.mrf.mxu0
        %v4424 = vadd.f32 %v4383, %v4423
        %4425 = vmatmul.f32.gmra.mxu0 %v4089
        %v4426 = vpop.f32.mrf.mxu0
        %v4427 = vadd.f32 %v4386, %v4426
        %4428 = vmatmul.f32.gmra.mxu0 %v4094
        %v4429 = vpop.f32.mrf.mxu0
        %v4430 = vadd.f32 %v4389, %v4429
        %4431 = vmatmul.f32.gmra.mxu0 %v4099
        %v4432 = vpop.f32.mrf.mxu0
        %v4433 = vadd.f32 %v4392, %v4432
        %4434 = vmatmul.f32.gmra.mxu0 %v4104
        %v4435 = vpop.f32.mrf.mxu0
        %v4436 = vadd.f32 %v4395, %v4435
        %4437 = vdwg.mxu0
        %4438 = vmatpush.msra.mxu0 0.0
        %4439 = vmatpush.msra.mxu0 0.0
        %4440 = vmatpush.msra.mxu0 0.0
        %4441 = vmatpush.msra.mxu0 0.0
        %4442 = vmatpush.msra.mxu0 0.0
        %4443 = vmatpush.msra.mxu0 0.0
        %4444 = vmatpush.msra.mxu0 0.0
        %4445 = vmatpush.msra.mxu0 0.0
        %4446 = vmatpush.msra.mxu0 %v4248
        %4447 = vmatpush.msra.mxu0 %v4246
        %4448 = vmatpush.msra.mxu0 %v4244
        %4449 = vmatpush.msra.mxu0 %v4242
        %4450 = vmatpush.msra.mxu0 %v4240
        %4451 = vmatpush.msra.mxu0 %v4238
        %4452 = vmatpush.msra.mxu0 %v4236
        %4453 = vmatpush.msra.mxu0 %v4234
        %4454 = vmatmul.f32.gmra.mxu0 %v4251
        %v4455 = vpop.f32.mrf.mxu0
        %v4456 = vadd.f32 %v4415, %v4455
        %4457 = vmatmul.f32.gmra.mxu0 %v4254
        %v4458 = vpop.f32.mrf.mxu0
        %v4459 = vadd.f32 %v4418, %v4458
        %4460 = vmatmul.f32.gmra.mxu0 %v4257
        %v4461 = vpop.f32.mrf.mxu0
        %v4462 = vadd.f32 %v4421, %v4461
        %4463 = vmatmul.f32.gmra.mxu0 %v4260
        %v4464 = vpop.f32.mrf.mxu0
        %v4465 = vadd.f32 %v4424, %v4464
        %4466 = vmatmul.f32.gmra.mxu0 %v4263
        %v4467 = vpop.f32.mrf.mxu0
        %v4468 = vadd.f32 %v4427, %v4467
        %4469 = vmatmul.f32.gmra.mxu0 %v4266
        %v4470 = vpop.f32.mrf.mxu0
        %v4471 = vadd.f32 %v4430, %v4470
        %4472 = vmatmul.f32.gmra.mxu0 %v4269
        %v4473 = vpop.f32.mrf.mxu0
        %v4474 = vadd.f32 %v4433, %v4473
        %4475 = vmatmul.f32.gmra.mxu0 %v4272
        %v4476 = vpop.f32.mrf.mxu0
        %v4477 = vadd.f32 %v4436, %v4476
        %4478 = vdwg.mxu0
        %4479 = vmatpush.msra.mxu0 %v4137
        %4480 = vmatpush.msra.mxu0 %v4135
        %4481 = vmatpush.msra.mxu0 %v4133
        %4482 = vmatpush.msra.mxu0 %v4131
        %4483 = vmatpush.msra.mxu0 %v4129
        %4484 = vmatpush.msra.mxu0 %v4127
        %4485 = vmatpush.msra.mxu0 %v4125
        %4486 = vmatpush.msra.mxu0 %v4123
        %4487 = vmatpush.msra.mxu0 %v4121
        %4488 = vmatpush.msra.mxu0 %v4119
        %4489 = vmatpush.msra.mxu0 %v4117
        %4490 = vmatpush.msra.mxu0 %v4115
        %4491 = vmatpush.msra.mxu0 %v4113
        %4492 = vmatpush.msra.mxu0 %v4111
        %4493 = vmatpush.msra.mxu0 %v4109
        %4494 = vmatpush.msra.mxu0 %v4107
        %4495 = vmatmul.f32.gmra.mxu0 %v4066
        %v4496 = vpop.f32.mrf.mxu0
        %v4497 = vadd.f32 0.0, %v4496
        %4498 = vmatmul.f32.gmra.mxu0 %v4071
        %v4499 = vpop.f32.mrf.mxu0
        %v4500 = vadd.f32 0.0, %v4499
        %4501 = vmatmul.f32.gmra.mxu0 %v4076
        %v4502 = vpop.f32.mrf.mxu0
        %v4503 = vadd.f32 0.0, %v4502
        %4504 = vmatmul.f32.gmra.mxu0 %v4081
        %v4505 = vpop.f32.mrf.mxu0
        %v4506 = vadd.f32 0.0, %v4505
        %4507 = vmatmul.f32.gmra.mxu0 %v4086
        %v4508 = vpop.f32.mrf.mxu0
        %v4509 = vadd.f32 0.0, %v4508
        %4510 = vmatmul.f32.gmra.mxu0 %v4091
        %v4511 = vpop.f32.mrf.mxu0
        %v4512 = vadd.f32 0.0, %v4511
        %4513 = vmatmul.f32.gmra.mxu0 %v4096
        %v4514 = vpop.f32.mrf.mxu0
        %v4515 = vadd.f32 0.0, %v4514
        %4516 = vmatmul.f32.gmra.mxu0 %v4101
        %v4517 = vpop.f32.mrf.mxu0
        %v4518 = vadd.f32 0.0, %v4517
        %4519 = vdwg.mxu0
        %4520 = vmatpush.msra.mxu0 %v4169
        %4521 = vmatpush.msra.mxu0 %v4167
        %4522 = vmatpush.msra.mxu0 %v4165
        %4523 = vmatpush.msra.mxu0 %v4163
        %4524 = vmatpush.msra.mxu0 %v4161
        %4525 = vmatpush.msra.mxu0 %v4159
        %4526 = vmatpush.msra.mxu0 %v4157
        %4527 = vmatpush.msra.mxu0 %v4155
        %4528 = vmatpush.msra.mxu0 %v4153
        %4529 = vmatpush.msra.mxu0 %v4151
        %4530 = vmatpush.msra.mxu0 %v4149
        %4531 = vmatpush.msra.mxu0 %v4147
        %4532 = vmatpush.msra.mxu0 %v4145
        %4533 = vmatpush.msra.mxu0 %v4143
        %4534 = vmatpush.msra.mxu0 %v4141
        %4535 = vmatpush.msra.mxu0 %v4139
        %4536 = vmatmul.f32.gmra.mxu0 %v4067
        %v4537 = vpop.f32.mrf.mxu0
        %v4538 = vadd.f32 %v4497, %v4537
        %4539 = vmatmul.f32.gmra.mxu0 %v4072
        %v4540 = vpop.f32.mrf.mxu0
        %v4541 = vadd.f32 %v4500, %v4540
        %4542 = vmatmul.f32.gmra.mxu0 %v4077
        %v4543 = vpop.f32.mrf.mxu0
        %v4544 = vadd.f32 %v4503, %v4543
        %4545 = vmatmul.f32.gmra.mxu0 %v4082
        %v4546 = vpop.f32.mrf.mxu0
        %v4547 = vadd.f32 %v4506, %v4546
        %4548 = vmatmul.f32.gmra.mxu0 %v4087
        %v4549 = vpop.f32.mrf.mxu0
        %v4550 = vadd.f32 %v4509, %v4549
        %4551 = vmatmul.f32.gmra.mxu0 %v4092
        %v4552 = vpop.f32.mrf.mxu0
        %v4553 = vadd.f32 %v4512, %v4552
        %4554 = vmatmul.f32.gmra.mxu0 %v4097
        %v4555 = vpop.f32.mrf.mxu0
        %v4556 = vadd.f32 %v4515, %v4555
        %4557 = vmatmul.f32.gmra.mxu0 %v4102
        %v4558 = vpop.f32.mrf.mxu0
        %v4559 = vadd.f32 %v4518, %v4558
        %4560 = vdwg.mxu0
        %4561 = vmatpush.msra.mxu0 %v4201
        %4562 = vmatpush.msra.mxu0 %v4199
        %4563 = vmatpush.msra.mxu0 %v4197
        %4564 = vmatpush.msra.mxu0 %v4195
        %4565 = vmatpush.msra.mxu0 %v4193
        %4566 = vmatpush.msra.mxu0 %v4191
        %4567 = vmatpush.msra.mxu0 %v4189
        %4568 = vmatpush.msra.mxu0 %v4187
        %4569 = vmatpush.msra.mxu0 %v4185
        %4570 = vmatpush.msra.mxu0 %v4183
        %4571 = vmatpush.msra.mxu0 %v4181
        %4572 = vmatpush.msra.mxu0 %v4179
        %4573 = vmatpush.msra.mxu0 %v4177
        %4574 = vmatpush.msra.mxu0 %v4175
        %4575 = vmatpush.msra.mxu0 %v4173
        %4576 = vmatpush.msra.mxu0 %v4171
        %4577 = vmatmul.f32.gmra.mxu0 %v4068
        %v4578 = vpop.f32.mrf.mxu0
        %v4579 = vadd.f32 %v4538, %v4578
        %4580 = vmatmul.f32.gmra.mxu0 %v4073
        %v4581 = vpop.f32.mrf.mxu0
        %v4582 = vadd.f32 %v4541, %v4581
        %4583 = vmatmul.f32.gmra.mxu0 %v4078
        %v4584 = vpop.f32.mrf.mxu0
        %v4585 = vadd.f32 %v4544, %v4584
        %4586 = vmatmul.f32.gmra.mxu0 %v4083
        %v4587 = vpop.f32.mrf.mxu0
        %v4588 = vadd.f32 %v4547, %v4587
        %4589 = vmatmul.f32.gmra.mxu0 %v4088
        %v4590 = vpop.f32.mrf.mxu0
        %v4591 = vadd.f32 %v4550, %v4590
        %4592 = vmatmul.f32.gmra.mxu0 %v4093
        %v4593 = vpop.f32.mrf.mxu0
        %v4594 = vadd.f32 %v4553, %v4593
        %4595 = vmatmul.f32.gmra.mxu0 %v4098
        %v4596 = vpop.f32.mrf.mxu0
        %v4597 = vadd.f32 %v4556, %v4596
        %4598 = vmatmul.f32.gmra.mxu0 %v4103
        %v4599 = vpop.f32.mrf.mxu0
        %v4600 = vadd.f32 %v4559, %v4599
        %4601 = vdwg.mxu0
        %4602 = vmatpush.msra.mxu0 %v4233
        %4603 = vmatpush.msra.mxu0 %v4231
        %4604 = vmatpush.msra.mxu0 %v4229
        %4605 = vmatpush.msra.mxu0 %v4227
        %4606 = vmatpush.msra.mxu0 %v4225
        %4607 = vmatpush.msra.mxu0 %v4223
        %4608 = vmatpush.msra.mxu0 %v4221
        %4609 = vmatpush.msra.mxu0 %v4219
        %4610 = vmatpush.msra.mxu0 %v4217
        %4611 = vmatpush.msra.mxu0 %v4215
        %4612 = vmatpush.msra.mxu0 %v4213
        %4613 = vmatpush.msra.mxu0 %v4211
        %4614 = vmatpush.msra.mxu0 %v4209
        %4615 = vmatpush.msra.mxu0 %v4207
        %4616 = vmatpush.msra.mxu0 %v4205
        %4617 = vmatpush.msra.mxu0 %v4203
        %4618 = vmatmul.f32.gmra.mxu0 %v4069
        %v4619 = vpop.f32.mrf.mxu0
        %v4620 = vadd.f32 %v4579, %v4619
        %4621 = vmatmul.f32.gmra.mxu0 %v4074
        %v4622 = vpop.f32.mrf.mxu0
        %v4623 = vadd.f32 %v4582, %v4622
        %4624 = vmatmul.f32.gmra.mxu0 %v4079
        %v4625 = vpop.f32.mrf.mxu0
        %v4626 = vadd.f32 %v4585, %v4625
        %4627 = vmatmul.f32.gmra.mxu0 %v4084
        %v4628 = vpop.f32.mrf.mxu0
        %v4629 = vadd.f32 %v4588, %v4628
        %4630 = vmatmul.f32.gmra.mxu0 %v4089
        %v4631 = vpop.f32.mrf.mxu0
        %v4632 = vadd.f32 %v4591, %v4631
        %4633 = vmatmul.f32.gmra.mxu0 %v4094
        %v4634 = vpop.f32.mrf.mxu0
        %v4635 = vadd.f32 %v4594, %v4634
        %4636 = vmatmul.f32.gmra.mxu0 %v4099
        %v4637 = vpop.f32.mrf.mxu0
        %v4638 = vadd.f32 %v4597, %v4637
        %4639 = vmatmul.f32.gmra.mxu0 %v4104
        %v4640 = vpop.f32.mrf.mxu0
        %v4641 = vadd.f32 %v4600, %v4640
        %4642 = vdwg.mxu0
        %4643 = vmatpush.msra.mxu0 0.0
        %4644 = vmatpush.msra.mxu0 0.0
        %4645 = vmatpush.msra.mxu0 0.0
        %4646 = vmatpush.msra.mxu0 0.0
        %4647 = vmatpush.msra.mxu0 0.0
        %4648 = vmatpush.msra.mxu0 0.0
        %4649 = vmatpush.msra.mxu0 0.0
        %4650 = vmatpush.msra.mxu0 0.0
        %4651 = vmatpush.msra.mxu0 %v4249
        %4652 = vmatpush.msra.mxu0 %v4247
        %4653 = vmatpush.msra.mxu0 %v4245
        %4654 = vmatpush.msra.mxu0 %v4243
        %4655 = vmatpush.msra.mxu0 %v4241
        %4656 = vmatpush.msra.mxu0 %v4239
        %4657 = vmatpush.msra.mxu0 %v4237
        %4658 = vmatpush.msra.mxu0 %v4235
        %4659 = vmatmul.f32.gmra.mxu0 %v4251
        %v4660 = vpop.f32.mrf.mxu0
        %v4661 = vadd.f32 %v4620, %v4660
        %4662 = vmatmul.f32.gmra.mxu0 %v4254
        %v4663 = vpop.f32.mrf.mxu0
        %v4664 = vadd.f32 %v4623, %v4663
        %4665 = vmatmul.f32.gmra.mxu0 %v4257
        %v4666 = vpop.f32.mrf.mxu0
        %v4667 = vadd.f32 %v4626, %v4666
        %4668 = vmatmul.f32.gmra.mxu0 %v4260
        %v4669 = vpop.f32.mrf.mxu0
        %v4670 = vadd.f32 %v4629, %v4669
        %4671 = vmatmul.f32.gmra.mxu0 %v4263
        %v4672 = vpop.f32.mrf.mxu0
        %v4673 = vadd.f32 %v4632, %v4672
        %4674 = vmatmul.f32.gmra.mxu0 %v4266
        %v4675 = vpop.f32.mrf.mxu0
        %v4676 = vadd.f32 %v4635, %v4675
        %4677 = vmatmul.f32.gmra.mxu0 %v4269
        %v4678 = vpop.f32.mrf.mxu0
        %v4679 = vadd.f32 %v4638, %v4678
        %4680 = vmatmul.f32.gmra.mxu0 %v4272
        %v4681 = vpop.f32.mrf.mxu0
        %v4682 = vadd.f32 %v4641, %v4681
        %4683 = vdwg.mxu0
        %vm4684 = vcmp.ge.f32.partialorder %v4456, 0.0
        %vm4685 = vcmp.ge.f32.partialorder %v4661, 0.0
        %vm4686 = vcmp.ge.f32.partialorder %v4459, 0.0
        %vm4687 = vcmp.ge.f32.partialorder %v4664, 0.0
        %vm4688 = vcmp.ge.f32.partialorder %v4462, 0.0
        %vm4689 = vcmp.ge.f32.partialorder %v4667, 0.0
        %vm4690 = vcmp.ge.f32.partialorder %v4465, 0.0
        %vm4691 = vcmp.ge.f32.partialorder %v4670, 0.0
        %vm4692 = vcmp.ge.f32.partialorder %v4468, 0.0
        %vm4693 = vcmp.ge.f32.partialorder %v4673, 0.0
        %vm4694 = vcmp.ge.f32.partialorder %v4471, 0.0
        %vm4695 = vcmp.ge.f32.partialorder %v4676, 0.0
        %vm4696 = vcmp.ge.f32.partialorder %v4474, 0.0
        %vm4697 = vcmp.ge.f32.partialorder %v4679, 0.0
        %vm4698 = vcmp.ge.f32.partialorder %v4477, 0.0
        %vm4699 = vcmp.ge.f32.partialorder %v4682, 0.0
        %v4700 = vmul.f32 %v4456, 0.1
        %v4701 = vmul.f32 %v4661, 0.1
        %v4702 = vmul.f32 %v4459, 0.1
        %v4703 = vmul.f32 %v4664, 0.1
        %v4704 = vmul.f32 %v4462, 0.1
        %v4705 = vmul.f32 %v4667, 0.1
        %v4706 = vmul.f32 %v4465, 0.1
        %v4707 = vmul.f32 %v4670, 0.1
        %v4708 = vmul.f32 %v4468, 0.1
        %v4709 = vmul.f32 %v4673, 0.1
        %v4710 = vmul.f32 %v4471, 0.1
        %v4711 = vmul.f32 %v4676, 0.1
        %v4712 = vmul.f32 %v4474, 0.1
        %v4713 = vmul.f32 %v4679, 0.1
        %v4714 = vmul.f32 %v4477, 0.1
        %v4715 = vmul.f32 %v4682, 0.1
        %v4716 = vsel %vm4684, %v4456, %v4700
        %v4717 = vsel %vm4685, %v4661, %v4701
        %v4718 = vsel %vm4686, %v4459, %v4702
        %v4719 = vsel %vm4687, %v4664, %v4703
        %v4720 = vsel %vm4688, %v4462, %v4704
        %v4721 = vsel %vm4689, %v4667, %v4705
        %v4722 = vsel %vm4690, %v4465, %v4706
        %v4723 = vsel %vm4691, %v4670, %v4707
        %v4724 = vsel %vm4692, %v4468, %v4708
        %v4725 = vsel %vm4693, %v4673, %v4709
        %v4726 = vsel %vm4694, %v4471, %v4710
        %v4727 = vsel %vm4695, %v4676, %v4711
        %v4728 = vsel %vm4696, %v4474, %v4712
        %v4729 = vsel %vm4697, %v4679, %v4713
        %v4730 = vsel %vm4698, %v4477, %v4714
        %v4731 = vsel %vm4699, %v4682, %v4715
        %v4732 = vld [vmem:[#allocation17] sm:$0xff]
        %v4733 = vld [vmem:[#allocation17 + $0x8] sm:$0xff]
        %v4734 = vld [vmem:[#allocation17 + $0x10] sm:$0xff]
        %v4735 = vld [vmem:[#allocation17 + $0x18] sm:$0xff]
        %v4737 = vsel %vm1602, %v4732, 0
        %v4740 = vsel %vm1602, %v4733, 0
        %v4743 = vsel %vm1602, %v4734, 0
        %v4746 = vsel %vm1602, %v4735, 0
        %4748 = vmatpush.msra.mxu0 0.0
        %4749 = vmatpush.msra.mxu0 0.0
        %4750 = vmatpush.msra.mxu0 0.0
        %4751 = vmatpush.msra.mxu0 0.0
        %4752 = vmatpush.msra.mxu0 0.0
        %4753 = vmatpush.msra.mxu0 0.0
        %4754 = vmatpush.msra.mxu0 0.0
        %4755 = vmatpush.msra.mxu0 0.0
        %4756 = vmatpush.msra.mxu0 %v4730
        %4757 = vmatpush.msra.mxu0 %v4728
        %4758 = vmatpush.msra.mxu0 %v4726
        %4759 = vmatpush.msra.mxu0 %v4724
        %4760 = vmatpush.msra.mxu0 %v4722
        %4761 = vmatpush.msra.mxu0 %v4720
        %4762 = vmatpush.msra.mxu0 %v4718
        %4763 = vmatpush.msra.mxu0 %v4716
        %4764 = vmatmul.f32.gmra.mxu0 %v4737
        %v4765 = vpop.f32.mrf.mxu0
        %v4766 = vadd.f32 0.0, %v4765
        %4767 = vmatmul.f32.gmra.mxu0 %v4740
        %v4768 = vpop.f32.mrf.mxu0
        %v4769 = vadd.f32 0.0, %v4768
        %4770 = vmatmul.f32.gmra.mxu0 %v4743
        %v4771 = vpop.f32.mrf.mxu0
        %v4772 = vadd.f32 0.0, %v4771
        %4773 = vmatmul.f32.gmra.mxu0 %v4746
        %v4774 = vpop.f32.mrf.mxu0
        %v4775 = vadd.f32 0.0, %v4774
        %4776 = vdwg.mxu0
        %4777 = vmatpush.msra.mxu0 0.0
        %4778 = vmatpush.msra.mxu0 0.0
        %4779 = vmatpush.msra.mxu0 0.0
        %4780 = vmatpush.msra.mxu0 0.0
        %4781 = vmatpush.msra.mxu0 0.0
        %4782 = vmatpush.msra.mxu0 0.0
        %4783 = vmatpush.msra.mxu0 0.0
        %4784 = vmatpush.msra.mxu0 0.0
        %4785 = vmatpush.msra.mxu0 %v4731
        %4786 = vmatpush.msra.mxu0 %v4729
        %4787 = vmatpush.msra.mxu0 %v4727
        %4788 = vmatpush.msra.mxu0 %v4725
        %4789 = vmatpush.msra.mxu0 %v4723
        %4790 = vmatpush.msra.mxu0 %v4721
        %4791 = vmatpush.msra.mxu0 %v4719
        %4792 = vmatpush.msra.mxu0 %v4717
        %4793 = vmatmul.f32.gmra.mxu0 %v4737
        %v4794 = vpop.f32.mrf.mxu0
        %v4795 = vadd.f32 0.0, %v4794
        %4796 = vmatmul.f32.gmra.mxu0 %v4740
        %v4797 = vpop.f32.mrf.mxu0
        %v4798 = vadd.f32 0.0, %v4797
        %4799 = vmatmul.f32.gmra.mxu0 %v4743
        %v4800 = vpop.f32.mrf.mxu0
        %v4801 = vadd.f32 0.0, %v4800
        %4802 = vmatmul.f32.gmra.mxu0 %v4746
        %v4803 = vpop.f32.mrf.mxu0
        %v4804 = vadd.f32 0.0, %v4803
        %4805 = vdwg.mxu0
        %v4807 = vsel %vm1602, %v2639, 0
        %v4810 = vsel %vm1602, %v2640, 0
        %v4813 = vsel %vm1602, %v2641, 0
        %v4816 = vsel %vm1602, %v2642, 0
        %4818 = vmatpush.msra.mxu0 0.0
        %4819 = vmatpush.msra.mxu0 0.0
        %4820 = vmatpush.msra.mxu0 0.0
        %4821 = vmatpush.msra.mxu0 0.0
        %4822 = vmatpush.msra.mxu0 0.0
        %4823 = vmatpush.msra.mxu0 0.0
        %4824 = vmatpush.msra.mxu0 0.0
        %4825 = vmatpush.msra.mxu0 0.0
        %4826 = vmatpush.msra.mxu0 %v2637
        %4827 = vmatpush.msra.mxu0 %v2635
        %4828 = vmatpush.msra.mxu0 %v2633
        %4829 = vmatpush.msra.mxu0 %v2631
        %4830 = vmatpush.msra.mxu0 %v2629
        %4831 = vmatpush.msra.mxu0 %v2627
        %4832 = vmatpush.msra.mxu0 %v2625
        %4833 = vmatpush.msra.mxu0 %v2623
        %4834 = vmatmul.f32.gmra.mxu0 %v4807
        %v4835 = vpop.f32.mrf.mxu0
        %v4836 = vadd.f32 %v4766, %v4835
        %4837 = vmatmul.f32.gmra.mxu0 %v4810
        %v4838 = vpop.f32.mrf.mxu0
        %v4839 = vadd.f32 %v4769, %v4838
        %4840 = vmatmul.f32.gmra.mxu0 %v4813
        %v4841 = vpop.f32.mrf.mxu0
        %v4842 = vadd.f32 %v4772, %v4841
        %4843 = vmatmul.f32.gmra.mxu0 %v4816
        %v4844 = vpop.f32.mrf.mxu0
        %v4845 = vadd.f32 %v4775, %v4844
        %4846 = vdwg.mxu0
        %4847 = vmatpush.msra.mxu0 0.0
        %4848 = vmatpush.msra.mxu0 0.0
        %4849 = vmatpush.msra.mxu0 0.0
        %4850 = vmatpush.msra.mxu0 0.0
        %4851 = vmatpush.msra.mxu0 0.0
        %4852 = vmatpush.msra.mxu0 0.0
        %4853 = vmatpush.msra.mxu0 0.0
        %4854 = vmatpush.msra.mxu0 0.0
        %4855 = vmatpush.msra.mxu0 %v2638
        %4856 = vmatpush.msra.mxu0 %v2636
        %4857 = vmatpush.msra.mxu0 %v2634
        %4858 = vmatpush.msra.mxu0 %v2632
        %4859 = vmatpush.msra.mxu0 %v2630
        %4860 = vmatpush.msra.mxu0 %v2628
        %4861 = vmatpush.msra.mxu0 %v2626
        %4862 = vmatpush.msra.mxu0 %v2624
        %4863 = vmatmul.f32.gmra.mxu0 %v4807
        %v4864 = vpop.f32.mrf.mxu0
        %v4865 = vadd.f32 %v4795, %v4864
        %4866 = vmatmul.f32.gmra.mxu0 %v4810
        %v4867 = vpop.f32.mrf.mxu0
        %v4868 = vadd.f32 %v4798, %v4867
        %4869 = vmatmul.f32.gmra.mxu0 %v4813
        %v4870 = vpop.f32.mrf.mxu0
        %v4871 = vadd.f32 %v4801, %v4870
        %4872 = vmatmul.f32.gmra.mxu0 %v4816
        %v4873 = vpop.f32.mrf.mxu0
        %v4874 = vadd.f32 %v4804, %v4873
        %4875 = vdwg.mxu0
        %4884 = vrot.lane.b32.xlu0 %v445, 17
        %v4885 = vpop.permute.xlu0 %4884
        %4886 = vrot.lane.b32.xlu0 %v446, 17
        %v4887 = vpop.permute.xlu0 %4886
        %4888 = vrot.lane.b32.xlu0 %v447, 17
        %v4889 = vpop.permute.xlu0 %4888
        %4890 = vrot.lane.b32.xlu0 %v448, 17
        %v4891 = vpop.permute.xlu0 %4890
        %4892 = vrot.lane.b32.xlu0 %v449, 17
        %v4893 = vpop.permute.xlu0 %4892
        %4894 = vrot.lane.b32.xlu0 %v450, 17
        %v4895 = vpop.permute.xlu0 %4894
        %4896 = vrot.lane.b32.xlu0 %v451, 17
        %v4897 = vpop.permute.xlu0 %4896
        %4898 = vrot.lane.b32.xlu0 %v452, 17
        %v4899 = vpop.permute.xlu0 %4898
        %v4900 = vsel %vm392, %v4885, %v4887
        %v4901 = vsel %vm392, %v4889, %v4891
        %v4902 = vsel %vm392, %v4893, %v4895
        %v4903 = vsel %vm392, %v4897, %v4899
        %vm4916 = vcmask 1047688
        %4917 = vst.msk [vmem:[#allocation2] sm:$0xff] %vm4916, %v4885
        %4918 = vst [vmem:[#allocation2 + $0x8] sm:$0xff] %v4900
        %4919 = vst.msk [vmem:[#allocation2 + $0x10] sm:$0xff] %vm392, %v4887
        %4920 = vst.msk [vmem:[#allocation2 + $0x18] sm:$0xff] %vm4916, %v4889
        %4921 = vst [vmem:[#allocation2 + $0x20] sm:$0xff] %v4901
        %4922 = vst.msk [vmem:[#allocation2 + $0x28] sm:$0xff] %vm392, %v4891
        %4923 = vst.msk [vmem:[#allocation2 + $0x30] sm:$0xff] %vm4916, %v4893
        %4924 = vst [vmem:[#allocation2 + $0x38] sm:$0xff] %v4902
        %4925 = vst.msk [vmem:[#allocation2 + $0x40] sm:$0xff] %vm392, %v4895
        %4926 = vst.msk [vmem:[#allocation2 + $0x48] sm:$0xff] %vm4916, %v4897
        %4927 = vst [vmem:[#allocation2 + $0x50] sm:$0xff] %v4903
        %4928 = vst.msk [vmem:[#allocation2 + $0x58] sm:$0xff] %vm392, %v4899
        %v4929 = vld [vmem:[#allocation2] sm:$0xff]
        %v4930 = vld [vmem:[#allocation2 + $0x8] sm:$0xff]
        %v4931 = vld [vmem:[#allocation2 + $0x18] sm:$0xff]
        %v4932 = vld [vmem:[#allocation2 + $0x20] sm:$0xff]
        %v4933 = vld [vmem:[#allocation2 + $0x30] sm:$0xff]
        %v4934 = vld [vmem:[#allocation2 + $0x38] sm:$0xff]
        %v4935 = vld [vmem:[#allocation2 + $0x48] sm:$0xff]
        %v4936 = vld [vmem:[#allocation2 + $0x50] sm:$0xff]
        %vm4937 = vcmp.ge.s32.totalorder %v390, 1
        %vm4938 = vcmp.ge.s32.totalorder %v391, 1
        %v4939 = vsel %vm4937, 1, 0
        %v4940 = vsel %vm4938, 1, 0
        %vm4941 = vcmp.eq.s32.totalorder %v4939, 1
        %vm4942 = vcmp.eq.s32.totalorder %v4940, 1
        %v4943 = vsel %vm4941, %v4929, 0.0
        %v4944 = vsel %vm4942, %v4930, 0.0
        %v4945 = vsel %vm4941, %v4931, 0.0
        %v4946 = vsel %vm4942, %v4932, 0.0
        %v4947 = vsel %vm4941, %v4933, 0.0
        %v4948 = vsel %vm4942, %v4934, 0.0
        %v4949 = vsel %vm4941, %v4935, 0.0
        %v4950 = vsel %vm4942, %v4936, 0.0
        %4951 = vst [vmem:[#allocation6] sm:$0xff] %v4943
        %4952 = vst [vmem:[#allocation6 + $0x8] sm:$0xff] %v4944
        %4953 = vst [vmem:[#allocation6 + $0x10] sm:$0xff] %v4945
        %4954 = vst [vmem:[#allocation6 + $0x18] sm:$0xff] %v4946
        %4955 = vst [vmem:[#allocation6 + $0x20] sm:$0xff] %v4947
        %4956 = vst [vmem:[#allocation6 + $0x28] sm:$0xff] %v4948
        %4957 = vst [vmem:[#allocation6 + $0x30] sm:$0xff] %v4949
        %4958 = vst [vmem:[#allocation6 + $0x38] sm:$0xff] %v4950
        %v4959 = vld [vmem:[#allocation2] sm:$0xff]
        %v4960 = vld [vmem:[#allocation2 + $0x8] sm:$0xff]
        %v4961 = vld [vmem:[#allocation2 + $0x10] sm:$0xff]
        %v4962 = vld [vmem:[#allocation2 + $0x18] sm:$0xff]
        %v4963 = vld [vmem:[#allocation2 + $0x20] sm:$0xff]
        %v4964 = vld [vmem:[#allocation2 + $0x28] sm:$0xff]
        %v4965 = vld [vmem:[#allocation2 + $0x30] sm:$0xff]
        %v4966 = vld [vmem:[#allocation2 + $0x38] sm:$0xff]
        %v4967 = vld [vmem:[#allocation2 + $0x40] sm:$0xff]
        %v4968 = vld [vmem:[#allocation2 + $0x48] sm:$0xff]
        %v4969 = vld [vmem:[#allocation2 + $0x50] sm:$0xff]
        %v4970 = vld [vmem:[#allocation2 + $0x58] sm:$0xff]
        %4983 = vrot.lane.b32.xlu0 %v4959, 127
        %v4984 = vpop.permute.xlu0 %4983
        %4985 = vrot.lane.b32.xlu0 %v4960, 127
        %v4986 = vpop.permute.xlu0 %4985
        %4987 = vrot.lane.b32.xlu0 %v4961, 127
        %v4988 = vpop.permute.xlu0 %4987
        %4989 = vrot.lane.b32.xlu0 %v4962, 127
        %v4990 = vpop.permute.xlu0 %4989
        %4991 = vrot.lane.b32.xlu0 %v4963, 127
        %v4992 = vpop.permute.xlu0 %4991
        %4993 = vrot.lane.b32.xlu0 %v4964, 127
        %v4994 = vpop.permute.xlu0 %4993
        %4995 = vrot.lane.b32.xlu0 %v4965, 127
        %v4996 = vpop.permute.xlu0 %4995
        %4997 = vrot.lane.b32.xlu0 %v4966, 127
        %v4998 = vpop.permute.xlu0 %4997
        %4999 = vrot.lane.b32.xlu0 %v4967, 127
        %v5000 = vpop.permute.xlu0 %4999
        %5001 = vrot.lane.b32.xlu0 %v4968, 127
        %v5002 = vpop.permute.xlu0 %5001
        %5003 = vrot.lane.b32.xlu0 %v4969, 127
        %v5004 = vpop.permute.xlu0 %5003
        %5005 = vrot.lane.b32.xlu0 %v4970, 127
        %v5006 = vpop.permute.xlu0 %5005
        %vm5007 = vcmask 1039360
        %v5008 = vsel %vm5007, %v4984, %v4986
        %v5009 = vsel %vm5007, %v4986, %v4988
        %v5010 = vsel %vm5007, %v4990, %v4992
        %v5011 = vsel %vm5007, %v4992, %v4994
        %v5012 = vsel %vm5007, %v4996, %v4998
        %v5013 = vsel %vm5007, %v4998, %v5000
        %v5014 = vsel %vm5007, %v5002, %v5004
        %v5015 = vsel %vm5007, %v5004, %v5006
        %5024 = vst [vmem:[#allocation6 + $0x40] sm:$0xff] %v5008
        %5025 = vst [vmem:[#allocation6 + $0x48] sm:$0xff] %v5009
        %5026 = vst [vmem:[#allocation6 + $0x50] sm:$0xff] %v5010
        %5027 = vst [vmem:[#allocation6 + $0x58] sm:$0xff] %v5011
        %5028 = vst [vmem:[#allocation6 + $0x60] sm:$0xff] %v5012
        %5029 = vst [vmem:[#allocation6 + $0x68] sm:$0xff] %v5013
        %5030 = vst [vmem:[#allocation6 + $0x70] sm:$0xff] %v5014
        %5031 = vst [vmem:[#allocation6 + $0x78] sm:$0xff] %v5015
        %v5032 = vld [vmem:[#allocation2] sm:$0xff]
        %v5033 = vld [vmem:[#allocation2 + $0x8] sm:$0xff]
        %v5034 = vld [vmem:[#allocation2 + $0x10] sm:$0xff]
        %v5035 = vld [vmem:[#allocation2 + $0x18] sm:$0xff]
        %v5036 = vld [vmem:[#allocation2 + $0x20] sm:$0xff]
        %v5037 = vld [vmem:[#allocation2 + $0x28] sm:$0xff]
        %v5038 = vld [vmem:[#allocation2 + $0x30] sm:$0xff]
        %v5039 = vld [vmem:[#allocation2 + $0x38] sm:$0xff]
        %v5040 = vld [vmem:[#allocation2 + $0x40] sm:$0xff]
        %v5041 = vld [vmem:[#allocation2 + $0x48] sm:$0xff]
        %v5042 = vld [vmem:[#allocation2 + $0x50] sm:$0xff]
        %v5043 = vld [vmem:[#allocation2 + $0x58] sm:$0xff]
        %vm5044 = vcmp.lt.s32.totalorder %v390, 15
        %vm5045 = vcmp.lt.s32.totalorder %v391, 15
        %v5046 = vsel %vm5044, 1, 0
        %v5047 = vsel %vm5045, 1, 0
        %vm5048 = vcmp.eq.s32.totalorder %v5046, 1
        %vm5049 = vcmp.eq.s32.totalorder %v5047, 1
        %5062 = vrot.lane.b32.xlu0 %v5032, 126
        %v5063 = vpop.permute.xlu0 %5062
        %5064 = vrot.lane.b32.xlu0 %v5033, 126
        %v5065 = vpop.permute.xlu0 %5064
        %5066 = vrot.lane.b32.xlu0 %v5034, 126
        %v5067 = vpop.permute.xlu0 %5066
        %5068 = vrot.lane.b32.xlu0 %v5035, 126
        %v5069 = vpop.permute.xlu0 %5068
        %5070 = vrot.lane.b32.xlu0 %v5036, 126
        %v5071 = vpop.permute.xlu0 %5070
        %5072 = vrot.lane.b32.xlu0 %v5037, 126
        %v5073 = vpop.permute.xlu0 %5072
        %5074 = vrot.lane.b32.xlu0 %v5038, 126
        %v5075 = vpop.permute.xlu0 %5074
        %5076 = vrot.lane.b32.xlu0 %v5039, 126
        %v5077 = vpop.permute.xlu0 %5076
        %5078 = vrot.lane.b32.xlu0 %v5040, 126
        %v5079 = vpop.permute.xlu0 %5078
        %5080 = vrot.lane.b32.xlu0 %v5041, 126
        %v5081 = vpop.permute.xlu0 %5080
        %5082 = vrot.lane.b32.xlu0 %v5042, 126
        %v5083 = vpop.permute.xlu0 %5082
        %5084 = vrot.lane.b32.xlu0 %v5043, 126
        %v5085 = vpop.permute.xlu0 %5084
        %v5086 = vsel %vm823, %v5063, %v5065
        %v5087 = vsel %vm823, %v5065, %v5067
        %v5088 = vsel %vm823, %v5069, %v5071
        %v5089 = vsel %vm823, %v5071, %v5073
        %v5090 = vsel %vm823, %v5075, %v5077
        %v5091 = vsel %vm823, %v5077, %v5079
        %v5092 = vsel %vm823, %v5081, %v5083
        %v5093 = vsel %vm823, %v5083, %v5085
        %v5102 = vsel %vm5048, %v5086, 0.0
        %v5103 = vsel %vm5049, %v5087, 0.0
        %v5104 = vsel %vm5048, %v5088, 0.0
        %v5105 = vsel %vm5049, %v5089, 0.0
        %v5106 = vsel %vm5048, %v5090, 0.0
        %v5107 = vsel %vm5049, %v5091, 0.0
        %v5108 = vsel %vm5048, %v5092, 0.0
        %v5109 = vsel %vm5049, %v5093, 0.0
        %5110 = vst [vmem:[#allocation6 + $0x80] sm:$0xff] %v5102
        %5111 = vst [vmem:[#allocation6 + $0x88] sm:$0xff] %v5103
        %5112 = vst [vmem:[#allocation6 + $0x90] sm:$0xff] %v5104
        %5113 = vst [vmem:[#allocation6 + $0x98] sm:$0xff] %v5105
        %5114 = vst [vmem:[#allocation6 + $0xa0] sm:$0xff] %v5106
        %5115 = vst [vmem:[#allocation6 + $0xa8] sm:$0xff] %v5107
        %5116 = vst [vmem:[#allocation6 + $0xb0] sm:$0xff] %v5108
        %5117 = vst [vmem:[#allocation6 + $0xb8] sm:$0xff] %v5109
        %v5118 = vld [vmem:[#allocation2] sm:$0xff]
        %v5119 = vld [vmem:[#allocation2 + $0x8] sm:$0xff]
        %v5120 = vld [vmem:[#allocation2 + $0x10] sm:$0xff]
        %v5121 = vld [vmem:[#allocation2 + $0x18] sm:$0xff]
        %v5122 = vld [vmem:[#allocation2 + $0x20] sm:$0xff]
        %v5123 = vld [vmem:[#allocation2 + $0x28] sm:$0xff]
        %v5124 = vld [vmem:[#allocation2 + $0x30] sm:$0xff]
        %v5125 = vld [vmem:[#allocation2 + $0x38] sm:$0xff]
        %v5126 = vld [vmem:[#allocation2 + $0x40] sm:$0xff]
        %v5127 = vld [vmem:[#allocation2 + $0x48] sm:$0xff]
        %v5128 = vld [vmem:[#allocation2 + $0x50] sm:$0xff]
        %v5129 = vld [vmem:[#allocation2 + $0x58] sm:$0xff]
        %5142 = vrot.lane.b32.xlu0 %v5118, 112
        %v5143 = vpop.permute.xlu0 %5142
        %5144 = vrot.lane.b32.xlu0 %v5119, 112
        %v5145 = vpop.permute.xlu0 %5144
        %5146 = vrot.lane.b32.xlu0 %v5120, 112
        %v5147 = vpop.permute.xlu0 %5146
        %5148 = vrot.lane.b32.xlu0 %v5121, 112
        %v5149 = vpop.permute.xlu0 %5148
        %5150 = vrot.lane.b32.xlu0 %v5122, 112
        %v5151 = vpop.permute.xlu0 %5150
        %5152 = vrot.lane.b32.xlu0 %v5123, 112
        %v5153 = vpop.permute.xlu0 %5152
        %5154 = vrot.lane.b32.xlu0 %v5124, 112
        %v5155 = vpop.permute.xlu0 %5154
        %5156 = vrot.lane.b32.xlu0 %v5125, 112
        %v5157 = vpop.permute.xlu0 %5156
        %5158 = vrot.lane.b32.xlu0 %v5126, 112
        %v5159 = vpop.permute.xlu0 %5158
        %5160 = vrot.lane.b32.xlu0 %v5127, 112
        %v5161 = vpop.permute.xlu0 %5160
        %5162 = vrot.lane.b32.xlu0 %v5128, 112
        %v5163 = vpop.permute.xlu0 %5162
        %5164 = vrot.lane.b32.xlu0 %v5129, 112
        %v5165 = vpop.permute.xlu0 %5164
        %vm5166 = vcmask 916480
        %v5167 = vsel %vm5166, %v5143, %v5145
        %v5168 = vsel %vm5166, %v5145, %v5147
        %v5169 = vsel %vm5166, %v5149, %v5151
        %v5170 = vsel %vm5166, %v5151, %v5153
        %v5171 = vsel %vm5166, %v5155, %v5157
        %v5172 = vsel %vm5166, %v5157, %v5159
        %v5173 = vsel %vm5166, %v5161, %v5163
        %v5174 = vsel %vm5166, %v5163, %v5165
        %v5183 = vsel %vm4941, %v5167, 0.0
        %v5184 = vsel %vm4942, %v5168, 0.0
        %v5185 = vsel %vm4941, %v5169, 0.0
        %v5186 = vsel %vm4942, %v5170, 0.0
        %v5187 = vsel %vm4941, %v5171, 0.0
        %v5188 = vsel %vm4942, %v5172, 0.0
        %v5189 = vsel %vm4941, %v5173, 0.0
        %v5190 = vsel %vm4942, %v5174, 0.0
        %5191 = vst [vmem:[#allocation6 + $0xc0] sm:$0xff] %v5183
        %5192 = vst [vmem:[#allocation6 + $0xc8] sm:$0xff] %v5184
        %5193 = vst [vmem:[#allocation6 + $0xd0] sm:$0xff] %v5185
        %5194 = vst [vmem:[#allocation6 + $0xd8] sm:$0xff] %v5186
        %5195 = vst [vmem:[#allocation6 + $0xe0] sm:$0xff] %v5187
        %5196 = vst [vmem:[#allocation6 + $0xe8] sm:$0xff] %v5188
        %5197 = vst [vmem:[#allocation6 + $0xf0] sm:$0xff] %v5189
        %5198 = vst [vmem:[#allocation6 + $0xf8] sm:$0xff] %v5190
        %v5199 = vld [vmem:[#allocation2] sm:$0xff]
        %v5200 = vld [vmem:[#allocation2 + $0x8] sm:$0xff]
        %v5201 = vld [vmem:[#allocation2 + $0x10] sm:$0xff]
        %v5202 = vld [vmem:[#allocation2 + $0x18] sm:$0xff]
        %v5203 = vld [vmem:[#allocation2 + $0x20] sm:$0xff]
        %v5204 = vld [vmem:[#allocation2 + $0x28] sm:$0xff]
        %v5205 = vld [vmem:[#allocation2 + $0x30] sm:$0xff]
        %v5206 = vld [vmem:[#allocation2 + $0x38] sm:$0xff]
        %v5207 = vld [vmem:[#allocation2 + $0x40] sm:$0xff]
        %v5208 = vld [vmem:[#allocation2 + $0x48] sm:$0xff]
        %v5209 = vld [vmem:[#allocation2 + $0x50] sm:$0xff]
        %v5210 = vld [vmem:[#allocation2 + $0x58] sm:$0xff]
        %5223 = vrot.lane.b32.xlu0 %v5199, 111
        %v5224 = vpop.permute.xlu0 %5223
        %5225 = vrot.lane.b32.xlu0 %v5200, 111
        %v5226 = vpop.permute.xlu0 %5225
        %5227 = vrot.lane.b32.xlu0 %v5201, 111
        %v5228 = vpop.permute.xlu0 %5227
        %5229 = vrot.lane.b32.xlu0 %v5202, 111
        %v5230 = vpop.permute.xlu0 %5229
        %5231 = vrot.lane.b32.xlu0 %v5203, 111
        %v5232 = vpop.permute.xlu0 %5231
        %5233 = vrot.lane.b32.xlu0 %v5204, 111
        %v5234 = vpop.permute.xlu0 %5233
        %5235 = vrot.lane.b32.xlu0 %v5205, 111
        %v5236 = vpop.permute.xlu0 %5235
        %5237 = vrot.lane.b32.xlu0 %v5206, 111
        %v5238 = vpop.permute.xlu0 %5237
        %5239 = vrot.lane.b32.xlu0 %v5207, 111
        %v5240 = vpop.permute.xlu0 %5239
        %5241 = vrot.lane.b32.xlu0 %v5208, 111
        %v5242 = vpop.permute.xlu0 %5241
        %5243 = vrot.lane.b32.xlu0 %v5209, 111
        %v5244 = vpop.permute.xlu0 %5243
        %5245 = vrot.lane.b32.xlu0 %v5210, 111
        %v5246 = vpop.permute.xlu0 %5245
        %vm5247 = vcmask 908288
        %v5248 = vsel %vm5247, %v5224, %v5226
        %v5249 = vsel %vm5247, %v5226, %v5228
        %v5250 = vsel %vm5247, %v5230, %v5232
        %v5251 = vsel %vm5247, %v5232, %v5234
        %v5252 = vsel %vm5247, %v5236, %v5238
        %v5253 = vsel %vm5247, %v5238, %v5240
        %v5254 = vsel %vm5247, %v5242, %v5244
        %v5255 = vsel %vm5247, %v5244, %v5246
        %5264 = vst [vmem:[#allocation6 + $0x100] sm:$0xff] %v5248
        %5265 = vst [vmem:[#allocation6 + $0x108] sm:$0xff] %v5249
        %5266 = vst [vmem:[#allocation6 + $0x110] sm:$0xff] %v5250
        %5267 = vst [vmem:[#allocation6 + $0x118] sm:$0xff] %v5251
        %5268 = vst [vmem:[#allocation6 + $0x120] sm:$0xff] %v5252
        %5269 = vst [vmem:[#allocation6 + $0x128] sm:$0xff] %v5253
        %5270 = vst [vmem:[#allocation6 + $0x130] sm:$0xff] %v5254
        %5271 = vst [vmem:[#allocation6 + $0x138] sm:$0xff] %v5255
        %v5272 = vld [vmem:[#allocation2] sm:$0xff]
        %v5273 = vld [vmem:[#allocation2 + $0x8] sm:$0xff]
        %v5274 = vld [vmem:[#allocation2 + $0x10] sm:$0xff]
        %v5275 = vld [vmem:[#allocation2 + $0x18] sm:$0xff]
        %v5276 = vld [vmem:[#allocation2 + $0x20] sm:$0xff]
        %v5277 = vld [vmem:[#allocation2 + $0x28] sm:$0xff]
        %v5278 = vld [vmem:[#allocation2 + $0x30] sm:$0xff]
        %v5279 = vld [vmem:[#allocation2 + $0x38] sm:$0xff]
        %v5280 = vld [vmem:[#allocation2 + $0x40] sm:$0xff]
        %v5281 = vld [vmem:[#allocation2 + $0x48] sm:$0xff]
        %v5282 = vld [vmem:[#allocation2 + $0x50] sm:$0xff]
        %v5283 = vld [vmem:[#allocation2 + $0x58] sm:$0xff]
        %5296 = vrot.lane.b32.xlu0 %v5272, 110
        %v5297 = vpop.permute.xlu0 %5296
        %5298 = vrot.lane.b32.xlu0 %v5273, 110
        %v5299 = vpop.permute.xlu0 %5298
        %5300 = vrot.lane.b32.xlu0 %v5274, 110
        %v5301 = vpop.permute.xlu0 %5300
        %5302 = vrot.lane.b32.xlu0 %v5275, 110
        %v5303 = vpop.permute.xlu0 %5302
        %5304 = vrot.lane.b32.xlu0 %v5276, 110
        %v5305 = vpop.permute.xlu0 %5304
        %5306 = vrot.lane.b32.xlu0 %v5277, 110
        %v5307 = vpop.permute.xlu0 %5306
        %5308 = vrot.lane.b32.xlu0 %v5278, 110
        %v5309 = vpop.permute.xlu0 %5308
        %5310 = vrot.lane.b32.xlu0 %v5279, 110
        %v5311 = vpop.permute.xlu0 %5310
        %5312 = vrot.lane.b32.xlu0 %v5280, 110
        %v5313 = vpop.permute.xlu0 %5312
        %5314 = vrot.lane.b32.xlu0 %v5281, 110
        %v5315 = vpop.permute.xlu0 %5314
        %5316 = vrot.lane.b32.xlu0 %v5282, 110
        %v5317 = vpop.permute.xlu0 %5316
        %5318 = vrot.lane.b32.xlu0 %v5283, 110
        %v5319 = vpop.permute.xlu0 %5318
        %vm5320 = vcmask 900096
        %v5321 = vsel %vm5320, %v5297, %v5299
        %v5322 = vsel %vm5320, %v5299, %v5301
        %v5323 = vsel %vm5320, %v5303, %v5305
        %v5324 = vsel %vm5320, %v5305, %v5307
        %v5325 = vsel %vm5320, %v5309, %v5311
        %v5326 = vsel %vm5320, %v5311, %v5313
        %v5327 = vsel %vm5320, %v5315, %v5317
        %v5328 = vsel %vm5320, %v5317, %v5319
        %v5337 = vsel %vm5048, %v5321, 0.0
        %v5338 = vsel %vm5049, %v5322, 0.0
        %v5339 = vsel %vm5048, %v5323, 0.0
        %v5340 = vsel %vm5049, %v5324, 0.0
        %v5341 = vsel %vm5048, %v5325, 0.0
        %v5342 = vsel %vm5049, %v5326, 0.0
        %v5343 = vsel %vm5048, %v5327, 0.0
        %v5344 = vsel %vm5049, %v5328, 0.0
        %5345 = vst [vmem:[#allocation6 + $0x140] sm:$0xff] %v5337
        %5346 = vst [vmem:[#allocation6 + $0x148] sm:$0xff] %v5338
        %5347 = vst [vmem:[#allocation6 + $0x150] sm:$0xff] %v5339
        %5348 = vst [vmem:[#allocation6 + $0x158] sm:$0xff] %v5340
        %5349 = vst [vmem:[#allocation6 + $0x160] sm:$0xff] %v5341
        %5350 = vst [vmem:[#allocation6 + $0x168] sm:$0xff] %v5342
        %5351 = vst [vmem:[#allocation6 + $0x170] sm:$0xff] %v5343
        %5352 = vst [vmem:[#allocation6 + $0x178] sm:$0xff] %v5344
        %v5353 = vld [vmem:[#allocation2] sm:$0xff]
        %v5354 = vld [vmem:[#allocation2 + $0x8] sm:$0xff]
        %v5355 = vld [vmem:[#allocation2 + $0x10] sm:$0xff]
        %v5356 = vld [vmem:[#allocation2 + $0x18] sm:$0xff]
        %v5357 = vld [vmem:[#allocation2 + $0x20] sm:$0xff]
        %v5358 = vld [vmem:[#allocation2 + $0x28] sm:$0xff]
        %v5359 = vld [vmem:[#allocation2 + $0x30] sm:$0xff]
        %v5360 = vld [vmem:[#allocation2 + $0x38] sm:$0xff]
        %v5361 = vld [vmem:[#allocation2 + $0x40] sm:$0xff]
        %v5362 = vld [vmem:[#allocation2 + $0x48] sm:$0xff]
        %v5363 = vld [vmem:[#allocation2 + $0x50] sm:$0xff]
        %v5364 = vld [vmem:[#allocation2 + $0x58] sm:$0xff]
        %5377 = vrot.lane.b32.xlu0 %v5353, 96
        %v5378 = vpop.permute.xlu0 %5377
        %5379 = vrot.lane.b32.xlu0 %v5354, 96
        %v5380 = vpop.permute.xlu0 %5379
        %5381 = vrot.lane.b32.xlu0 %v5355, 96
        %v5382 = vpop.permute.xlu0 %5381
        %5383 = vrot.lane.b32.xlu0 %v5356, 96
        %v5384 = vpop.permute.xlu0 %5383
        %5385 = vrot.lane.b32.xlu0 %v5357, 96
        %v5386 = vpop.permute.xlu0 %5385
        %5387 = vrot.lane.b32.xlu0 %v5358, 96
        %v5388 = vpop.permute.xlu0 %5387
        %5389 = vrot.lane.b32.xlu0 %v5359, 96
        %v5390 = vpop.permute.xlu0 %5389
        %5391 = vrot.lane.b32.xlu0 %v5360, 96
        %v5392 = vpop.permute.xlu0 %5391
        %5393 = vrot.lane.b32.xlu0 %v5361, 96
        %v5394 = vpop.permute.xlu0 %5393
        %5395 = vrot.lane.b32.xlu0 %v5362, 96
        %v5396 = vpop.permute.xlu0 %5395
        %5397 = vrot.lane.b32.xlu0 %v5363, 96
        %v5398 = vpop.permute.xlu0 %5397
        %5399 = vrot.lane.b32.xlu0 %v5364, 96
        %v5400 = vpop.permute.xlu0 %5399
        %v5401 = vsel %vm1135, %v5378, %v5380
        %v5402 = vsel %vm1135, %v5380, %v5382
        %v5403 = vsel %vm1135, %v5384, %v5386
        %v5404 = vsel %vm1135, %v5386, %v5388
        %v5405 = vsel %vm1135, %v5390, %v5392
        %v5406 = vsel %vm1135, %v5392, %v5394
        %v5407 = vsel %vm1135, %v5396, %v5398
        %v5408 = vsel %vm1135, %v5398, %v5400
        %v5417 = vsel %vm4941, %v5401, 0.0
        %v5418 = vsel %vm4942, %v5402, 0.0
        %v5419 = vsel %vm4941, %v5403, 0.0
        %v5420 = vsel %vm4942, %v5404, 0.0
        %v5421 = vsel %vm4941, %v5405, 0.0
        %v5422 = vsel %vm4942, %v5406, 0.0
        %v5423 = vsel %vm4941, %v5407, 0.0
        %v5424 = vsel %vm4942, %v5408, 0.0
        %5425 = vst [vmem:[#allocation6 + $0x180] sm:$0xff] %v5417
        %5426 = vst [vmem:[#allocation6 + $0x188] sm:$0xff] %v5418
        %5427 = vst [vmem:[#allocation6 + $0x190] sm:$0xff] %v5419
        %5428 = vst [vmem:[#allocation6 + $0x198] sm:$0xff] %v5420
        %5429 = vst [vmem:[#allocation6 + $0x1a0] sm:$0xff] %v5421
        %5430 = vst [vmem:[#allocation6 + $0x1a8] sm:$0xff] %v5422
        %5431 = vst [vmem:[#allocation6 + $0x1b0] sm:$0xff] %v5423
        %5432 = vst [vmem:[#allocation6 + $0x1b8] sm:$0xff] %v5424
        %v5433 = vld [vmem:[#allocation2] sm:$0xff]
        %v5434 = vld [vmem:[#allocation2 + $0x8] sm:$0xff]
        %v5435 = vld [vmem:[#allocation2 + $0x10] sm:$0xff]
        %v5436 = vld [vmem:[#allocation2 + $0x18] sm:$0xff]
        %v5437 = vld [vmem:[#allocation2 + $0x20] sm:$0xff]
        %v5438 = vld [vmem:[#allocation2 + $0x28] sm:$0xff]
        %v5439 = vld [vmem:[#allocation2 + $0x30] sm:$0xff]
        %v5440 = vld [vmem:[#allocation2 + $0x38] sm:$0xff]
        %v5441 = vld [vmem:[#allocation2 + $0x40] sm:$0xff]
        %v5442 = vld [vmem:[#allocation2 + $0x48] sm:$0xff]
        %v5443 = vld [vmem:[#allocation2 + $0x50] sm:$0xff]
        %v5444 = vld [vmem:[#allocation2 + $0x58] sm:$0xff]
        %5457 = vrot.lane.b32.xlu0 %v5433, 95
        %v5458 = vpop.permute.xlu0 %5457
        %5459 = vrot.lane.b32.xlu0 %v5434, 95
        %v5460 = vpop.permute.xlu0 %5459
        %5461 = vrot.lane.b32.xlu0 %v5435, 95
        %v5462 = vpop.permute.xlu0 %5461
        %5463 = vrot.lane.b32.xlu0 %v5436, 95
        %v5464 = vpop.permute.xlu0 %5463
        %5465 = vrot.lane.b32.xlu0 %v5437, 95
        %v5466 = vpop.permute.xlu0 %5465
        %5467 = vrot.lane.b32.xlu0 %v5438, 95
        %v5468 = vpop.permute.xlu0 %5467
        %5469 = vrot.lane.b32.xlu0 %v5439, 95
        %v5470 = vpop.permute.xlu0 %5469
        %5471 = vrot.lane.b32.xlu0 %v5440, 95
        %v5472 = vpop.permute.xlu0 %5471
        %5473 = vrot.lane.b32.xlu0 %v5441, 95
        %v5474 = vpop.permute.xlu0 %5473
        %5475 = vrot.lane.b32.xlu0 %v5442, 95
        %v5476 = vpop.permute.xlu0 %5475
        %5477 = vrot.lane.b32.xlu0 %v5443, 95
        %v5478 = vpop.permute.xlu0 %5477
        %5479 = vrot.lane.b32.xlu0 %v5444, 95
        %v5480 = vpop.permute.xlu0 %5479
        %vm5481 = vcmask 777216
        %v5482 = vsel %vm5481, %v5458, %v5460
        %v5483 = vsel %vm5481, %v5460, %v5462
        %v5484 = vsel %vm5481, %v5464, %v5466
        %v5485 = vsel %vm5481, %v5466, %v5468
        %v5486 = vsel %vm5481, %v5470, %v5472
        %v5487 = vsel %vm5481, %v5472, %v5474
        %v5488 = vsel %vm5481, %v5476, %v5478
        %v5489 = vsel %vm5481, %v5478, %v5480
        %5498 = vst [vmem:[#allocation6 + $0x1c0] sm:$0xff] %v5482
        %5499 = vst [vmem:[#allocation6 + $0x1c8] sm:$0xff] %v5483
        %5500 = vst [vmem:[#allocation6 + $0x1d0] sm:$0xff] %v5484
        %5501 = vst [vmem:[#allocation6 + $0x1d8] sm:$0xff] %v5485
        %5502 = vst [vmem:[#allocation6 + $0x1e0] sm:$0xff] %v5486
        %5503 = vst [vmem:[#allocation6 + $0x1e8] sm:$0xff] %v5487
        %5504 = vst [vmem:[#allocation6 + $0x1f0] sm:$0xff] %v5488
        %5505 = vst [vmem:[#allocation6 + $0x1f8] sm:$0xff] %v5489
        %v5506 = vld [vmem:[#allocation2] sm:$0xff]
        %v5507 = vld [vmem:[#allocation2 + $0x8] sm:$0xff]
        %v5508 = vld [vmem:[#allocation2 + $0x10] sm:$0xff]
        %v5509 = vld [vmem:[#allocation2 + $0x18] sm:$0xff]
        %v5510 = vld [vmem:[#allocation2 + $0x20] sm:$0xff]
        %v5511 = vld [vmem:[#allocation2 + $0x28] sm:$0xff]
        %v5512 = vld [vmem:[#allocation2 + $0x30] sm:$0xff]
        %v5513 = vld [vmem:[#allocation2 + $0x38] sm:$0xff]
        %v5514 = vld [vmem:[#allocation2 + $0x40] sm:$0xff]
        %v5515 = vld [vmem:[#allocation2 + $0x48] sm:$0xff]
        %v5516 = vld [vmem:[#allocation2 + $0x50] sm:$0xff]
        %v5517 = vld [vmem:[#allocation2 + $0x58] sm:$0xff]
        %5530 = vrot.lane.b32.xlu0 %v5506, 94
        %v5531 = vpop.permute.xlu0 %5530
        %5532 = vrot.lane.b32.xlu0 %v5507, 94
        %v5533 = vpop.permute.xlu0 %5532
        %5534 = vrot.lane.b32.xlu0 %v5508, 94
        %v5535 = vpop.permute.xlu0 %5534
        %5536 = vrot.lane.b32.xlu0 %v5509, 94
        %v5537 = vpop.permute.xlu0 %5536
        %5538 = vrot.lane.b32.xlu0 %v5510, 94
        %v5539 = vpop.permute.xlu0 %5538
        %5540 = vrot.lane.b32.xlu0 %v5511, 94
        %v5541 = vpop.permute.xlu0 %5540
        %5542 = vrot.lane.b32.xlu0 %v5512, 94
        %v5543 = vpop.permute.xlu0 %5542
        %5544 = vrot.lane.b32.xlu0 %v5513, 94
        %v5545 = vpop.permute.xlu0 %5544
        %5546 = vrot.lane.b32.xlu0 %v5514, 94
        %v5547 = vpop.permute.xlu0 %5546
        %5548 = vrot.lane.b32.xlu0 %v5515, 94
        %v5549 = vpop.permute.xlu0 %5548
        %5550 = vrot.lane.b32.xlu0 %v5516, 94
        %v5551 = vpop.permute.xlu0 %5550
        %5552 = vrot.lane.b32.xlu0 %v5517, 94
        %v5553 = vpop.permute.xlu0 %5552
        %v5554 = vsel %vm1296, %v5531, %v5533
        %v5555 = vsel %vm1296, %v5533, %v5535
        %v5556 = vsel %vm1296, %v5537, %v5539
        %v5557 = vsel %vm1296, %v5539, %v5541
        %v5558 = vsel %vm1296, %v5543, %v5545
        %v5559 = vsel %vm1296, %v5545, %v5547
        %v5560 = vsel %vm1296, %v5549, %v5551
        %v5561 = vsel %vm1296, %v5551, %v5553
        %v5570 = vsel %vm5048, %v5554, 0.0
        %v5571 = vsel %vm5049, %v5555, 0.0
        %v5572 = vsel %vm5048, %v5556, 0.0
        %v5573 = vsel %vm5049, %v5557, 0.0
        %v5574 = vsel %vm5048, %v5558, 0.0
        %v5575 = vsel %vm5049, %v5559, 0.0
        %v5576 = vsel %vm5048, %v5560, 0.0
        %v5577 = vsel %vm5049, %v5561, 0.0
        %5578 = vst [vmem:[#allocation6 + $0x200] sm:$0xff] %v5570
        %5579 = vst [vmem:[#allocation6 + $0x208] sm:$0xff] %v5571
        %5580 = vst [vmem:[#allocation6 + $0x210] sm:$0xff] %v5572
        %5581 = vst [vmem:[#allocation6 + $0x218] sm:$0xff] %v5573
        %5582 = vst [vmem:[#allocation6 + $0x220] sm:$0xff] %v5574
        %5583 = vst [vmem:[#allocation6 + $0x228] sm:$0xff] %v5575
        %5584 = vst [vmem:[#allocation6 + $0x230] sm:$0xff] %v5576
        %5585 = vst [vmem:[#allocation6 + $0x238] sm:$0xff] %v5577
        %v5586 = vld [vmem:[%s4] sm:$0xff]
        %v5587 = vld [vmem:[%s4 + $0x8] sm:$0xff]
        %v5588 = vld [vmem:[%s4 + $0x10] sm:$0xff]
        %v5589 = vld [vmem:[%s4 + $0x18] sm:$0xff]
        %v5590 = vld [vmem:[%s4 + $0x20] sm:$0xff]
        %v5591 = vld [vmem:[%s4 + $0x28] sm:$0xff]
        %v5592 = vld [vmem:[%s4 + $0x30] sm:$0xff]
        %v5593 = vld [vmem:[%s4 + $0x38] sm:$0xff]
        %v5594 = vld [vmem:[%s4 + $0x40] sm:$0xff]
        %v5595 = vld [vmem:[%s4 + $0x48] sm:$0xff]
        %v5596 = vld [vmem:[%s4 + $0x50] sm:$0xff]
        %v5597 = vld [vmem:[%s4 + $0x58] sm:$0xff]
        %v5598 = vld [vmem:[#allocation6] sm:$0xff]
        %v5599 = vld [vmem:[#allocation6 + $0x8] sm:$0xff]
        %v5600 = vld [vmem:[#allocation6 + $0x10] sm:$0xff]
        %v5601 = vld [vmem:[#allocation6 + $0x18] sm:$0xff]
        %v5602 = vld [vmem:[#allocation6 + $0x20] sm:$0xff]
        %v5603 = vld [vmem:[#allocation6 + $0x28] sm:$0xff]
        %v5604 = vld [vmem:[#allocation6 + $0x30] sm:$0xff]
        %v5605 = vld [vmem:[#allocation6 + $0x38] sm:$0xff]
        %v5606 = vld [vmem:[#allocation6 + $0x40] sm:$0xff]
        %v5607 = vld [vmem:[#allocation6 + $0x48] sm:$0xff]
        %v5608 = vld [vmem:[#allocation6 + $0x50] sm:$0xff]
        %v5609 = vld [vmem:[#allocation6 + $0x58] sm:$0xff]
        %v5610 = vld [vmem:[#allocation6 + $0x60] sm:$0xff]
        %v5611 = vld [vmem:[#allocation6 + $0x68] sm:$0xff]
        %v5612 = vld [vmem:[#allocation6 + $0x70] sm:$0xff]
        %v5613 = vld [vmem:[#allocation6 + $0x78] sm:$0xff]
        %v5614 = vld [vmem:[#allocation6 + $0x80] sm:$0xff]
        %v5615 = vld [vmem:[#allocation6 + $0x88] sm:$0xff]
        %v5616 = vld [vmem:[#allocation6 + $0x90] sm:$0xff]
        %v5617 = vld [vmem:[#allocation6 + $0x98] sm:$0xff]
        %v5618 = vld [vmem:[#allocation6 + $0xa0] sm:$0xff]
        %v5619 = vld [vmem:[#allocation6 + $0xa8] sm:$0xff]
        %v5620 = vld [vmem:[#allocation6 + $0xb0] sm:$0xff]
        %v5621 = vld [vmem:[#allocation6 + $0xb8] sm:$0xff]
        %v5622 = vld [vmem:[#allocation6 + $0xc0] sm:$0xff]
        %v5623 = vld [vmem:[#allocation6 + $0xc8] sm:$0xff]
        %v5624 = vld [vmem:[#allocation6 + $0xd0] sm:$0xff]
        %v5625 = vld [vmem:[#allocation6 + $0xd8] sm:$0xff]
        %v5626 = vld [vmem:[#allocation6 + $0xe0] sm:$0xff]
        %v5627 = vld [vmem:[#allocation6 + $0xe8] sm:$0xff]
        %v5628 = vld [vmem:[#allocation6 + $0xf0] sm:$0xff]
        %v5629 = vld [vmem:[#allocation6 + $0xf8] sm:$0xff]
        %v5630 = vld [vmem:[#allocation6 + $0x100] sm:$0xff]
        %v5631 = vld [vmem:[#allocation6 + $0x108] sm:$0xff]
        %v5632 = vld [vmem:[#allocation6 + $0x110] sm:$0xff]
        %v5633 = vld [vmem:[#allocation6 + $0x118] sm:$0xff]
        %v5634 = vld [vmem:[#allocation6 + $0x120] sm:$0xff]
        %v5635 = vld [vmem:[#allocation6 + $0x128] sm:$0xff]
        %v5636 = vld [vmem:[#allocation6 + $0x130] sm:$0xff]
        %v5637 = vld [vmem:[#allocation6 + $0x138] sm:$0xff]
        %v5638 = vld [vmem:[#allocation6 + $0x140] sm:$0xff]
        %v5639 = vld [vmem:[#allocation6 + $0x148] sm:$0xff]
        %v5640 = vld [vmem:[#allocation6 + $0x150] sm:$0xff]
        %v5641 = vld [vmem:[#allocation6 + $0x158] sm:$0xff]
        %v5642 = vld [vmem:[#allocation6 + $0x160] sm:$0xff]
        %v5643 = vld [vmem:[#allocation6 + $0x168] sm:$0xff]
        %v5644 = vld [vmem:[#allocation6 + $0x170] sm:$0xff]
        %v5645 = vld [vmem:[#allocation6 + $0x178] sm:$0xff]
        %v5646 = vld [vmem:[#allocation6 + $0x180] sm:$0xff]
        %v5647 = vld [vmem:[#allocation6 + $0x188] sm:$0xff]
        %v5648 = vld [vmem:[#allocation6 + $0x190] sm:$0xff]
        %v5649 = vld [vmem:[#allocation6 + $0x198] sm:$0xff]
        %v5650 = vld [vmem:[#allocation6 + $0x1a0] sm:$0xff]
        %v5651 = vld [vmem:[#allocation6 + $0x1a8] sm:$0xff]
        %v5652 = vld [vmem:[#allocation6 + $0x1b0] sm:$0xff]
        %v5653 = vld [vmem:[#allocation6 + $0x1b8] sm:$0xff]
        %v5654 = vld [vmem:[#allocation6 + $0x1c0] sm:$0xff]
        %v5655 = vld [vmem:[#allocation6 + $0x1c8] sm:$0xff]
        %v5656 = vld [vmem:[#allocation6 + $0x1d0] sm:$0xff]
        %v5657 = vld [vmem:[#allocation6 + $0x1d8] sm:$0xff]
        %v5658 = vld [vmem:[#allocation6 + $0x1e0] sm:$0xff]
        %v5659 = vld [vmem:[#allocation6 + $0x1e8] sm:$0xff]
        %v5660 = vld [vmem:[#allocation6 + $0x1f0] sm:$0xff]
        %v5661 = vld [vmem:[#allocation6 + $0x1f8] sm:$0xff]
        %v5662 = vld [vmem:[#allocation6 + $0x200] sm:$0xff]
        %v5663 = vld [vmem:[#allocation6 + $0x208] sm:$0xff]
        %v5664 = vld [vmem:[#allocation6 + $0x210] sm:$0xff]
        %v5665 = vld [vmem:[#allocation6 + $0x218] sm:$0xff]
        %v5666 = vld [vmem:[#allocation6 + $0x220] sm:$0xff]
        %v5667 = vld [vmem:[#allocation6 + $0x228] sm:$0xff]
        %v5668 = vld [vmem:[#allocation6 + $0x230] sm:$0xff]
        %v5669 = vld [vmem:[#allocation6 + $0x238] sm:$0xff]
        %v5671 = vsel %vm461, %v5588, 0
        %v5674 = vsel %vm461, %v5591, 0
        %v5677 = vsel %vm461, %v5594, 0
        %v5680 = vsel %vm461, %v5597, 0
        %5682 = vmatpush.msra.mxu0 %v5628
        %5683 = vmatpush.msra.mxu0 %v5626
        %5684 = vmatpush.msra.mxu0 %v5624
        %5685 = vmatpush.msra.mxu0 %v5622
        %5686 = vmatpush.msra.mxu0 %v5620
        %5687 = vmatpush.msra.mxu0 %v5618
        %5688 = vmatpush.msra.mxu0 %v5616
        %5689 = vmatpush.msra.mxu0 %v5614
        %5690 = vmatpush.msra.mxu0 %v5612
        %5691 = vmatpush.msra.mxu0 %v5610
        %5692 = vmatpush.msra.mxu0 %v5608
        %5693 = vmatpush.msra.mxu0 %v5606
        %5694 = vmatpush.msra.mxu0 %v5604
        %5695 = vmatpush.msra.mxu0 %v5602
        %5696 = vmatpush.msra.mxu0 %v5600
        %5697 = vmatpush.msra.mxu0 %v5598
        %5698 = vmatmul.f32.gmra.mxu0 %v5586
        %v5699 = vpop.f32.mrf.mxu0
        %v5700 = vadd.f32 0.0, %v5699
        %5701 = vmatmul.f32.gmra.mxu0 %v5589
        %v5702 = vpop.f32.mrf.mxu0
        %v5703 = vadd.f32 0.0, %v5702
        %5704 = vmatmul.f32.gmra.mxu0 %v5592
        %v5705 = vpop.f32.mrf.mxu0
        %v5706 = vadd.f32 0.0, %v5705
        %5707 = vmatmul.f32.gmra.mxu0 %v5595
        %v5708 = vpop.f32.mrf.mxu0
        %v5709 = vadd.f32 0.0, %v5708
        %5710 = vdwg.mxu0
        %5711 = vmatpush.msra.mxu0 %v5660
        %5712 = vmatpush.msra.mxu0 %v5658
        %5713 = vmatpush.msra.mxu0 %v5656
        %5714 = vmatpush.msra.mxu0 %v5654
        %5715 = vmatpush.msra.mxu0 %v5652
        %5716 = vmatpush.msra.mxu0 %v5650
        %5717 = vmatpush.msra.mxu0 %v5648
        %5718 = vmatpush.msra.mxu0 %v5646
        %5719 = vmatpush.msra.mxu0 %v5644
        %5720 = vmatpush.msra.mxu0 %v5642
        %5721 = vmatpush.msra.mxu0 %v5640
        %5722 = vmatpush.msra.mxu0 %v5638
        %5723 = vmatpush.msra.mxu0 %v5636
        %5724 = vmatpush.msra.mxu0 %v5634
        %5725 = vmatpush.msra.mxu0 %v5632
        %5726 = vmatpush.msra.mxu0 %v5630
        %5727 = vmatmul.f32.gmra.mxu0 %v5587
        %v5728 = vpop.f32.mrf.mxu0
        %v5729 = vadd.f32 %v5700, %v5728
        %5730 = vmatmul.f32.gmra.mxu0 %v5590
        %v5731 = vpop.f32.mrf.mxu0
        %v5732 = vadd.f32 %v5703, %v5731
        %5733 = vmatmul.f32.gmra.mxu0 %v5593
        %v5734 = vpop.f32.mrf.mxu0
        %v5735 = vadd.f32 %v5706, %v5734
        %5736 = vmatmul.f32.gmra.mxu0 %v5596
        %v5737 = vpop.f32.mrf.mxu0
        %v5738 = vadd.f32 %v5709, %v5737
        %5739 = vdwg.mxu0
        %5740 = vmatpush.msra.mxu0 0.0
        %5741 = vmatpush.msra.mxu0 0.0
        %5742 = vmatpush.msra.mxu0 0.0
        %5743 = vmatpush.msra.mxu0 0.0
        %5744 = vmatpush.msra.mxu0 0.0
        %5745 = vmatpush.msra.mxu0 0.0
        %5746 = vmatpush.msra.mxu0 0.0
        %5747 = vmatpush.msra.mxu0 0.0
        %5748 = vmatpush.msra.mxu0 0.0
        %5749 = vmatpush.msra.mxu0 0.0
        %5750 = vmatpush.msra.mxu0 0.0
        %5751 = vmatpush.msra.mxu0 0.0
        %5752 = vmatpush.msra.mxu0 %v5668
        %5753 = vmatpush.msra.mxu0 %v5666
        %5754 = vmatpush.msra.mxu0 %v5664
        %5755 = vmatpush.msra.mxu0 %v5662
        %5756 = vmatmul.f32.gmra.mxu0 %v5671
        %v5757 = vpop.f32.mrf.mxu0
        %v5758 = vadd.f32 %v5729, %v5757
        %5759 = vmatmul.f32.gmra.mxu0 %v5674
        %v5760 = vpop.f32.mrf.mxu0
        %v5761 = vadd.f32 %v5732, %v5760
        %5762 = vmatmul.f32.gmra.mxu0 %v5677
        %v5763 = vpop.f32.mrf.mxu0
        %v5764 = vadd.f32 %v5735, %v5763
        %5765 = vmatmul.f32.gmra.mxu0 %v5680
        %v5766 = vpop.f32.mrf.mxu0
        %v5767 = vadd.f32 %v5738, %v5766
        %5768 = vdwg.mxu0
        %5769 = vmatpush.msra.mxu0 %v5629
        %5770 = vmatpush.msra.mxu0 %v5627
        %5771 = vmatpush.msra.mxu0 %v5625
        %5772 = vmatpush.msra.mxu0 %v5623
        %5773 = vmatpush.msra.mxu0 %v5621
        %5774 = vmatpush.msra.mxu0 %v5619
        %5775 = vmatpush.msra.mxu0 %v5617
        %5776 = vmatpush.msra.mxu0 %v5615
        %5777 = vmatpush.msra.mxu0 %v5613
        %5778 = vmatpush.msra.mxu0 %v5611
        %5779 = vmatpush.msra.mxu0 %v5609
        %5780 = vmatpush.msra.mxu0 %v5607
        %5781 = vmatpush.msra.mxu0 %v5605
        %5782 = vmatpush.msra.mxu0 %v5603
        %5783 = vmatpush.msra.mxu0 %v5601
        %5784 = vmatpush.msra.mxu0 %v5599
        %5785 = vmatmul.f32.gmra.mxu0 %v5586
        %v5786 = vpop.f32.mrf.mxu0
        %v5787 = vadd.f32 0.0, %v5786
        %5788 = vmatmul.f32.gmra.mxu0 %v5589
        %v5789 = vpop.f32.mrf.mxu0
        %v5790 = vadd.f32 0.0, %v5789
        %5791 = vmatmul.f32.gmra.mxu0 %v5592
        %v5792 = vpop.f32.mrf.mxu0
        %v5793 = vadd.f32 0.0, %v5792
        %5794 = vmatmul.f32.gmra.mxu0 %v5595
        %v5795 = vpop.f32.mrf.mxu0
        %v5796 = vadd.f32 0.0, %v5795
        %5797 = vdwg.mxu0
        %5798 = vmatpush.msra.mxu0 %v5661
        %5799 = vmatpush.msra.mxu0 %v5659
        %5800 = vmatpush.msra.mxu0 %v5657
        %5801 = vmatpush.msra.mxu0 %v5655
        %5802 = vmatpush.msra.mxu0 %v5653
        %5803 = vmatpush.msra.mxu0 %v5651
        %5804 = vmatpush.msra.mxu0 %v5649
        %5805 = vmatpush.msra.mxu0 %v5647
        %5806 = vmatpush.msra.mxu0 %v5645
        %5807 = vmatpush.msra.mxu0 %v5643
        %5808 = vmatpush.msra.mxu0 %v5641
        %5809 = vmatpush.msra.mxu0 %v5639
        %5810 = vmatpush.msra.mxu0 %v5637
        %5811 = vmatpush.msra.mxu0 %v5635
        %5812 = vmatpush.msra.mxu0 %v5633
        %5813 = vmatpush.msra.mxu0 %v5631
        %5814 = vmatmul.f32.gmra.mxu0 %v5587
        %v5815 = vpop.f32.mrf.mxu0
        %v5816 = vadd.f32 %v5787, %v5815
        %5817 = vmatmul.f32.gmra.mxu0 %v5590
        %v5818 = vpop.f32.mrf.mxu0
        %v5819 = vadd.f32 %v5790, %v5818
        %5820 = vmatmul.f32.gmra.mxu0 %v5593
        %v5821 = vpop.f32.mrf.mxu0
        %v5822 = vadd.f32 %v5793, %v5821
        %5823 = vmatmul.f32.gmra.mxu0 %v5596
        %v5824 = vpop.f32.mrf.mxu0
        %v5825 = vadd.f32 %v5796, %v5824
        %5826 = vdwg.mxu0
        %5827 = vmatpush.msra.mxu0 0.0
        %5828 = vmatpush.msra.mxu0 0.0
        %5829 = vmatpush.msra.mxu0 0.0
        %5830 = vmatpush.msra.mxu0 0.0
        %5831 = vmatpush.msra.mxu0 0.0
        %5832 = vmatpush.msra.mxu0 0.0
        %5833 = vmatpush.msra.mxu0 0.0
        %5834 = vmatpush.msra.mxu0 0.0
        %5835 = vmatpush.msra.mxu0 0.0
        %5836 = vmatpush.msra.mxu0 0.0
        %5837 = vmatpush.msra.mxu0 0.0
        %5838 = vmatpush.msra.mxu0 0.0
        %5839 = vmatpush.msra.mxu0 %v5669
        %5840 = vmatpush.msra.mxu0 %v5667
        %5841 = vmatpush.msra.mxu0 %v5665
        %5842 = vmatpush.msra.mxu0 %v5663
        %5843 = vmatmul.f32.gmra.mxu0 %v5671
        %v5844 = vpop.f32.mrf.mxu0
        %v5845 = vadd.f32 %v5816, %v5844
        %5846 = vmatmul.f32.gmra.mxu0 %v5674
        %v5847 = vpop.f32.mrf.mxu0
        %v5848 = vadd.f32 %v5819, %v5847
        %5849 = vmatmul.f32.gmra.mxu0 %v5677
        %v5850 = vpop.f32.mrf.mxu0
        %v5851 = vadd.f32 %v5822, %v5850
        %5852 = vmatmul.f32.gmra.mxu0 %v5680
        %v5853 = vpop.f32.mrf.mxu0
        %v5854 = vadd.f32 %v5825, %v5853
        %5855 = vdwg.mxu0
        %v5856 = vadd.f32 %v4836, %v5758
        %v5857 = vadd.f32 %v4865, %v5845
        %v5858 = vadd.f32 %v4839, %v5761
        %v5859 = vadd.f32 %v4868, %v5848
        %v5860 = vadd.f32 %v4842, %v5764
        %v5861 = vadd.f32 %v4871, %v5851
        %v5862 = vadd.f32 %v4845, %v5767
        %v5863 = vadd.f32 %v4874, %v5854
        %5864 = vst [vmem:[%s364] sm:$0xff] %v5856
        %5865 = vst [vmem:[%s364 + $0x8] sm:$0xff] %v5857
        %5866 = vst [vmem:[%s364 + $0x10] sm:$0xff] %v5858
        %5867 = vst [vmem:[%s364 + $0x18] sm:$0xff] %v5859
        %5868 = vst [vmem:[%s364 + $0x20] sm:$0xff] %v5860
        %5869 = vst [vmem:[%s364 + $0x28] sm:$0xff] %v5861
        %5870 = vst [vmem:[%s364 + $0x30] sm:$0xff] %v5862
        %5871 = vst [vmem:[%s364 + $0x38] sm:$0xff] %v5863
        %s5872 = sand.u32 %s186, 1
        %s5873 = scalar_lea.sflag [#allocation11], %s5872
        %s5874 = sand.u32 %s186, 1
        %s5875 = smul.addr %s5874, 64
        %s5876 = scalar_lea.vmem [#allocation18], %s5875
        // Predicated region
        $region69: #{tpu_custom_call.1} parent=47 // pred_check
          %p5877 = pneg %p196
        $region70: #{tpu_custom_call.1} parent=47 // pred_check_branch
          %5879 = sbr.rel (%p5877) target = $region72
        $region71: #{tpu_custom_call.1} parent=47 // pred_region
          %5881 = vsyncadd %s5873, 0
          %s5882 = smul.addr %s26, 8
          %s5883 = smul.addr %s5882, 8
          %s5884 = scalar_lea.hbm %s7, %s5883
          %s5885 = sshll.u32 %s5876, 4
          %s5886 = int_to_ptr.vmem [resolvable:$true] %s5885
          %s5887 = sshll.u32 %s5884, 4
          %s5888 = int_to_ptr.hbm [resolvable:$true] %s5887
          %5893 = dma.vmem_to_hbm [thread:$0]  %s5886, 1024, %s5888, %s5873, 256, 256, 16
        $region72: #{tpu_custom_call.1} parent=47 // pred_fallthru
          _
      $region48: #{tpu_custom_call.1} parent=5 // pred_fallthru
        _
      %p5894 = scmp.le.s32.totalorder 2, %s21
      // Predicated region
      $region73: #{tpu_custom_call.1} parent=5 // pred_check
        %p5895 = pneg %p5894
      $region74: #{tpu_custom_call.1} parent=5 // pred_check_branch
        %5897 = sbr.rel (%p5895) target = $region76
      $region75: #{tpu_custom_call.1} parent=5 // pred_region
        %s5898 = ssub.s32 %s21, 2
        // Predicated region
        $region77: #{tpu_custom_call.1} parent=75 // pred_check
          %p5899 = pneg %p202
        $region78: #{tpu_custom_call.1} parent=75 // pred_check_branch
          %5901 = sbr.rel (%p5899) target = $region80
        $region79: #{tpu_custom_call.1} parent=75 // pred_region
          %s5902 = sand.u32 %s187, 1
          %s5903 = scalar_lea.sflag [#allocation11], %s5902
          %s5904 = sand.u32 %s187, 1
          %s5905 = smul.addr %s5904, 64
          %s5906 = scalar_lea.vmem [#allocation18], %s5905
          %5908 = dma.done %s5903, 1024
        $region80: #{tpu_custom_call.1} parent=75 // pred_fallthru
          _
      $region76: #{tpu_custom_call.1} parent=5 // pred_fallthru
        _
    $region6: #{tpu_custom_call.1} parent=1 // loop_footer
      %s25 = sadd.s32 1, %s21
    $region7: #{tpu_custom_call.1} parent=1 // loop_footer_branch
      %20 = sbr.rel target = $region3
    $region8: #{tpu_custom_call.1} parent=1 // loop_exit
      _
    %5909 = vsyncpa [#allocation10], 1
    %s5910 = scalar_lea.sflag [#allocation10], 1
    %5911 = vsyncpa %s5910, 1
    %5912 = vsyncpa [#allocation13], 1
    %5913 = vsyncpa [#allocation16], 1
    %5914 = vsyncpa [#allocation11], 1
    %s5915 = scalar_lea.sflag [#allocation11], 1
    %5916 = vsyncpa %s5915, 1

</llo_original>
